<compile_context>
chip_gen: v7x
topology: tpu7x:2x2x1
jax: 0.10.0
libtpu: 0.0.40
codegen_flags: <defaults>
</compile_context>

<pallas_src>
import functools

import jax
import jax.numpy as jnp
from jax.experimental import pallas as pl
from jax.experimental.pallas import tpu as pltpu


def _linear_kernel(x_ref, w_ref, b_ref, o_ref, acc_ref):
    k = pl.program_id(0)

    @pl.when(k == 0)
    def _():
        acc_ref[...] = jnp.zeros_like(acc_ref)

    # (B, tk) contract-K (N, tk) -> (B, N), accumulated in f32 on the MXU.
    acc_ref[...] += jax.lax.dot_general(
        x_ref[...],
        w_ref[...],
        dimension_numbers=(((1,), (1,)), ((), ())),
        preferred_element_type=jnp.float32,
    )

    @pl.when(k == pl.num_programs(0) - 1)
    def _():
        o_ref[...] = (acc_ref[...] + b_ref[...]).astype(o_ref.dtype)


@functools.partial(jax.jit, static_argnames=("tk",))
def sj_forward(x, w_nk, b, *, tk=24576):
    """out = x @ w_nk.T + b  (torch: Linear(in_features=K, out_features=N),
    with w_nk in torch-native (N, K) layout)."""
    B, K = x.shape
    N, Kw = w_nk.shape
    assert K == Kw and K % tk == 0

    b2 = b.reshape(1, N)

    return pl.pallas_call(
        _linear_kernel,
        out_shape=jax.ShapeDtypeStruct((B, N), x.dtype),
        grid_spec=pltpu.PrefetchScalarGridSpec(
            num_scalar_prefetch=0,
            grid=(K // tk,),
            in_specs=[
                # x tile: (B, tk) — B is the full batch dim, tk multiple of 128.
                pl.BlockSpec((B, tk), lambda k: (0, k)),
                # weight tile: (N, tk) — lane-dense, K on the lane axis.
                pl.BlockSpec((N, tk), lambda k: (0, k)),
                # bias: tiny, resident across all steps.
                pl.BlockSpec((1, N), lambda k: (0, 0)),
            ],
            out_specs=pl.BlockSpec((B, N), lambda k: (0, 0)),
            scratch_shapes=[pltpu.VMEM((B, N), jnp.float32)],
        ),
        compiler_params=pltpu.CompilerParams(
            dimension_semantics=("arbitrary",),  # K is a reduction axis
            vmem_limit_bytes=32 * 1024 * 1024,   # explicit headroom (v7x-safe)
        ),
    )(x, w_nk, b2)


if __name__ == "__main__":
    IN_FEATURES = 196608  # fixed by the module: Linear(196608, 10)
    OUT_FEATURES = 10
    BATCH = 2

    key = jax.random.PRNGKey(0)
    kx, kw, kb = jax.random.split(key, 3)

    # Deterministic parameter init mimicking torch.nn.Linear's default
    # uniform(-1/sqrt(in_features), 1/sqrt(in_features)); weight kept in the
    # torch-native (out_features, in_features) layout.
    bound = 1.0 / (IN_FEATURES ** 0.5)
    w_nk = jax.random.uniform(
        kw, (OUT_FEATURES, IN_FEATURES), jnp.float32, -bound, bound
    )
    b = jax.random.uniform(kb, (OUT_FEATURES,), jnp.float32, -bound, bound)

    x = jax.random.normal(kx, (BATCH, IN_FEATURES), jnp.float32)

    out = sj_forward(x, w_nk, b)
    jax.block_until_ready(out)

    # Sanity check against plain-JAX reference.
    ref = x @ w_nk.T + b
    assert out.shape == (BATCH, OUT_FEATURES)
    assert jnp.allclose(out, ref, atol=1e-3, rtol=1e-3)

    print("KERNEL_OK")
</pallas_src>

<mosaic_0001>
module attributes {stable_mosaic.version = 11 : i64} {
  func.func @_linear_kernel(%arg0: i32, %arg1: memref<2x24576xf32, #tpu.memory_space<vmem>>, %arg2: memref<10x24576xf32, #tpu.memory_space<vmem>>, %arg3: memref<1x10xf32, #tpu.memory_space<vmem>>, %arg4: memref<2x10xf32, #tpu.memory_space<vmem>>, %arg5: memref<2x10xf32, #tpu.memory_space<vmem>>) attributes {dimension_semantics = [#tpu.dimension_semantics<arbitrary>], iteration_bounds = array<i64: 8>, scalar_prefetch = 0 : i64, scratch_operands = 1 : i64, tpu.core_type = #tpu.core_type<tc>, window_params = [{transform_indices = @transform_0, window_bounds = array<i64: 2, 24576>}, {transform_indices = @transform_1, window_bounds = array<i64: 10, 24576>}, {pipeline_mode = #tpu.pipeline_mode<synchronous>, transform_indices = @transform_2, window_bounds = array<i64: 1, 10>}, {pipeline_mode = #tpu.pipeline_mode<synchronous>, transform_indices = @transform_3, window_bounds = array<i64: 2, 10>}]} {
    %c0_i32 = arith.constant 0 : i32
    %0 = arith.cmpi eq, %arg0, %c0_i32 : i32
    %1 = arith.extui %0 : i1 to i32
    %c0_i32_0 = arith.constant 0 : i32
    %2 = arith.cmpi ne, %1, %c0_i32_0 : i32
    scf.if %2 {
      %cst_9 = arith.constant 0.000000e+00 : f32
      %12 = vector.broadcast %cst_9 : f32 to vector<2x10xf32>
      %c0_10 = arith.constant 0 : index
      %c0_11 = arith.constant 0 : index
      %13 = vector.load %arg5[%c0_10, %c0_11] : memref<2x10xf32, #tpu.memory_space<vmem>>, vector<2x10xf32>
      tpu.vector_store %arg5[%c0_10, %c0_11], %12 {strides = array<i32>} : memref<2x10xf32, #tpu.memory_space<vmem>>, vector<2x10xf32>,
    } else {
    }
    %c0 = arith.constant 0 : index
    %c0_1 = arith.constant 0 : index
    %3 = vector.load %arg5[%c0, %c0_1] : memref<2x10xf32, #tpu.memory_space<vmem>>, vector<2x10xf32>
    %c0_2 = arith.constant 0 : index
    %c0_3 = arith.constant 0 : index
    %4 = vector.load %arg1[%c0_2, %c0_3] : memref<2x24576xf32, #tpu.memory_space<vmem>>, vector<2x24576xf32>
    %c0_4 = arith.constant 0 : index
    %c0_5 = arith.constant 0 : index
    %5 = vector.load %arg2[%c0_4, %c0_5] : memref<10x24576xf32, #tpu.memory_space<vmem>>, vector<10x24576xf32>
    %cst = arith.constant dense<0.000000e+00> : vector<2x10xf32>
    %6 = tpu.matmul %4, %5, %cst {dimension_numbers = #tpu.dot_dimension_numbers<[1], [1], [0], [0], [0, 0, 1, 0], [], []>} : vector<2x24576xf32>, vector<10x24576xf32>, vector<2x10xf32> -> vector<2x10xf32>
    %7 = arith.addf %3, %6 : vector<2x10xf32>
    %c0_6 = arith.constant 0 : index
    %c0_7 = arith.constant 0 : index
    %8 = vector.load %arg5[%c0_6, %c0_7] : memref<2x10xf32, #tpu.memory_space<vmem>>, vector<2x10xf32>
    tpu.vector_store %arg5[%c0_6, %c0_7], %7 {strides = array<i32>} : memref<2x10xf32, #tpu.memory_space<vmem>>, vector<2x10xf32>,
    %c7_i32 = arith.constant 7 : i32
    %9 = arith.cmpi eq, %arg0, %c7_i32 : i32
    %10 = arith.extui %9 : i1 to i32
    %c0_i32_8 = arith.constant 0 : i32
    %11 = arith.cmpi ne, %10, %c0_i32_8 : i32
    scf.if %11 {
      %c0_9 = arith.constant 0 : index
      %c0_10 = arith.constant 0 : index
      %12 = vector.load %arg5[%c0_9, %c0_10] : memref<2x10xf32, #tpu.memory_space<vmem>>, vector<2x10xf32>
      %c0_11 = arith.constant 0 : index
      %c0_12 = arith.constant 0 : index
      %13 = vector.load %arg3[%c0_11, %c0_12] : memref<1x10xf32, #tpu.memory_space<vmem>>, vector<1x10xf32>
      %14 = vector.broadcast %13 : vector<1x10xf32> to vector<2x10xf32>
      %15 = arith.addf %12, %14 : vector<2x10xf32>
      %c0_13 = arith.constant 0 : index
      %c0_14 = arith.constant 0 : index
      %16 = vector.load %arg4[%c0_13, %c0_14] : memref<2x10xf32, #tpu.memory_space<vmem>>, vector<2x10xf32>
      tpu.vector_store %arg4[%c0_13, %c0_14], %15 {strides = array<i32>} : memref<2x10xf32, #tpu.memory_space<vmem>>, vector<2x10xf32>,
    } else {
    }
    return
  }
  func.func @transform_0(%arg0: i32) -> (i32, i32) {
    %c0_i32 = arith.constant 0 : i32
    %c0_i32_0 = arith.constant 0 : i32
    return %c0_i32, %arg0 : i32, i32
  }
  func.func @transform_1(%arg0: i32) -> (i32, i32) {
    %c0_i32 = arith.constant 0 : i32
    %c0_i32_0 = arith.constant 0 : i32
    return %c0_i32, %arg0 : i32, i32
  }
  func.func @transform_2(%arg0: i32) -> (i32, i32) {
    %c0_i32 = arith.constant 0 : i32
    %c0_i32_0 = arith.constant 0 : i32
    %c0_i32_1 = arith.constant 0 : i32
    return %c0_i32, %c0_i32_0 : i32, i32
  }
  func.func @transform_3(%arg0: i32) -> (i32, i32) {
    %c0_i32 = arith.constant 0 : i32
    %c0_i32_0 = arith.constant 0 : i32
    %c0_i32_1 = arith.constant 0 : i32
    return %c0_i32, %c0_i32_0 : i32, i32
  }
}

</mosaic_0001>

<llo_original>
// kernel: sj_forward.1
$region0: #{sj_forward.1}
  #allocation0 [shape = 'u32[]', space=smem, size = 0x4, offset = 0x4, fixed_abs, tag = 'smem constant byte address 0x4 - core index']
  #allocation1 [shape = 'u32[144,128]{1,0:T(1,128)}', space=vmem, size = 0x12000, scoped, tag = 'internal scratch']
  #allocation2 [shape = 'f32[2,10]{1,0:T(2,128)}', space=vmem, size = 0x400, scoped, tag = 'scratch operand']
  %s0 = inlined_call_operand.hbm [shape: f32[2,196608], index: 0, kind: input, shape index: {}]
  %s1 = inlined_call_operand.hbm [shape: f32[10,196608], index: 1, kind: input, shape index: {}]
  %s2 = inlined_call_operand.hbm [shape: f32[1,10], index: 2, kind: input, shape index: {}]
  %s3 = inlined_call_operand.hbm [shape: f32[2,10], index: 3, kind: output, shape index: {}]
  %s4 = sld [smem:[#allocation0]]
  $region65: #{sj_forward.1} parent=0
    _
  %s6 = ssub.s32 1, %s4
  %s7 = scalar_select 0, %s6, %s4
  $region1: #{sj_forward.1} parent=0
    #allocation3 [shape = 'u8[393216]{0}', space=vmem, size = 0x60000, scoped, tag = 'input window, operand 0']
    #allocation4 [shape = 's32[2]{0}', space=sflag, size = 0x8, scoped, tag = 'scoped memory for sj_forward.1']
    #allocation5 [shape = 's32[2]{0}', space=sflag, size = 0x8, scoped, tag = 'scoped memory for sj_forward.1']
    #allocation6 [shape = 'u8[3145728]{0}', space=vmem, size = 0x300000, scoped, tag = 'input window, operand 1']
    #allocation7 [shape = 's32[2]{0}', space=sflag, size = 0x8, scoped, tag = 'scoped memory for sj_forward.1']
    #allocation8 [shape = 'u8[512]{0}', space=vmem, size = 0x400, scoped, tag = 'input window, operand 2, single buffered']
    #allocation9 [shape = 'u8[1024]{0}', space=vmem, size = 0x400, scoped, tag = 'output window, operand 0, single buffered']
    %8 = vsyncpa [#allocation4], 0
    %s9 = scalar_lea.sflag [#allocation4], 1
    %10 = vsyncpa %s9, 0
    %11 = vsyncpa [#allocation7], 0
    %s12 = scalar_lea.sflag [#allocation7], 1
    %13 = vsyncpa %s12, 0
    %14 = vsyncpa [#allocation5], 0
    loop: start=0, step=1, limit=10
    $region2: #{sj_forward.1} parent=1 // loop_pre_header
      _
    $region3: #{sj_forward.1} parent=1 // loop_header
      %s16 = sphi 0, %s20
      %p17 = scmp.ge.s32.totalorder %s16, 10
      %s26 = sphi 0, %s28
      %s29 = sphi 0, %s26
      %s30 = sphi 0, %s29
      %s46 = sphi 0, %s30
      %s52 = sphi 0, %s54
      %s55 = sphi 0, %s52
      %s56 = sphi 0, %s55
      %s72 = sphi 0, %s56
      %s76 = sphi 0, %s76
      %s78 = sphi 0, %s76
      %s79 = sphi 0, %s78
      %s93 = sphi 0, %s79
      %s97 = sphi 0, %s97
      %s99 = sphi 0, %s97
      %s100 = sphi 0, %s99
      %s114 = sphi 0, %s100
    $region4: #{sj_forward.1} parent=1 // loop_header_branch
      %19 = sbr.rel (%p17) target = $region8
    $region5: #{sj_forward.1} parent=1 // loop_body
      %s21 = ssub.s32 %s16, 1
      %s22 = ssub.s32 %s16, 2
      %s23 = sadd.s32 %s16, 1
      %s24 = ssub.s32 %s16, %s23
      %p25 = scmp.eq.s32.totalorder %s24, 0
      %s27 = sadd.s32 %s26, 1
      %s28 = scalar_select %p25, %s26, %s27
      %p31 = pneg %p25
      %p32 = scmp.eq.s32.totalorder %s16, 7
      %p33 = por %p31, %p32
      %p34 = scmp.ne.s32.totalorder %s26, %s29
      %p35 = scmp.eq.s32.totalorder %s16, 0
      %p36 = por %p34, %p35
      %p37 = scmp.ne.s32.totalorder %s26, %s29
      %p38 = scmp.eq.s32.totalorder %s21, 7
      %p39 = por %p37, %p38
      %p40 = scmp.ne.s32.totalorder %s29, %s30
      %p41 = scmp.eq.s32.totalorder %s21, 0
      %p42 = por %p40, %p41
      %p43 = scmp.ne.s32.totalorder %s29, %s30
      %p44 = scmp.eq.s32.totalorder %s22, 7
      %p45 = por %p43, %p44
      %p47 = scmp.ne.s32.totalorder %s30, %s46
      %p48 = scmp.eq.s32.totalorder %s22, 0
      %p49 = por %p47, %p48
      %s50 = ssub.s32 %s16, %s23
      %p51 = scmp.eq.s32.totalorder %s50, 0
      %s53 = sadd.s32 %s52, 1
      %s54 = scalar_select %p51, %s52, %s53
      %p57 = pneg %p51
      %p58 = scmp.eq.s32.totalorder %s16, 7
      %p59 = por %p57, %p58
      %p60 = scmp.ne.s32.totalorder %s52, %s55
      %p61 = scmp.eq.s32.totalorder %s16, 0
      %p62 = por %p60, %p61
      %p63 = scmp.ne.s32.totalorder %s52, %s55
      %p64 = scmp.eq.s32.totalorder %s21, 7
      %p65 = por %p63, %p64
      %p66 = scmp.ne.s32.totalorder %s55, %s56
      %p67 = scmp.eq.s32.totalorder %s21, 0
      %p68 = por %p66, %p67
      %p69 = scmp.ne.s32.totalorder %s55, %s56
      %p70 = scmp.eq.s32.totalorder %s22, 7
      %p71 = por %p69, %p70
      %p73 = scmp.ne.s32.totalorder %s56, %s72
      %p74 = scmp.eq.s32.totalorder %s22, 0
      %p75 = por %p73, %p74
      %s77 = sadd.s32 %s76, 1
      %p80 = scmp.eq.s32.totalorder %s16, 7
      %p81 = scmp.ne.s32.totalorder %s76, %s78
      %p82 = scmp.eq.s32.totalorder %s16, 0
      %p83 = por %p81, %p82
      %p84 = scmp.ne.s32.totalorder %s76, %s78
      %p85 = scmp.eq.s32.totalorder %s21, 7
      %p86 = por %p84, %p85
      %p87 = scmp.ne.s32.totalorder %s78, %s79
      %p88 = scmp.eq.s32.totalorder %s21, 0
      %p89 = por %p87, %p88
      %p90 = scmp.ne.s32.totalorder %s78, %s79
      %p91 = scmp.eq.s32.totalorder %s22, 7
      %p92 = por %p90, %p91
      %p94 = scmp.ne.s32.totalorder %s79, %s93
      %p95 = scmp.eq.s32.totalorder %s22, 0
      %p96 = por %p94, %p95
      %s98 = sadd.s32 %s97, 1
      %p101 = scmp.eq.s32.totalorder %s16, 7
      %p102 = scmp.ne.s32.totalorder %s97, %s99
      %p103 = scmp.eq.s32.totalorder %s16, 0
      %p104 = por %p102, %p103
      %p105 = scmp.ne.s32.totalorder %s97, %s99
      %p106 = scmp.eq.s32.totalorder %s21, 7
      %p107 = por %p105, %p106
      %p108 = scmp.ne.s32.totalorder %s99, %s100
      %p109 = scmp.eq.s32.totalorder %s21, 0
      %p110 = por %p108, %p109
      %p111 = scmp.ne.s32.totalorder %s99, %s100
      %p112 = scmp.eq.s32.totalorder %s22, 7
      %p113 = por %p111, %p112
      %p115 = scmp.ne.s32.totalorder %s100, %s114
      %p116 = scmp.eq.s32.totalorder %s22, 0
      %p117 = por %p115, %p116
      %p118 = scmp.le.s32.totalorder 1, %s16
      %p119 = scmp.lt.s32.totalorder %s16, 9
      %p120 = pnand %p118, %p119
      %p121 = pneg %p120
      // Predicated region
      $region9: #{sj_forward.1} parent=5 // pred_check
        _
      $region10: #{sj_forward.1} parent=5 // pred_check_branch
        %123 = sbr.rel (%p120) target = $region12
      $region11: #{sj_forward.1} parent=5 // pred_region
        %s124 = ssub.s32 %s16, 1
        // Predicated region
        $region13: #{sj_forward.1} parent=11 // pred_check
          %p125 = pneg %p89
        $region14: #{sj_forward.1} parent=11 // pred_check_branch
          %127 = sbr.rel (%p125) target = $region16
        $region15: #{sj_forward.1} parent=11 // pred_region
          %s129 = ssub.s32 16, 16
          %130 = vsyncadd [#allocation7], %s129
          %s132 = sshll.u32 [#allocation8], 4
          %s133 = int_to_ptr.vmem [resolvable:$true] %s132
          %135 = dma.hbm_to_vmem [thread:$0]  %s2, 16, %s133, [#allocation7]
        $region16: #{sj_forward.1} parent=11 // pred_fallthru
          _
      $region12: #{sj_forward.1} parent=5 // pred_fallthru
        _
      %p136 = scmp.lt.s32.totalorder %s16, 8
      // Predicated region
      $region17: #{sj_forward.1} parent=5 // pred_check
        %p137 = pneg %p136
      $region18: #{sj_forward.1} parent=5 // pred_check_branch
        %139 = sbr.rel (%p137) target = $region20
      $region19: #{sj_forward.1} parent=5 // pred_region
        // Predicated region
        $region21: #{sj_forward.1} parent=19 // pred_check
          %p140 = pneg %p36
        $region22: #{sj_forward.1} parent=19 // pred_check_branch
          %142 = sbr.rel (%p140) target = $region24
        $region23: #{sj_forward.1} parent=19 // pred_region
          %s143 = sand.u32 %s26, 1
          %s144 = scalar_lea.sflag [#allocation4], %s143
          %s145 = sand.u32 %s26, 1
          %s146 = smul.addr %s145, 384
          %s147 = scalar_lea.vmem [#allocation3], %s146
          %s148 = smul.u32 192, %s16
          %s150 = ssub.s32 6144, 6144
          %151 = vsyncadd %s144, %s150
          %s152 = smul.addr %s148, 32
          %s153 = scalar_lea.hbm %s0, %s152
          %s155 = sshll.u32 %s147, 4
          %s156 = int_to_ptr.vmem [resolvable:$true] %s155
          %158 = dma.hbm_to_vmem [thread:$0]  %s153, 6144, %s156, %s144
        $region24: #{sj_forward.1} parent=19 // pred_fallthru
          _
        // Predicated region
        $region25: #{sj_forward.1} parent=19 // pred_check
          %p159 = pneg %p62
        $region26: #{sj_forward.1} parent=19 // pred_check_branch
          %161 = sbr.rel (%p159) target = $region28
        $region27: #{sj_forward.1} parent=19 // pred_region
          %s162 = sand.u32 %s16, 1
          %s163 = scalar_lea.sflag [#allocation7], %s162
          %s164 = sand.u32 %s52, 1
          %s165 = smul.addr %s164, 3072
          %s166 = scalar_lea.vmem [#allocation6], %s165
          %s167 = smul.u32 192, %s16
          %s169 = ssub.s32 49152, 49152
          %170 = vsyncadd %s163, %s169
          %s171 = smul.addr %s167, 128
          %s172 = scalar_lea.hbm %s1, %s171
          %s173 = sshll.u32 %s166, 4
          %s174 = int_to_ptr.vmem [resolvable:$true] %s173
          %179 = dma.hbm_to_vmem [thread:$0]  %s172, 49152, %s174, %s163, 196608, 24576, 1536
        $region28: #{sj_forward.1} parent=19 // pred_fallthru
          _
      $region20: #{sj_forward.1} parent=5 // pred_fallthru
        _
      %p180 = scmp.le.s32.totalorder 1, %s16
      %p181 = scmp.lt.s32.totalorder %s16, 9
      %p182 = pnand %p180, %p181
      %p183 = pneg %p182
      // Predicated region
      $region29: #{sj_forward.1} parent=5 // pred_check
        _
      $region30: #{sj_forward.1} parent=5 // pred_check_branch
        %185 = sbr.rel (%p182) target = $region32
      $region31: #{sj_forward.1} parent=5 // pred_region
        %s186 = ssub.s32 %s16, 1
        %s187 = sand.u32 %s29, 1
        %s188 = scalar_lea.sflag [#allocation4], %s187
        %s189 = sand.u32 %s29, 1
        %s190 = smul.addr %s189, 384
        %s191 = scalar_lea.vmem [#allocation3], %s190
        // Predicated region
        $region33: #{sj_forward.1} parent=31 // pred_check
          %p192 = pneg %p42
        $region34: #{sj_forward.1} parent=31 // pred_check_branch
          %194 = sbr.rel (%p192) target = $region36
        $region35: #{sj_forward.1} parent=31 // pred_region
          %195 = dma.done %s188, 6144
        $region36: #{sj_forward.1} parent=31 // pred_fallthru
          _
        %s196 = sand.u32 %s21, 1
        %s197 = scalar_lea.sflag [#allocation7], %s196
        %s198 = sand.u32 %s55, 1
        %s199 = smul.addr %s198, 3072
        %s200 = scalar_lea.vmem [#allocation6], %s199
        // Predicated region
        $region37: #{sj_forward.1} parent=31 // pred_check
          %p201 = pneg %p68
        $region38: #{sj_forward.1} parent=31 // pred_check_branch
          %203 = sbr.rel (%p201) target = $region40
        $region39: #{sj_forward.1} parent=31 // pred_region
          %204 = dma.done %s197, 49152
        $region40: #{sj_forward.1} parent=31 // pred_fallthru
          _
        // Predicated region
        $region41: #{sj_forward.1} parent=31 // pred_check
          %p205 = pneg %p89
        $region42: #{sj_forward.1} parent=31 // pred_check_branch
          %207 = sbr.rel (%p205) target = $region44
        $region43: #{sj_forward.1} parent=31 // pred_region
          %208 = dma.done [#allocation7], 16
        $region44: #{sj_forward.1} parent=31 // pred_fallthru
          _
        %s209 = sand.u32 %s29, 1
        %s210 = scalar_lea.sflag [#allocation4], %s209
        %s211 = sand.u32 %s29, 1
        %s212 = smul.addr %s211, 384
        %s213 = scalar_lea.vmem [#allocation3], %s212
        %p214 = pneg %p42
        %p215 = pneg %p39
        %s216 = sand.u32 %s21, 1
        %s217 = scalar_lea.sflag [#allocation7], %s216
        %s218 = sand.u32 %s55, 1
        %s219 = smul.addr %s218, 3072
        %s220 = scalar_lea.vmem [#allocation6], %s219
        %p221 = pneg %p68
        %p222 = pneg %p65
        %p223 = pneg %p89
        %p224 = pneg %p86
        %p225 = pneg %p110
        %p226 = pneg %p107
        %s227 = smul.u32 192, %s21
        %s228 = smul.u32 192, %s21
        %p229 = scmp.eq.s32.totalorder %s21, 0
        // Predicated region
        $region45: #{sj_forward.1} parent=31 // pred_check
          %p230 = pneg %p229
        $region46: #{sj_forward.1} parent=31 // pred_check_branch
          %232 = sbr.rel (%p230) target = $region48
        $region47: #{sj_forward.1} parent=31 // pred_region
          %vm233 = vcmask 74752
          %234 = vst.msk [vmem:[#allocation2] sm:$0x3] %vm233, 0.0
        $region48: #{sj_forward.1} parent=31 // pred_fallthru
          _
        %v235 = vld [vmem:[#allocation2] sm:$0x3]
        %v236 = vld [vmem:[%s191] sm:$0xff]
        %v237 = vld [vmem:[%s191 + $0x8] sm:$0xff]
        %v238 = vld [vmem:[%s191 + $0x10] sm:$0xff]
        %v239 = vld [vmem:[%s191 + $0x18] sm:$0xff]
        %v240 = vld [vmem:[%s191 + $0x20] sm:$0xff]
        %v241 = vld [vmem:[%s191 + $0x28] sm:$0xff]
        %v242 = vld [vmem:[%s191 + $0x30] sm:$0xff]
        %v243 = vld [vmem:[%s191 + $0x38] sm:$0xff]
        %v244 = vld [vmem:[%s191 + $0x40] sm:$0xff]
        %v245 = vld [vmem:[%s191 + $0x48] sm:$0xff]
        %v246 = vld [vmem:[%s191 + $0x50] sm:$0xff]
        %v247 = vld [vmem:[%s191 + $0x58] sm:$0xff]
        %v248 = vld [vmem:[%s191 + $0x60] sm:$0xff]
        %v249 = vld [vmem:[%s191 + $0x68] sm:$0xff]
        %v250 = vld [vmem:[%s191 + $0x70] sm:$0xff]
        %v251 = vld [vmem:[%s191 + $0x78] sm:$0xff]
        %v252 = vld [vmem:[%s191 + $0x80] sm:$0xff]
        %v253 = vld [vmem:[%s191 + $0x88] sm:$0xff]
        %v254 = vld [vmem:[%s191 + $0x90] sm:$0xff]
        %v255 = vld [vmem:[%s191 + $0x98] sm:$0xff]
        %v256 = vld [vmem:[%s191 + $0xa0] sm:$0xff]
        %v257 = vld [vmem:[%s191 + $0xa8] sm:$0xff]
        %v258 = vld [vmem:[%s191 + $0xb0] sm:$0xff]
        %v259 = vld [vmem:[%s191 + $0xb8] sm:$0xff]
        %v260 = vld [vmem:[%s191 + $0xc0] sm:$0xff]
        %v261 = vld [vmem:[%s191 + $0xc8] sm:$0xff]
        %v262 = vld [vmem:[%s191 + $0xd0] sm:$0xff]
        %v263 = vld [vmem:[%s191 + $0xd8] sm:$0xff]
        %v264 = vld [vmem:[%s191 + $0xe0] sm:$0xff]
        %v265 = vld [vmem:[%s191 + $0xe8] sm:$0xff]
        %v266 = vld [vmem:[%s191 + $0xf0] sm:$0xff]
        %v267 = vld [vmem:[%s191 + $0xf8] sm:$0xff]
        %v268 = vld [vmem:[%s191 + $0x100] sm:$0xff]
        %v269 = vld [vmem:[%s191 + $0x108] sm:$0xff]
        %v270 = vld [vmem:[%s191 + $0x110] sm:$0xff]
        %v271 = vld [vmem:[%s191 + $0x118] sm:$0xff]
        %v272 = vld [vmem:[%s191 + $0x120] sm:$0xff]
        %v273 = vld [vmem:[%s191 + $0x128] sm:$0xff]
        %v274 = vld [vmem:[%s191 + $0x130] sm:$0xff]
        %v275 = vld [vmem:[%s191 + $0x138] sm:$0xff]
        %v276 = vld [vmem:[%s191 + $0x140] sm:$0xff]
        %v277 = vld [vmem:[%s191 + $0x148] sm:$0xff]
        %v278 = vld [vmem:[%s191 + $0x150] sm:$0xff]
        %v279 = vld [vmem:[%s191 + $0x158] sm:$0xff]
        %v280 = vld [vmem:[%s191 + $0x160] sm:$0xff]
        %v281 = vld [vmem:[%s191 + $0x168] sm:$0xff]
        %v282 = vld [vmem:[%s191 + $0x170] sm:$0xff]
        %v283 = vld [vmem:[%s191 + $0x178] sm:$0xff]
        %v284 = vld [vmem:[%s200] sm:$0xff]
        %v285 = vld [vmem:[%s200 + $0x8] sm:$0xff]
        %v286 = vld [vmem:[%s200 + $0x10] sm:$0xff]
        %v287 = vld [vmem:[%s200 + $0x18] sm:$0xff]
        %v288 = vld [vmem:[%s200 + $0x20] sm:$0xff]
        %v289 = vld [vmem:[%s200 + $0x28] sm:$0xff]
        %v290 = vld [vmem:[%s200 + $0x30] sm:$0xff]
        %v291 = vld [vmem:[%s200 + $0x38] sm:$0xff]
        %v292 = vld [vmem:[%s200 + $0x40] sm:$0xff]
        %v293 = vld [vmem:[%s200 + $0x48] sm:$0xff]
        %v294 = vld [vmem:[%s200 + $0x50] sm:$0xff]
        %v295 = vld [vmem:[%s200 + $0x58] sm:$0xff]
        %v296 = vld [vmem:[%s200 + $0x60] sm:$0xff]
        %v297 = vld [vmem:[%s200 + $0x68] sm:$0xff]
        %v298 = vld [vmem:[%s200 + $0x70] sm:$0xff]
        %v299 = vld [vmem:[%s200 + $0x78] sm:$0xff]
        %v300 = vld [vmem:[%s200 + $0x80] sm:$0xff]
        %v301 = vld [vmem:[%s200 + $0x88] sm:$0xff]
        %v302 = vld [vmem:[%s200 + $0x90] sm:$0xff]
        %v303 = vld [vmem:[%s200 + $0x98] sm:$0xff]
        %v304 = vld [vmem:[%s200 + $0xa0] sm:$0xff]
        %v305 = vld [vmem:[%s200 + $0xa8] sm:$0xff]
        %v306 = vld [vmem:[%s200 + $0xb0] sm:$0xff]
        %v307 = vld [vmem:[%s200 + $0xb8] sm:$0xff]
        %v308 = vld [vmem:[%s200 + $0xc0] sm:$0xff]
        %v309 = vld [vmem:[%s200 + $0xc8] sm:$0xff]
        %v310 = vld [vmem:[%s200 + $0xd0] sm:$0xff]
        %v311 = vld [vmem:[%s200 + $0xd8] sm:$0xff]
        %v312 = vld [vmem:[%s200 + $0xe0] sm:$0xff]
        %v313 = vld [vmem:[%s200 + $0xe8] sm:$0xff]
        %v314 = vld [vmem:[%s200 + $0xf0] sm:$0xff]
        %v315 = vld [vmem:[%s200 + $0xf8] sm:$0xff]
        %v316 = vld [vmem:[%s200 + $0x100] sm:$0xff]
        %v317 = vld [vmem:[%s200 + $0x108] sm:$0xff]
        %v318 = vld [vmem:[%s200 + $0x110] sm:$0xff]
        %v319 = vld [vmem:[%s200 + $0x118] sm:$0xff]
        %v320 = vld [vmem:[%s200 + $0x120] sm:$0xff]
        %v321 = vld [vmem:[%s200 + $0x128] sm:$0xff]
        %v322 = vld [vmem:[%s200 + $0x130] sm:$0xff]
        %v323 = vld [vmem:[%s200 + $0x138] sm:$0xff]
        %v324 = vld [vmem:[%s200 + $0x140] sm:$0xff]
        %v325 = vld [vmem:[%s200 + $0x148] sm:$0xff]
        %v326 = vld [vmem:[%s200 + $0x150] sm:$0xff]
        %v327 = vld [vmem:[%s200 + $0x158] sm:$0xff]
        %v328 = vld [vmem:[%s200 + $0x160] sm:$0xff]
        %v329 = vld [vmem:[%s200 + $0x168] sm:$0xff]
        %v330 = vld [vmem:[%s200 + $0x170] sm:$0xff]
        %v331 = vld [vmem:[%s200 + $0x178] sm:$0xff]
        %v332 = vld [vmem:[%s200 + $0x180] sm:$0xff]
        %v333 = vld [vmem:[%s200 + $0x188] sm:$0xff]
        %v334 = vld [vmem:[%s200 + $0x190] sm:$0xff]
        %v335 = vld [vmem:[%s200 + $0x198] sm:$0xff]
        %v336 = vld [vmem:[%s200 + $0x1a0] sm:$0xff]
        %v337 = vld [vmem:[%s200 + $0x1a8] sm:$0xff]
        %v338 = vld [vmem:[%s200 + $0x1b0] sm:$0xff]
        %v339 = vld [vmem:[%s200 + $0x1b8] sm:$0xff]
        %v340 = vld [vmem:[%s200 + $0x1c0] sm:$0xff]
        %v341 = vld [vmem:[%s200 + $0x1c8] sm:$0xff]
        %v342 = vld [vmem:[%s200 + $0x1d0] sm:$0xff]
        %v343 = vld [vmem:[%s200 + $0x1d8] sm:$0xff]
        %v344 = vld [vmem:[%s200 + $0x1e0] sm:$0xff]
        %v345 = vld [vmem:[%s200 + $0x1e8] sm:$0xff]
        %v346 = vld [vmem:[%s200 + $0x1f0] sm:$0xff]
        %v347 = vld [vmem:[%s200 + $0x1f8] sm:$0xff]
        %v348 = vld [vmem:[%s200 + $0x200] sm:$0xff]
        %v349 = vld [vmem:[%s200 + $0x208] sm:$0xff]
        %v350 = vld [vmem:[%s200 + $0x210] sm:$0xff]
        %v351 = vld [vmem:[%s200 + $0x218] sm:$0xff]
        %v352 = vld [vmem:[%s200 + $0x220] sm:$0xff]
        %v353 = vld [vmem:[%s200 + $0x228] sm:$0xff]
        %v354 = vld [vmem:[%s200 + $0x230] sm:$0xff]
        %v355 = vld [vmem:[%s200 + $0x238] sm:$0xff]
        %v356 = vld [vmem:[%s200 + $0x240] sm:$0xff]
        %v357 = vld [vmem:[%s200 + $0x248] sm:$0xff]
        %v358 = vld [vmem:[%s200 + $0x250] sm:$0xff]
        %v359 = vld [vmem:[%s200 + $0x258] sm:$0xff]
        %v360 = vld [vmem:[%s200 + $0x260] sm:$0xff]
        %v361 = vld [vmem:[%s200 + $0x268] sm:$0xff]
        %v362 = vld [vmem:[%s200 + $0x270] sm:$0xff]
        %v363 = vld [vmem:[%s200 + $0x278] sm:$0xff]
        %v364 = vld [vmem:[%s200 + $0x280] sm:$0xff]
        %v365 = vld [vmem:[%s200 + $0x288] sm:$0xff]
        %v366 = vld [vmem:[%s200 + $0x290] sm:$0xff]
        %v367 = vld [vmem:[%s200 + $0x298] sm:$0xff]
        %v368 = vld [vmem:[%s200 + $0x2a0] sm:$0xff]
        %v369 = vld [vmem:[%s200 + $0x2a8] sm:$0xff]
        %v370 = vld [vmem:[%s200 + $0x2b0] sm:$0xff]
        %v371 = vld [vmem:[%s200 + $0x2b8] sm:$0xff]
        %v372 = vld [vmem:[%s200 + $0x2c0] sm:$0xff]
        %v373 = vld [vmem:[%s200 + $0x2c8] sm:$0xff]
        %v374 = vld [vmem:[%s200 + $0x2d0] sm:$0xff]
        %v375 = vld [vmem:[%s200 + $0x2d8] sm:$0xff]
        %v376 = vld [vmem:[%s200 + $0x2e0] sm:$0xff]
        %v377 = vld [vmem:[%s200 + $0x2e8] sm:$0xff]
        %v378 = vld [vmem:[%s200 + $0x2f0] sm:$0xff]
        %v379 = vld [vmem:[%s200 + $0x2f8] sm:$0xff]
        %v380 = vld [vmem:[%s200 + $0x300] sm:$0xff]
        %v381 = vld [vmem:[%s200 + $0x308] sm:$0xff]
        %v382 = vld [vmem:[%s200 + $0x310] sm:$0xff]
        %v383 = vld [vmem:[%s200 + $0x318] sm:$0xff]
        %v384 = vld [vmem:[%s200 + $0x320] sm:$0xff]
        %v385 = vld [vmem:[%s200 + $0x328] sm:$0xff]
        %v386 = vld [vmem:[%s200 + $0x330] sm:$0xff]
        %v387 = vld [vmem:[%s200 + $0x338] sm:$0xff]
        %v388 = vld [vmem:[%s200 + $0x340] sm:$0xff]
        %v389 = vld [vmem:[%s200 + $0x348] sm:$0xff]
        %v390 = vld [vmem:[%s200 + $0x350] sm:$0xff]
        %v391 = vld [vmem:[%s200 + $0x358] sm:$0xff]
        %v392 = vld [vmem:[%s200 + $0x360] sm:$0xff]
        %v393 = vld [vmem:[%s200 + $0x368] sm:$0xff]
        %v394 = vld [vmem:[%s200 + $0x370] sm:$0xff]
        %v395 = vld [vmem:[%s200 + $0x378] sm:$0xff]
        %v396 = vld [vmem:[%s200 + $0x380] sm:$0xff]
        %v397 = vld [vmem:[%s200 + $0x388] sm:$0xff]
        %v398 = vld [vmem:[%s200 + $0x390] sm:$0xff]
        %v399 = vld [vmem:[%s200 + $0x398] sm:$0xff]
        %v400 = vld [vmem:[%s200 + $0x3a0] sm:$0xff]
        %v401 = vld [vmem:[%s200 + $0x3a8] sm:$0xff]
        %v402 = vld [vmem:[%s200 + $0x3b0] sm:$0xff]
        %v403 = vld [vmem:[%s200 + $0x3b8] sm:$0xff]
        %v404 = vld [vmem:[%s200 + $0x3c0] sm:$0xff]
        %v405 = vld [vmem:[%s200 + $0x3c8] sm:$0xff]
        %v406 = vld [vmem:[%s200 + $0x3d0] sm:$0xff]
        %v407 = vld [vmem:[%s200 + $0x3d8] sm:$0xff]
        %v408 = vld [vmem:[%s200 + $0x3e0] sm:$0xff]
        %v409 = vld [vmem:[%s200 + $0x3e8] sm:$0xff]
        %v410 = vld [vmem:[%s200 + $0x3f0] sm:$0xff]
        %v411 = vld [vmem:[%s200 + $0x3f8] sm:$0xff]
        %v412 = vld [vmem:[%s200 + $0x400] sm:$0xff]
        %v413 = vld [vmem:[%s200 + $0x408] sm:$0xff]
        %v414 = vld [vmem:[%s200 + $0x410] sm:$0xff]
        %v415 = vld [vmem:[%s200 + $0x418] sm:$0xff]
        %v416 = vld [vmem:[%s200 + $0x420] sm:$0xff]
        %v417 = vld [vmem:[%s200 + $0x428] sm:$0xff]
        %v418 = vld [vmem:[%s200 + $0x430] sm:$0xff]
        %v419 = vld [vmem:[%s200 + $0x438] sm:$0xff]
        %v420 = vld [vmem:[%s200 + $0x440] sm:$0xff]
        %v421 = vld [vmem:[%s200 + $0x448] sm:$0xff]
        %v422 = vld [vmem:[%s200 + $0x450] sm:$0xff]
        %v423 = vld [vmem:[%s200 + $0x458] sm:$0xff]
        %v424 = vld [vmem:[%s200 + $0x460] sm:$0xff]
        %v425 = vld [vmem:[%s200 + $0x468] sm:$0xff]
        %v426 = vld [vmem:[%s200 + $0x470] sm:$0xff]
        %v427 = vld [vmem:[%s200 + $0x478] sm:$0xff]
        %v428 = vld [vmem:[%s200 + $0x480] sm:$0xff]
        %v429 = vld [vmem:[%s200 + $0x488] sm:$0xff]
        %v430 = vld [vmem:[%s200 + $0x490] sm:$0xff]
        %v431 = vld [vmem:[%s200 + $0x498] sm:$0xff]
        %v432 = vld [vmem:[%s200 + $0x4a0] sm:$0xff]
        %v433 = vld [vmem:[%s200 + $0x4a8] sm:$0xff]
        %v434 = vld [vmem:[%s200 + $0x4b0] sm:$0xff]
        %v435 = vld [vmem:[%s200 + $0x4b8] sm:$0xff]
        %v436 = vld [vmem:[%s200 + $0x4c0] sm:$0xff]
        %v437 = vld [vmem:[%s200 + $0x4c8] sm:$0xff]
        %v438 = vld [vmem:[%s200 + $0x4d0] sm:$0xff]
        %v439 = vld [vmem:[%s200 + $0x4d8] sm:$0xff]
        %v440 = vld [vmem:[%s200 + $0x4e0] sm:$0xff]
        %v441 = vld [vmem:[%s200 + $0x4e8] sm:$0xff]
        %v442 = vld [vmem:[%s200 + $0x4f0] sm:$0xff]
        %v443 = vld [vmem:[%s200 + $0x4f8] sm:$0xff]
        %v444 = vld [vmem:[%s200 + $0x500] sm:$0xff]
        %v445 = vld [vmem:[%s200 + $0x508] sm:$0xff]
        %v446 = vld [vmem:[%s200 + $0x510] sm:$0xff]
        %v447 = vld [vmem:[%s200 + $0x518] sm:$0xff]
        %v448 = vld [vmem:[%s200 + $0x520] sm:$0xff]
        %v449 = vld [vmem:[%s200 + $0x528] sm:$0xff]
        %v450 = vld [vmem:[%s200 + $0x530] sm:$0xff]
        %v451 = vld [vmem:[%s200 + $0x538] sm:$0xff]
        %v452 = vld [vmem:[%s200 + $0x540] sm:$0xff]
        %v453 = vld [vmem:[%s200 + $0x548] sm:$0xff]
        %v454 = vld [vmem:[%s200 + $0x550] sm:$0xff]
        %v455 = vld [vmem:[%s200 + $0x558] sm:$0xff]
        %v456 = vld [vmem:[%s200 + $0x560] sm:$0xff]
        %v457 = vld [vmem:[%s200 + $0x568] sm:$0xff]
        %v458 = vld [vmem:[%s200 + $0x570] sm:$0xff]
        %v459 = vld [vmem:[%s200 + $0x578] sm:$0xff]
        %v460 = vld [vmem:[%s200 + $0x580] sm:$0xff]
        %v461 = vld [vmem:[%s200 + $0x588] sm:$0xff]
        %v462 = vld [vmem:[%s200 + $0x590] sm:$0xff]
        %v463 = vld [vmem:[%s200 + $0x598] sm:$0xff]
        %v464 = vld [vmem:[%s200 + $0x5a0] sm:$0xff]
        %v465 = vld [vmem:[%s200 + $0x5a8] sm:$0xff]
        %v466 = vld [vmem:[%s200 + $0x5b0] sm:$0xff]
        %v467 = vld [vmem:[%s200 + $0x5b8] sm:$0xff]
        %v468 = vld [vmem:[%s200 + $0x5c0] sm:$0xff]
        %v469 = vld [vmem:[%s200 + $0x5c8] sm:$0xff]
        %v470 = vld [vmem:[%s200 + $0x5d0] sm:$0xff]
        %v471 = vld [vmem:[%s200 + $0x5d8] sm:$0xff]
        %v472 = vld [vmem:[%s200 + $0x5e0] sm:$0xff]
        %v473 = vld [vmem:[%s200 + $0x5e8] sm:$0xff]
        %v474 = vld [vmem:[%s200 + $0x5f0] sm:$0xff]
        %v475 = vld [vmem:[%s200 + $0x5f8] sm:$0xff]
        %v476 = vld [vmem:[%s200 + $0x600] sm:$0x3]
        %v477 = vld [vmem:[%s200 + $0x608] sm:$0x3]
        %v478 = vld [vmem:[%s200 + $0x610] sm:$0x3]
        %v479 = vld [vmem:[%s200 + $0x618] sm:$0x3]
        %v480 = vld [vmem:[%s200 + $0x620] sm:$0x3]
        %v481 = vld [vmem:[%s200 + $0x628] sm:$0x3]
        %v482 = vld [vmem:[%s200 + $0x630] sm:$0x3]
        %v483 = vld [vmem:[%s200 + $0x638] sm:$0x3]
        %v484 = vld [vmem:[%s200 + $0x640] sm:$0x3]
        %v485 = vld [vmem:[%s200 + $0x648] sm:$0x3]
        %v486 = vld [vmem:[%s200 + $0x650] sm:$0x3]
        %v487 = vld [vmem:[%s200 + $0x658] sm:$0x3]
        %v488 = vld [vmem:[%s200 + $0x660] sm:$0x3]
        %v489 = vld [vmem:[%s200 + $0x668] sm:$0x3]
        %v490 = vld [vmem:[%s200 + $0x670] sm:$0x3]
        %v491 = vld [vmem:[%s200 + $0x678] sm:$0x3]
        %v492 = vld [vmem:[%s200 + $0x680] sm:$0x3]
        %v493 = vld [vmem:[%s200 + $0x688] sm:$0x3]
        %v494 = vld [vmem:[%s200 + $0x690] sm:$0x3]
        %v495 = vld [vmem:[%s200 + $0x698] sm:$0x3]
        %v496 = vld [vmem:[%s200 + $0x6a0] sm:$0x3]
        %v497 = vld [vmem:[%s200 + $0x6a8] sm:$0x3]
        %v498 = vld [vmem:[%s200 + $0x6b0] sm:$0x3]
        %v499 = vld [vmem:[%s200 + $0x6b8] sm:$0x3]
        %v500 = vld [vmem:[%s200 + $0x6c0] sm:$0x3]
        %v501 = vld [vmem:[%s200 + $0x6c8] sm:$0x3]
        %v502 = vld [vmem:[%s200 + $0x6d0] sm:$0x3]
        %v503 = vld [vmem:[%s200 + $0x6d8] sm:$0x3]
        %v504 = vld [vmem:[%s200 + $0x6e0] sm:$0x3]
        %v505 = vld [vmem:[%s200 + $0x6e8] sm:$0x3]
        %v506 = vld [vmem:[%s200 + $0x6f0] sm:$0x3]
        %v507 = vld [vmem:[%s200 + $0x6f8] sm:$0x3]
        %v508 = vld [vmem:[%s200 + $0x700] sm:$0x3]
        %v509 = vld [vmem:[%s200 + $0x708] sm:$0x3]
        %v510 = vld [vmem:[%s200 + $0x710] sm:$0x3]
        %v511 = vld [vmem:[%s200 + $0x718] sm:$0x3]
        %v512 = vld [vmem:[%s200 + $0x720] sm:$0x3]
        %v513 = vld [vmem:[%s200 + $0x728] sm:$0x3]
        %v514 = vld [vmem:[%s200 + $0x730] sm:$0x3]
        %v515 = vld [vmem:[%s200 + $0x738] sm:$0x3]
        %v516 = vld [vmem:[%s200 + $0x740] sm:$0x3]
        %v517 = vld [vmem:[%s200 + $0x748] sm:$0x3]
        %v518 = vld [vmem:[%s200 + $0x750] sm:$0x3]
        %v519 = vld [vmem:[%s200 + $0x758] sm:$0x3]
        %v520 = vld [vmem:[%s200 + $0x760] sm:$0x3]
        %v521 = vld [vmem:[%s200 + $0x768] sm:$0x3]
        %v522 = vld [vmem:[%s200 + $0x770] sm:$0x3]
        %v523 = vld [vmem:[%s200 + $0x778] sm:$0x3]
        %v524 = vld [vmem:[%s200 + $0x780] sm:$0x3]
        %v525 = vld [vmem:[%s200 + $0x788] sm:$0x3]
        %v526 = vld [vmem:[%s200 + $0x790] sm:$0x3]
        %v527 = vld [vmem:[%s200 + $0x798] sm:$0x3]
        %v528 = vld [vmem:[%s200 + $0x7a0] sm:$0x3]
        %v529 = vld [vmem:[%s200 + $0x7a8] sm:$0x3]
        %v530 = vld [vmem:[%s200 + $0x7b0] sm:$0x3]
        %v531 = vld [vmem:[%s200 + $0x7b8] sm:$0x3]
        %v532 = vld [vmem:[%s200 + $0x7c0] sm:$0x3]
        %v533 = vld [vmem:[%s200 + $0x7c8] sm:$0x3]
        %v534 = vld [vmem:[%s200 + $0x7d0] sm:$0x3]
        %v535 = vld [vmem:[%s200 + $0x7d8] sm:$0x3]
        %v536 = vld [vmem:[%s200 + $0x7e0] sm:$0x3]
        %v537 = vld [vmem:[%s200 + $0x7e8] sm:$0x3]
        %v538 = vld [vmem:[%s200 + $0x7f0] sm:$0x3]
        %v539 = vld [vmem:[%s200 + $0x7f8] sm:$0x3]
        %v540 = vld [vmem:[%s200 + $0x800] sm:$0x3]
        %v541 = vld [vmem:[%s200 + $0x808] sm:$0x3]
        %v542 = vld [vmem:[%s200 + $0x810] sm:$0x3]
        %v543 = vld [vmem:[%s200 + $0x818] sm:$0x3]
        %v544 = vld [vmem:[%s200 + $0x820] sm:$0x3]
        %v545 = vld [vmem:[%s200 + $0x828] sm:$0x3]
        %v546 = vld [vmem:[%s200 + $0x830] sm:$0x3]
        %v547 = vld [vmem:[%s200 + $0x838] sm:$0x3]
        %v548 = vld [vmem:[%s200 + $0x840] sm:$0x3]
        %v549 = vld [vmem:[%s200 + $0x848] sm:$0x3]
        %v550 = vld [vmem:[%s200 + $0x850] sm:$0x3]
        %v551 = vld [vmem:[%s200 + $0x858] sm:$0x3]
        %v552 = vld [vmem:[%s200 + $0x860] sm:$0x3]
        %v553 = vld [vmem:[%s200 + $0x868] sm:$0x3]
        %v554 = vld [vmem:[%s200 + $0x870] sm:$0x3]
        %v555 = vld [vmem:[%s200 + $0x878] sm:$0x3]
        %v556 = vld [vmem:[%s200 + $0x880] sm:$0x3]
        %v557 = vld [vmem:[%s200 + $0x888] sm:$0x3]
        %v558 = vld [vmem:[%s200 + $0x890] sm:$0x3]
        %v559 = vld [vmem:[%s200 + $0x898] sm:$0x3]
        %v560 = vld [vmem:[%s200 + $0x8a0] sm:$0x3]
        %v561 = vld [vmem:[%s200 + $0x8a8] sm:$0x3]
        %v562 = vld [vmem:[%s200 + $0x8b0] sm:$0x3]
        %v563 = vld [vmem:[%s200 + $0x8b8] sm:$0x3]
        %v564 = vld [vmem:[%s200 + $0x8c0] sm:$0x3]
        %v565 = vld [vmem:[%s200 + $0x8c8] sm:$0x3]
        %v566 = vld [vmem:[%s200 + $0x8d0] sm:$0x3]
        %v567 = vld [vmem:[%s200 + $0x8d8] sm:$0x3]
        %v568 = vld [vmem:[%s200 + $0x8e0] sm:$0x3]
        %v569 = vld [vmem:[%s200 + $0x8e8] sm:$0x3]
        %v570 = vld [vmem:[%s200 + $0x8f0] sm:$0x3]
        %v571 = vld [vmem:[%s200 + $0x8f8] sm:$0x3]
        %v572 = vld [vmem:[%s200 + $0x900] sm:$0x3]
        %v573 = vld [vmem:[%s200 + $0x908] sm:$0x3]
        %v574 = vld [vmem:[%s200 + $0x910] sm:$0x3]
        %v575 = vld [vmem:[%s200 + $0x918] sm:$0x3]
        %v576 = vld [vmem:[%s200 + $0x920] sm:$0x3]
        %v577 = vld [vmem:[%s200 + $0x928] sm:$0x3]
        %v578 = vld [vmem:[%s200 + $0x930] sm:$0x3]
        %v579 = vld [vmem:[%s200 + $0x938] sm:$0x3]
        %v580 = vld [vmem:[%s200 + $0x940] sm:$0x3]
        %v581 = vld [vmem:[%s200 + $0x948] sm:$0x3]
        %v582 = vld [vmem:[%s200 + $0x950] sm:$0x3]
        %v583 = vld [vmem:[%s200 + $0x958] sm:$0x3]
        %v584 = vld [vmem:[%s200 + $0x960] sm:$0x3]
        %v585 = vld [vmem:[%s200 + $0x968] sm:$0x3]
        %v586 = vld [vmem:[%s200 + $0x970] sm:$0x3]
        %v587 = vld [vmem:[%s200 + $0x978] sm:$0x3]
        %v588 = vld [vmem:[%s200 + $0x980] sm:$0x3]
        %v589 = vld [vmem:[%s200 + $0x988] sm:$0x3]
        %v590 = vld [vmem:[%s200 + $0x990] sm:$0x3]
        %v591 = vld [vmem:[%s200 + $0x998] sm:$0x3]
        %v592 = vld [vmem:[%s200 + $0x9a0] sm:$0x3]
        %v593 = vld [vmem:[%s200 + $0x9a8] sm:$0x3]
        %v594 = vld [vmem:[%s200 + $0x9b0] sm:$0x3]
        %v595 = vld [vmem:[%s200 + $0x9b8] sm:$0x3]
        %v596 = vld [vmem:[%s200 + $0x9c0] sm:$0x3]
        %v597 = vld [vmem:[%s200 + $0x9c8] sm:$0x3]
        %v598 = vld [vmem:[%s200 + $0x9d0] sm:$0x3]
        %v599 = vld [vmem:[%s200 + $0x9d8] sm:$0x3]
        %v600 = vld [vmem:[%s200 + $0x9e0] sm:$0x3]
        %v601 = vld [vmem:[%s200 + $0x9e8] sm:$0x3]
        %v602 = vld [vmem:[%s200 + $0x9f0] sm:$0x3]
        %v603 = vld [vmem:[%s200 + $0x9f8] sm:$0x3]
        %v604 = vld [vmem:[%s200 + $0xa00] sm:$0x3]
        %v605 = vld [vmem:[%s200 + $0xa08] sm:$0x3]
        %v606 = vld [vmem:[%s200 + $0xa10] sm:$0x3]
        %v607 = vld [vmem:[%s200 + $0xa18] sm:$0x3]
        %v608 = vld [vmem:[%s200 + $0xa20] sm:$0x3]
        %v609 = vld [vmem:[%s200 + $0xa28] sm:$0x3]
        %v610 = vld [vmem:[%s200 + $0xa30] sm:$0x3]
        %v611 = vld [vmem:[%s200 + $0xa38] sm:$0x3]
        %v612 = vld [vmem:[%s200 + $0xa40] sm:$0x3]
        %v613 = vld [vmem:[%s200 + $0xa48] sm:$0x3]
        %v614 = vld [vmem:[%s200 + $0xa50] sm:$0x3]
        %v615 = vld [vmem:[%s200 + $0xa58] sm:$0x3]
        %v616 = vld [vmem:[%s200 + $0xa60] sm:$0x3]
        %v617 = vld [vmem:[%s200 + $0xa68] sm:$0x3]
        %v618 = vld [vmem:[%s200 + $0xa70] sm:$0x3]
        %v619 = vld [vmem:[%s200 + $0xa78] sm:$0x3]
        %v620 = vld [vmem:[%s200 + $0xa80] sm:$0x3]
        %v621 = vld [vmem:[%s200 + $0xa88] sm:$0x3]
        %v622 = vld [vmem:[%s200 + $0xa90] sm:$0x3]
        %v623 = vld [vmem:[%s200 + $0xa98] sm:$0x3]
        %v624 = vld [vmem:[%s200 + $0xaa0] sm:$0x3]
        %v625 = vld [vmem:[%s200 + $0xaa8] sm:$0x3]
        %v626 = vld [vmem:[%s200 + $0xab0] sm:$0x3]
        %v627 = vld [vmem:[%s200 + $0xab8] sm:$0x3]
        %v628 = vld [vmem:[%s200 + $0xac0] sm:$0x3]
        %v629 = vld [vmem:[%s200 + $0xac8] sm:$0x3]
        %v630 = vld [vmem:[%s200 + $0xad0] sm:$0x3]
        %v631 = vld [vmem:[%s200 + $0xad8] sm:$0x3]
        %v632 = vld [vmem:[%s200 + $0xae0] sm:$0x3]
        %v633 = vld [vmem:[%s200 + $0xae8] sm:$0x3]
        %v634 = vld [vmem:[%s200 + $0xaf0] sm:$0x3]
        %v635 = vld [vmem:[%s200 + $0xaf8] sm:$0x3]
        %v636 = vld [vmem:[%s200 + $0xb00] sm:$0x3]
        %v637 = vld [vmem:[%s200 + $0xb08] sm:$0x3]
        %v638 = vld [vmem:[%s200 + $0xb10] sm:$0x3]
        %v639 = vld [vmem:[%s200 + $0xb18] sm:$0x3]
        %v640 = vld [vmem:[%s200 + $0xb20] sm:$0x3]
        %v641 = vld [vmem:[%s200 + $0xb28] sm:$0x3]
        %v642 = vld [vmem:[%s200 + $0xb30] sm:$0x3]
        %v643 = vld [vmem:[%s200 + $0xb38] sm:$0x3]
        %v644 = vld [vmem:[%s200 + $0xb40] sm:$0x3]
        %v645 = vld [vmem:[%s200 + $0xb48] sm:$0x3]
        %v646 = vld [vmem:[%s200 + $0xb50] sm:$0x3]
        %v647 = vld [vmem:[%s200 + $0xb58] sm:$0x3]
        %v648 = vld [vmem:[%s200 + $0xb60] sm:$0x3]
        %v649 = vld [vmem:[%s200 + $0xb68] sm:$0x3]
        %v650 = vld [vmem:[%s200 + $0xb70] sm:$0x3]
        %v651 = vld [vmem:[%s200 + $0xb78] sm:$0x3]
        %v652 = vld [vmem:[%s200 + $0xb80] sm:$0x3]
        %v653 = vld [vmem:[%s200 + $0xb88] sm:$0x3]
        %v654 = vld [vmem:[%s200 + $0xb90] sm:$0x3]
        %v655 = vld [vmem:[%s200 + $0xb98] sm:$0x3]
        %v656 = vld [vmem:[%s200 + $0xba0] sm:$0x3]
        %v657 = vld [vmem:[%s200 + $0xba8] sm:$0x3]
        %v658 = vld [vmem:[%s200 + $0xbb0] sm:$0x3]
        %v659 = vld [vmem:[%s200 + $0xbb8] sm:$0x3]
        %v660 = vld [vmem:[%s200 + $0xbc0] sm:$0x3]
        %v661 = vld [vmem:[%s200 + $0xbc8] sm:$0x3]
        %v662 = vld [vmem:[%s200 + $0xbd0] sm:$0x3]
        %v663 = vld [vmem:[%s200 + $0xbd8] sm:$0x3]
        %v664 = vld [vmem:[%s200 + $0xbe0] sm:$0x3]
        %v665 = vld [vmem:[%s200 + $0xbe8] sm:$0x3]
        %v666 = vld [vmem:[%s200 + $0xbf0] sm:$0x3]
        %v667 = vld [vmem:[%s200 + $0xbf8] sm:$0x3]
        %v716 = vcombine.high %v236, %v236
        %v718 = vunpack.c.l.s4 1983009808
        %v719 = vunpack.c.0.s8 %v718
        %v720 = vlaneseq
        %v721 = vshrl.u32 %v720, 7
        %v722 = vsub.s32 %v719, %v721
        %v723 = vrot.slane %v236, %v722
        %v725 = vunpack.c.l.s4 1983009808
        %v726 = vunpack.c.0.s8 %v725
        %v727 = vlaneseq
        %v728 = vshrl.u32 %v727, 7
        %v729 = vsub.s32 %v726, %v728
        %v730 = vrot.slane %v716, %v729
        %v731 = vcombine.high %v723, %v723
        %v732 = vcombine.high %v730, %v730
        %v733 = vcombine.high %v237, %v237
        %v735 = vunpack.c.l.s4 1983009808
        %v736 = vunpack.c.0.s8 %v735
        %v737 = vlaneseq
        %v738 = vshrl.u32 %v737, 7
        %v739 = vsub.s32 %v736, %v738
        %v740 = vrot.slane %v237, %v739
        %v742 = vunpack.c.l.s4 1983009808
        %v743 = vunpack.c.0.s8 %v742
        %v744 = vlaneseq
        %v745 = vshrl.u32 %v744, 7
        %v746 = vsub.s32 %v743, %v745
        %v747 = vrot.slane %v733, %v746
        %v748 = vcombine.high %v740, %v740
        %v749 = vcombine.high %v747, %v747
        %v750 = vcombine.high %v238, %v238
        %v752 = vunpack.c.l.s4 1983009808
        %v753 = vunpack.c.0.s8 %v752
        %v754 = vlaneseq
        %v755 = vshrl.u32 %v754, 7
        %v756 = vsub.s32 %v753, %v755
        %v757 = vrot.slane %v238, %v756
        %v759 = vunpack.c.l.s4 1983009808
        %v760 = vunpack.c.0.s8 %v759
        %v761 = vlaneseq
        %v762 = vshrl.u32 %v761, 7
        %v763 = vsub.s32 %v760, %v762
        %v764 = vrot.slane %v750, %v763
        %v765 = vcombine.high %v757, %v757
        %v766 = vcombine.high %v764, %v764
        %v767 = vcombine.high %v239, %v239
        %v769 = vunpack.c.l.s4 1983009808
        %v770 = vunpack.c.0.s8 %v769
        %v771 = vlaneseq
        %v772 = vshrl.u32 %v771, 7
        %v773 = vsub.s32 %v770, %v772
        %v774 = vrot.slane %v239, %v773
        %v776 = vunpack.c.l.s4 1983009808
        %v777 = vunpack.c.0.s8 %v776
        %v778 = vlaneseq
        %v779 = vshrl.u32 %v778, 7
        %v780 = vsub.s32 %v777, %v779
        %v781 = vrot.slane %v767, %v780
        %v782 = vcombine.high %v774, %v774
        %v783 = vcombine.high %v781, %v781
        %v784 = vcombine.high %v240, %v240
        %v786 = vunpack.c.l.s4 1983009808
        %v787 = vunpack.c.0.s8 %v786
        %v788 = vlaneseq
        %v789 = vshrl.u32 %v788, 7
        %v790 = vsub.s32 %v787, %v789
        %v791 = vrot.slane %v240, %v790
        %v793 = vunpack.c.l.s4 1983009808
        %v794 = vunpack.c.0.s8 %v793
        %v795 = vlaneseq
        %v796 = vshrl.u32 %v795, 7
        %v797 = vsub.s32 %v794, %v796
        %v798 = vrot.slane %v784, %v797
        %v799 = vcombine.high %v791, %v791
        %v800 = vcombine.high %v798, %v798
        %v801 = vcombine.high %v241, %v241
        %v803 = vunpack.c.l.s4 1983009808
        %v804 = vunpack.c.0.s8 %v803
        %v805 = vlaneseq
        %v806 = vshrl.u32 %v805, 7
        %v807 = vsub.s32 %v804, %v806
        %v808 = vrot.slane %v241, %v807
        %v810 = vunpack.c.l.s4 1983009808
        %v811 = vunpack.c.0.s8 %v810
        %v812 = vlaneseq
        %v813 = vshrl.u32 %v812, 7
        %v814 = vsub.s32 %v811, %v813
        %v815 = vrot.slane %v801, %v814
        %v816 = vcombine.high %v808, %v808
        %v817 = vcombine.high %v815, %v815
        %v818 = vcombine.high %v242, %v242
        %v820 = vunpack.c.l.s4 1983009808
        %v821 = vunpack.c.0.s8 %v820
        %v822 = vlaneseq
        %v823 = vshrl.u32 %v822, 7
        %v824 = vsub.s32 %v821, %v823
        %v825 = vrot.slane %v242, %v824
        %v827 = vunpack.c.l.s4 1983009808
        %v828 = vunpack.c.0.s8 %v827
        %v829 = vlaneseq
        %v830 = vshrl.u32 %v829, 7
        %v831 = vsub.s32 %v828, %v830
        %v832 = vrot.slane %v818, %v831
        %v833 = vcombine.high %v825, %v825
        %v834 = vcombine.high %v832, %v832
        %v835 = vcombine.high %v243, %v243
        %v837 = vunpack.c.l.s4 1983009808
        %v838 = vunpack.c.0.s8 %v837
        %v839 = vlaneseq
        %v840 = vshrl.u32 %v839, 7
        %v841 = vsub.s32 %v838, %v840
        %v842 = vrot.slane %v243, %v841
        %v844 = vunpack.c.l.s4 1983009808
        %v845 = vunpack.c.0.s8 %v844
        %v846 = vlaneseq
        %v847 = vshrl.u32 %v846, 7
        %v848 = vsub.s32 %v845, %v847
        %v849 = vrot.slane %v835, %v848
        %v850 = vcombine.high %v842, %v842
        %v851 = vcombine.high %v849, %v849
        %v852 = vcombine.high %v244, %v244
        %v854 = vunpack.c.l.s4 1983009808
        %v855 = vunpack.c.0.s8 %v854
        %v856 = vlaneseq
        %v857 = vshrl.u32 %v856, 7
        %v858 = vsub.s32 %v855, %v857
        %v859 = vrot.slane %v244, %v858
        %v861 = vunpack.c.l.s4 1983009808
        %v862 = vunpack.c.0.s8 %v861
        %v863 = vlaneseq
        %v864 = vshrl.u32 %v863, 7
        %v865 = vsub.s32 %v862, %v864
        %v866 = vrot.slane %v852, %v865
        %v867 = vcombine.high %v859, %v859
        %v868 = vcombine.high %v866, %v866
        %v869 = vcombine.high %v245, %v245
        %v871 = vunpack.c.l.s4 1983009808
        %v872 = vunpack.c.0.s8 %v871
        %v873 = vlaneseq
        %v874 = vshrl.u32 %v873, 7
        %v875 = vsub.s32 %v872, %v874
        %v876 = vrot.slane %v245, %v875
        %v878 = vunpack.c.l.s4 1983009808
        %v879 = vunpack.c.0.s8 %v878
        %v880 = vlaneseq
        %v881 = vshrl.u32 %v880, 7
        %v882 = vsub.s32 %v879, %v881
        %v883 = vrot.slane %v869, %v882
        %v884 = vcombine.high %v876, %v876
        %v885 = vcombine.high %v883, %v883
        %v886 = vcombine.high %v246, %v246
        %v888 = vunpack.c.l.s4 1983009808
        %v889 = vunpack.c.0.s8 %v888
        %v890 = vlaneseq
        %v891 = vshrl.u32 %v890, 7
        %v892 = vsub.s32 %v889, %v891
        %v893 = vrot.slane %v246, %v892
        %v895 = vunpack.c.l.s4 1983009808
        %v896 = vunpack.c.0.s8 %v895
        %v897 = vlaneseq
        %v898 = vshrl.u32 %v897, 7
        %v899 = vsub.s32 %v896, %v898
        %v900 = vrot.slane %v886, %v899
        %v901 = vcombine.high %v893, %v893
        %v902 = vcombine.high %v900, %v900
        %v903 = vcombine.high %v247, %v247
        %v905 = vunpack.c.l.s4 1983009808
        %v906 = vunpack.c.0.s8 %v905
        %v907 = vlaneseq
        %v908 = vshrl.u32 %v907, 7
        %v909 = vsub.s32 %v906, %v908
        %v910 = vrot.slane %v247, %v909
        %v912 = vunpack.c.l.s4 1983009808
        %v913 = vunpack.c.0.s8 %v912
        %v914 = vlaneseq
        %v915 = vshrl.u32 %v914, 7
        %v916 = vsub.s32 %v913, %v915
        %v917 = vrot.slane %v903, %v916
        %v918 = vcombine.high %v910, %v910
        %v919 = vcombine.high %v917, %v917
        %v920 = vcombine.high %v248, %v248
        %v922 = vunpack.c.l.s4 1983009808
        %v923 = vunpack.c.0.s8 %v922
        %v924 = vlaneseq
        %v925 = vshrl.u32 %v924, 7
        %v926 = vsub.s32 %v923, %v925
        %v927 = vrot.slane %v248, %v926
        %v929 = vunpack.c.l.s4 1983009808
        %v930 = vunpack.c.0.s8 %v929
        %v931 = vlaneseq
        %v932 = vshrl.u32 %v931, 7
        %v933 = vsub.s32 %v930, %v932
        %v934 = vrot.slane %v920, %v933
        %v935 = vcombine.high %v927, %v927
        %v936 = vcombine.high %v934, %v934
        %v937 = vcombine.high %v249, %v249
        %v939 = vunpack.c.l.s4 1983009808
        %v940 = vunpack.c.0.s8 %v939
        %v941 = vlaneseq
        %v942 = vshrl.u32 %v941, 7
        %v943 = vsub.s32 %v940, %v942
        %v944 = vrot.slane %v249, %v943
        %v946 = vunpack.c.l.s4 1983009808
        %v947 = vunpack.c.0.s8 %v946
        %v948 = vlaneseq
        %v949 = vshrl.u32 %v948, 7
        %v950 = vsub.s32 %v947, %v949
        %v951 = vrot.slane %v937, %v950
        %v952 = vcombine.high %v944, %v944
        %v953 = vcombine.high %v951, %v951
        %v954 = vcombine.high %v250, %v250
        %v956 = vunpack.c.l.s4 1983009808
        %v957 = vunpack.c.0.s8 %v956
        %v958 = vlaneseq
        %v959 = vshrl.u32 %v958, 7
        %v960 = vsub.s32 %v957, %v959
        %v961 = vrot.slane %v250, %v960
        %v963 = vunpack.c.l.s4 1983009808
        %v964 = vunpack.c.0.s8 %v963
        %v965 = vlaneseq
        %v966 = vshrl.u32 %v965, 7
        %v967 = vsub.s32 %v964, %v966
        %v968 = vrot.slane %v954, %v967
        %v969 = vcombine.high %v961, %v961
        %v970 = vcombine.high %v968, %v968
        %v971 = vcombine.high %v251, %v251
        %v973 = vunpack.c.l.s4 1983009808
        %v974 = vunpack.c.0.s8 %v973
        %v975 = vlaneseq
        %v976 = vshrl.u32 %v975, 7
        %v977 = vsub.s32 %v974, %v976
        %v978 = vrot.slane %v251, %v977
        %v980 = vunpack.c.l.s4 1983009808
        %v981 = vunpack.c.0.s8 %v980
        %v982 = vlaneseq
        %v983 = vshrl.u32 %v982, 7
        %v984 = vsub.s32 %v981, %v983
        %v985 = vrot.slane %v971, %v984
        %v986 = vcombine.high %v978, %v978
        %v987 = vcombine.high %v985, %v985
        %v988 = vcombine.high %v252, %v252
        %v990 = vunpack.c.l.s4 1983009808
        %v991 = vunpack.c.0.s8 %v990
        %v992 = vlaneseq
        %v993 = vshrl.u32 %v992, 7
        %v994 = vsub.s32 %v991, %v993
        %v995 = vrot.slane %v252, %v994
        %v997 = vunpack.c.l.s4 1983009808
        %v998 = vunpack.c.0.s8 %v997
        %v999 = vlaneseq
        %v1000 = vshrl.u32 %v999, 7
        %v1001 = vsub.s32 %v998, %v1000
        %v1002 = vrot.slane %v988, %v1001
        %v1003 = vcombine.high %v995, %v995
        %v1004 = vcombine.high %v1002, %v1002
        %v1005 = vcombine.high %v253, %v253
        %v1007 = vunpack.c.l.s4 1983009808
        %v1008 = vunpack.c.0.s8 %v1007
        %v1009 = vlaneseq
        %v1010 = vshrl.u32 %v1009, 7
        %v1011 = vsub.s32 %v1008, %v1010
        %v1012 = vrot.slane %v253, %v1011
        %v1014 = vunpack.c.l.s4 1983009808
        %v1015 = vunpack.c.0.s8 %v1014
        %v1016 = vlaneseq
        %v1017 = vshrl.u32 %v1016, 7
        %v1018 = vsub.s32 %v1015, %v1017
        %v1019 = vrot.slane %v1005, %v1018
        %v1020 = vcombine.high %v1012, %v1012
        %v1021 = vcombine.high %v1019, %v1019
        %v1022 = vcombine.high %v254, %v254
        %v1024 = vunpack.c.l.s4 1983009808
        %v1025 = vunpack.c.0.s8 %v1024
        %v1026 = vlaneseq
        %v1027 = vshrl.u32 %v1026, 7
        %v1028 = vsub.s32 %v1025, %v1027
        %v1029 = vrot.slane %v254, %v1028
        %v1031 = vunpack.c.l.s4 1983009808
        %v1032 = vunpack.c.0.s8 %v1031
        %v1033 = vlaneseq
        %v1034 = vshrl.u32 %v1033, 7
        %v1035 = vsub.s32 %v1032, %v1034
        %v1036 = vrot.slane %v1022, %v1035
        %v1037 = vcombine.high %v1029, %v1029
        %v1038 = vcombine.high %v1036, %v1036
        %v1039 = vcombine.high %v255, %v255
        %v1041 = vunpack.c.l.s4 1983009808
        %v1042 = vunpack.c.0.s8 %v1041
        %v1043 = vlaneseq
        %v1044 = vshrl.u32 %v1043, 7
        %v1045 = vsub.s32 %v1042, %v1044
        %v1046 = vrot.slane %v255, %v1045
        %v1048 = vunpack.c.l.s4 1983009808
        %v1049 = vunpack.c.0.s8 %v1048
        %v1050 = vlaneseq
        %v1051 = vshrl.u32 %v1050, 7
        %v1052 = vsub.s32 %v1049, %v1051
        %v1053 = vrot.slane %v1039, %v1052
        %v1054 = vcombine.high %v1046, %v1046
        %v1055 = vcombine.high %v1053, %v1053
        %v1056 = vcombine.high %v256, %v256
        %v1058 = vunpack.c.l.s4 1983009808
        %v1059 = vunpack.c.0.s8 %v1058
        %v1060 = vlaneseq
        %v1061 = vshrl.u32 %v1060, 7
        %v1062 = vsub.s32 %v1059, %v1061
        %v1063 = vrot.slane %v256, %v1062
        %v1065 = vunpack.c.l.s4 1983009808
        %v1066 = vunpack.c.0.s8 %v1065
        %v1067 = vlaneseq
        %v1068 = vshrl.u32 %v1067, 7
        %v1069 = vsub.s32 %v1066, %v1068
        %v1070 = vrot.slane %v1056, %v1069
        %v1071 = vcombine.high %v1063, %v1063
        %v1072 = vcombine.high %v1070, %v1070
        %v1073 = vcombine.high %v257, %v257
        %v1075 = vunpack.c.l.s4 1983009808
        %v1076 = vunpack.c.0.s8 %v1075
        %v1077 = vlaneseq
        %v1078 = vshrl.u32 %v1077, 7
        %v1079 = vsub.s32 %v1076, %v1078
        %v1080 = vrot.slane %v257, %v1079
        %v1082 = vunpack.c.l.s4 1983009808
        %v1083 = vunpack.c.0.s8 %v1082
        %v1084 = vlaneseq
        %v1085 = vshrl.u32 %v1084, 7
        %v1086 = vsub.s32 %v1083, %v1085
        %v1087 = vrot.slane %v1073, %v1086
        %v1088 = vcombine.high %v1080, %v1080
        %v1089 = vcombine.high %v1087, %v1087
        %v1090 = vcombine.high %v258, %v258
        %v1092 = vunpack.c.l.s4 1983009808
        %v1093 = vunpack.c.0.s8 %v1092
        %v1094 = vlaneseq
        %v1095 = vshrl.u32 %v1094, 7
        %v1096 = vsub.s32 %v1093, %v1095
        %v1097 = vrot.slane %v258, %v1096
        %v1099 = vunpack.c.l.s4 1983009808
        %v1100 = vunpack.c.0.s8 %v1099
        %v1101 = vlaneseq
        %v1102 = vshrl.u32 %v1101, 7
        %v1103 = vsub.s32 %v1100, %v1102
        %v1104 = vrot.slane %v1090, %v1103
        %v1105 = vcombine.high %v1097, %v1097
        %v1106 = vcombine.high %v1104, %v1104
        %v1107 = vcombine.high %v259, %v259
        %v1109 = vunpack.c.l.s4 1983009808
        %v1110 = vunpack.c.0.s8 %v1109
        %v1111 = vlaneseq
        %v1112 = vshrl.u32 %v1111, 7
        %v1113 = vsub.s32 %v1110, %v1112
        %v1114 = vrot.slane %v259, %v1113
        %v1116 = vunpack.c.l.s4 1983009808
        %v1117 = vunpack.c.0.s8 %v1116
        %v1118 = vlaneseq
        %v1119 = vshrl.u32 %v1118, 7
        %v1120 = vsub.s32 %v1117, %v1119
        %v1121 = vrot.slane %v1107, %v1120
        %v1122 = vcombine.high %v1114, %v1114
        %v1123 = vcombine.high %v1121, %v1121
        %v1124 = vcombine.high %v260, %v260
        %v1126 = vunpack.c.l.s4 1983009808
        %v1127 = vunpack.c.0.s8 %v1126
        %v1128 = vlaneseq
        %v1129 = vshrl.u32 %v1128, 7
        %v1130 = vsub.s32 %v1127, %v1129
        %v1131 = vrot.slane %v260, %v1130
        %v1133 = vunpack.c.l.s4 1983009808
        %v1134 = vunpack.c.0.s8 %v1133
        %v1135 = vlaneseq
        %v1136 = vshrl.u32 %v1135, 7
        %v1137 = vsub.s32 %v1134, %v1136
        %v1138 = vrot.slane %v1124, %v1137
        %v1139 = vcombine.high %v1131, %v1131
        %v1140 = vcombine.high %v1138, %v1138
        %v1141 = vcombine.high %v261, %v261
        %v1143 = vunpack.c.l.s4 1983009808
        %v1144 = vunpack.c.0.s8 %v1143
        %v1145 = vlaneseq
        %v1146 = vshrl.u32 %v1145, 7
        %v1147 = vsub.s32 %v1144, %v1146
        %v1148 = vrot.slane %v261, %v1147
        %v1150 = vunpack.c.l.s4 1983009808
        %v1151 = vunpack.c.0.s8 %v1150
        %v1152 = vlaneseq
        %v1153 = vshrl.u32 %v1152, 7
        %v1154 = vsub.s32 %v1151, %v1153
        %v1155 = vrot.slane %v1141, %v1154
        %v1156 = vcombine.high %v1148, %v1148
        %v1157 = vcombine.high %v1155, %v1155
        %v1158 = vcombine.high %v262, %v262
        %v1160 = vunpack.c.l.s4 1983009808
        %v1161 = vunpack.c.0.s8 %v1160
        %v1162 = vlaneseq
        %v1163 = vshrl.u32 %v1162, 7
        %v1164 = vsub.s32 %v1161, %v1163
        %v1165 = vrot.slane %v262, %v1164
        %v1167 = vunpack.c.l.s4 1983009808
        %v1168 = vunpack.c.0.s8 %v1167
        %v1169 = vlaneseq
        %v1170 = vshrl.u32 %v1169, 7
        %v1171 = vsub.s32 %v1168, %v1170
        %v1172 = vrot.slane %v1158, %v1171
        %v1173 = vcombine.high %v1165, %v1165
        %v1174 = vcombine.high %v1172, %v1172
        %v1175 = vcombine.high %v263, %v263
        %v1177 = vunpack.c.l.s4 1983009808
        %v1178 = vunpack.c.0.s8 %v1177
        %v1179 = vlaneseq
        %v1180 = vshrl.u32 %v1179, 7
        %v1181 = vsub.s32 %v1178, %v1180
        %v1182 = vrot.slane %v263, %v1181
        %v1184 = vunpack.c.l.s4 1983009808
        %v1185 = vunpack.c.0.s8 %v1184
        %v1186 = vlaneseq
        %v1187 = vshrl.u32 %v1186, 7
        %v1188 = vsub.s32 %v1185, %v1187
        %v1189 = vrot.slane %v1175, %v1188
        %v1190 = vcombine.high %v1182, %v1182
        %v1191 = vcombine.high %v1189, %v1189
        %v1192 = vcombine.high %v264, %v264
        %v1194 = vunpack.c.l.s4 1983009808
        %v1195 = vunpack.c.0.s8 %v1194
        %v1196 = vlaneseq
        %v1197 = vshrl.u32 %v1196, 7
        %v1198 = vsub.s32 %v1195, %v1197
        %v1199 = vrot.slane %v264, %v1198
        %v1201 = vunpack.c.l.s4 1983009808
        %v1202 = vunpack.c.0.s8 %v1201
        %v1203 = vlaneseq
        %v1204 = vshrl.u32 %v1203, 7
        %v1205 = vsub.s32 %v1202, %v1204
        %v1206 = vrot.slane %v1192, %v1205
        %v1207 = vcombine.high %v1199, %v1199
        %v1208 = vcombine.high %v1206, %v1206
        %v1209 = vcombine.high %v265, %v265
        %v1211 = vunpack.c.l.s4 1983009808
        %v1212 = vunpack.c.0.s8 %v1211
        %v1213 = vlaneseq
        %v1214 = vshrl.u32 %v1213, 7
        %v1215 = vsub.s32 %v1212, %v1214
        %v1216 = vrot.slane %v265, %v1215
        %v1218 = vunpack.c.l.s4 1983009808
        %v1219 = vunpack.c.0.s8 %v1218
        %v1220 = vlaneseq
        %v1221 = vshrl.u32 %v1220, 7
        %v1222 = vsub.s32 %v1219, %v1221
        %v1223 = vrot.slane %v1209, %v1222
        %v1224 = vcombine.high %v1216, %v1216
        %v1225 = vcombine.high %v1223, %v1223
        %v1226 = vcombine.high %v266, %v266
        %v1228 = vunpack.c.l.s4 1983009808
        %v1229 = vunpack.c.0.s8 %v1228
        %v1230 = vlaneseq
        %v1231 = vshrl.u32 %v1230, 7
        %v1232 = vsub.s32 %v1229, %v1231
        %v1233 = vrot.slane %v266, %v1232
        %v1235 = vunpack.c.l.s4 1983009808
        %v1236 = vunpack.c.0.s8 %v1235
        %v1237 = vlaneseq
        %v1238 = vshrl.u32 %v1237, 7
        %v1239 = vsub.s32 %v1236, %v1238
        %v1240 = vrot.slane %v1226, %v1239
        %v1241 = vcombine.high %v1233, %v1233
        %v1242 = vcombine.high %v1240, %v1240
        %v1243 = vcombine.high %v267, %v267
        %v1245 = vunpack.c.l.s4 1983009808
        %v1246 = vunpack.c.0.s8 %v1245
        %v1247 = vlaneseq
        %v1248 = vshrl.u32 %v1247, 7
        %v1249 = vsub.s32 %v1246, %v1248
        %v1250 = vrot.slane %v267, %v1249
        %v1252 = vunpack.c.l.s4 1983009808
        %v1253 = vunpack.c.0.s8 %v1252
        %v1254 = vlaneseq
        %v1255 = vshrl.u32 %v1254, 7
        %v1256 = vsub.s32 %v1253, %v1255
        %v1257 = vrot.slane %v1243, %v1256
        %v1258 = vcombine.high %v1250, %v1250
        %v1259 = vcombine.high %v1257, %v1257
        %v1260 = vcombine.high %v268, %v268
        %v1262 = vunpack.c.l.s4 1983009808
        %v1263 = vunpack.c.0.s8 %v1262
        %v1264 = vlaneseq
        %v1265 = vshrl.u32 %v1264, 7
        %v1266 = vsub.s32 %v1263, %v1265
        %v1267 = vrot.slane %v268, %v1266
        %v1269 = vunpack.c.l.s4 1983009808
        %v1270 = vunpack.c.0.s8 %v1269
        %v1271 = vlaneseq
        %v1272 = vshrl.u32 %v1271, 7
        %v1273 = vsub.s32 %v1270, %v1272
        %v1274 = vrot.slane %v1260, %v1273
        %v1275 = vcombine.high %v1267, %v1267
        %v1276 = vcombine.high %v1274, %v1274
        %v1277 = vcombine.high %v269, %v269
        %v1279 = vunpack.c.l.s4 1983009808
        %v1280 = vunpack.c.0.s8 %v1279
        %v1281 = vlaneseq
        %v1282 = vshrl.u32 %v1281, 7
        %v1283 = vsub.s32 %v1280, %v1282
        %v1284 = vrot.slane %v269, %v1283
        %v1286 = vunpack.c.l.s4 1983009808
        %v1287 = vunpack.c.0.s8 %v1286
        %v1288 = vlaneseq
        %v1289 = vshrl.u32 %v1288, 7
        %v1290 = vsub.s32 %v1287, %v1289
        %v1291 = vrot.slane %v1277, %v1290
        %v1292 = vcombine.high %v1284, %v1284
        %v1293 = vcombine.high %v1291, %v1291
        %v1294 = vcombine.high %v270, %v270
        %v1296 = vunpack.c.l.s4 1983009808
        %v1297 = vunpack.c.0.s8 %v1296
        %v1298 = vlaneseq
        %v1299 = vshrl.u32 %v1298, 7
        %v1300 = vsub.s32 %v1297, %v1299
        %v1301 = vrot.slane %v270, %v1300
        %v1303 = vunpack.c.l.s4 1983009808
        %v1304 = vunpack.c.0.s8 %v1303
        %v1305 = vlaneseq
        %v1306 = vshrl.u32 %v1305, 7
        %v1307 = vsub.s32 %v1304, %v1306
        %v1308 = vrot.slane %v1294, %v1307
        %v1309 = vcombine.high %v1301, %v1301
        %v1310 = vcombine.high %v1308, %v1308
        %v1311 = vcombine.high %v271, %v271
        %v1313 = vunpack.c.l.s4 1983009808
        %v1314 = vunpack.c.0.s8 %v1313
        %v1315 = vlaneseq
        %v1316 = vshrl.u32 %v1315, 7
        %v1317 = vsub.s32 %v1314, %v1316
        %v1318 = vrot.slane %v271, %v1317
        %v1320 = vunpack.c.l.s4 1983009808
        %v1321 = vunpack.c.0.s8 %v1320
        %v1322 = vlaneseq
        %v1323 = vshrl.u32 %v1322, 7
        %v1324 = vsub.s32 %v1321, %v1323
        %v1325 = vrot.slane %v1311, %v1324
        %v1326 = vcombine.high %v1318, %v1318
        %v1327 = vcombine.high %v1325, %v1325
        %v1328 = vcombine.high %v272, %v272
        %v1330 = vunpack.c.l.s4 1983009808
        %v1331 = vunpack.c.0.s8 %v1330
        %v1332 = vlaneseq
        %v1333 = vshrl.u32 %v1332, 7
        %v1334 = vsub.s32 %v1331, %v1333
        %v1335 = vrot.slane %v272, %v1334
        %v1337 = vunpack.c.l.s4 1983009808
        %v1338 = vunpack.c.0.s8 %v1337
        %v1339 = vlaneseq
        %v1340 = vshrl.u32 %v1339, 7
        %v1341 = vsub.s32 %v1338, %v1340
        %v1342 = vrot.slane %v1328, %v1341
        %v1343 = vcombine.high %v1335, %v1335
        %v1344 = vcombine.high %v1342, %v1342
        %v1345 = vcombine.high %v273, %v273
        %v1347 = vunpack.c.l.s4 1983009808
        %v1348 = vunpack.c.0.s8 %v1347
        %v1349 = vlaneseq
        %v1350 = vshrl.u32 %v1349, 7
        %v1351 = vsub.s32 %v1348, %v1350
        %v1352 = vrot.slane %v273, %v1351
        %v1354 = vunpack.c.l.s4 1983009808
        %v1355 = vunpack.c.0.s8 %v1354
        %v1356 = vlaneseq
        %v1357 = vshrl.u32 %v1356, 7
        %v1358 = vsub.s32 %v1355, %v1357
        %v1359 = vrot.slane %v1345, %v1358
        %v1360 = vcombine.high %v1352, %v1352
        %v1361 = vcombine.high %v1359, %v1359
        %v1362 = vcombine.high %v274, %v274
        %v1364 = vunpack.c.l.s4 1983009808
        %v1365 = vunpack.c.0.s8 %v1364
        %v1366 = vlaneseq
        %v1367 = vshrl.u32 %v1366, 7
        %v1368 = vsub.s32 %v1365, %v1367
        %v1369 = vrot.slane %v274, %v1368
        %v1371 = vunpack.c.l.s4 1983009808
        %v1372 = vunpack.c.0.s8 %v1371
        %v1373 = vlaneseq
        %v1374 = vshrl.u32 %v1373, 7
        %v1375 = vsub.s32 %v1372, %v1374
        %v1376 = vrot.slane %v1362, %v1375
        %v1377 = vcombine.high %v1369, %v1369
        %v1378 = vcombine.high %v1376, %v1376
        %v1379 = vcombine.high %v275, %v275
        %v1381 = vunpack.c.l.s4 1983009808
        %v1382 = vunpack.c.0.s8 %v1381
        %v1383 = vlaneseq
        %v1384 = vshrl.u32 %v1383, 7
        %v1385 = vsub.s32 %v1382, %v1384
        %v1386 = vrot.slane %v275, %v1385
        %v1388 = vunpack.c.l.s4 1983009808
        %v1389 = vunpack.c.0.s8 %v1388
        %v1390 = vlaneseq
        %v1391 = vshrl.u32 %v1390, 7
        %v1392 = vsub.s32 %v1389, %v1391
        %v1393 = vrot.slane %v1379, %v1392
        %v1394 = vcombine.high %v1386, %v1386
        %v1395 = vcombine.high %v1393, %v1393
        %v1396 = vcombine.high %v276, %v276
        %v1398 = vunpack.c.l.s4 1983009808
        %v1399 = vunpack.c.0.s8 %v1398
        %v1400 = vlaneseq
        %v1401 = vshrl.u32 %v1400, 7
        %v1402 = vsub.s32 %v1399, %v1401
        %v1403 = vrot.slane %v276, %v1402
        %v1405 = vunpack.c.l.s4 1983009808
        %v1406 = vunpack.c.0.s8 %v1405
        %v1407 = vlaneseq
        %v1408 = vshrl.u32 %v1407, 7
        %v1409 = vsub.s32 %v1406, %v1408
        %v1410 = vrot.slane %v1396, %v1409
        %v1411 = vcombine.high %v1403, %v1403
        %v1412 = vcombine.high %v1410, %v1410
        %v1413 = vcombine.high %v277, %v277
        %v1415 = vunpack.c.l.s4 1983009808
        %v1416 = vunpack.c.0.s8 %v1415
        %v1417 = vlaneseq
        %v1418 = vshrl.u32 %v1417, 7
        %v1419 = vsub.s32 %v1416, %v1418
        %v1420 = vrot.slane %v277, %v1419
        %v1422 = vunpack.c.l.s4 1983009808
        %v1423 = vunpack.c.0.s8 %v1422
        %v1424 = vlaneseq
        %v1425 = vshrl.u32 %v1424, 7
        %v1426 = vsub.s32 %v1423, %v1425
        %v1427 = vrot.slane %v1413, %v1426
        %v1428 = vcombine.high %v1420, %v1420
        %v1429 = vcombine.high %v1427, %v1427
        %v1430 = vcombine.high %v278, %v278
        %v1432 = vunpack.c.l.s4 1983009808
        %v1433 = vunpack.c.0.s8 %v1432
        %v1434 = vlaneseq
        %v1435 = vshrl.u32 %v1434, 7
        %v1436 = vsub.s32 %v1433, %v1435
        %v1437 = vrot.slane %v278, %v1436
        %v1439 = vunpack.c.l.s4 1983009808
        %v1440 = vunpack.c.0.s8 %v1439
        %v1441 = vlaneseq
        %v1442 = vshrl.u32 %v1441, 7
        %v1443 = vsub.s32 %v1440, %v1442
        %v1444 = vrot.slane %v1430, %v1443
        %v1445 = vcombine.high %v1437, %v1437
        %v1446 = vcombine.high %v1444, %v1444
        %v1447 = vcombine.high %v279, %v279
        %v1449 = vunpack.c.l.s4 1983009808
        %v1450 = vunpack.c.0.s8 %v1449
        %v1451 = vlaneseq
        %v1452 = vshrl.u32 %v1451, 7
        %v1453 = vsub.s32 %v1450, %v1452
        %v1454 = vrot.slane %v279, %v1453
        %v1456 = vunpack.c.l.s4 1983009808
        %v1457 = vunpack.c.0.s8 %v1456
        %v1458 = vlaneseq
        %v1459 = vshrl.u32 %v1458, 7
        %v1460 = vsub.s32 %v1457, %v1459
        %v1461 = vrot.slane %v1447, %v1460
        %v1462 = vcombine.high %v1454, %v1454
        %v1463 = vcombine.high %v1461, %v1461
        %v1464 = vcombine.high %v280, %v280
        %v1466 = vunpack.c.l.s4 1983009808
        %v1467 = vunpack.c.0.s8 %v1466
        %v1468 = vlaneseq
        %v1469 = vshrl.u32 %v1468, 7
        %v1470 = vsub.s32 %v1467, %v1469
        %v1471 = vrot.slane %v280, %v1470
        %v1473 = vunpack.c.l.s4 1983009808
        %v1474 = vunpack.c.0.s8 %v1473
        %v1475 = vlaneseq
        %v1476 = vshrl.u32 %v1475, 7
        %v1477 = vsub.s32 %v1474, %v1476
        %v1478 = vrot.slane %v1464, %v1477
        %v1479 = vcombine.high %v1471, %v1471
        %v1480 = vcombine.high %v1478, %v1478
        %v1481 = vcombine.high %v281, %v281
        %v1483 = vunpack.c.l.s4 1983009808
        %v1484 = vunpack.c.0.s8 %v1483
        %v1485 = vlaneseq
        %v1486 = vshrl.u32 %v1485, 7
        %v1487 = vsub.s32 %v1484, %v1486
        %v1488 = vrot.slane %v281, %v1487
        %v1490 = vunpack.c.l.s4 1983009808
        %v1491 = vunpack.c.0.s8 %v1490
        %v1492 = vlaneseq
        %v1493 = vshrl.u32 %v1492, 7
        %v1494 = vsub.s32 %v1491, %v1493
        %v1495 = vrot.slane %v1481, %v1494
        %v1496 = vcombine.high %v1488, %v1488
        %v1497 = vcombine.high %v1495, %v1495
        %v1498 = vcombine.high %v282, %v282
        %v1500 = vunpack.c.l.s4 1983009808
        %v1501 = vunpack.c.0.s8 %v1500
        %v1502 = vlaneseq
        %v1503 = vshrl.u32 %v1502, 7
        %v1504 = vsub.s32 %v1501, %v1503
        %v1505 = vrot.slane %v282, %v1504
        %v1507 = vunpack.c.l.s4 1983009808
        %v1508 = vunpack.c.0.s8 %v1507
        %v1509 = vlaneseq
        %v1510 = vshrl.u32 %v1509, 7
        %v1511 = vsub.s32 %v1508, %v1510
        %v1512 = vrot.slane %v1498, %v1511
        %v1513 = vcombine.high %v1505, %v1505
        %v1514 = vcombine.high %v1512, %v1512
        %v1515 = vcombine.high %v283, %v283
        %v1517 = vunpack.c.l.s4 1983009808
        %v1518 = vunpack.c.0.s8 %v1517
        %v1519 = vlaneseq
        %v1520 = vshrl.u32 %v1519, 7
        %v1521 = vsub.s32 %v1518, %v1520
        %v1522 = vrot.slane %v283, %v1521
        %v1524 = vunpack.c.l.s4 1983009808
        %v1525 = vunpack.c.0.s8 %v1524
        %v1526 = vlaneseq
        %v1527 = vshrl.u32 %v1526, 7
        %v1528 = vsub.s32 %v1525, %v1527
        %v1529 = vrot.slane %v1515, %v1528
        %v1530 = vcombine.high %v1522, %v1522
        %v1531 = vcombine.high %v1529, %v1529
        %1724 = vmatprep.subr.mxu0 %v285
        %1725 = vmatpush1.xpose.msra.mxu0 %v284
        %1726 = vmatprep.subr.mxu0 %v477
        %1727 = vmatpush1.xpose.msra.mxu0 %v476
        %1728 = vmatprep.subr.mxu0 0.0
        %1729 = vmatpush1.xpose.msra.mxu0 0.0
        %1730 = vmatprep.subr.mxu0 0.0
        %1731 = vmatpush1.xpose.msra.mxu0 0.0
        %1732 = vmatprep.subr.mxu0 0.0
        %1733 = vmatpush1.xpose.msra.mxu0 0.0
        %1734 = vmatprep.subr.mxu0 0.0
        %1735 = vmatpush1.xpose.msra.mxu0 0.0
        %1736 = vmatprep.subr.mxu0 0.0
        %1737 = vmatpush1.xpose.msra.mxu0 0.0
        %1738 = vmatprep.subr.mxu0 0.0
        %1739 = vmatpush1.xpose.msra.mxu0 0.0
        %1740 = vmatprep.subr.mxu0 0.0
        %1741 = vmatpush1.xpose.msra.mxu0 0.0
        %1742 = vmatprep.subr.mxu0 0.0
        %1743 = vmatpush1.xpose.msra.mxu0 0.0
        %1744 = vmatprep.subr.mxu0 0.0
        %1745 = vmatpush1.xpose.msra.mxu0 0.0
        %1746 = vmatprep.subr.mxu0 0.0
        %1747 = vmatpush1.xpose.msra.mxu0 0.0
        %1748 = vmatprep.subr.mxu0 0.0
        %1749 = vmatpush1.xpose.msra.mxu0 0.0
        %1750 = vmatprep.subr.mxu0 0.0
        %1751 = vmatpush1.xpose.msra.mxu0 0.0
        %1752 = vmatprep.subr.mxu0 0.0
        %1753 = vmatpush1.xpose.msra.mxu0 0.0
        %1754 = vmatprep.subr.mxu0 0.0
        %1755 = vmatpush1.xpose.msra.mxu0 0.0
        %1756 = vmatprep.subr.mxu0 0.0
        %1757 = vmatpush1.xpose.msra.mxu0 0.0
        %1758 = vmatprep.subr.mxu0 0.0
        %1759 = vmatpush1.xpose.msra.mxu0 0.0
        %1760 = vmatprep.subr.mxu0 0.0
        %1761 = vmatpush1.xpose.msra.mxu0 0.0
        %1762 = vmatprep.subr.mxu0 0.0
        %1763 = vmatpush1.xpose.msra.mxu0 0.0
        %1764 = vmatprep.subr.mxu0 0.0
        %1765 = vmatpush1.xpose.msra.mxu0 0.0
        %1766 = vmatprep.subr.mxu0 0.0
        %1767 = vmatpush1.xpose.msra.mxu0 0.0
        %1768 = vmatprep.subr.mxu0 0.0
        %1769 = vmatpush1.xpose.msra.mxu0 0.0
        %1770 = vmatprep.subr.mxu0 0.0
        %1771 = vmatpush1.xpose.msra.mxu0 0.0
        %1772 = vmatprep.subr.mxu0 0.0
        %1773 = vmatpush1.xpose.msra.mxu0 0.0
        %1774 = vmatprep.subr.mxu0 0.0
        %1775 = vmatpush1.xpose.msra.mxu0 0.0
        %1776 = vmatprep.subr.mxu0 0.0
        %1777 = vmatpush1.xpose.msra.mxu0 0.0
        %1778 = vmatprep.subr.mxu0 0.0
        %1779 = vmatpush1.xpose.msra.mxu0 0.0
        %1780 = vmatprep.subr.mxu0 0.0
        %1781 = vmatpush1.xpose.msra.mxu0 0.0
        %1782 = vmatprep.subr.mxu0 0.0
        %1783 = vmatpush1.xpose.msra.mxu0 0.0
        %1784 = vmatprep.subr.mxu0 0.0
        %1785 = vmatpush1.xpose.msra.mxu0 0.0
        %1786 = vmatprep.subr.mxu0 0.0
        %1787 = vmatpush1.xpose.msra.mxu0 0.0
        %1788 = vmatprep.mubr.f32.mxu0 %v731
        %1789 = vmatmul.mubr.f32.gmra.mrb[0].mxu0 %v723
        %v1790 = vpop.f32.mrb[0].mxu0
        %v1791 = vadd.f32 0.0, %v1790
        %v1792 = vpop.f32.mrb[0].mxu0
        %1793 = vdwg.mxu0
        %1794 = vmatprep.subr.mxu0 %v287
        %1795 = vmatpush1.xpose.msra.mxu0 %v286
        %1796 = vmatprep.subr.mxu0 %v479
        %1797 = vmatpush1.xpose.msra.mxu0 %v478
        %1798 = vmatprep.subr.mxu0 0.0
        %1799 = vmatpush1.xpose.msra.mxu0 0.0
        %1800 = vmatprep.subr.mxu0 0.0
        %1801 = vmatpush1.xpose.msra.mxu0 0.0
        %1802 = vmatprep.subr.mxu0 0.0
        %1803 = vmatpush1.xpose.msra.mxu0 0.0
        %1804 = vmatprep.subr.mxu0 0.0
        %1805 = vmatpush1.xpose.msra.mxu0 0.0
        %1806 = vmatprep.subr.mxu0 0.0
        %1807 = vmatpush1.xpose.msra.mxu0 0.0
        %1808 = vmatprep.subr.mxu0 0.0
        %1809 = vmatpush1.xpose.msra.mxu0 0.0
        %1810 = vmatprep.subr.mxu0 0.0
        %1811 = vmatpush1.xpose.msra.mxu0 0.0
        %1812 = vmatprep.subr.mxu0 0.0
        %1813 = vmatpush1.xpose.msra.mxu0 0.0
        %1814 = vmatprep.subr.mxu0 0.0
        %1815 = vmatpush1.xpose.msra.mxu0 0.0
        %1816 = vmatprep.subr.mxu0 0.0
        %1817 = vmatpush1.xpose.msra.mxu0 0.0
        %1818 = vmatprep.subr.mxu0 0.0
        %1819 = vmatpush1.xpose.msra.mxu0 0.0
        %1820 = vmatprep.subr.mxu0 0.0
        %1821 = vmatpush1.xpose.msra.mxu0 0.0
        %1822 = vmatprep.subr.mxu0 0.0
        %1823 = vmatpush1.xpose.msra.mxu0 0.0
        %1824 = vmatprep.subr.mxu0 0.0
        %1825 = vmatpush1.xpose.msra.mxu0 0.0
        %1826 = vmatprep.subr.mxu0 0.0
        %1827 = vmatpush1.xpose.msra.mxu0 0.0
        %1828 = vmatprep.subr.mxu0 0.0
        %1829 = vmatpush1.xpose.msra.mxu0 0.0
        %1830 = vmatprep.subr.mxu0 0.0
        %1831 = vmatpush1.xpose.msra.mxu0 0.0
        %1832 = vmatprep.subr.mxu0 0.0
        %1833 = vmatpush1.xpose.msra.mxu0 0.0
        %1834 = vmatprep.subr.mxu0 0.0
        %1835 = vmatpush1.xpose.msra.mxu0 0.0
        %1836 = vmatprep.subr.mxu0 0.0
        %1837 = vmatpush1.xpose.msra.mxu0 0.0
        %1838 = vmatprep.subr.mxu0 0.0
        %1839 = vmatpush1.xpose.msra.mxu0 0.0
        %1840 = vmatprep.subr.mxu0 0.0
        %1841 = vmatpush1.xpose.msra.mxu0 0.0
        %1842 = vmatprep.subr.mxu0 0.0
        %1843 = vmatpush1.xpose.msra.mxu0 0.0
        %1844 = vmatprep.subr.mxu0 0.0
        %1845 = vmatpush1.xpose.msra.mxu0 0.0
        %1846 = vmatprep.subr.mxu0 0.0
        %1847 = vmatpush1.xpose.msra.mxu0 0.0
        %1848 = vmatprep.subr.mxu0 0.0
        %1849 = vmatpush1.xpose.msra.mxu0 0.0
        %1850 = vmatprep.subr.mxu0 0.0
        %1851 = vmatpush1.xpose.msra.mxu0 0.0
        %1852 = vmatprep.subr.mxu0 0.0
        %1853 = vmatpush1.xpose.msra.mxu0 0.0
        %1854 = vmatprep.subr.mxu0 0.0
        %1855 = vmatpush1.xpose.msra.mxu0 0.0
        %1856 = vmatprep.subr.mxu0 0.0
        %1857 = vmatpush1.xpose.msra.mxu0 0.0
        %1858 = vmatprep.mubr.f32.mxu0 %v732
        %1859 = vmatmul.mubr.f32.gmra.mrb[0].mxu0 %v730
        %v1860 = vpop.f32.mrb[0].mxu0
        %v1861 = vadd.f32 %v1791, %v1860
        %v1862 = vpop.f32.mrb[0].mxu0
        %1863 = vdwg.mxu0
        %1864 = vmatprep.subr.mxu0 %v289
        %1865 = vmatpush1.xpose.msra.mxu0 %v288
        %1866 = vmatprep.subr.mxu0 %v481
        %1867 = vmatpush1.xpose.msra.mxu0 %v480
        %1868 = vmatprep.subr.mxu0 0.0
        %1869 = vmatpush1.xpose.msra.mxu0 0.0
        %1870 = vmatprep.subr.mxu0 0.0
        %1871 = vmatpush1.xpose.msra.mxu0 0.0
        %1872 = vmatprep.subr.mxu0 0.0
        %1873 = vmatpush1.xpose.msra.mxu0 0.0
        %1874 = vmatprep.subr.mxu0 0.0
        %1875 = vmatpush1.xpose.msra.mxu0 0.0
        %1876 = vmatprep.subr.mxu0 0.0
        %1877 = vmatpush1.xpose.msra.mxu0 0.0
        %1878 = vmatprep.subr.mxu0 0.0
        %1879 = vmatpush1.xpose.msra.mxu0 0.0
        %1880 = vmatprep.subr.mxu0 0.0
        %1881 = vmatpush1.xpose.msra.mxu0 0.0
        %1882 = vmatprep.subr.mxu0 0.0
        %1883 = vmatpush1.xpose.msra.mxu0 0.0
        %1884 = vmatprep.subr.mxu0 0.0
        %1885 = vmatpush1.xpose.msra.mxu0 0.0
        %1886 = vmatprep.subr.mxu0 0.0
        %1887 = vmatpush1.xpose.msra.mxu0 0.0
        %1888 = vmatprep.subr.mxu0 0.0
        %1889 = vmatpush1.xpose.msra.mxu0 0.0
        %1890 = vmatprep.subr.mxu0 0.0
        %1891 = vmatpush1.xpose.msra.mxu0 0.0
        %1892 = vmatprep.subr.mxu0 0.0
        %1893 = vmatpush1.xpose.msra.mxu0 0.0
        %1894 = vmatprep.subr.mxu0 0.0
        %1895 = vmatpush1.xpose.msra.mxu0 0.0
        %1896 = vmatprep.subr.mxu0 0.0
        %1897 = vmatpush1.xpose.msra.mxu0 0.0
        %1898 = vmatprep.subr.mxu0 0.0
        %1899 = vmatpush1.xpose.msra.mxu0 0.0
        %1900 = vmatprep.subr.mxu0 0.0
        %1901 = vmatpush1.xpose.msra.mxu0 0.0
        %1902 = vmatprep.subr.mxu0 0.0
        %1903 = vmatpush1.xpose.msra.mxu0 0.0
        %1904 = vmatprep.subr.mxu0 0.0
        %1905 = vmatpush1.xpose.msra.mxu0 0.0
        %1906 = vmatprep.subr.mxu0 0.0
        %1907 = vmatpush1.xpose.msra.mxu0 0.0
        %1908 = vmatprep.subr.mxu0 0.0
        %1909 = vmatpush1.xpose.msra.mxu0 0.0
        %1910 = vmatprep.subr.mxu0 0.0
        %1911 = vmatpush1.xpose.msra.mxu0 0.0
        %1912 = vmatprep.subr.mxu0 0.0
        %1913 = vmatpush1.xpose.msra.mxu0 0.0
        %1914 = vmatprep.subr.mxu0 0.0
        %1915 = vmatpush1.xpose.msra.mxu0 0.0
        %1916 = vmatprep.subr.mxu0 0.0
        %1917 = vmatpush1.xpose.msra.mxu0 0.0
        %1918 = vmatprep.subr.mxu0 0.0
        %1919 = vmatpush1.xpose.msra.mxu0 0.0
        %1920 = vmatprep.subr.mxu0 0.0
        %1921 = vmatpush1.xpose.msra.mxu0 0.0
        %1922 = vmatprep.subr.mxu0 0.0
        %1923 = vmatpush1.xpose.msra.mxu0 0.0
        %1924 = vmatprep.subr.mxu0 0.0
        %1925 = vmatpush1.xpose.msra.mxu0 0.0
        %1926 = vmatprep.subr.mxu0 0.0
        %1927 = vmatpush1.xpose.msra.mxu0 0.0
        %1928 = vmatprep.mubr.f32.mxu0 %v748
        %1929 = vmatmul.mubr.f32.gmra.mrb[0].mxu0 %v740
        %v1930 = vpop.f32.mrb[0].mxu0
        %v1931 = vadd.f32 %v1861, %v1930
        %v1932 = vpop.f32.mrb[0].mxu0
        %1933 = vdwg.mxu0
        %1934 = vmatprep.subr.mxu0 %v291
        %1935 = vmatpush1.xpose.msra.mxu0 %v290
        %1936 = vmatprep.subr.mxu0 %v483
        %1937 = vmatpush1.xpose.msra.mxu0 %v482
        %1938 = vmatprep.subr.mxu0 0.0
        %1939 = vmatpush1.xpose.msra.mxu0 0.0
        %1940 = vmatprep.subr.mxu0 0.0
        %1941 = vmatpush1.xpose.msra.mxu0 0.0
        %1942 = vmatprep.subr.mxu0 0.0
        %1943 = vmatpush1.xpose.msra.mxu0 0.0
        %1944 = vmatprep.subr.mxu0 0.0
        %1945 = vmatpush1.xpose.msra.mxu0 0.0
        %1946 = vmatprep.subr.mxu0 0.0
        %1947 = vmatpush1.xpose.msra.mxu0 0.0
        %1948 = vmatprep.subr.mxu0 0.0
        %1949 = vmatpush1.xpose.msra.mxu0 0.0
        %1950 = vmatprep.subr.mxu0 0.0
        %1951 = vmatpush1.xpose.msra.mxu0 0.0
        %1952 = vmatprep.subr.mxu0 0.0
        %1953 = vmatpush1.xpose.msra.mxu0 0.0
        %1954 = vmatprep.subr.mxu0 0.0
        %1955 = vmatpush1.xpose.msra.mxu0 0.0
        %1956 = vmatprep.subr.mxu0 0.0
        %1957 = vmatpush1.xpose.msra.mxu0 0.0
        %1958 = vmatprep.subr.mxu0 0.0
        %1959 = vmatpush1.xpose.msra.mxu0 0.0
        %1960 = vmatprep.subr.mxu0 0.0
        %1961 = vmatpush1.xpose.msra.mxu0 0.0
        %1962 = vmatprep.subr.mxu0 0.0
        %1963 = vmatpush1.xpose.msra.mxu0 0.0
        %1964 = vmatprep.subr.mxu0 0.0
        %1965 = vmatpush1.xpose.msra.mxu0 0.0
        %1966 = vmatprep.subr.mxu0 0.0
        %1967 = vmatpush1.xpose.msra.mxu0 0.0
        %1968 = vmatprep.subr.mxu0 0.0
        %1969 = vmatpush1.xpose.msra.mxu0 0.0
        %1970 = vmatprep.subr.mxu0 0.0
        %1971 = vmatpush1.xpose.msra.mxu0 0.0
        %1972 = vmatprep.subr.mxu0 0.0
        %1973 = vmatpush1.xpose.msra.mxu0 0.0
        %1974 = vmatprep.subr.mxu0 0.0
        %1975 = vmatpush1.xpose.msra.mxu0 0.0
        %1976 = vmatprep.subr.mxu0 0.0
        %1977 = vmatpush1.xpose.msra.mxu0 0.0
        %1978 = vmatprep.subr.mxu0 0.0
        %1979 = vmatpush1.xpose.msra.mxu0 0.0
        %1980 = vmatprep.subr.mxu0 0.0
        %1981 = vmatpush1.xpose.msra.mxu0 0.0
        %1982 = vmatprep.subr.mxu0 0.0
        %1983 = vmatpush1.xpose.msra.mxu0 0.0
        %1984 = vmatprep.subr.mxu0 0.0
        %1985 = vmatpush1.xpose.msra.mxu0 0.0
        %1986 = vmatprep.subr.mxu0 0.0
        %1987 = vmatpush1.xpose.msra.mxu0 0.0
        %1988 = vmatprep.subr.mxu0 0.0
        %1989 = vmatpush1.xpose.msra.mxu0 0.0
        %1990 = vmatprep.subr.mxu0 0.0
        %1991 = vmatpush1.xpose.msra.mxu0 0.0
        %1992 = vmatprep.subr.mxu0 0.0
        %1993 = vmatpush1.xpose.msra.mxu0 0.0
        %1994 = vmatprep.subr.mxu0 0.0
        %1995 = vmatpush1.xpose.msra.mxu0 0.0
        %1996 = vmatprep.subr.mxu0 0.0
        %1997 = vmatpush1.xpose.msra.mxu0 0.0
        %1998 = vmatprep.mubr.f32.mxu0 %v749
        %1999 = vmatmul.mubr.f32.gmra.mrb[0].mxu0 %v747
        %v2000 = vpop.f32.mrb[0].mxu0
        %v2001 = vadd.f32 %v1931, %v2000
        %v2002 = vpop.f32.mrb[0].mxu0
        %2003 = vdwg.mxu0
        %2004 = vmatprep.subr.mxu0 %v293
        %2005 = vmatpush1.xpose.msra.mxu0 %v292
        %2006 = vmatprep.subr.mxu0 %v485
        %2007 = vmatpush1.xpose.msra.mxu0 %v484
        %2008 = vmatprep.subr.mxu0 0.0
        %2009 = vmatpush1.xpose.msra.mxu0 0.0
        %2010 = vmatprep.subr.mxu0 0.0
        %2011 = vmatpush1.xpose.msra.mxu0 0.0
        %2012 = vmatprep.subr.mxu0 0.0
        %2013 = vmatpush1.xpose.msra.mxu0 0.0
        %2014 = vmatprep.subr.mxu0 0.0
        %2015 = vmatpush1.xpose.msra.mxu0 0.0
        %2016 = vmatprep.subr.mxu0 0.0
        %2017 = vmatpush1.xpose.msra.mxu0 0.0
        %2018 = vmatprep.subr.mxu0 0.0
        %2019 = vmatpush1.xpose.msra.mxu0 0.0
        %2020 = vmatprep.subr.mxu0 0.0
        %2021 = vmatpush1.xpose.msra.mxu0 0.0
        %2022 = vmatprep.subr.mxu0 0.0
        %2023 = vmatpush1.xpose.msra.mxu0 0.0
        %2024 = vmatprep.subr.mxu0 0.0
        %2025 = vmatpush1.xpose.msra.mxu0 0.0
        %2026 = vmatprep.subr.mxu0 0.0
        %2027 = vmatpush1.xpose.msra.mxu0 0.0
        %2028 = vmatprep.subr.mxu0 0.0
        %2029 = vmatpush1.xpose.msra.mxu0 0.0
        %2030 = vmatprep.subr.mxu0 0.0
        %2031 = vmatpush1.xpose.msra.mxu0 0.0
        %2032 = vmatprep.subr.mxu0 0.0
        %2033 = vmatpush1.xpose.msra.mxu0 0.0
        %2034 = vmatprep.subr.mxu0 0.0
        %2035 = vmatpush1.xpose.msra.mxu0 0.0
        %2036 = vmatprep.subr.mxu0 0.0
        %2037 = vmatpush1.xpose.msra.mxu0 0.0
        %2038 = vmatprep.subr.mxu0 0.0
        %2039 = vmatpush1.xpose.msra.mxu0 0.0
        %2040 = vmatprep.subr.mxu0 0.0
        %2041 = vmatpush1.xpose.msra.mxu0 0.0
        %2042 = vmatprep.subr.mxu0 0.0
        %2043 = vmatpush1.xpose.msra.mxu0 0.0
        %2044 = vmatprep.subr.mxu0 0.0
        %2045 = vmatpush1.xpose.msra.mxu0 0.0
        %2046 = vmatprep.subr.mxu0 0.0
        %2047 = vmatpush1.xpose.msra.mxu0 0.0
        %2048 = vmatprep.subr.mxu0 0.0
        %2049 = vmatpush1.xpose.msra.mxu0 0.0
        %2050 = vmatprep.subr.mxu0 0.0
        %2051 = vmatpush1.xpose.msra.mxu0 0.0
        %2052 = vmatprep.subr.mxu0 0.0
        %2053 = vmatpush1.xpose.msra.mxu0 0.0
        %2054 = vmatprep.subr.mxu0 0.0
        %2055 = vmatpush1.xpose.msra.mxu0 0.0
        %2056 = vmatprep.subr.mxu0 0.0
        %2057 = vmatpush1.xpose.msra.mxu0 0.0
        %2058 = vmatprep.subr.mxu0 0.0
        %2059 = vmatpush1.xpose.msra.mxu0 0.0
        %2060 = vmatprep.subr.mxu0 0.0
        %2061 = vmatpush1.xpose.msra.mxu0 0.0
        %2062 = vmatprep.subr.mxu0 0.0
        %2063 = vmatpush1.xpose.msra.mxu0 0.0
        %2064 = vmatprep.subr.mxu0 0.0
        %2065 = vmatpush1.xpose.msra.mxu0 0.0
        %2066 = vmatprep.subr.mxu0 0.0
        %2067 = vmatpush1.xpose.msra.mxu0 0.0
        %2068 = vmatprep.mubr.f32.mxu0 %v765
        %2069 = vmatmul.mubr.f32.gmra.mrb[0].mxu0 %v757
        %v2070 = vpop.f32.mrb[0].mxu0
        %v2071 = vadd.f32 %v2001, %v2070
        %v2072 = vpop.f32.mrb[0].mxu0
        %2073 = vdwg.mxu0
        %2074 = vmatprep.subr.mxu0 %v295
        %2075 = vmatpush1.xpose.msra.mxu0 %v294
        %2076 = vmatprep.subr.mxu0 %v487
        %2077 = vmatpush1.xpose.msra.mxu0 %v486
        %2078 = vmatprep.subr.mxu0 0.0
        %2079 = vmatpush1.xpose.msra.mxu0 0.0
        %2080 = vmatprep.subr.mxu0 0.0
        %2081 = vmatpush1.xpose.msra.mxu0 0.0
        %2082 = vmatprep.subr.mxu0 0.0
        %2083 = vmatpush1.xpose.msra.mxu0 0.0
        %2084 = vmatprep.subr.mxu0 0.0
        %2085 = vmatpush1.xpose.msra.mxu0 0.0
        %2086 = vmatprep.subr.mxu0 0.0
        %2087 = vmatpush1.xpose.msra.mxu0 0.0
        %2088 = vmatprep.subr.mxu0 0.0
        %2089 = vmatpush1.xpose.msra.mxu0 0.0
        %2090 = vmatprep.subr.mxu0 0.0
        %2091 = vmatpush1.xpose.msra.mxu0 0.0
        %2092 = vmatprep.subr.mxu0 0.0
        %2093 = vmatpush1.xpose.msra.mxu0 0.0
        %2094 = vmatprep.subr.mxu0 0.0
        %2095 = vmatpush1.xpose.msra.mxu0 0.0
        %2096 = vmatprep.subr.mxu0 0.0
        %2097 = vmatpush1.xpose.msra.mxu0 0.0
        %2098 = vmatprep.subr.mxu0 0.0
        %2099 = vmatpush1.xpose.msra.mxu0 0.0
        %2100 = vmatprep.subr.mxu0 0.0
        %2101 = vmatpush1.xpose.msra.mxu0 0.0
        %2102 = vmatprep.subr.mxu0 0.0
        %2103 = vmatpush1.xpose.msra.mxu0 0.0
        %2104 = vmatprep.subr.mxu0 0.0
        %2105 = vmatpush1.xpose.msra.mxu0 0.0
        %2106 = vmatprep.subr.mxu0 0.0
        %2107 = vmatpush1.xpose.msra.mxu0 0.0
        %2108 = vmatprep.subr.mxu0 0.0
        %2109 = vmatpush1.xpose.msra.mxu0 0.0
        %2110 = vmatprep.subr.mxu0 0.0
        %2111 = vmatpush1.xpose.msra.mxu0 0.0
        %2112 = vmatprep.subr.mxu0 0.0
        %2113 = vmatpush1.xpose.msra.mxu0 0.0
        %2114 = vmatprep.subr.mxu0 0.0
        %2115 = vmatpush1.xpose.msra.mxu0 0.0
        %2116 = vmatprep.subr.mxu0 0.0
        %2117 = vmatpush1.xpose.msra.mxu0 0.0
        %2118 = vmatprep.subr.mxu0 0.0
        %2119 = vmatpush1.xpose.msra.mxu0 0.0
        %2120 = vmatprep.subr.mxu0 0.0
        %2121 = vmatpush1.xpose.msra.mxu0 0.0
        %2122 = vmatprep.subr.mxu0 0.0
        %2123 = vmatpush1.xpose.msra.mxu0 0.0
        %2124 = vmatprep.subr.mxu0 0.0
        %2125 = vmatpush1.xpose.msra.mxu0 0.0
        %2126 = vmatprep.subr.mxu0 0.0
        %2127 = vmatpush1.xpose.msra.mxu0 0.0
        %2128 = vmatprep.subr.mxu0 0.0
        %2129 = vmatpush1.xpose.msra.mxu0 0.0
        %2130 = vmatprep.subr.mxu0 0.0
        %2131 = vmatpush1.xpose.msra.mxu0 0.0
        %2132 = vmatprep.subr.mxu0 0.0
        %2133 = vmatpush1.xpose.msra.mxu0 0.0
        %2134 = vmatprep.subr.mxu0 0.0
        %2135 = vmatpush1.xpose.msra.mxu0 0.0
        %2136 = vmatprep.subr.mxu0 0.0
        %2137 = vmatpush1.xpose.msra.mxu0 0.0
        %2138 = vmatprep.mubr.f32.mxu0 %v766
        %2139 = vmatmul.mubr.f32.gmra.mrb[0].mxu0 %v764
        %v2140 = vpop.f32.mrb[0].mxu0
        %v2141 = vadd.f32 %v2071, %v2140
        %v2142 = vpop.f32.mrb[0].mxu0
        %2143 = vdwg.mxu0
        %2144 = vmatprep.subr.mxu0 %v297
        %2145 = vmatpush1.xpose.msra.mxu0 %v296
        %2146 = vmatprep.subr.mxu0 %v489
        %2147 = vmatpush1.xpose.msra.mxu0 %v488
        %2148 = vmatprep.subr.mxu0 0.0
        %2149 = vmatpush1.xpose.msra.mxu0 0.0
        %2150 = vmatprep.subr.mxu0 0.0
        %2151 = vmatpush1.xpose.msra.mxu0 0.0
        %2152 = vmatprep.subr.mxu0 0.0
        %2153 = vmatpush1.xpose.msra.mxu0 0.0
        %2154 = vmatprep.subr.mxu0 0.0
        %2155 = vmatpush1.xpose.msra.mxu0 0.0
        %2156 = vmatprep.subr.mxu0 0.0
        %2157 = vmatpush1.xpose.msra.mxu0 0.0
        %2158 = vmatprep.subr.mxu0 0.0
        %2159 = vmatpush1.xpose.msra.mxu0 0.0
        %2160 = vmatprep.subr.mxu0 0.0
        %2161 = vmatpush1.xpose.msra.mxu0 0.0
        %2162 = vmatprep.subr.mxu0 0.0
        %2163 = vmatpush1.xpose.msra.mxu0 0.0
        %2164 = vmatprep.subr.mxu0 0.0
        %2165 = vmatpush1.xpose.msra.mxu0 0.0
        %2166 = vmatprep.subr.mxu0 0.0
        %2167 = vmatpush1.xpose.msra.mxu0 0.0
        %2168 = vmatprep.subr.mxu0 0.0
        %2169 = vmatpush1.xpose.msra.mxu0 0.0
        %2170 = vmatprep.subr.mxu0 0.0
        %2171 = vmatpush1.xpose.msra.mxu0 0.0
        %2172 = vmatprep.subr.mxu0 0.0
        %2173 = vmatpush1.xpose.msra.mxu0 0.0
        %2174 = vmatprep.subr.mxu0 0.0
        %2175 = vmatpush1.xpose.msra.mxu0 0.0
        %2176 = vmatprep.subr.mxu0 0.0
        %2177 = vmatpush1.xpose.msra.mxu0 0.0
        %2178 = vmatprep.subr.mxu0 0.0
        %2179 = vmatpush1.xpose.msra.mxu0 0.0
        %2180 = vmatprep.subr.mxu0 0.0
        %2181 = vmatpush1.xpose.msra.mxu0 0.0
        %2182 = vmatprep.subr.mxu0 0.0
        %2183 = vmatpush1.xpose.msra.mxu0 0.0
        %2184 = vmatprep.subr.mxu0 0.0
        %2185 = vmatpush1.xpose.msra.mxu0 0.0
        %2186 = vmatprep.subr.mxu0 0.0
        %2187 = vmatpush1.xpose.msra.mxu0 0.0
        %2188 = vmatprep.subr.mxu0 0.0
        %2189 = vmatpush1.xpose.msra.mxu0 0.0
        %2190 = vmatprep.subr.mxu0 0.0
        %2191 = vmatpush1.xpose.msra.mxu0 0.0
        %2192 = vmatprep.subr.mxu0 0.0
        %2193 = vmatpush1.xpose.msra.mxu0 0.0
        %2194 = vmatprep.subr.mxu0 0.0
        %2195 = vmatpush1.xpose.msra.mxu0 0.0
        %2196 = vmatprep.subr.mxu0 0.0
        %2197 = vmatpush1.xpose.msra.mxu0 0.0
        %2198 = vmatprep.subr.mxu0 0.0
        %2199 = vmatpush1.xpose.msra.mxu0 0.0
        %2200 = vmatprep.subr.mxu0 0.0
        %2201 = vmatpush1.xpose.msra.mxu0 0.0
        %2202 = vmatprep.subr.mxu0 0.0
        %2203 = vmatpush1.xpose.msra.mxu0 0.0
        %2204 = vmatprep.subr.mxu0 0.0
        %2205 = vmatpush1.xpose.msra.mxu0 0.0
        %2206 = vmatprep.subr.mxu0 0.0
        %2207 = vmatpush1.xpose.msra.mxu0 0.0
        %2208 = vmatprep.mubr.f32.mxu0 %v782
        %2209 = vmatmul.mubr.f32.gmra.mrb[0].mxu0 %v774
        %v2210 = vpop.f32.mrb[0].mxu0
        %v2211 = vadd.f32 %v2141, %v2210
        %v2212 = vpop.f32.mrb[0].mxu0
        %2213 = vdwg.mxu0
        %2214 = vmatprep.subr.mxu0 %v299
        %2215 = vmatpush1.xpose.msra.mxu0 %v298
        %2216 = vmatprep.subr.mxu0 %v491
        %2217 = vmatpush1.xpose.msra.mxu0 %v490
        %2218 = vmatprep.subr.mxu0 0.0
        %2219 = vmatpush1.xpose.msra.mxu0 0.0
        %2220 = vmatprep.subr.mxu0 0.0
        %2221 = vmatpush1.xpose.msra.mxu0 0.0
        %2222 = vmatprep.subr.mxu0 0.0
        %2223 = vmatpush1.xpose.msra.mxu0 0.0
        %2224 = vmatprep.subr.mxu0 0.0
        %2225 = vmatpush1.xpose.msra.mxu0 0.0
        %2226 = vmatprep.subr.mxu0 0.0
        %2227 = vmatpush1.xpose.msra.mxu0 0.0
        %2228 = vmatprep.subr.mxu0 0.0
        %2229 = vmatpush1.xpose.msra.mxu0 0.0
        %2230 = vmatprep.subr.mxu0 0.0
        %2231 = vmatpush1.xpose.msra.mxu0 0.0
        %2232 = vmatprep.subr.mxu0 0.0
        %2233 = vmatpush1.xpose.msra.mxu0 0.0
        %2234 = vmatprep.subr.mxu0 0.0
        %2235 = vmatpush1.xpose.msra.mxu0 0.0
        %2236 = vmatprep.subr.mxu0 0.0
        %2237 = vmatpush1.xpose.msra.mxu0 0.0
        %2238 = vmatprep.subr.mxu0 0.0
        %2239 = vmatpush1.xpose.msra.mxu0 0.0
        %2240 = vmatprep.subr.mxu0 0.0
        %2241 = vmatpush1.xpose.msra.mxu0 0.0
        %2242 = vmatprep.subr.mxu0 0.0
        %2243 = vmatpush1.xpose.msra.mxu0 0.0
        %2244 = vmatprep.subr.mxu0 0.0
        %2245 = vmatpush1.xpose.msra.mxu0 0.0
        %2246 = vmatprep.subr.mxu0 0.0
        %2247 = vmatpush1.xpose.msra.mxu0 0.0
        %2248 = vmatprep.subr.mxu0 0.0
        %2249 = vmatpush1.xpose.msra.mxu0 0.0
        %2250 = vmatprep.subr.mxu0 0.0
        %2251 = vmatpush1.xpose.msra.mxu0 0.0
        %2252 = vmatprep.subr.mxu0 0.0
        %2253 = vmatpush1.xpose.msra.mxu0 0.0
        %2254 = vmatprep.subr.mxu0 0.0
        %2255 = vmatpush1.xpose.msra.mxu0 0.0
        %2256 = vmatprep.subr.mxu0 0.0
        %2257 = vmatpush1.xpose.msra.mxu0 0.0
        %2258 = vmatprep.subr.mxu0 0.0
        %2259 = vmatpush1.xpose.msra.mxu0 0.0
        %2260 = vmatprep.subr.mxu0 0.0
        %2261 = vmatpush1.xpose.msra.mxu0 0.0
        %2262 = vmatprep.subr.mxu0 0.0
        %2263 = vmatpush1.xpose.msra.mxu0 0.0
        %2264 = vmatprep.subr.mxu0 0.0
        %2265 = vmatpush1.xpose.msra.mxu0 0.0
        %2266 = vmatprep.subr.mxu0 0.0
        %2267 = vmatpush1.xpose.msra.mxu0 0.0
        %2268 = vmatprep.subr.mxu0 0.0
        %2269 = vmatpush1.xpose.msra.mxu0 0.0
        %2270 = vmatprep.subr.mxu0 0.0
        %2271 = vmatpush1.xpose.msra.mxu0 0.0
        %2272 = vmatprep.subr.mxu0 0.0
        %2273 = vmatpush1.xpose.msra.mxu0 0.0
        %2274 = vmatprep.subr.mxu0 0.0
        %2275 = vmatpush1.xpose.msra.mxu0 0.0
        %2276 = vmatprep.subr.mxu0 0.0
        %2277 = vmatpush1.xpose.msra.mxu0 0.0
        %2278 = vmatprep.mubr.f32.mxu0 %v783
        %2279 = vmatmul.mubr.f32.gmra.mrb[0].mxu0 %v781
        %v2280 = vpop.f32.mrb[0].mxu0
        %v2281 = vadd.f32 %v2211, %v2280
        %v2282 = vpop.f32.mrb[0].mxu0
        %2283 = vdwg.mxu0
        %2284 = vmatprep.subr.mxu0 %v301
        %2285 = vmatpush1.xpose.msra.mxu0 %v300
        %2286 = vmatprep.subr.mxu0 %v493
        %2287 = vmatpush1.xpose.msra.mxu0 %v492
        %2288 = vmatprep.subr.mxu0 0.0
        %2289 = vmatpush1.xpose.msra.mxu0 0.0
        %2290 = vmatprep.subr.mxu0 0.0
        %2291 = vmatpush1.xpose.msra.mxu0 0.0
        %2292 = vmatprep.subr.mxu0 0.0
        %2293 = vmatpush1.xpose.msra.mxu0 0.0
        %2294 = vmatprep.subr.mxu0 0.0
        %2295 = vmatpush1.xpose.msra.mxu0 0.0
        %2296 = vmatprep.subr.mxu0 0.0
        %2297 = vmatpush1.xpose.msra.mxu0 0.0
        %2298 = vmatprep.subr.mxu0 0.0
        %2299 = vmatpush1.xpose.msra.mxu0 0.0
        %2300 = vmatprep.subr.mxu0 0.0
        %2301 = vmatpush1.xpose.msra.mxu0 0.0
        %2302 = vmatprep.subr.mxu0 0.0
        %2303 = vmatpush1.xpose.msra.mxu0 0.0
        %2304 = vmatprep.subr.mxu0 0.0
        %2305 = vmatpush1.xpose.msra.mxu0 0.0
        %2306 = vmatprep.subr.mxu0 0.0
        %2307 = vmatpush1.xpose.msra.mxu0 0.0
        %2308 = vmatprep.subr.mxu0 0.0
        %2309 = vmatpush1.xpose.msra.mxu0 0.0
        %2310 = vmatprep.subr.mxu0 0.0
        %2311 = vmatpush1.xpose.msra.mxu0 0.0
        %2312 = vmatprep.subr.mxu0 0.0
        %2313 = vmatpush1.xpose.msra.mxu0 0.0
        %2314 = vmatprep.subr.mxu0 0.0
        %2315 = vmatpush1.xpose.msra.mxu0 0.0
        %2316 = vmatprep.subr.mxu0 0.0
        %2317 = vmatpush1.xpose.msra.mxu0 0.0
        %2318 = vmatprep.subr.mxu0 0.0
        %2319 = vmatpush1.xpose.msra.mxu0 0.0
        %2320 = vmatprep.subr.mxu0 0.0
        %2321 = vmatpush1.xpose.msra.mxu0 0.0
        %2322 = vmatprep.subr.mxu0 0.0
        %2323 = vmatpush1.xpose.msra.mxu0 0.0
        %2324 = vmatprep.subr.mxu0 0.0
        %2325 = vmatpush1.xpose.msra.mxu0 0.0
        %2326 = vmatprep.subr.mxu0 0.0
        %2327 = vmatpush1.xpose.msra.mxu0 0.0
        %2328 = vmatprep.subr.mxu0 0.0
        %2329 = vmatpush1.xpose.msra.mxu0 0.0
        %2330 = vmatprep.subr.mxu0 0.0
        %2331 = vmatpush1.xpose.msra.mxu0 0.0
        %2332 = vmatprep.subr.mxu0 0.0
        %2333 = vmatpush1.xpose.msra.mxu0 0.0
        %2334 = vmatprep.subr.mxu0 0.0
        %2335 = vmatpush1.xpose.msra.mxu0 0.0
        %2336 = vmatprep.subr.mxu0 0.0
        %2337 = vmatpush1.xpose.msra.mxu0 0.0
        %2338 = vmatprep.subr.mxu0 0.0
        %2339 = vmatpush1.xpose.msra.mxu0 0.0
        %2340 = vmatprep.subr.mxu0 0.0
        %2341 = vmatpush1.xpose.msra.mxu0 0.0
        %2342 = vmatprep.subr.mxu0 0.0
        %2343 = vmatpush1.xpose.msra.mxu0 0.0
        %2344 = vmatprep.subr.mxu0 0.0
        %2345 = vmatpush1.xpose.msra.mxu0 0.0
        %2346 = vmatprep.subr.mxu0 0.0
        %2347 = vmatpush1.xpose.msra.mxu0 0.0
        %2348 = vmatprep.mubr.f32.mxu0 %v799
        %2349 = vmatmul.mubr.f32.gmra.mrb[0].mxu0 %v791
        %v2350 = vpop.f32.mrb[0].mxu0
        %v2351 = vadd.f32 %v2281, %v2350
        %v2352 = vpop.f32.mrb[0].mxu0
        %2353 = vdwg.mxu0
        %2354 = vmatprep.subr.mxu0 %v303
        %2355 = vmatpush1.xpose.msra.mxu0 %v302
        %2356 = vmatprep.subr.mxu0 %v495
        %2357 = vmatpush1.xpose.msra.mxu0 %v494
        %2358 = vmatprep.subr.mxu0 0.0
        %2359 = vmatpush1.xpose.msra.mxu0 0.0
        %2360 = vmatprep.subr.mxu0 0.0
        %2361 = vmatpush1.xpose.msra.mxu0 0.0
        %2362 = vmatprep.subr.mxu0 0.0
        %2363 = vmatpush1.xpose.msra.mxu0 0.0
        %2364 = vmatprep.subr.mxu0 0.0
        %2365 = vmatpush1.xpose.msra.mxu0 0.0
        %2366 = vmatprep.subr.mxu0 0.0
        %2367 = vmatpush1.xpose.msra.mxu0 0.0
        %2368 = vmatprep.subr.mxu0 0.0
        %2369 = vmatpush1.xpose.msra.mxu0 0.0
        %2370 = vmatprep.subr.mxu0 0.0
        %2371 = vmatpush1.xpose.msra.mxu0 0.0
        %2372 = vmatprep.subr.mxu0 0.0
        %2373 = vmatpush1.xpose.msra.mxu0 0.0
        %2374 = vmatprep.subr.mxu0 0.0
        %2375 = vmatpush1.xpose.msra.mxu0 0.0
        %2376 = vmatprep.subr.mxu0 0.0
        %2377 = vmatpush1.xpose.msra.mxu0 0.0
        %2378 = vmatprep.subr.mxu0 0.0
        %2379 = vmatpush1.xpose.msra.mxu0 0.0
        %2380 = vmatprep.subr.mxu0 0.0
        %2381 = vmatpush1.xpose.msra.mxu0 0.0
        %2382 = vmatprep.subr.mxu0 0.0
        %2383 = vmatpush1.xpose.msra.mxu0 0.0
        %2384 = vmatprep.subr.mxu0 0.0
        %2385 = vmatpush1.xpose.msra.mxu0 0.0
        %2386 = vmatprep.subr.mxu0 0.0
        %2387 = vmatpush1.xpose.msra.mxu0 0.0
        %2388 = vmatprep.subr.mxu0 0.0
        %2389 = vmatpush1.xpose.msra.mxu0 0.0
        %2390 = vmatprep.subr.mxu0 0.0
        %2391 = vmatpush1.xpose.msra.mxu0 0.0
        %2392 = vmatprep.subr.mxu0 0.0
        %2393 = vmatpush1.xpose.msra.mxu0 0.0
        %2394 = vmatprep.subr.mxu0 0.0
        %2395 = vmatpush1.xpose.msra.mxu0 0.0
        %2396 = vmatprep.subr.mxu0 0.0
        %2397 = vmatpush1.xpose.msra.mxu0 0.0
        %2398 = vmatprep.subr.mxu0 0.0
        %2399 = vmatpush1.xpose.msra.mxu0 0.0
        %2400 = vmatprep.subr.mxu0 0.0
        %2401 = vmatpush1.xpose.msra.mxu0 0.0
        %2402 = vmatprep.subr.mxu0 0.0
        %2403 = vmatpush1.xpose.msra.mxu0 0.0
        %2404 = vmatprep.subr.mxu0 0.0
        %2405 = vmatpush1.xpose.msra.mxu0 0.0
        %2406 = vmatprep.subr.mxu0 0.0
        %2407 = vmatpush1.xpose.msra.mxu0 0.0
        %2408 = vmatprep.subr.mxu0 0.0
        %2409 = vmatpush1.xpose.msra.mxu0 0.0
        %2410 = vmatprep.subr.mxu0 0.0
        %2411 = vmatpush1.xpose.msra.mxu0 0.0
        %2412 = vmatprep.subr.mxu0 0.0
        %2413 = vmatpush1.xpose.msra.mxu0 0.0
        %2414 = vmatprep.subr.mxu0 0.0
        %2415 = vmatpush1.xpose.msra.mxu0 0.0
        %2416 = vmatprep.subr.mxu0 0.0
        %2417 = vmatpush1.xpose.msra.mxu0 0.0
        %2418 = vmatprep.mubr.f32.mxu0 %v800
        %2419 = vmatmul.mubr.f32.gmra.mrb[0].mxu0 %v798
        %v2420 = vpop.f32.mrb[0].mxu0
        %v2421 = vadd.f32 %v2351, %v2420
        %v2422 = vpop.f32.mrb[0].mxu0
        %2423 = vdwg.mxu0
        %2424 = vmatprep.subr.mxu0 %v305
        %2425 = vmatpush1.xpose.msra.mxu0 %v304
        %2426 = vmatprep.subr.mxu0 %v497
        %2427 = vmatpush1.xpose.msra.mxu0 %v496
        %2428 = vmatprep.subr.mxu0 0.0
        %2429 = vmatpush1.xpose.msra.mxu0 0.0
        %2430 = vmatprep.subr.mxu0 0.0
        %2431 = vmatpush1.xpose.msra.mxu0 0.0
        %2432 = vmatprep.subr.mxu0 0.0
        %2433 = vmatpush1.xpose.msra.mxu0 0.0
        %2434 = vmatprep.subr.mxu0 0.0
        %2435 = vmatpush1.xpose.msra.mxu0 0.0
        %2436 = vmatprep.subr.mxu0 0.0
        %2437 = vmatpush1.xpose.msra.mxu0 0.0
        %2438 = vmatprep.subr.mxu0 0.0
        %2439 = vmatpush1.xpose.msra.mxu0 0.0
        %2440 = vmatprep.subr.mxu0 0.0
        %2441 = vmatpush1.xpose.msra.mxu0 0.0
        %2442 = vmatprep.subr.mxu0 0.0
        %2443 = vmatpush1.xpose.msra.mxu0 0.0
        %2444 = vmatprep.subr.mxu0 0.0
        %2445 = vmatpush1.xpose.msra.mxu0 0.0
        %2446 = vmatprep.subr.mxu0 0.0
        %2447 = vmatpush1.xpose.msra.mxu0 0.0
        %2448 = vmatprep.subr.mxu0 0.0
        %2449 = vmatpush1.xpose.msra.mxu0 0.0
        %2450 = vmatprep.subr.mxu0 0.0
        %2451 = vmatpush1.xpose.msra.mxu0 0.0
        %2452 = vmatprep.subr.mxu0 0.0
        %2453 = vmatpush1.xpose.msra.mxu0 0.0
        %2454 = vmatprep.subr.mxu0 0.0
        %2455 = vmatpush1.xpose.msra.mxu0 0.0
        %2456 = vmatprep.subr.mxu0 0.0
        %2457 = vmatpush1.xpose.msra.mxu0 0.0
        %2458 = vmatprep.subr.mxu0 0.0
        %2459 = vmatpush1.xpose.msra.mxu0 0.0
        %2460 = vmatprep.subr.mxu0 0.0
        %2461 = vmatpush1.xpose.msra.mxu0 0.0
        %2462 = vmatprep.subr.mxu0 0.0
        %2463 = vmatpush1.xpose.msra.mxu0 0.0
        %2464 = vmatprep.subr.mxu0 0.0
        %2465 = vmatpush1.xpose.msra.mxu0 0.0
        %2466 = vmatprep.subr.mxu0 0.0
        %2467 = vmatpush1.xpose.msra.mxu0 0.0
        %2468 = vmatprep.subr.mxu0 0.0
        %2469 = vmatpush1.xpose.msra.mxu0 0.0
        %2470 = vmatprep.subr.mxu0 0.0
        %2471 = vmatpush1.xpose.msra.mxu0 0.0
        %2472 = vmatprep.subr.mxu0 0.0
        %2473 = vmatpush1.xpose.msra.mxu0 0.0
        %2474 = vmatprep.subr.mxu0 0.0
        %2475 = vmatpush1.xpose.msra.mxu0 0.0
        %2476 = vmatprep.subr.mxu0 0.0
        %2477 = vmatpush1.xpose.msra.mxu0 0.0
        %2478 = vmatprep.subr.mxu0 0.0
        %2479 = vmatpush1.xpose.msra.mxu0 0.0
        %2480 = vmatprep.subr.mxu0 0.0
        %2481 = vmatpush1.xpose.msra.mxu0 0.0
        %2482 = vmatprep.subr.mxu0 0.0
        %2483 = vmatpush1.xpose.msra.mxu0 0.0
        %2484 = vmatprep.subr.mxu0 0.0
        %2485 = vmatpush1.xpose.msra.mxu0 0.0
        %2486 = vmatprep.subr.mxu0 0.0
        %2487 = vmatpush1.xpose.msra.mxu0 0.0
        %2488 = vmatprep.mubr.f32.mxu0 %v816
        %2489 = vmatmul.mubr.f32.gmra.mrb[0].mxu0 %v808
        %v2490 = vpop.f32.mrb[0].mxu0
        %v2491 = vadd.f32 %v2421, %v2490
        %v2492 = vpop.f32.mrb[0].mxu0
        %2493 = vdwg.mxu0
        %2494 = vmatprep.subr.mxu0 %v307
        %2495 = vmatpush1.xpose.msra.mxu0 %v306
        %2496 = vmatprep.subr.mxu0 %v499
        %2497 = vmatpush1.xpose.msra.mxu0 %v498
        %2498 = vmatprep.subr.mxu0 0.0
        %2499 = vmatpush1.xpose.msra.mxu0 0.0
        %2500 = vmatprep.subr.mxu0 0.0
        %2501 = vmatpush1.xpose.msra.mxu0 0.0
        %2502 = vmatprep.subr.mxu0 0.0
        %2503 = vmatpush1.xpose.msra.mxu0 0.0
        %2504 = vmatprep.subr.mxu0 0.0
        %2505 = vmatpush1.xpose.msra.mxu0 0.0
        %2506 = vmatprep.subr.mxu0 0.0
        %2507 = vmatpush1.xpose.msra.mxu0 0.0
        %2508 = vmatprep.subr.mxu0 0.0
        %2509 = vmatpush1.xpose.msra.mxu0 0.0
        %2510 = vmatprep.subr.mxu0 0.0
        %2511 = vmatpush1.xpose.msra.mxu0 0.0
        %2512 = vmatprep.subr.mxu0 0.0
        %2513 = vmatpush1.xpose.msra.mxu0 0.0
        %2514 = vmatprep.subr.mxu0 0.0
        %2515 = vmatpush1.xpose.msra.mxu0 0.0
        %2516 = vmatprep.subr.mxu0 0.0
        %2517 = vmatpush1.xpose.msra.mxu0 0.0
        %2518 = vmatprep.subr.mxu0 0.0
        %2519 = vmatpush1.xpose.msra.mxu0 0.0
        %2520 = vmatprep.subr.mxu0 0.0
        %2521 = vmatpush1.xpose.msra.mxu0 0.0
        %2522 = vmatprep.subr.mxu0 0.0
        %2523 = vmatpush1.xpose.msra.mxu0 0.0
        %2524 = vmatprep.subr.mxu0 0.0
        %2525 = vmatpush1.xpose.msra.mxu0 0.0
        %2526 = vmatprep.subr.mxu0 0.0
        %2527 = vmatpush1.xpose.msra.mxu0 0.0
        %2528 = vmatprep.subr.mxu0 0.0
        %2529 = vmatpush1.xpose.msra.mxu0 0.0
        %2530 = vmatprep.subr.mxu0 0.0
        %2531 = vmatpush1.xpose.msra.mxu0 0.0
        %2532 = vmatprep.subr.mxu0 0.0
        %2533 = vmatpush1.xpose.msra.mxu0 0.0
        %2534 = vmatprep.subr.mxu0 0.0
        %2535 = vmatpush1.xpose.msra.mxu0 0.0
        %2536 = vmatprep.subr.mxu0 0.0
        %2537 = vmatpush1.xpose.msra.mxu0 0.0
        %2538 = vmatprep.subr.mxu0 0.0
        %2539 = vmatpush1.xpose.msra.mxu0 0.0
        %2540 = vmatprep.subr.mxu0 0.0
        %2541 = vmatpush1.xpose.msra.mxu0 0.0
        %2542 = vmatprep.subr.mxu0 0.0
        %2543 = vmatpush1.xpose.msra.mxu0 0.0
        %2544 = vmatprep.subr.mxu0 0.0
        %2545 = vmatpush1.xpose.msra.mxu0 0.0
        %2546 = vmatprep.subr.mxu0 0.0
        %2547 = vmatpush1.xpose.msra.mxu0 0.0
        %2548 = vmatprep.subr.mxu0 0.0
        %2549 = vmatpush1.xpose.msra.mxu0 0.0
        %2550 = vmatprep.subr.mxu0 0.0
        %2551 = vmatpush1.xpose.msra.mxu0 0.0
        %2552 = vmatprep.subr.mxu0 0.0
        %2553 = vmatpush1.xpose.msra.mxu0 0.0
        %2554 = vmatprep.subr.mxu0 0.0
        %2555 = vmatpush1.xpose.msra.mxu0 0.0
        %2556 = vmatprep.subr.mxu0 0.0
        %2557 = vmatpush1.xpose.msra.mxu0 0.0
        %2558 = vmatprep.mubr.f32.mxu0 %v817
        %2559 = vmatmul.mubr.f32.gmra.mrb[0].mxu0 %v815
        %v2560 = vpop.f32.mrb[0].mxu0
        %v2561 = vadd.f32 %v2491, %v2560
        %v2562 = vpop.f32.mrb[0].mxu0
        %2563 = vdwg.mxu0
        %2564 = vmatprep.subr.mxu0 %v309
        %2565 = vmatpush1.xpose.msra.mxu0 %v308
        %2566 = vmatprep.subr.mxu0 %v501
        %2567 = vmatpush1.xpose.msra.mxu0 %v500
        %2568 = vmatprep.subr.mxu0 0.0
        %2569 = vmatpush1.xpose.msra.mxu0 0.0
        %2570 = vmatprep.subr.mxu0 0.0
        %2571 = vmatpush1.xpose.msra.mxu0 0.0
        %2572 = vmatprep.subr.mxu0 0.0
        %2573 = vmatpush1.xpose.msra.mxu0 0.0
        %2574 = vmatprep.subr.mxu0 0.0
        %2575 = vmatpush1.xpose.msra.mxu0 0.0
        %2576 = vmatprep.subr.mxu0 0.0
        %2577 = vmatpush1.xpose.msra.mxu0 0.0
        %2578 = vmatprep.subr.mxu0 0.0
        %2579 = vmatpush1.xpose.msra.mxu0 0.0
        %2580 = vmatprep.subr.mxu0 0.0
        %2581 = vmatpush1.xpose.msra.mxu0 0.0
        %2582 = vmatprep.subr.mxu0 0.0
        %2583 = vmatpush1.xpose.msra.mxu0 0.0
        %2584 = vmatprep.subr.mxu0 0.0
        %2585 = vmatpush1.xpose.msra.mxu0 0.0
        %2586 = vmatprep.subr.mxu0 0.0
        %2587 = vmatpush1.xpose.msra.mxu0 0.0
        %2588 = vmatprep.subr.mxu0 0.0
        %2589 = vmatpush1.xpose.msra.mxu0 0.0
        %2590 = vmatprep.subr.mxu0 0.0
        %2591 = vmatpush1.xpose.msra.mxu0 0.0
        %2592 = vmatprep.subr.mxu0 0.0
        %2593 = vmatpush1.xpose.msra.mxu0 0.0
        %2594 = vmatprep.subr.mxu0 0.0
        %2595 = vmatpush1.xpose.msra.mxu0 0.0
        %2596 = vmatprep.subr.mxu0 0.0
        %2597 = vmatpush1.xpose.msra.mxu0 0.0
        %2598 = vmatprep.subr.mxu0 0.0
        %2599 = vmatpush1.xpose.msra.mxu0 0.0
        %2600 = vmatprep.subr.mxu0 0.0
        %2601 = vmatpush1.xpose.msra.mxu0 0.0
        %2602 = vmatprep.subr.mxu0 0.0
        %2603 = vmatpush1.xpose.msra.mxu0 0.0
        %2604 = vmatprep.subr.mxu0 0.0
        %2605 = vmatpush1.xpose.msra.mxu0 0.0
        %2606 = vmatprep.subr.mxu0 0.0
        %2607 = vmatpush1.xpose.msra.mxu0 0.0
        %2608 = vmatprep.subr.mxu0 0.0
        %2609 = vmatpush1.xpose.msra.mxu0 0.0
        %2610 = vmatprep.subr.mxu0 0.0
        %2611 = vmatpush1.xpose.msra.mxu0 0.0
        %2612 = vmatprep.subr.mxu0 0.0
        %2613 = vmatpush1.xpose.msra.mxu0 0.0
        %2614 = vmatprep.subr.mxu0 0.0
        %2615 = vmatpush1.xpose.msra.mxu0 0.0
        %2616 = vmatprep.subr.mxu0 0.0
        %2617 = vmatpush1.xpose.msra.mxu0 0.0
        %2618 = vmatprep.subr.mxu0 0.0
        %2619 = vmatpush1.xpose.msra.mxu0 0.0
        %2620 = vmatprep.subr.mxu0 0.0
        %2621 = vmatpush1.xpose.msra.mxu0 0.0
        %2622 = vmatprep.subr.mxu0 0.0
        %2623 = vmatpush1.xpose.msra.mxu0 0.0
        %2624 = vmatprep.subr.mxu0 0.0
        %2625 = vmatpush1.xpose.msra.mxu0 0.0
        %2626 = vmatprep.subr.mxu0 0.0
        %2627 = vmatpush1.xpose.msra.mxu0 0.0
        %2628 = vmatprep.mubr.f32.mxu0 %v833
        %2629 = vmatmul.mubr.f32.gmra.mrb[0].mxu0 %v825
        %v2630 = vpop.f32.mrb[0].mxu0
        %v2631 = vadd.f32 %v2561, %v2630
        %v2632 = vpop.f32.mrb[0].mxu0
        %2633 = vdwg.mxu0
        %2634 = vmatprep.subr.mxu0 %v311
        %2635 = vmatpush1.xpose.msra.mxu0 %v310
        %2636 = vmatprep.subr.mxu0 %v503
        %2637 = vmatpush1.xpose.msra.mxu0 %v502
        %2638 = vmatprep.subr.mxu0 0.0
        %2639 = vmatpush1.xpose.msra.mxu0 0.0
        %2640 = vmatprep.subr.mxu0 0.0
        %2641 = vmatpush1.xpose.msra.mxu0 0.0
        %2642 = vmatprep.subr.mxu0 0.0
        %2643 = vmatpush1.xpose.msra.mxu0 0.0
        %2644 = vmatprep.subr.mxu0 0.0
        %2645 = vmatpush1.xpose.msra.mxu0 0.0
        %2646 = vmatprep.subr.mxu0 0.0
        %2647 = vmatpush1.xpose.msra.mxu0 0.0
        %2648 = vmatprep.subr.mxu0 0.0
        %2649 = vmatpush1.xpose.msra.mxu0 0.0
        %2650 = vmatprep.subr.mxu0 0.0
        %2651 = vmatpush1.xpose.msra.mxu0 0.0
        %2652 = vmatprep.subr.mxu0 0.0
        %2653 = vmatpush1.xpose.msra.mxu0 0.0
        %2654 = vmatprep.subr.mxu0 0.0
        %2655 = vmatpush1.xpose.msra.mxu0 0.0
        %2656 = vmatprep.subr.mxu0 0.0
        %2657 = vmatpush1.xpose.msra.mxu0 0.0
        %2658 = vmatprep.subr.mxu0 0.0
        %2659 = vmatpush1.xpose.msra.mxu0 0.0
        %2660 = vmatprep.subr.mxu0 0.0
        %2661 = vmatpush1.xpose.msra.mxu0 0.0
        %2662 = vmatprep.subr.mxu0 0.0
        %2663 = vmatpush1.xpose.msra.mxu0 0.0
        %2664 = vmatprep.subr.mxu0 0.0
        %2665 = vmatpush1.xpose.msra.mxu0 0.0
        %2666 = vmatprep.subr.mxu0 0.0
        %2667 = vmatpush1.xpose.msra.mxu0 0.0
        %2668 = vmatprep.subr.mxu0 0.0
        %2669 = vmatpush1.xpose.msra.mxu0 0.0
        %2670 = vmatprep.subr.mxu0 0.0
        %2671 = vmatpush1.xpose.msra.mxu0 0.0
        %2672 = vmatprep.subr.mxu0 0.0
        %2673 = vmatpush1.xpose.msra.mxu0 0.0
        %2674 = vmatprep.subr.mxu0 0.0
        %2675 = vmatpush1.xpose.msra.mxu0 0.0
        %2676 = vmatprep.subr.mxu0 0.0
        %2677 = vmatpush1.xpose.msra.mxu0 0.0
        %2678 = vmatprep.subr.mxu0 0.0
        %2679 = vmatpush1.xpose.msra.mxu0 0.0
        %2680 = vmatprep.subr.mxu0 0.0
        %2681 = vmatpush1.xpose.msra.mxu0 0.0
        %2682 = vmatprep.subr.mxu0 0.0
        %2683 = vmatpush1.xpose.msra.mxu0 0.0
        %2684 = vmatprep.subr.mxu0 0.0
        %2685 = vmatpush1.xpose.msra.mxu0 0.0
        %2686 = vmatprep.subr.mxu0 0.0
        %2687 = vmatpush1.xpose.msra.mxu0 0.0
        %2688 = vmatprep.subr.mxu0 0.0
        %2689 = vmatpush1.xpose.msra.mxu0 0.0
        %2690 = vmatprep.subr.mxu0 0.0
        %2691 = vmatpush1.xpose.msra.mxu0 0.0
        %2692 = vmatprep.subr.mxu0 0.0
        %2693 = vmatpush1.xpose.msra.mxu0 0.0
        %2694 = vmatprep.subr.mxu0 0.0
        %2695 = vmatpush1.xpose.msra.mxu0 0.0
        %2696 = vmatprep.subr.mxu0 0.0
        %2697 = vmatpush1.xpose.msra.mxu0 0.0
        %2698 = vmatprep.mubr.f32.mxu0 %v834
        %2699 = vmatmul.mubr.f32.gmra.mrb[0].mxu0 %v832
        %v2700 = vpop.f32.mrb[0].mxu0
        %v2701 = vadd.f32 %v2631, %v2700
        %v2702 = vpop.f32.mrb[0].mxu0
        %2703 = vdwg.mxu0
        %2704 = vmatprep.subr.mxu0 %v313
        %2705 = vmatpush1.xpose.msra.mxu0 %v312
        %2706 = vmatprep.subr.mxu0 %v505
        %2707 = vmatpush1.xpose.msra.mxu0 %v504
        %2708 = vmatprep.subr.mxu0 0.0
        %2709 = vmatpush1.xpose.msra.mxu0 0.0
        %2710 = vmatprep.subr.mxu0 0.0
        %2711 = vmatpush1.xpose.msra.mxu0 0.0
        %2712 = vmatprep.subr.mxu0 0.0
        %2713 = vmatpush1.xpose.msra.mxu0 0.0
        %2714 = vmatprep.subr.mxu0 0.0
        %2715 = vmatpush1.xpose.msra.mxu0 0.0
        %2716 = vmatprep.subr.mxu0 0.0
        %2717 = vmatpush1.xpose.msra.mxu0 0.0
        %2718 = vmatprep.subr.mxu0 0.0
        %2719 = vmatpush1.xpose.msra.mxu0 0.0
        %2720 = vmatprep.subr.mxu0 0.0
        %2721 = vmatpush1.xpose.msra.mxu0 0.0
        %2722 = vmatprep.subr.mxu0 0.0
        %2723 = vmatpush1.xpose.msra.mxu0 0.0
        %2724 = vmatprep.subr.mxu0 0.0
        %2725 = vmatpush1.xpose.msra.mxu0 0.0
        %2726 = vmatprep.subr.mxu0 0.0
        %2727 = vmatpush1.xpose.msra.mxu0 0.0
        %2728 = vmatprep.subr.mxu0 0.0
        %2729 = vmatpush1.xpose.msra.mxu0 0.0
        %2730 = vmatprep.subr.mxu0 0.0
        %2731 = vmatpush1.xpose.msra.mxu0 0.0
        %2732 = vmatprep.subr.mxu0 0.0
        %2733 = vmatpush1.xpose.msra.mxu0 0.0
        %2734 = vmatprep.subr.mxu0 0.0
        %2735 = vmatpush1.xpose.msra.mxu0 0.0
        %2736 = vmatprep.subr.mxu0 0.0
        %2737 = vmatpush1.xpose.msra.mxu0 0.0
        %2738 = vmatprep.subr.mxu0 0.0
        %2739 = vmatpush1.xpose.msra.mxu0 0.0
        %2740 = vmatprep.subr.mxu0 0.0
        %2741 = vmatpush1.xpose.msra.mxu0 0.0
        %2742 = vmatprep.subr.mxu0 0.0
        %2743 = vmatpush1.xpose.msra.mxu0 0.0
        %2744 = vmatprep.subr.mxu0 0.0
        %2745 = vmatpush1.xpose.msra.mxu0 0.0
        %2746 = vmatprep.subr.mxu0 0.0
        %2747 = vmatpush1.xpose.msra.mxu0 0.0
        %2748 = vmatprep.subr.mxu0 0.0
        %2749 = vmatpush1.xpose.msra.mxu0 0.0
        %2750 = vmatprep.subr.mxu0 0.0
        %2751 = vmatpush1.xpose.msra.mxu0 0.0
        %2752 = vmatprep.subr.mxu0 0.0
        %2753 = vmatpush1.xpose.msra.mxu0 0.0
        %2754 = vmatprep.subr.mxu0 0.0
        %2755 = vmatpush1.xpose.msra.mxu0 0.0
        %2756 = vmatprep.subr.mxu0 0.0
        %2757 = vmatpush1.xpose.msra.mxu0 0.0
        %2758 = vmatprep.subr.mxu0 0.0
        %2759 = vmatpush1.xpose.msra.mxu0 0.0
        %2760 = vmatprep.subr.mxu0 0.0
        %2761 = vmatpush1.xpose.msra.mxu0 0.0
        %2762 = vmatprep.subr.mxu0 0.0
        %2763 = vmatpush1.xpose.msra.mxu0 0.0
        %2764 = vmatprep.subr.mxu0 0.0
        %2765 = vmatpush1.xpose.msra.mxu0 0.0
        %2766 = vmatprep.subr.mxu0 0.0
        %2767 = vmatpush1.xpose.msra.mxu0 0.0
        %2768 = vmatprep.mubr.f32.mxu0 %v850
        %2769 = vmatmul.mubr.f32.gmra.mrb[0].mxu0 %v842
        %v2770 = vpop.f32.mrb[0].mxu0
        %v2771 = vadd.f32 %v2701, %v2770
        %v2772 = vpop.f32.mrb[0].mxu0
        %2773 = vdwg.mxu0
        %2774 = vmatprep.subr.mxu0 %v315
        %2775 = vmatpush1.xpose.msra.mxu0 %v314
        %2776 = vmatprep.subr.mxu0 %v507
        %2777 = vmatpush1.xpose.msra.mxu0 %v506
        %2778 = vmatprep.subr.mxu0 0.0
        %2779 = vmatpush1.xpose.msra.mxu0 0.0
        %2780 = vmatprep.subr.mxu0 0.0
        %2781 = vmatpush1.xpose.msra.mxu0 0.0
        %2782 = vmatprep.subr.mxu0 0.0
        %2783 = vmatpush1.xpose.msra.mxu0 0.0
        %2784 = vmatprep.subr.mxu0 0.0
        %2785 = vmatpush1.xpose.msra.mxu0 0.0
        %2786 = vmatprep.subr.mxu0 0.0
        %2787 = vmatpush1.xpose.msra.mxu0 0.0
        %2788 = vmatprep.subr.mxu0 0.0
        %2789 = vmatpush1.xpose.msra.mxu0 0.0
        %2790 = vmatprep.subr.mxu0 0.0
        %2791 = vmatpush1.xpose.msra.mxu0 0.0
        %2792 = vmatprep.subr.mxu0 0.0
        %2793 = vmatpush1.xpose.msra.mxu0 0.0
        %2794 = vmatprep.subr.mxu0 0.0
        %2795 = vmatpush1.xpose.msra.mxu0 0.0
        %2796 = vmatprep.subr.mxu0 0.0
        %2797 = vmatpush1.xpose.msra.mxu0 0.0
        %2798 = vmatprep.subr.mxu0 0.0
        %2799 = vmatpush1.xpose.msra.mxu0 0.0
        %2800 = vmatprep.subr.mxu0 0.0
        %2801 = vmatpush1.xpose.msra.mxu0 0.0
        %2802 = vmatprep.subr.mxu0 0.0
        %2803 = vmatpush1.xpose.msra.mxu0 0.0
        %2804 = vmatprep.subr.mxu0 0.0
        %2805 = vmatpush1.xpose.msra.mxu0 0.0
        %2806 = vmatprep.subr.mxu0 0.0
        %2807 = vmatpush1.xpose.msra.mxu0 0.0
        %2808 = vmatprep.subr.mxu0 0.0
        %2809 = vmatpush1.xpose.msra.mxu0 0.0
        %2810 = vmatprep.subr.mxu0 0.0
        %2811 = vmatpush1.xpose.msra.mxu0 0.0
        %2812 = vmatprep.subr.mxu0 0.0
        %2813 = vmatpush1.xpose.msra.mxu0 0.0
        %2814 = vmatprep.subr.mxu0 0.0
        %2815 = vmatpush1.xpose.msra.mxu0 0.0
        %2816 = vmatprep.subr.mxu0 0.0
        %2817 = vmatpush1.xpose.msra.mxu0 0.0
        %2818 = vmatprep.subr.mxu0 0.0
        %2819 = vmatpush1.xpose.msra.mxu0 0.0
        %2820 = vmatprep.subr.mxu0 0.0
        %2821 = vmatpush1.xpose.msra.mxu0 0.0
        %2822 = vmatprep.subr.mxu0 0.0
        %2823 = vmatpush1.xpose.msra.mxu0 0.0
        %2824 = vmatprep.subr.mxu0 0.0
        %2825 = vmatpush1.xpose.msra.mxu0 0.0
        %2826 = vmatprep.subr.mxu0 0.0
        %2827 = vmatpush1.xpose.msra.mxu0 0.0
        %2828 = vmatprep.subr.mxu0 0.0
        %2829 = vmatpush1.xpose.msra.mxu0 0.0
        %2830 = vmatprep.subr.mxu0 0.0
        %2831 = vmatpush1.xpose.msra.mxu0 0.0
        %2832 = vmatprep.subr.mxu0 0.0
        %2833 = vmatpush1.xpose.msra.mxu0 0.0
        %2834 = vmatprep.subr.mxu0 0.0
        %2835 = vmatpush1.xpose.msra.mxu0 0.0
        %2836 = vmatprep.subr.mxu0 0.0
        %2837 = vmatpush1.xpose.msra.mxu0 0.0
        %2838 = vmatprep.mubr.f32.mxu0 %v851
        %2839 = vmatmul.mubr.f32.gmra.mrb[0].mxu0 %v849
        %v2840 = vpop.f32.mrb[0].mxu0
        %v2841 = vadd.f32 %v2771, %v2840
        %v2842 = vpop.f32.mrb[0].mxu0
        %2843 = vdwg.mxu0
        %2844 = vmatprep.subr.mxu0 %v317
        %2845 = vmatpush1.xpose.msra.mxu0 %v316
        %2846 = vmatprep.subr.mxu0 %v509
        %2847 = vmatpush1.xpose.msra.mxu0 %v508
        %2848 = vmatprep.subr.mxu0 0.0
        %2849 = vmatpush1.xpose.msra.mxu0 0.0
        %2850 = vmatprep.subr.mxu0 0.0
        %2851 = vmatpush1.xpose.msra.mxu0 0.0
        %2852 = vmatprep.subr.mxu0 0.0
        %2853 = vmatpush1.xpose.msra.mxu0 0.0
        %2854 = vmatprep.subr.mxu0 0.0
        %2855 = vmatpush1.xpose.msra.mxu0 0.0
        %2856 = vmatprep.subr.mxu0 0.0
        %2857 = vmatpush1.xpose.msra.mxu0 0.0
        %2858 = vmatprep.subr.mxu0 0.0
        %2859 = vmatpush1.xpose.msra.mxu0 0.0
        %2860 = vmatprep.subr.mxu0 0.0
        %2861 = vmatpush1.xpose.msra.mxu0 0.0
        %2862 = vmatprep.subr.mxu0 0.0
        %2863 = vmatpush1.xpose.msra.mxu0 0.0
        %2864 = vmatprep.subr.mxu0 0.0
        %2865 = vmatpush1.xpose.msra.mxu0 0.0
        %2866 = vmatprep.subr.mxu0 0.0
        %2867 = vmatpush1.xpose.msra.mxu0 0.0
        %2868 = vmatprep.subr.mxu0 0.0
        %2869 = vmatpush1.xpose.msra.mxu0 0.0
        %2870 = vmatprep.subr.mxu0 0.0
        %2871 = vmatpush1.xpose.msra.mxu0 0.0
        %2872 = vmatprep.subr.mxu0 0.0
        %2873 = vmatpush1.xpose.msra.mxu0 0.0
        %2874 = vmatprep.subr.mxu0 0.0
        %2875 = vmatpush1.xpose.msra.mxu0 0.0
        %2876 = vmatprep.subr.mxu0 0.0
        %2877 = vmatpush1.xpose.msra.mxu0 0.0
        %2878 = vmatprep.subr.mxu0 0.0
        %2879 = vmatpush1.xpose.msra.mxu0 0.0
        %2880 = vmatprep.subr.mxu0 0.0
        %2881 = vmatpush1.xpose.msra.mxu0 0.0
        %2882 = vmatprep.subr.mxu0 0.0
        %2883 = vmatpush1.xpose.msra.mxu0 0.0
        %2884 = vmatprep.subr.mxu0 0.0
        %2885 = vmatpush1.xpose.msra.mxu0 0.0
        %2886 = vmatprep.subr.mxu0 0.0
        %2887 = vmatpush1.xpose.msra.mxu0 0.0
        %2888 = vmatprep.subr.mxu0 0.0
        %2889 = vmatpush1.xpose.msra.mxu0 0.0
        %2890 = vmatprep.subr.mxu0 0.0
        %2891 = vmatpush1.xpose.msra.mxu0 0.0
        %2892 = vmatprep.subr.mxu0 0.0
        %2893 = vmatpush1.xpose.msra.mxu0 0.0
        %2894 = vmatprep.subr.mxu0 0.0
        %2895 = vmatpush1.xpose.msra.mxu0 0.0
        %2896 = vmatprep.subr.mxu0 0.0
        %2897 = vmatpush1.xpose.msra.mxu0 0.0
        %2898 = vmatprep.subr.mxu0 0.0
        %2899 = vmatpush1.xpose.msra.mxu0 0.0
        %2900 = vmatprep.subr.mxu0 0.0
        %2901 = vmatpush1.xpose.msra.mxu0 0.0
        %2902 = vmatprep.subr.mxu0 0.0
        %2903 = vmatpush1.xpose.msra.mxu0 0.0
        %2904 = vmatprep.subr.mxu0 0.0
        %2905 = vmatpush1.xpose.msra.mxu0 0.0
        %2906 = vmatprep.subr.mxu0 0.0
        %2907 = vmatpush1.xpose.msra.mxu0 0.0
        %2908 = vmatprep.mubr.f32.mxu0 %v867
        %2909 = vmatmul.mubr.f32.gmra.mrb[0].mxu0 %v859
        %v2910 = vpop.f32.mrb[0].mxu0
        %v2911 = vadd.f32 %v2841, %v2910
        %v2912 = vpop.f32.mrb[0].mxu0
        %2913 = vdwg.mxu0
        %2914 = vmatprep.subr.mxu0 %v319
        %2915 = vmatpush1.xpose.msra.mxu0 %v318
        %2916 = vmatprep.subr.mxu0 %v511
        %2917 = vmatpush1.xpose.msra.mxu0 %v510
        %2918 = vmatprep.subr.mxu0 0.0
        %2919 = vmatpush1.xpose.msra.mxu0 0.0
        %2920 = vmatprep.subr.mxu0 0.0
        %2921 = vmatpush1.xpose.msra.mxu0 0.0
        %2922 = vmatprep.subr.mxu0 0.0
        %2923 = vmatpush1.xpose.msra.mxu0 0.0
        %2924 = vmatprep.subr.mxu0 0.0
        %2925 = vmatpush1.xpose.msra.mxu0 0.0
        %2926 = vmatprep.subr.mxu0 0.0
        %2927 = vmatpush1.xpose.msra.mxu0 0.0
        %2928 = vmatprep.subr.mxu0 0.0
        %2929 = vmatpush1.xpose.msra.mxu0 0.0
        %2930 = vmatprep.subr.mxu0 0.0
        %2931 = vmatpush1.xpose.msra.mxu0 0.0
        %2932 = vmatprep.subr.mxu0 0.0
        %2933 = vmatpush1.xpose.msra.mxu0 0.0
        %2934 = vmatprep.subr.mxu0 0.0
        %2935 = vmatpush1.xpose.msra.mxu0 0.0
        %2936 = vmatprep.subr.mxu0 0.0
        %2937 = vmatpush1.xpose.msra.mxu0 0.0
        %2938 = vmatprep.subr.mxu0 0.0
        %2939 = vmatpush1.xpose.msra.mxu0 0.0
        %2940 = vmatprep.subr.mxu0 0.0
        %2941 = vmatpush1.xpose.msra.mxu0 0.0
        %2942 = vmatprep.subr.mxu0 0.0
        %2943 = vmatpush1.xpose.msra.mxu0 0.0
        %2944 = vmatprep.subr.mxu0 0.0
        %2945 = vmatpush1.xpose.msra.mxu0 0.0
        %2946 = vmatprep.subr.mxu0 0.0
        %2947 = vmatpush1.xpose.msra.mxu0 0.0
        %2948 = vmatprep.subr.mxu0 0.0
        %2949 = vmatpush1.xpose.msra.mxu0 0.0
        %2950 = vmatprep.subr.mxu0 0.0
        %2951 = vmatpush1.xpose.msra.mxu0 0.0
        %2952 = vmatprep.subr.mxu0 0.0
        %2953 = vmatpush1.xpose.msra.mxu0 0.0
        %2954 = vmatprep.subr.mxu0 0.0
        %2955 = vmatpush1.xpose.msra.mxu0 0.0
        %2956 = vmatprep.subr.mxu0 0.0
        %2957 = vmatpush1.xpose.msra.mxu0 0.0
        %2958 = vmatprep.subr.mxu0 0.0
        %2959 = vmatpush1.xpose.msra.mxu0 0.0
        %2960 = vmatprep.subr.mxu0 0.0
        %2961 = vmatpush1.xpose.msra.mxu0 0.0
        %2962 = vmatprep.subr.mxu0 0.0
        %2963 = vmatpush1.xpose.msra.mxu0 0.0
        %2964 = vmatprep.subr.mxu0 0.0
        %2965 = vmatpush1.xpose.msra.mxu0 0.0
        %2966 = vmatprep.subr.mxu0 0.0
        %2967 = vmatpush1.xpose.msra.mxu0 0.0
        %2968 = vmatprep.subr.mxu0 0.0
        %2969 = vmatpush1.xpose.msra.mxu0 0.0
        %2970 = vmatprep.subr.mxu0 0.0
        %2971 = vmatpush1.xpose.msra.mxu0 0.0
        %2972 = vmatprep.subr.mxu0 0.0
        %2973 = vmatpush1.xpose.msra.mxu0 0.0
        %2974 = vmatprep.subr.mxu0 0.0
        %2975 = vmatpush1.xpose.msra.mxu0 0.0
        %2976 = vmatprep.subr.mxu0 0.0
        %2977 = vmatpush1.xpose.msra.mxu0 0.0
        %2978 = vmatprep.mubr.f32.mxu0 %v868
        %2979 = vmatmul.mubr.f32.gmra.mrb[0].mxu0 %v866
        %v2980 = vpop.f32.mrb[0].mxu0
        %v2981 = vadd.f32 %v2911, %v2980
        %v2982 = vpop.f32.mrb[0].mxu0
        %2983 = vdwg.mxu0
        %2984 = vmatprep.subr.mxu0 %v321
        %2985 = vmatpush1.xpose.msra.mxu0 %v320
        %2986 = vmatprep.subr.mxu0 %v513
        %2987 = vmatpush1.xpose.msra.mxu0 %v512
        %2988 = vmatprep.subr.mxu0 0.0
        %2989 = vmatpush1.xpose.msra.mxu0 0.0
        %2990 = vmatprep.subr.mxu0 0.0
        %2991 = vmatpush1.xpose.msra.mxu0 0.0
        %2992 = vmatprep.subr.mxu0 0.0
        %2993 = vmatpush1.xpose.msra.mxu0 0.0
        %2994 = vmatprep.subr.mxu0 0.0
        %2995 = vmatpush1.xpose.msra.mxu0 0.0
        %2996 = vmatprep.subr.mxu0 0.0
        %2997 = vmatpush1.xpose.msra.mxu0 0.0
        %2998 = vmatprep.subr.mxu0 0.0
        %2999 = vmatpush1.xpose.msra.mxu0 0.0
        %3000 = vmatprep.subr.mxu0 0.0
        %3001 = vmatpush1.xpose.msra.mxu0 0.0
        %3002 = vmatprep.subr.mxu0 0.0
        %3003 = vmatpush1.xpose.msra.mxu0 0.0
        %3004 = vmatprep.subr.mxu0 0.0
        %3005 = vmatpush1.xpose.msra.mxu0 0.0
        %3006 = vmatprep.subr.mxu0 0.0
        %3007 = vmatpush1.xpose.msra.mxu0 0.0
        %3008 = vmatprep.subr.mxu0 0.0
        %3009 = vmatpush1.xpose.msra.mxu0 0.0
        %3010 = vmatprep.subr.mxu0 0.0
        %3011 = vmatpush1.xpose.msra.mxu0 0.0
        %3012 = vmatprep.subr.mxu0 0.0
        %3013 = vmatpush1.xpose.msra.mxu0 0.0
        %3014 = vmatprep.subr.mxu0 0.0
        %3015 = vmatpush1.xpose.msra.mxu0 0.0
        %3016 = vmatprep.subr.mxu0 0.0
        %3017 = vmatpush1.xpose.msra.mxu0 0.0
        %3018 = vmatprep.subr.mxu0 0.0
        %3019 = vmatpush1.xpose.msra.mxu0 0.0
        %3020 = vmatprep.subr.mxu0 0.0
        %3021 = vmatpush1.xpose.msra.mxu0 0.0
        %3022 = vmatprep.subr.mxu0 0.0
        %3023 = vmatpush1.xpose.msra.mxu0 0.0
        %3024 = vmatprep.subr.mxu0 0.0
        %3025 = vmatpush1.xpose.msra.mxu0 0.0
        %3026 = vmatprep.subr.mxu0 0.0
        %3027 = vmatpush1.xpose.msra.mxu0 0.0
        %3028 = vmatprep.subr.mxu0 0.0
        %3029 = vmatpush1.xpose.msra.mxu0 0.0
        %3030 = vmatprep.subr.mxu0 0.0
        %3031 = vmatpush1.xpose.msra.mxu0 0.0
        %3032 = vmatprep.subr.mxu0 0.0
        %3033 = vmatpush1.xpose.msra.mxu0 0.0
        %3034 = vmatprep.subr.mxu0 0.0
        %3035 = vmatpush1.xpose.msra.mxu0 0.0
        %3036 = vmatprep.subr.mxu0 0.0
        %3037 = vmatpush1.xpose.msra.mxu0 0.0
        %3038 = vmatprep.subr.mxu0 0.0
        %3039 = vmatpush1.xpose.msra.mxu0 0.0
        %3040 = vmatprep.subr.mxu0 0.0
        %3041 = vmatpush1.xpose.msra.mxu0 0.0
        %3042 = vmatprep.subr.mxu0 0.0
        %3043 = vmatpush1.xpose.msra.mxu0 0.0
        %3044 = vmatprep.subr.mxu0 0.0
        %3045 = vmatpush1.xpose.msra.mxu0 0.0
        %3046 = vmatprep.subr.mxu0 0.0
        %3047 = vmatpush1.xpose.msra.mxu0 0.0
        %3048 = vmatprep.mubr.f32.mxu0 %v884
        %3049 = vmatmul.mubr.f32.gmra.mrb[0].mxu0 %v876
        %v3050 = vpop.f32.mrb[0].mxu0
        %v3051 = vadd.f32 %v2981, %v3050
        %v3052 = vpop.f32.mrb[0].mxu0
        %3053 = vdwg.mxu0
        %3054 = vmatprep.subr.mxu0 %v323
        %3055 = vmatpush1.xpose.msra.mxu0 %v322
        %3056 = vmatprep.subr.mxu0 %v515
        %3057 = vmatpush1.xpose.msra.mxu0 %v514
        %3058 = vmatprep.subr.mxu0 0.0
        %3059 = vmatpush1.xpose.msra.mxu0 0.0
        %3060 = vmatprep.subr.mxu0 0.0
        %3061 = vmatpush1.xpose.msra.mxu0 0.0
        %3062 = vmatprep.subr.mxu0 0.0
        %3063 = vmatpush1.xpose.msra.mxu0 0.0
        %3064 = vmatprep.subr.mxu0 0.0
        %3065 = vmatpush1.xpose.msra.mxu0 0.0
        %3066 = vmatprep.subr.mxu0 0.0
        %3067 = vmatpush1.xpose.msra.mxu0 0.0
        %3068 = vmatprep.subr.mxu0 0.0
        %3069 = vmatpush1.xpose.msra.mxu0 0.0
        %3070 = vmatprep.subr.mxu0 0.0
        %3071 = vmatpush1.xpose.msra.mxu0 0.0
        %3072 = vmatprep.subr.mxu0 0.0
        %3073 = vmatpush1.xpose.msra.mxu0 0.0
        %3074 = vmatprep.subr.mxu0 0.0
        %3075 = vmatpush1.xpose.msra.mxu0 0.0
        %3076 = vmatprep.subr.mxu0 0.0
        %3077 = vmatpush1.xpose.msra.mxu0 0.0
        %3078 = vmatprep.subr.mxu0 0.0
        %3079 = vmatpush1.xpose.msra.mxu0 0.0
        %3080 = vmatprep.subr.mxu0 0.0
        %3081 = vmatpush1.xpose.msra.mxu0 0.0
        %3082 = vmatprep.subr.mxu0 0.0
        %3083 = vmatpush1.xpose.msra.mxu0 0.0
        %3084 = vmatprep.subr.mxu0 0.0
        %3085 = vmatpush1.xpose.msra.mxu0 0.0
        %3086 = vmatprep.subr.mxu0 0.0
        %3087 = vmatpush1.xpose.msra.mxu0 0.0
        %3088 = vmatprep.subr.mxu0 0.0
        %3089 = vmatpush1.xpose.msra.mxu0 0.0
        %3090 = vmatprep.subr.mxu0 0.0
        %3091 = vmatpush1.xpose.msra.mxu0 0.0
        %3092 = vmatprep.subr.mxu0 0.0
        %3093 = vmatpush1.xpose.msra.mxu0 0.0
        %3094 = vmatprep.subr.mxu0 0.0
        %3095 = vmatpush1.xpose.msra.mxu0 0.0
        %3096 = vmatprep.subr.mxu0 0.0
        %3097 = vmatpush1.xpose.msra.mxu0 0.0
        %3098 = vmatprep.subr.mxu0 0.0
        %3099 = vmatpush1.xpose.msra.mxu0 0.0
        %3100 = vmatprep.subr.mxu0 0.0
        %3101 = vmatpush1.xpose.msra.mxu0 0.0
        %3102 = vmatprep.subr.mxu0 0.0
        %3103 = vmatpush1.xpose.msra.mxu0 0.0
        %3104 = vmatprep.subr.mxu0 0.0
        %3105 = vmatpush1.xpose.msra.mxu0 0.0
        %3106 = vmatprep.subr.mxu0 0.0
        %3107 = vmatpush1.xpose.msra.mxu0 0.0
        %3108 = vmatprep.subr.mxu0 0.0
        %3109 = vmatpush1.xpose.msra.mxu0 0.0
        %3110 = vmatprep.subr.mxu0 0.0
        %3111 = vmatpush1.xpose.msra.mxu0 0.0
        %3112 = vmatprep.subr.mxu0 0.0
        %3113 = vmatpush1.xpose.msra.mxu0 0.0
        %3114 = vmatprep.subr.mxu0 0.0
        %3115 = vmatpush1.xpose.msra.mxu0 0.0
        %3116 = vmatprep.subr.mxu0 0.0
        %3117 = vmatpush1.xpose.msra.mxu0 0.0
        %3118 = vmatprep.mubr.f32.mxu0 %v885
        %3119 = vmatmul.mubr.f32.gmra.mrb[0].mxu0 %v883
        %v3120 = vpop.f32.mrb[0].mxu0
        %v3121 = vadd.f32 %v3051, %v3120
        %v3122 = vpop.f32.mrb[0].mxu0
        %3123 = vdwg.mxu0
        %3124 = vmatprep.subr.mxu0 %v325
        %3125 = vmatpush1.xpose.msra.mxu0 %v324
        %3126 = vmatprep.subr.mxu0 %v517
        %3127 = vmatpush1.xpose.msra.mxu0 %v516
        %3128 = vmatprep.subr.mxu0 0.0
        %3129 = vmatpush1.xpose.msra.mxu0 0.0
        %3130 = vmatprep.subr.mxu0 0.0
        %3131 = vmatpush1.xpose.msra.mxu0 0.0
        %3132 = vmatprep.subr.mxu0 0.0
        %3133 = vmatpush1.xpose.msra.mxu0 0.0
        %3134 = vmatprep.subr.mxu0 0.0
        %3135 = vmatpush1.xpose.msra.mxu0 0.0
        %3136 = vmatprep.subr.mxu0 0.0
        %3137 = vmatpush1.xpose.msra.mxu0 0.0
        %3138 = vmatprep.subr.mxu0 0.0
        %3139 = vmatpush1.xpose.msra.mxu0 0.0
        %3140 = vmatprep.subr.mxu0 0.0
        %3141 = vmatpush1.xpose.msra.mxu0 0.0
        %3142 = vmatprep.subr.mxu0 0.0
        %3143 = vmatpush1.xpose.msra.mxu0 0.0
        %3144 = vmatprep.subr.mxu0 0.0
        %3145 = vmatpush1.xpose.msra.mxu0 0.0
        %3146 = vmatprep.subr.mxu0 0.0
        %3147 = vmatpush1.xpose.msra.mxu0 0.0
        %3148 = vmatprep.subr.mxu0 0.0
        %3149 = vmatpush1.xpose.msra.mxu0 0.0
        %3150 = vmatprep.subr.mxu0 0.0
        %3151 = vmatpush1.xpose.msra.mxu0 0.0
        %3152 = vmatprep.subr.mxu0 0.0
        %3153 = vmatpush1.xpose.msra.mxu0 0.0
        %3154 = vmatprep.subr.mxu0 0.0
        %3155 = vmatpush1.xpose.msra.mxu0 0.0
        %3156 = vmatprep.subr.mxu0 0.0
        %3157 = vmatpush1.xpose.msra.mxu0 0.0
        %3158 = vmatprep.subr.mxu0 0.0
        %3159 = vmatpush1.xpose.msra.mxu0 0.0
        %3160 = vmatprep.subr.mxu0 0.0
        %3161 = vmatpush1.xpose.msra.mxu0 0.0
        %3162 = vmatprep.subr.mxu0 0.0
        %3163 = vmatpush1.xpose.msra.mxu0 0.0
        %3164 = vmatprep.subr.mxu0 0.0
        %3165 = vmatpush1.xpose.msra.mxu0 0.0
        %3166 = vmatprep.subr.mxu0 0.0
        %3167 = vmatpush1.xpose.msra.mxu0 0.0
        %3168 = vmatprep.subr.mxu0 0.0
        %3169 = vmatpush1.xpose.msra.mxu0 0.0
        %3170 = vmatprep.subr.mxu0 0.0
        %3171 = vmatpush1.xpose.msra.mxu0 0.0
        %3172 = vmatprep.subr.mxu0 0.0
        %3173 = vmatpush1.xpose.msra.mxu0 0.0
        %3174 = vmatprep.subr.mxu0 0.0
        %3175 = vmatpush1.xpose.msra.mxu0 0.0
        %3176 = vmatprep.subr.mxu0 0.0
        %3177 = vmatpush1.xpose.msra.mxu0 0.0
        %3178 = vmatprep.subr.mxu0 0.0
        %3179 = vmatpush1.xpose.msra.mxu0 0.0
        %3180 = vmatprep.subr.mxu0 0.0
        %3181 = vmatpush1.xpose.msra.mxu0 0.0
        %3182 = vmatprep.subr.mxu0 0.0
        %3183 = vmatpush1.xpose.msra.mxu0 0.0
        %3184 = vmatprep.subr.mxu0 0.0
        %3185 = vmatpush1.xpose.msra.mxu0 0.0
        %3186 = vmatprep.subr.mxu0 0.0
        %3187 = vmatpush1.xpose.msra.mxu0 0.0
        %3188 = vmatprep.mubr.f32.mxu0 %v901
        %3189 = vmatmul.mubr.f32.gmra.mrb[0].mxu0 %v893
        %v3190 = vpop.f32.mrb[0].mxu0
        %v3191 = vadd.f32 %v3121, %v3190
        %v3192 = vpop.f32.mrb[0].mxu0
        %3193 = vdwg.mxu0
        %3194 = vmatprep.subr.mxu0 %v327
        %3195 = vmatpush1.xpose.msra.mxu0 %v326
        %3196 = vmatprep.subr.mxu0 %v519
        %3197 = vmatpush1.xpose.msra.mxu0 %v518
        %3198 = vmatprep.subr.mxu0 0.0
        %3199 = vmatpush1.xpose.msra.mxu0 0.0
        %3200 = vmatprep.subr.mxu0 0.0
        %3201 = vmatpush1.xpose.msra.mxu0 0.0
        %3202 = vmatprep.subr.mxu0 0.0
        %3203 = vmatpush1.xpose.msra.mxu0 0.0
        %3204 = vmatprep.subr.mxu0 0.0
        %3205 = vmatpush1.xpose.msra.mxu0 0.0
        %3206 = vmatprep.subr.mxu0 0.0
        %3207 = vmatpush1.xpose.msra.mxu0 0.0
        %3208 = vmatprep.subr.mxu0 0.0
        %3209 = vmatpush1.xpose.msra.mxu0 0.0
        %3210 = vmatprep.subr.mxu0 0.0
        %3211 = vmatpush1.xpose.msra.mxu0 0.0
        %3212 = vmatprep.subr.mxu0 0.0
        %3213 = vmatpush1.xpose.msra.mxu0 0.0
        %3214 = vmatprep.subr.mxu0 0.0
        %3215 = vmatpush1.xpose.msra.mxu0 0.0
        %3216 = vmatprep.subr.mxu0 0.0
        %3217 = vmatpush1.xpose.msra.mxu0 0.0
        %3218 = vmatprep.subr.mxu0 0.0
        %3219 = vmatpush1.xpose.msra.mxu0 0.0
        %3220 = vmatprep.subr.mxu0 0.0
        %3221 = vmatpush1.xpose.msra.mxu0 0.0
        %3222 = vmatprep.subr.mxu0 0.0
        %3223 = vmatpush1.xpose.msra.mxu0 0.0
        %3224 = vmatprep.subr.mxu0 0.0
        %3225 = vmatpush1.xpose.msra.mxu0 0.0
        %3226 = vmatprep.subr.mxu0 0.0
        %3227 = vmatpush1.xpose.msra.mxu0 0.0
        %3228 = vmatprep.subr.mxu0 0.0
        %3229 = vmatpush1.xpose.msra.mxu0 0.0
        %3230 = vmatprep.subr.mxu0 0.0
        %3231 = vmatpush1.xpose.msra.mxu0 0.0
        %3232 = vmatprep.subr.mxu0 0.0
        %3233 = vmatpush1.xpose.msra.mxu0 0.0
        %3234 = vmatprep.subr.mxu0 0.0
        %3235 = vmatpush1.xpose.msra.mxu0 0.0
        %3236 = vmatprep.subr.mxu0 0.0
        %3237 = vmatpush1.xpose.msra.mxu0 0.0
        %3238 = vmatprep.subr.mxu0 0.0
        %3239 = vmatpush1.xpose.msra.mxu0 0.0
        %3240 = vmatprep.subr.mxu0 0.0
        %3241 = vmatpush1.xpose.msra.mxu0 0.0
        %3242 = vmatprep.subr.mxu0 0.0
        %3243 = vmatpush1.xpose.msra.mxu0 0.0
        %3244 = vmatprep.subr.mxu0 0.0
        %3245 = vmatpush1.xpose.msra.mxu0 0.0
        %3246 = vmatprep.subr.mxu0 0.0
        %3247 = vmatpush1.xpose.msra.mxu0 0.0
        %3248 = vmatprep.subr.mxu0 0.0
        %3249 = vmatpush1.xpose.msra.mxu0 0.0
        %3250 = vmatprep.subr.mxu0 0.0
        %3251 = vmatpush1.xpose.msra.mxu0 0.0
        %3252 = vmatprep.subr.mxu0 0.0
        %3253 = vmatpush1.xpose.msra.mxu0 0.0
        %3254 = vmatprep.subr.mxu0 0.0
        %3255 = vmatpush1.xpose.msra.mxu0 0.0
        %3256 = vmatprep.subr.mxu0 0.0
        %3257 = vmatpush1.xpose.msra.mxu0 0.0
        %3258 = vmatprep.mubr.f32.mxu0 %v902
        %3259 = vmatmul.mubr.f32.gmra.mrb[0].mxu0 %v900
        %v3260 = vpop.f32.mrb[0].mxu0
        %v3261 = vadd.f32 %v3191, %v3260
        %v3262 = vpop.f32.mrb[0].mxu0
        %3263 = vdwg.mxu0
        %3264 = vmatprep.subr.mxu0 %v329
        %3265 = vmatpush1.xpose.msra.mxu0 %v328
        %3266 = vmatprep.subr.mxu0 %v521
        %3267 = vmatpush1.xpose.msra.mxu0 %v520
        %3268 = vmatprep.subr.mxu0 0.0
        %3269 = vmatpush1.xpose.msra.mxu0 0.0
        %3270 = vmatprep.subr.mxu0 0.0
        %3271 = vmatpush1.xpose.msra.mxu0 0.0
        %3272 = vmatprep.subr.mxu0 0.0
        %3273 = vmatpush1.xpose.msra.mxu0 0.0
        %3274 = vmatprep.subr.mxu0 0.0
        %3275 = vmatpush1.xpose.msra.mxu0 0.0
        %3276 = vmatprep.subr.mxu0 0.0
        %3277 = vmatpush1.xpose.msra.mxu0 0.0
        %3278 = vmatprep.subr.mxu0 0.0
        %3279 = vmatpush1.xpose.msra.mxu0 0.0
        %3280 = vmatprep.subr.mxu0 0.0
        %3281 = vmatpush1.xpose.msra.mxu0 0.0
        %3282 = vmatprep.subr.mxu0 0.0
        %3283 = vmatpush1.xpose.msra.mxu0 0.0
        %3284 = vmatprep.subr.mxu0 0.0
        %3285 = vmatpush1.xpose.msra.mxu0 0.0
        %3286 = vmatprep.subr.mxu0 0.0
        %3287 = vmatpush1.xpose.msra.mxu0 0.0
        %3288 = vmatprep.subr.mxu0 0.0
        %3289 = vmatpush1.xpose.msra.mxu0 0.0
        %3290 = vmatprep.subr.mxu0 0.0
        %3291 = vmatpush1.xpose.msra.mxu0 0.0
        %3292 = vmatprep.subr.mxu0 0.0
        %3293 = vmatpush1.xpose.msra.mxu0 0.0
        %3294 = vmatprep.subr.mxu0 0.0
        %3295 = vmatpush1.xpose.msra.mxu0 0.0
        %3296 = vmatprep.subr.mxu0 0.0
        %3297 = vmatpush1.xpose.msra.mxu0 0.0
        %3298 = vmatprep.subr.mxu0 0.0
        %3299 = vmatpush1.xpose.msra.mxu0 0.0
        %3300 = vmatprep.subr.mxu0 0.0
        %3301 = vmatpush1.xpose.msra.mxu0 0.0
        %3302 = vmatprep.subr.mxu0 0.0
        %3303 = vmatpush1.xpose.msra.mxu0 0.0
        %3304 = vmatprep.subr.mxu0 0.0
        %3305 = vmatpush1.xpose.msra.mxu0 0.0
        %3306 = vmatprep.subr.mxu0 0.0
        %3307 = vmatpush1.xpose.msra.mxu0 0.0
        %3308 = vmatprep.subr.mxu0 0.0
        %3309 = vmatpush1.xpose.msra.mxu0 0.0
        %3310 = vmatprep.subr.mxu0 0.0
        %3311 = vmatpush1.xpose.msra.mxu0 0.0
        %3312 = vmatprep.subr.mxu0 0.0
        %3313 = vmatpush1.xpose.msra.mxu0 0.0
        %3314 = vmatprep.subr.mxu0 0.0
        %3315 = vmatpush1.xpose.msra.mxu0 0.0
        %3316 = vmatprep.subr.mxu0 0.0
        %3317 = vmatpush1.xpose.msra.mxu0 0.0
        %3318 = vmatprep.subr.mxu0 0.0
        %3319 = vmatpush1.xpose.msra.mxu0 0.0
        %3320 = vmatprep.subr.mxu0 0.0
        %3321 = vmatpush1.xpose.msra.mxu0 0.0
        %3322 = vmatprep.subr.mxu0 0.0
        %3323 = vmatpush1.xpose.msra.mxu0 0.0
        %3324 = vmatprep.subr.mxu0 0.0
        %3325 = vmatpush1.xpose.msra.mxu0 0.0
        %3326 = vmatprep.subr.mxu0 0.0
        %3327 = vmatpush1.xpose.msra.mxu0 0.0
        %3328 = vmatprep.mubr.f32.mxu0 %v918
        %3329 = vmatmul.mubr.f32.gmra.mrb[0].mxu0 %v910
        %v3330 = vpop.f32.mrb[0].mxu0
        %v3331 = vadd.f32 %v3261, %v3330
        %v3332 = vpop.f32.mrb[0].mxu0
        %3333 = vdwg.mxu0
        %3334 = vmatprep.subr.mxu0 %v331
        %3335 = vmatpush1.xpose.msra.mxu0 %v330
        %3336 = vmatprep.subr.mxu0 %v523
        %3337 = vmatpush1.xpose.msra.mxu0 %v522
        %3338 = vmatprep.subr.mxu0 0.0
        %3339 = vmatpush1.xpose.msra.mxu0 0.0
        %3340 = vmatprep.subr.mxu0 0.0
        %3341 = vmatpush1.xpose.msra.mxu0 0.0
        %3342 = vmatprep.subr.mxu0 0.0
        %3343 = vmatpush1.xpose.msra.mxu0 0.0
        %3344 = vmatprep.subr.mxu0 0.0
        %3345 = vmatpush1.xpose.msra.mxu0 0.0
        %3346 = vmatprep.subr.mxu0 0.0
        %3347 = vmatpush1.xpose.msra.mxu0 0.0
        %3348 = vmatprep.subr.mxu0 0.0
        %3349 = vmatpush1.xpose.msra.mxu0 0.0
        %3350 = vmatprep.subr.mxu0 0.0
        %3351 = vmatpush1.xpose.msra.mxu0 0.0
        %3352 = vmatprep.subr.mxu0 0.0
        %3353 = vmatpush1.xpose.msra.mxu0 0.0
        %3354 = vmatprep.subr.mxu0 0.0
        %3355 = vmatpush1.xpose.msra.mxu0 0.0
        %3356 = vmatprep.subr.mxu0 0.0
        %3357 = vmatpush1.xpose.msra.mxu0 0.0
        %3358 = vmatprep.subr.mxu0 0.0
        %3359 = vmatpush1.xpose.msra.mxu0 0.0
        %3360 = vmatprep.subr.mxu0 0.0
        %3361 = vmatpush1.xpose.msra.mxu0 0.0
        %3362 = vmatprep.subr.mxu0 0.0
        %3363 = vmatpush1.xpose.msra.mxu0 0.0
        %3364 = vmatprep.subr.mxu0 0.0
        %3365 = vmatpush1.xpose.msra.mxu0 0.0
        %3366 = vmatprep.subr.mxu0 0.0
        %3367 = vmatpush1.xpose.msra.mxu0 0.0
        %3368 = vmatprep.subr.mxu0 0.0
        %3369 = vmatpush1.xpose.msra.mxu0 0.0
        %3370 = vmatprep.subr.mxu0 0.0
        %3371 = vmatpush1.xpose.msra.mxu0 0.0
        %3372 = vmatprep.subr.mxu0 0.0
        %3373 = vmatpush1.xpose.msra.mxu0 0.0
        %3374 = vmatprep.subr.mxu0 0.0
        %3375 = vmatpush1.xpose.msra.mxu0 0.0
        %3376 = vmatprep.subr.mxu0 0.0
        %3377 = vmatpush1.xpose.msra.mxu0 0.0
        %3378 = vmatprep.subr.mxu0 0.0
        %3379 = vmatpush1.xpose.msra.mxu0 0.0
        %3380 = vmatprep.subr.mxu0 0.0
        %3381 = vmatpush1.xpose.msra.mxu0 0.0
        %3382 = vmatprep.subr.mxu0 0.0
        %3383 = vmatpush1.xpose.msra.mxu0 0.0
        %3384 = vmatprep.subr.mxu0 0.0
        %3385 = vmatpush1.xpose.msra.mxu0 0.0
        %3386 = vmatprep.subr.mxu0 0.0
        %3387 = vmatpush1.xpose.msra.mxu0 0.0
        %3388 = vmatprep.subr.mxu0 0.0
        %3389 = vmatpush1.xpose.msra.mxu0 0.0
        %3390 = vmatprep.subr.mxu0 0.0
        %3391 = vmatpush1.xpose.msra.mxu0 0.0
        %3392 = vmatprep.subr.mxu0 0.0
        %3393 = vmatpush1.xpose.msra.mxu0 0.0
        %3394 = vmatprep.subr.mxu0 0.0
        %3395 = vmatpush1.xpose.msra.mxu0 0.0
        %3396 = vmatprep.subr.mxu0 0.0
        %3397 = vmatpush1.xpose.msra.mxu0 0.0
        %3398 = vmatprep.mubr.f32.mxu0 %v919
        %3399 = vmatmul.mubr.f32.gmra.mrb[0].mxu0 %v917
        %v3400 = vpop.f32.mrb[0].mxu0
        %v3401 = vadd.f32 %v3331, %v3400
        %v3402 = vpop.f32.mrb[0].mxu0
        %3403 = vdwg.mxu0
        %3404 = vmatprep.subr.mxu0 %v333
        %3405 = vmatpush1.xpose.msra.mxu0 %v332
        %3406 = vmatprep.subr.mxu0 %v525
        %3407 = vmatpush1.xpose.msra.mxu0 %v524
        %3408 = vmatprep.subr.mxu0 0.0
        %3409 = vmatpush1.xpose.msra.mxu0 0.0
        %3410 = vmatprep.subr.mxu0 0.0
        %3411 = vmatpush1.xpose.msra.mxu0 0.0
        %3412 = vmatprep.subr.mxu0 0.0
        %3413 = vmatpush1.xpose.msra.mxu0 0.0
        %3414 = vmatprep.subr.mxu0 0.0
        %3415 = vmatpush1.xpose.msra.mxu0 0.0
        %3416 = vmatprep.subr.mxu0 0.0
        %3417 = vmatpush1.xpose.msra.mxu0 0.0
        %3418 = vmatprep.subr.mxu0 0.0
        %3419 = vmatpush1.xpose.msra.mxu0 0.0
        %3420 = vmatprep.subr.mxu0 0.0
        %3421 = vmatpush1.xpose.msra.mxu0 0.0
        %3422 = vmatprep.subr.mxu0 0.0
        %3423 = vmatpush1.xpose.msra.mxu0 0.0
        %3424 = vmatprep.subr.mxu0 0.0
        %3425 = vmatpush1.xpose.msra.mxu0 0.0
        %3426 = vmatprep.subr.mxu0 0.0
        %3427 = vmatpush1.xpose.msra.mxu0 0.0
        %3428 = vmatprep.subr.mxu0 0.0
        %3429 = vmatpush1.xpose.msra.mxu0 0.0
        %3430 = vmatprep.subr.mxu0 0.0
        %3431 = vmatpush1.xpose.msra.mxu0 0.0
        %3432 = vmatprep.subr.mxu0 0.0
        %3433 = vmatpush1.xpose.msra.mxu0 0.0
        %3434 = vmatprep.subr.mxu0 0.0
        %3435 = vmatpush1.xpose.msra.mxu0 0.0
        %3436 = vmatprep.subr.mxu0 0.0
        %3437 = vmatpush1.xpose.msra.mxu0 0.0
        %3438 = vmatprep.subr.mxu0 0.0
        %3439 = vmatpush1.xpose.msra.mxu0 0.0
        %3440 = vmatprep.subr.mxu0 0.0
        %3441 = vmatpush1.xpose.msra.mxu0 0.0
        %3442 = vmatprep.subr.mxu0 0.0
        %3443 = vmatpush1.xpose.msra.mxu0 0.0
        %3444 = vmatprep.subr.mxu0 0.0
        %3445 = vmatpush1.xpose.msra.mxu0 0.0
        %3446 = vmatprep.subr.mxu0 0.0
        %3447 = vmatpush1.xpose.msra.mxu0 0.0
        %3448 = vmatprep.subr.mxu0 0.0
        %3449 = vmatpush1.xpose.msra.mxu0 0.0
        %3450 = vmatprep.subr.mxu0 0.0
        %3451 = vmatpush1.xpose.msra.mxu0 0.0
        %3452 = vmatprep.subr.mxu0 0.0
        %3453 = vmatpush1.xpose.msra.mxu0 0.0
        %3454 = vmatprep.subr.mxu0 0.0
        %3455 = vmatpush1.xpose.msra.mxu0 0.0
        %3456 = vmatprep.subr.mxu0 0.0
        %3457 = vmatpush1.xpose.msra.mxu0 0.0
        %3458 = vmatprep.subr.mxu0 0.0
        %3459 = vmatpush1.xpose.msra.mxu0 0.0
        %3460 = vmatprep.subr.mxu0 0.0
        %3461 = vmatpush1.xpose.msra.mxu0 0.0
        %3462 = vmatprep.subr.mxu0 0.0
        %3463 = vmatpush1.xpose.msra.mxu0 0.0
        %3464 = vmatprep.subr.mxu0 0.0
        %3465 = vmatpush1.xpose.msra.mxu0 0.0
        %3466 = vmatprep.subr.mxu0 0.0
        %3467 = vmatpush1.xpose.msra.mxu0 0.0
        %3468 = vmatprep.mubr.f32.mxu0 %v935
        %3469 = vmatmul.mubr.f32.gmra.mrb[0].mxu0 %v927
        %v3470 = vpop.f32.mrb[0].mxu0
        %v3471 = vadd.f32 %v3401, %v3470
        %v3472 = vpop.f32.mrb[0].mxu0
        %3473 = vdwg.mxu0
        %3474 = vmatprep.subr.mxu0 %v335
        %3475 = vmatpush1.xpose.msra.mxu0 %v334
        %3476 = vmatprep.subr.mxu0 %v527
        %3477 = vmatpush1.xpose.msra.mxu0 %v526
        %3478 = vmatprep.subr.mxu0 0.0
        %3479 = vmatpush1.xpose.msra.mxu0 0.0
        %3480 = vmatprep.subr.mxu0 0.0
        %3481 = vmatpush1.xpose.msra.mxu0 0.0
        %3482 = vmatprep.subr.mxu0 0.0
        %3483 = vmatpush1.xpose.msra.mxu0 0.0
        %3484 = vmatprep.subr.mxu0 0.0
        %3485 = vmatpush1.xpose.msra.mxu0 0.0
        %3486 = vmatprep.subr.mxu0 0.0
        %3487 = vmatpush1.xpose.msra.mxu0 0.0
        %3488 = vmatprep.subr.mxu0 0.0
        %3489 = vmatpush1.xpose.msra.mxu0 0.0
        %3490 = vmatprep.subr.mxu0 0.0
        %3491 = vmatpush1.xpose.msra.mxu0 0.0
        %3492 = vmatprep.subr.mxu0 0.0
        %3493 = vmatpush1.xpose.msra.mxu0 0.0
        %3494 = vmatprep.subr.mxu0 0.0
        %3495 = vmatpush1.xpose.msra.mxu0 0.0
        %3496 = vmatprep.subr.mxu0 0.0
        %3497 = vmatpush1.xpose.msra.mxu0 0.0
        %3498 = vmatprep.subr.mxu0 0.0
        %3499 = vmatpush1.xpose.msra.mxu0 0.0
        %3500 = vmatprep.subr.mxu0 0.0
        %3501 = vmatpush1.xpose.msra.mxu0 0.0
        %3502 = vmatprep.subr.mxu0 0.0
        %3503 = vmatpush1.xpose.msra.mxu0 0.0
        %3504 = vmatprep.subr.mxu0 0.0
        %3505 = vmatpush1.xpose.msra.mxu0 0.0
        %3506 = vmatprep.subr.mxu0 0.0
        %3507 = vmatpush1.xpose.msra.mxu0 0.0
        %3508 = vmatprep.subr.mxu0 0.0
        %3509 = vmatpush1.xpose.msra.mxu0 0.0
        %3510 = vmatprep.subr.mxu0 0.0
        %3511 = vmatpush1.xpose.msra.mxu0 0.0
        %3512 = vmatprep.subr.mxu0 0.0
        %3513 = vmatpush1.xpose.msra.mxu0 0.0
        %3514 = vmatprep.subr.mxu0 0.0
        %3515 = vmatpush1.xpose.msra.mxu0 0.0
        %3516 = vmatprep.subr.mxu0 0.0
        %3517 = vmatpush1.xpose.msra.mxu0 0.0
        %3518 = vmatprep.subr.mxu0 0.0
        %3519 = vmatpush1.xpose.msra.mxu0 0.0
        %3520 = vmatprep.subr.mxu0 0.0
        %3521 = vmatpush1.xpose.msra.mxu0 0.0
        %3522 = vmatprep.subr.mxu0 0.0
        %3523 = vmatpush1.xpose.msra.mxu0 0.0
        %3524 = vmatprep.subr.mxu0 0.0
        %3525 = vmatpush1.xpose.msra.mxu0 0.0
        %3526 = vmatprep.subr.mxu0 0.0
        %3527 = vmatpush1.xpose.msra.mxu0 0.0
        %3528 = vmatprep.subr.mxu0 0.0
        %3529 = vmatpush1.xpose.msra.mxu0 0.0
        %3530 = vmatprep.subr.mxu0 0.0
        %3531 = vmatpush1.xpose.msra.mxu0 0.0
        %3532 = vmatprep.subr.mxu0 0.0
        %3533 = vmatpush1.xpose.msra.mxu0 0.0
        %3534 = vmatprep.subr.mxu0 0.0
        %3535 = vmatpush1.xpose.msra.mxu0 0.0
        %3536 = vmatprep.subr.mxu0 0.0
        %3537 = vmatpush1.xpose.msra.mxu0 0.0
        %3538 = vmatprep.mubr.f32.mxu0 %v936
        %3539 = vmatmul.mubr.f32.gmra.mrb[0].mxu0 %v934
        %v3540 = vpop.f32.mrb[0].mxu0
        %v3541 = vadd.f32 %v3471, %v3540
        %v3542 = vpop.f32.mrb[0].mxu0
        %3543 = vdwg.mxu0
        %3544 = vmatprep.subr.mxu0 %v337
        %3545 = vmatpush1.xpose.msra.mxu0 %v336
        %3546 = vmatprep.subr.mxu0 %v529
        %3547 = vmatpush1.xpose.msra.mxu0 %v528
        %3548 = vmatprep.subr.mxu0 0.0
        %3549 = vmatpush1.xpose.msra.mxu0 0.0
        %3550 = vmatprep.subr.mxu0 0.0
        %3551 = vmatpush1.xpose.msra.mxu0 0.0
        %3552 = vmatprep.subr.mxu0 0.0
        %3553 = vmatpush1.xpose.msra.mxu0 0.0
        %3554 = vmatprep.subr.mxu0 0.0
        %3555 = vmatpush1.xpose.msra.mxu0 0.0
        %3556 = vmatprep.subr.mxu0 0.0
        %3557 = vmatpush1.xpose.msra.mxu0 0.0
        %3558 = vmatprep.subr.mxu0 0.0
        %3559 = vmatpush1.xpose.msra.mxu0 0.0
        %3560 = vmatprep.subr.mxu0 0.0
        %3561 = vmatpush1.xpose.msra.mxu0 0.0
        %3562 = vmatprep.subr.mxu0 0.0
        %3563 = vmatpush1.xpose.msra.mxu0 0.0
        %3564 = vmatprep.subr.mxu0 0.0
        %3565 = vmatpush1.xpose.msra.mxu0 0.0
        %3566 = vmatprep.subr.mxu0 0.0
        %3567 = vmatpush1.xpose.msra.mxu0 0.0
        %3568 = vmatprep.subr.mxu0 0.0
        %3569 = vmatpush1.xpose.msra.mxu0 0.0
        %3570 = vmatprep.subr.mxu0 0.0
        %3571 = vmatpush1.xpose.msra.mxu0 0.0
        %3572 = vmatprep.subr.mxu0 0.0
        %3573 = vmatpush1.xpose.msra.mxu0 0.0
        %3574 = vmatprep.subr.mxu0 0.0
        %3575 = vmatpush1.xpose.msra.mxu0 0.0
        %3576 = vmatprep.subr.mxu0 0.0
        %3577 = vmatpush1.xpose.msra.mxu0 0.0
        %3578 = vmatprep.subr.mxu0 0.0
        %3579 = vmatpush1.xpose.msra.mxu0 0.0
        %3580 = vmatprep.subr.mxu0 0.0
        %3581 = vmatpush1.xpose.msra.mxu0 0.0
        %3582 = vmatprep.subr.mxu0 0.0
        %3583 = vmatpush1.xpose.msra.mxu0 0.0
        %3584 = vmatprep.subr.mxu0 0.0
        %3585 = vmatpush1.xpose.msra.mxu0 0.0
        %3586 = vmatprep.subr.mxu0 0.0
        %3587 = vmatpush1.xpose.msra.mxu0 0.0
        %3588 = vmatprep.subr.mxu0 0.0
        %3589 = vmatpush1.xpose.msra.mxu0 0.0
        %3590 = vmatprep.subr.mxu0 0.0
        %3591 = vmatpush1.xpose.msra.mxu0 0.0
        %3592 = vmatprep.subr.mxu0 0.0
        %3593 = vmatpush1.xpose.msra.mxu0 0.0
        %3594 = vmatprep.subr.mxu0 0.0
        %3595 = vmatpush1.xpose.msra.mxu0 0.0
        %3596 = vmatprep.subr.mxu0 0.0
        %3597 = vmatpush1.xpose.msra.mxu0 0.0
        %3598 = vmatprep.subr.mxu0 0.0
        %3599 = vmatpush1.xpose.msra.mxu0 0.0
        %3600 = vmatprep.subr.mxu0 0.0
        %3601 = vmatpush1.xpose.msra.mxu0 0.0
        %3602 = vmatprep.subr.mxu0 0.0
        %3603 = vmatpush1.xpose.msra.mxu0 0.0
        %3604 = vmatprep.subr.mxu0 0.0
        %3605 = vmatpush1.xpose.msra.mxu0 0.0
        %3606 = vmatprep.subr.mxu0 0.0
        %3607 = vmatpush1.xpose.msra.mxu0 0.0
        %3608 = vmatprep.mubr.f32.mxu0 %v952
        %3609 = vmatmul.mubr.f32.gmra.mrb[0].mxu0 %v944
        %v3610 = vpop.f32.mrb[0].mxu0
        %v3611 = vadd.f32 %v3541, %v3610
        %v3612 = vpop.f32.mrb[0].mxu0
        %3613 = vdwg.mxu0
        %3614 = vmatprep.subr.mxu0 %v339
        %3615 = vmatpush1.xpose.msra.mxu0 %v338
        %3616 = vmatprep.subr.mxu0 %v531
        %3617 = vmatpush1.xpose.msra.mxu0 %v530
        %3618 = vmatprep.subr.mxu0 0.0
        %3619 = vmatpush1.xpose.msra.mxu0 0.0
        %3620 = vmatprep.subr.mxu0 0.0
        %3621 = vmatpush1.xpose.msra.mxu0 0.0
        %3622 = vmatprep.subr.mxu0 0.0
        %3623 = vmatpush1.xpose.msra.mxu0 0.0
        %3624 = vmatprep.subr.mxu0 0.0
        %3625 = vmatpush1.xpose.msra.mxu0 0.0
        %3626 = vmatprep.subr.mxu0 0.0
        %3627 = vmatpush1.xpose.msra.mxu0 0.0
        %3628 = vmatprep.subr.mxu0 0.0
        %3629 = vmatpush1.xpose.msra.mxu0 0.0
        %3630 = vmatprep.subr.mxu0 0.0
        %3631 = vmatpush1.xpose.msra.mxu0 0.0
        %3632 = vmatprep.subr.mxu0 0.0
        %3633 = vmatpush1.xpose.msra.mxu0 0.0
        %3634 = vmatprep.subr.mxu0 0.0
        %3635 = vmatpush1.xpose.msra.mxu0 0.0
        %3636 = vmatprep.subr.mxu0 0.0
        %3637 = vmatpush1.xpose.msra.mxu0 0.0
        %3638 = vmatprep.subr.mxu0 0.0
        %3639 = vmatpush1.xpose.msra.mxu0 0.0
        %3640 = vmatprep.subr.mxu0 0.0
        %3641 = vmatpush1.xpose.msra.mxu0 0.0
        %3642 = vmatprep.subr.mxu0 0.0
        %3643 = vmatpush1.xpose.msra.mxu0 0.0
        %3644 = vmatprep.subr.mxu0 0.0
        %3645 = vmatpush1.xpose.msra.mxu0 0.0
        %3646 = vmatprep.subr.mxu0 0.0
        %3647 = vmatpush1.xpose.msra.mxu0 0.0
        %3648 = vmatprep.subr.mxu0 0.0
        %3649 = vmatpush1.xpose.msra.mxu0 0.0
        %3650 = vmatprep.subr.mxu0 0.0
        %3651 = vmatpush1.xpose.msra.mxu0 0.0
        %3652 = vmatprep.subr.mxu0 0.0
        %3653 = vmatpush1.xpose.msra.mxu0 0.0
        %3654 = vmatprep.subr.mxu0 0.0
        %3655 = vmatpush1.xpose.msra.mxu0 0.0
        %3656 = vmatprep.subr.mxu0 0.0
        %3657 = vmatpush1.xpose.msra.mxu0 0.0
        %3658 = vmatprep.subr.mxu0 0.0
        %3659 = vmatpush1.xpose.msra.mxu0 0.0
        %3660 = vmatprep.subr.mxu0 0.0
        %3661 = vmatpush1.xpose.msra.mxu0 0.0
        %3662 = vmatprep.subr.mxu0 0.0
        %3663 = vmatpush1.xpose.msra.mxu0 0.0
        %3664 = vmatprep.subr.mxu0 0.0
        %3665 = vmatpush1.xpose.msra.mxu0 0.0
        %3666 = vmatprep.subr.mxu0 0.0
        %3667 = vmatpush1.xpose.msra.mxu0 0.0
        %3668 = vmatprep.subr.mxu0 0.0
        %3669 = vmatpush1.xpose.msra.mxu0 0.0
        %3670 = vmatprep.subr.mxu0 0.0
        %3671 = vmatpush1.xpose.msra.mxu0 0.0
        %3672 = vmatprep.subr.mxu0 0.0
        %3673 = vmatpush1.xpose.msra.mxu0 0.0
        %3674 = vmatprep.subr.mxu0 0.0
        %3675 = vmatpush1.xpose.msra.mxu0 0.0
        %3676 = vmatprep.subr.mxu0 0.0
        %3677 = vmatpush1.xpose.msra.mxu0 0.0
        %3678 = vmatprep.mubr.f32.mxu0 %v953
        %3679 = vmatmul.mubr.f32.gmra.mrb[0].mxu0 %v951
        %v3680 = vpop.f32.mrb[0].mxu0
        %v3681 = vadd.f32 %v3611, %v3680
        %v3682 = vpop.f32.mrb[0].mxu0
        %3683 = vdwg.mxu0
        %3684 = vmatprep.subr.mxu0 %v341
        %3685 = vmatpush1.xpose.msra.mxu0 %v340
        %3686 = vmatprep.subr.mxu0 %v533
        %3687 = vmatpush1.xpose.msra.mxu0 %v532
        %3688 = vmatprep.subr.mxu0 0.0
        %3689 = vmatpush1.xpose.msra.mxu0 0.0
        %3690 = vmatprep.subr.mxu0 0.0
        %3691 = vmatpush1.xpose.msra.mxu0 0.0
        %3692 = vmatprep.subr.mxu0 0.0
        %3693 = vmatpush1.xpose.msra.mxu0 0.0
        %3694 = vmatprep.subr.mxu0 0.0
        %3695 = vmatpush1.xpose.msra.mxu0 0.0
        %3696 = vmatprep.subr.mxu0 0.0
        %3697 = vmatpush1.xpose.msra.mxu0 0.0
        %3698 = vmatprep.subr.mxu0 0.0
        %3699 = vmatpush1.xpose.msra.mxu0 0.0
        %3700 = vmatprep.subr.mxu0 0.0
        %3701 = vmatpush1.xpose.msra.mxu0 0.0
        %3702 = vmatprep.subr.mxu0 0.0
        %3703 = vmatpush1.xpose.msra.mxu0 0.0
        %3704 = vmatprep.subr.mxu0 0.0
        %3705 = vmatpush1.xpose.msra.mxu0 0.0
        %3706 = vmatprep.subr.mxu0 0.0
        %3707 = vmatpush1.xpose.msra.mxu0 0.0
        %3708 = vmatprep.subr.mxu0 0.0
        %3709 = vmatpush1.xpose.msra.mxu0 0.0
        %3710 = vmatprep.subr.mxu0 0.0
        %3711 = vmatpush1.xpose.msra.mxu0 0.0
        %3712 = vmatprep.subr.mxu0 0.0
        %3713 = vmatpush1.xpose.msra.mxu0 0.0
        %3714 = vmatprep.subr.mxu0 0.0
        %3715 = vmatpush1.xpose.msra.mxu0 0.0
        %3716 = vmatprep.subr.mxu0 0.0
        %3717 = vmatpush1.xpose.msra.mxu0 0.0
        %3718 = vmatprep.subr.mxu0 0.0
        %3719 = vmatpush1.xpose.msra.mxu0 0.0
        %3720 = vmatprep.subr.mxu0 0.0
        %3721 = vmatpush1.xpose.msra.mxu0 0.0
        %3722 = vmatprep.subr.mxu0 0.0
        %3723 = vmatpush1.xpose.msra.mxu0 0.0
        %3724 = vmatprep.subr.mxu0 0.0
        %3725 = vmatpush1.xpose.msra.mxu0 0.0
        %3726 = vmatprep.subr.mxu0 0.0
        %3727 = vmatpush1.xpose.msra.mxu0 0.0
        %3728 = vmatprep.subr.mxu0 0.0
        %3729 = vmatpush1.xpose.msra.mxu0 0.0
        %3730 = vmatprep.subr.mxu0 0.0
        %3731 = vmatpush1.xpose.msra.mxu0 0.0
        %3732 = vmatprep.subr.mxu0 0.0
        %3733 = vmatpush1.xpose.msra.mxu0 0.0
        %3734 = vmatprep.subr.mxu0 0.0
        %3735 = vmatpush1.xpose.msra.mxu0 0.0
        %3736 = vmatprep.subr.mxu0 0.0
        %3737 = vmatpush1.xpose.msra.mxu0 0.0
        %3738 = vmatprep.subr.mxu0 0.0
        %3739 = vmatpush1.xpose.msra.mxu0 0.0
        %3740 = vmatprep.subr.mxu0 0.0
        %3741 = vmatpush1.xpose.msra.mxu0 0.0
        %3742 = vmatprep.subr.mxu0 0.0
        %3743 = vmatpush1.xpose.msra.mxu0 0.0
        %3744 = vmatprep.subr.mxu0 0.0
        %3745 = vmatpush1.xpose.msra.mxu0 0.0
        %3746 = vmatprep.subr.mxu0 0.0
        %3747 = vmatpush1.xpose.msra.mxu0 0.0
        %3748 = vmatprep.mubr.f32.mxu0 %v969
        %3749 = vmatmul.mubr.f32.gmra.mrb[0].mxu0 %v961
        %v3750 = vpop.f32.mrb[0].mxu0
        %v3751 = vadd.f32 %v3681, %v3750
        %v3752 = vpop.f32.mrb[0].mxu0
        %3753 = vdwg.mxu0
        %3754 = vmatprep.subr.mxu0 %v343
        %3755 = vmatpush1.xpose.msra.mxu0 %v342
        %3756 = vmatprep.subr.mxu0 %v535
        %3757 = vmatpush1.xpose.msra.mxu0 %v534
        %3758 = vmatprep.subr.mxu0 0.0
        %3759 = vmatpush1.xpose.msra.mxu0 0.0
        %3760 = vmatprep.subr.mxu0 0.0
        %3761 = vmatpush1.xpose.msra.mxu0 0.0
        %3762 = vmatprep.subr.mxu0 0.0
        %3763 = vmatpush1.xpose.msra.mxu0 0.0
        %3764 = vmatprep.subr.mxu0 0.0
        %3765 = vmatpush1.xpose.msra.mxu0 0.0
        %3766 = vmatprep.subr.mxu0 0.0
        %3767 = vmatpush1.xpose.msra.mxu0 0.0
        %3768 = vmatprep.subr.mxu0 0.0
        %3769 = vmatpush1.xpose.msra.mxu0 0.0
        %3770 = vmatprep.subr.mxu0 0.0
        %3771 = vmatpush1.xpose.msra.mxu0 0.0
        %3772 = vmatprep.subr.mxu0 0.0
        %3773 = vmatpush1.xpose.msra.mxu0 0.0
        %3774 = vmatprep.subr.mxu0 0.0
        %3775 = vmatpush1.xpose.msra.mxu0 0.0
        %3776 = vmatprep.subr.mxu0 0.0
        %3777 = vmatpush1.xpose.msra.mxu0 0.0
        %3778 = vmatprep.subr.mxu0 0.0
        %3779 = vmatpush1.xpose.msra.mxu0 0.0
        %3780 = vmatprep.subr.mxu0 0.0
        %3781 = vmatpush1.xpose.msra.mxu0 0.0
        %3782 = vmatprep.subr.mxu0 0.0
        %3783 = vmatpush1.xpose.msra.mxu0 0.0
        %3784 = vmatprep.subr.mxu0 0.0
        %3785 = vmatpush1.xpose.msra.mxu0 0.0
        %3786 = vmatprep.subr.mxu0 0.0
        %3787 = vmatpush1.xpose.msra.mxu0 0.0
        %3788 = vmatprep.subr.mxu0 0.0
        %3789 = vmatpush1.xpose.msra.mxu0 0.0
        %3790 = vmatprep.subr.mxu0 0.0
        %3791 = vmatpush1.xpose.msra.mxu0 0.0
        %3792 = vmatprep.subr.mxu0 0.0
        %3793 = vmatpush1.xpose.msra.mxu0 0.0
        %3794 = vmatprep.subr.mxu0 0.0
        %3795 = vmatpush1.xpose.msra.mxu0 0.0
        %3796 = vmatprep.subr.mxu0 0.0
        %3797 = vmatpush1.xpose.msra.mxu0 0.0
        %3798 = vmatprep.subr.mxu0 0.0
        %3799 = vmatpush1.xpose.msra.mxu0 0.0
        %3800 = vmatprep.subr.mxu0 0.0
        %3801 = vmatpush1.xpose.msra.mxu0 0.0
        %3802 = vmatprep.subr.mxu0 0.0
        %3803 = vmatpush1.xpose.msra.mxu0 0.0
        %3804 = vmatprep.subr.mxu0 0.0
        %3805 = vmatpush1.xpose.msra.mxu0 0.0
        %3806 = vmatprep.subr.mxu0 0.0
        %3807 = vmatpush1.xpose.msra.mxu0 0.0
        %3808 = vmatprep.subr.mxu0 0.0
        %3809 = vmatpush1.xpose.msra.mxu0 0.0
        %3810 = vmatprep.subr.mxu0 0.0
        %3811 = vmatpush1.xpose.msra.mxu0 0.0
        %3812 = vmatprep.subr.mxu0 0.0
        %3813 = vmatpush1.xpose.msra.mxu0 0.0
        %3814 = vmatprep.subr.mxu0 0.0
        %3815 = vmatpush1.xpose.msra.mxu0 0.0
        %3816 = vmatprep.subr.mxu0 0.0
        %3817 = vmatpush1.xpose.msra.mxu0 0.0
        %3818 = vmatprep.mubr.f32.mxu0 %v970
        %3819 = vmatmul.mubr.f32.gmra.mrb[0].mxu0 %v968
        %v3820 = vpop.f32.mrb[0].mxu0
        %v3821 = vadd.f32 %v3751, %v3820
        %v3822 = vpop.f32.mrb[0].mxu0
        %3823 = vdwg.mxu0
        %3824 = vmatprep.subr.mxu0 %v345
        %3825 = vmatpush1.xpose.msra.mxu0 %v344
        %3826 = vmatprep.subr.mxu0 %v537
        %3827 = vmatpush1.xpose.msra.mxu0 %v536
        %3828 = vmatprep.subr.mxu0 0.0
        %3829 = vmatpush1.xpose.msra.mxu0 0.0
        %3830 = vmatprep.subr.mxu0 0.0
        %3831 = vmatpush1.xpose.msra.mxu0 0.0
        %3832 = vmatprep.subr.mxu0 0.0
        %3833 = vmatpush1.xpose.msra.mxu0 0.0
        %3834 = vmatprep.subr.mxu0 0.0
        %3835 = vmatpush1.xpose.msra.mxu0 0.0
        %3836 = vmatprep.subr.mxu0 0.0
        %3837 = vmatpush1.xpose.msra.mxu0 0.0
        %3838 = vmatprep.subr.mxu0 0.0
        %3839 = vmatpush1.xpose.msra.mxu0 0.0
        %3840 = vmatprep.subr.mxu0 0.0
        %3841 = vmatpush1.xpose.msra.mxu0 0.0
        %3842 = vmatprep.subr.mxu0 0.0
        %3843 = vmatpush1.xpose.msra.mxu0 0.0
        %3844 = vmatprep.subr.mxu0 0.0
        %3845 = vmatpush1.xpose.msra.mxu0 0.0
        %3846 = vmatprep.subr.mxu0 0.0
        %3847 = vmatpush1.xpose.msra.mxu0 0.0
        %3848 = vmatprep.subr.mxu0 0.0
        %3849 = vmatpush1.xpose.msra.mxu0 0.0
        %3850 = vmatprep.subr.mxu0 0.0
        %3851 = vmatpush1.xpose.msra.mxu0 0.0
        %3852 = vmatprep.subr.mxu0 0.0
        %3853 = vmatpush1.xpose.msra.mxu0 0.0
        %3854 = vmatprep.subr.mxu0 0.0
        %3855 = vmatpush1.xpose.msra.mxu0 0.0
        %3856 = vmatprep.subr.mxu0 0.0
        %3857 = vmatpush1.xpose.msra.mxu0 0.0
        %3858 = vmatprep.subr.mxu0 0.0
        %3859 = vmatpush1.xpose.msra.mxu0 0.0
        %3860 = vmatprep.subr.mxu0 0.0
        %3861 = vmatpush1.xpose.msra.mxu0 0.0
        %3862 = vmatprep.subr.mxu0 0.0
        %3863 = vmatpush1.xpose.msra.mxu0 0.0
        %3864 = vmatprep.subr.mxu0 0.0
        %3865 = vmatpush1.xpose.msra.mxu0 0.0
        %3866 = vmatprep.subr.mxu0 0.0
        %3867 = vmatpush1.xpose.msra.mxu0 0.0
        %3868 = vmatprep.subr.mxu0 0.0
        %3869 = vmatpush1.xpose.msra.mxu0 0.0
        %3870 = vmatprep.subr.mxu0 0.0
        %3871 = vmatpush1.xpose.msra.mxu0 0.0
        %3872 = vmatprep.subr.mxu0 0.0
        %3873 = vmatpush1.xpose.msra.mxu0 0.0
        %3874 = vmatprep.subr.mxu0 0.0
        %3875 = vmatpush1.xpose.msra.mxu0 0.0
        %3876 = vmatprep.subr.mxu0 0.0
        %3877 = vmatpush1.xpose.msra.mxu0 0.0
        %3878 = vmatprep.subr.mxu0 0.0
        %3879 = vmatpush1.xpose.msra.mxu0 0.0
        %3880 = vmatprep.subr.mxu0 0.0
        %3881 = vmatpush1.xpose.msra.mxu0 0.0
        %3882 = vmatprep.subr.mxu0 0.0
        %3883 = vmatpush1.xpose.msra.mxu0 0.0
        %3884 = vmatprep.subr.mxu0 0.0
        %3885 = vmatpush1.xpose.msra.mxu0 0.0
        %3886 = vmatprep.subr.mxu0 0.0
        %3887 = vmatpush1.xpose.msra.mxu0 0.0
        %3888 = vmatprep.mubr.f32.mxu0 %v986
        %3889 = vmatmul.mubr.f32.gmra.mrb[0].mxu0 %v978
        %v3890 = vpop.f32.mrb[0].mxu0
        %v3891 = vadd.f32 %v3821, %v3890
        %v3892 = vpop.f32.mrb[0].mxu0
        %3893 = vdwg.mxu0
        %3894 = vmatprep.subr.mxu0 %v347
        %3895 = vmatpush1.xpose.msra.mxu0 %v346
        %3896 = vmatprep.subr.mxu0 %v539
        %3897 = vmatpush1.xpose.msra.mxu0 %v538
        %3898 = vmatprep.subr.mxu0 0.0
        %3899 = vmatpush1.xpose.msra.mxu0 0.0
        %3900 = vmatprep.subr.mxu0 0.0
        %3901 = vmatpush1.xpose.msra.mxu0 0.0
        %3902 = vmatprep.subr.mxu0 0.0
        %3903 = vmatpush1.xpose.msra.mxu0 0.0
        %3904 = vmatprep.subr.mxu0 0.0
        %3905 = vmatpush1.xpose.msra.mxu0 0.0
        %3906 = vmatprep.subr.mxu0 0.0
        %3907 = vmatpush1.xpose.msra.mxu0 0.0
        %3908 = vmatprep.subr.mxu0 0.0
        %3909 = vmatpush1.xpose.msra.mxu0 0.0
        %3910 = vmatprep.subr.mxu0 0.0
        %3911 = vmatpush1.xpose.msra.mxu0 0.0
        %3912 = vmatprep.subr.mxu0 0.0
        %3913 = vmatpush1.xpose.msra.mxu0 0.0
        %3914 = vmatprep.subr.mxu0 0.0
        %3915 = vmatpush1.xpose.msra.mxu0 0.0
        %3916 = vmatprep.subr.mxu0 0.0
        %3917 = vmatpush1.xpose.msra.mxu0 0.0
        %3918 = vmatprep.subr.mxu0 0.0
        %3919 = vmatpush1.xpose.msra.mxu0 0.0
        %3920 = vmatprep.subr.mxu0 0.0
        %3921 = vmatpush1.xpose.msra.mxu0 0.0
        %3922 = vmatprep.subr.mxu0 0.0
        %3923 = vmatpush1.xpose.msra.mxu0 0.0
        %3924 = vmatprep.subr.mxu0 0.0
        %3925 = vmatpush1.xpose.msra.mxu0 0.0
        %3926 = vmatprep.subr.mxu0 0.0
        %3927 = vmatpush1.xpose.msra.mxu0 0.0
        %3928 = vmatprep.subr.mxu0 0.0
        %3929 = vmatpush1.xpose.msra.mxu0 0.0
        %3930 = vmatprep.subr.mxu0 0.0
        %3931 = vmatpush1.xpose.msra.mxu0 0.0
        %3932 = vmatprep.subr.mxu0 0.0
        %3933 = vmatpush1.xpose.msra.mxu0 0.0
        %3934 = vmatprep.subr.mxu0 0.0
        %3935 = vmatpush1.xpose.msra.mxu0 0.0
        %3936 = vmatprep.subr.mxu0 0.0
        %3937 = vmatpush1.xpose.msra.mxu0 0.0
        %3938 = vmatprep.subr.mxu0 0.0
        %3939 = vmatpush1.xpose.msra.mxu0 0.0
        %3940 = vmatprep.subr.mxu0 0.0
        %3941 = vmatpush1.xpose.msra.mxu0 0.0
        %3942 = vmatprep.subr.mxu0 0.0
        %3943 = vmatpush1.xpose.msra.mxu0 0.0
        %3944 = vmatprep.subr.mxu0 0.0
        %3945 = vmatpush1.xpose.msra.mxu0 0.0
        %3946 = vmatprep.subr.mxu0 0.0
        %3947 = vmatpush1.xpose.msra.mxu0 0.0
        %3948 = vmatprep.subr.mxu0 0.0
        %3949 = vmatpush1.xpose.msra.mxu0 0.0
        %3950 = vmatprep.subr.mxu0 0.0
        %3951 = vmatpush1.xpose.msra.mxu0 0.0
        %3952 = vmatprep.subr.mxu0 0.0
        %3953 = vmatpush1.xpose.msra.mxu0 0.0
        %3954 = vmatprep.subr.mxu0 0.0
        %3955 = vmatpush1.xpose.msra.mxu0 0.0
        %3956 = vmatprep.subr.mxu0 0.0
        %3957 = vmatpush1.xpose.msra.mxu0 0.0
        %3958 = vmatprep.mubr.f32.mxu0 %v987
        %3959 = vmatmul.mubr.f32.gmra.mrb[0].mxu0 %v985
        %v3960 = vpop.f32.mrb[0].mxu0
        %v3961 = vadd.f32 %v3891, %v3960
        %v3962 = vpop.f32.mrb[0].mxu0
        %3963 = vdwg.mxu0
        %3964 = vmatprep.subr.mxu0 %v349
        %3965 = vmatpush1.xpose.msra.mxu0 %v348
        %3966 = vmatprep.subr.mxu0 %v541
        %3967 = vmatpush1.xpose.msra.mxu0 %v540
        %3968 = vmatprep.subr.mxu0 0.0
        %3969 = vmatpush1.xpose.msra.mxu0 0.0
        %3970 = vmatprep.subr.mxu0 0.0
        %3971 = vmatpush1.xpose.msra.mxu0 0.0
        %3972 = vmatprep.subr.mxu0 0.0
        %3973 = vmatpush1.xpose.msra.mxu0 0.0
        %3974 = vmatprep.subr.mxu0 0.0
        %3975 = vmatpush1.xpose.msra.mxu0 0.0
        %3976 = vmatprep.subr.mxu0 0.0
        %3977 = vmatpush1.xpose.msra.mxu0 0.0
        %3978 = vmatprep.subr.mxu0 0.0
        %3979 = vmatpush1.xpose.msra.mxu0 0.0
        %3980 = vmatprep.subr.mxu0 0.0
        %3981 = vmatpush1.xpose.msra.mxu0 0.0
        %3982 = vmatprep.subr.mxu0 0.0
        %3983 = vmatpush1.xpose.msra.mxu0 0.0
        %3984 = vmatprep.subr.mxu0 0.0
        %3985 = vmatpush1.xpose.msra.mxu0 0.0
        %3986 = vmatprep.subr.mxu0 0.0
        %3987 = vmatpush1.xpose.msra.mxu0 0.0
        %3988 = vmatprep.subr.mxu0 0.0
        %3989 = vmatpush1.xpose.msra.mxu0 0.0
        %3990 = vmatprep.subr.mxu0 0.0
        %3991 = vmatpush1.xpose.msra.mxu0 0.0
        %3992 = vmatprep.subr.mxu0 0.0
        %3993 = vmatpush1.xpose.msra.mxu0 0.0
        %3994 = vmatprep.subr.mxu0 0.0
        %3995 = vmatpush1.xpose.msra.mxu0 0.0
        %3996 = vmatprep.subr.mxu0 0.0
        %3997 = vmatpush1.xpose.msra.mxu0 0.0
        %3998 = vmatprep.subr.mxu0 0.0
        %3999 = vmatpush1.xpose.msra.mxu0 0.0
        %4000 = vmatprep.subr.mxu0 0.0
        %4001 = vmatpush1.xpose.msra.mxu0 0.0
        %4002 = vmatprep.subr.mxu0 0.0
        %4003 = vmatpush1.xpose.msra.mxu0 0.0
        %4004 = vmatprep.subr.mxu0 0.0
        %4005 = vmatpush1.xpose.msra.mxu0 0.0
        %4006 = vmatprep.subr.mxu0 0.0
        %4007 = vmatpush1.xpose.msra.mxu0 0.0
        %4008 = vmatprep.subr.mxu0 0.0
        %4009 = vmatpush1.xpose.msra.mxu0 0.0
        %4010 = vmatprep.subr.mxu0 0.0
        %4011 = vmatpush1.xpose.msra.mxu0 0.0
        %4012 = vmatprep.subr.mxu0 0.0
        %4013 = vmatpush1.xpose.msra.mxu0 0.0
        %4014 = vmatprep.subr.mxu0 0.0
        %4015 = vmatpush1.xpose.msra.mxu0 0.0
        %4016 = vmatprep.subr.mxu0 0.0
        %4017 = vmatpush1.xpose.msra.mxu0 0.0
        %4018 = vmatprep.subr.mxu0 0.0
        %4019 = vmatpush1.xpose.msra.mxu0 0.0
        %4020 = vmatprep.subr.mxu0 0.0
        %4021 = vmatpush1.xpose.msra.mxu0 0.0
        %4022 = vmatprep.subr.mxu0 0.0
        %4023 = vmatpush1.xpose.msra.mxu0 0.0
        %4024 = vmatprep.subr.mxu0 0.0
        %4025 = vmatpush1.xpose.msra.mxu0 0.0
        %4026 = vmatprep.subr.mxu0 0.0
        %4027 = vmatpush1.xpose.msra.mxu0 0.0
        %4028 = vmatprep.mubr.f32.mxu0 %v1003
        %4029 = vmatmul.mubr.f32.gmra.mrb[0].mxu0 %v995
        %v4030 = vpop.f32.mrb[0].mxu0
        %v4031 = vadd.f32 %v3961, %v4030
        %v4032 = vpop.f32.mrb[0].mxu0
        %4033 = vdwg.mxu0
        %4034 = vmatprep.subr.mxu0 %v351
        %4035 = vmatpush1.xpose.msra.mxu0 %v350
        %4036 = vmatprep.subr.mxu0 %v543
        %4037 = vmatpush1.xpose.msra.mxu0 %v542
        %4038 = vmatprep.subr.mxu0 0.0
        %4039 = vmatpush1.xpose.msra.mxu0 0.0
        %4040 = vmatprep.subr.mxu0 0.0
        %4041 = vmatpush1.xpose.msra.mxu0 0.0
        %4042 = vmatprep.subr.mxu0 0.0
        %4043 = vmatpush1.xpose.msra.mxu0 0.0
        %4044 = vmatprep.subr.mxu0 0.0
        %4045 = vmatpush1.xpose.msra.mxu0 0.0
        %4046 = vmatprep.subr.mxu0 0.0
        %4047 = vmatpush1.xpose.msra.mxu0 0.0
        %4048 = vmatprep.subr.mxu0 0.0
        %4049 = vmatpush1.xpose.msra.mxu0 0.0
        %4050 = vmatprep.subr.mxu0 0.0
        %4051 = vmatpush1.xpose.msra.mxu0 0.0
        %4052 = vmatprep.subr.mxu0 0.0
        %4053 = vmatpush1.xpose.msra.mxu0 0.0
        %4054 = vmatprep.subr.mxu0 0.0
        %4055 = vmatpush1.xpose.msra.mxu0 0.0
        %4056 = vmatprep.subr.mxu0 0.0
        %4057 = vmatpush1.xpose.msra.mxu0 0.0
        %4058 = vmatprep.subr.mxu0 0.0
        %4059 = vmatpush1.xpose.msra.mxu0 0.0
        %4060 = vmatprep.subr.mxu0 0.0
        %4061 = vmatpush1.xpose.msra.mxu0 0.0
        %4062 = vmatprep.subr.mxu0 0.0
        %4063 = vmatpush1.xpose.msra.mxu0 0.0
        %4064 = vmatprep.subr.mxu0 0.0
        %4065 = vmatpush1.xpose.msra.mxu0 0.0
        %4066 = vmatprep.subr.mxu0 0.0
        %4067 = vmatpush1.xpose.msra.mxu0 0.0
        %4068 = vmatprep.subr.mxu0 0.0
        %4069 = vmatpush1.xpose.msra.mxu0 0.0
        %4070 = vmatprep.subr.mxu0 0.0
        %4071 = vmatpush1.xpose.msra.mxu0 0.0
        %4072 = vmatprep.subr.mxu0 0.0
        %4073 = vmatpush1.xpose.msra.mxu0 0.0
        %4074 = vmatprep.subr.mxu0 0.0
        %4075 = vmatpush1.xpose.msra.mxu0 0.0
        %4076 = vmatprep.subr.mxu0 0.0
        %4077 = vmatpush1.xpose.msra.mxu0 0.0
        %4078 = vmatprep.subr.mxu0 0.0
        %4079 = vmatpush1.xpose.msra.mxu0 0.0
        %4080 = vmatprep.subr.mxu0 0.0
        %4081 = vmatpush1.xpose.msra.mxu0 0.0
        %4082 = vmatprep.subr.mxu0 0.0
        %4083 = vmatpush1.xpose.msra.mxu0 0.0
        %4084 = vmatprep.subr.mxu0 0.0
        %4085 = vmatpush1.xpose.msra.mxu0 0.0
        %4086 = vmatprep.subr.mxu0 0.0
        %4087 = vmatpush1.xpose.msra.mxu0 0.0
        %4088 = vmatprep.subr.mxu0 0.0
        %4089 = vmatpush1.xpose.msra.mxu0 0.0
        %4090 = vmatprep.subr.mxu0 0.0
        %4091 = vmatpush1.xpose.msra.mxu0 0.0
        %4092 = vmatprep.subr.mxu0 0.0
        %4093 = vmatpush1.xpose.msra.mxu0 0.0
        %4094 = vmatprep.subr.mxu0 0.0
        %4095 = vmatpush1.xpose.msra.mxu0 0.0
        %4096 = vmatprep.subr.mxu0 0.0
        %4097 = vmatpush1.xpose.msra.mxu0 0.0
        %4098 = vmatprep.mubr.f32.mxu0 %v1004
        %4099 = vmatmul.mubr.f32.gmra.mrb[0].mxu0 %v1002
        %v4100 = vpop.f32.mrb[0].mxu0
        %v4101 = vadd.f32 %v4031, %v4100
        %v4102 = vpop.f32.mrb[0].mxu0
        %4103 = vdwg.mxu0
        %4104 = vmatprep.subr.mxu0 %v353
        %4105 = vmatpush1.xpose.msra.mxu0 %v352
        %4106 = vmatprep.subr.mxu0 %v545
        %4107 = vmatpush1.xpose.msra.mxu0 %v544
        %4108 = vmatprep.subr.mxu0 0.0
        %4109 = vmatpush1.xpose.msra.mxu0 0.0
        %4110 = vmatprep.subr.mxu0 0.0
        %4111 = vmatpush1.xpose.msra.mxu0 0.0
        %4112 = vmatprep.subr.mxu0 0.0
        %4113 = vmatpush1.xpose.msra.mxu0 0.0
        %4114 = vmatprep.subr.mxu0 0.0
        %4115 = vmatpush1.xpose.msra.mxu0 0.0
        %4116 = vmatprep.subr.mxu0 0.0
        %4117 = vmatpush1.xpose.msra.mxu0 0.0
        %4118 = vmatprep.subr.mxu0 0.0
        %4119 = vmatpush1.xpose.msra.mxu0 0.0
        %4120 = vmatprep.subr.mxu0 0.0
        %4121 = vmatpush1.xpose.msra.mxu0 0.0
        %4122 = vmatprep.subr.mxu0 0.0
        %4123 = vmatpush1.xpose.msra.mxu0 0.0
        %4124 = vmatprep.subr.mxu0 0.0
        %4125 = vmatpush1.xpose.msra.mxu0 0.0
        %4126 = vmatprep.subr.mxu0 0.0
        %4127 = vmatpush1.xpose.msra.mxu0 0.0
        %4128 = vmatprep.subr.mxu0 0.0
        %4129 = vmatpush1.xpose.msra.mxu0 0.0
        %4130 = vmatprep.subr.mxu0 0.0
        %4131 = vmatpush1.xpose.msra.mxu0 0.0
        %4132 = vmatprep.subr.mxu0 0.0
        %4133 = vmatpush1.xpose.msra.mxu0 0.0
        %4134 = vmatprep.subr.mxu0 0.0
        %4135 = vmatpush1.xpose.msra.mxu0 0.0
        %4136 = vmatprep.subr.mxu0 0.0
        %4137 = vmatpush1.xpose.msra.mxu0 0.0
        %4138 = vmatprep.subr.mxu0 0.0
        %4139 = vmatpush1.xpose.msra.mxu0 0.0
        %4140 = vmatprep.subr.mxu0 0.0
        %4141 = vmatpush1.xpose.msra.mxu0 0.0
        %4142 = vmatprep.subr.mxu0 0.0
        %4143 = vmatpush1.xpose.msra.mxu0 0.0
        %4144 = vmatprep.subr.mxu0 0.0
        %4145 = vmatpush1.xpose.msra.mxu0 0.0
        %4146 = vmatprep.subr.mxu0 0.0
        %4147 = vmatpush1.xpose.msra.mxu0 0.0
        %4148 = vmatprep.subr.mxu0 0.0
        %4149 = vmatpush1.xpose.msra.mxu0 0.0
        %4150 = vmatprep.subr.mxu0 0.0
        %4151 = vmatpush1.xpose.msra.mxu0 0.0
        %4152 = vmatprep.subr.mxu0 0.0
        %4153 = vmatpush1.xpose.msra.mxu0 0.0
        %4154 = vmatprep.subr.mxu0 0.0
        %4155 = vmatpush1.xpose.msra.mxu0 0.0
        %4156 = vmatprep.subr.mxu0 0.0
        %4157 = vmatpush1.xpose.msra.mxu0 0.0
        %4158 = vmatprep.subr.mxu0 0.0
        %4159 = vmatpush1.xpose.msra.mxu0 0.0
        %4160 = vmatprep.subr.mxu0 0.0
        %4161 = vmatpush1.xpose.msra.mxu0 0.0
        %4162 = vmatprep.subr.mxu0 0.0
        %4163 = vmatpush1.xpose.msra.mxu0 0.0
        %4164 = vmatprep.subr.mxu0 0.0
        %4165 = vmatpush1.xpose.msra.mxu0 0.0
        %4166 = vmatprep.subr.mxu0 0.0
        %4167 = vmatpush1.xpose.msra.mxu0 0.0
        %4168 = vmatprep.mubr.f32.mxu0 %v1020
        %4169 = vmatmul.mubr.f32.gmra.mrb[0].mxu0 %v1012
        %v4170 = vpop.f32.mrb[0].mxu0
        %v4171 = vadd.f32 %v4101, %v4170
        %v4172 = vpop.f32.mrb[0].mxu0
        %4173 = vdwg.mxu0
        %4174 = vmatprep.subr.mxu0 %v355
        %4175 = vmatpush1.xpose.msra.mxu0 %v354
        %4176 = vmatprep.subr.mxu0 %v547
        %4177 = vmatpush1.xpose.msra.mxu0 %v546
        %4178 = vmatprep.subr.mxu0 0.0
        %4179 = vmatpush1.xpose.msra.mxu0 0.0
        %4180 = vmatprep.subr.mxu0 0.0
        %4181 = vmatpush1.xpose.msra.mxu0 0.0
        %4182 = vmatprep.subr.mxu0 0.0
        %4183 = vmatpush1.xpose.msra.mxu0 0.0
        %4184 = vmatprep.subr.mxu0 0.0
        %4185 = vmatpush1.xpose.msra.mxu0 0.0
        %4186 = vmatprep.subr.mxu0 0.0
        %4187 = vmatpush1.xpose.msra.mxu0 0.0
        %4188 = vmatprep.subr.mxu0 0.0
        %4189 = vmatpush1.xpose.msra.mxu0 0.0
        %4190 = vmatprep.subr.mxu0 0.0
        %4191 = vmatpush1.xpose.msra.mxu0 0.0
        %4192 = vmatprep.subr.mxu0 0.0
        %4193 = vmatpush1.xpose.msra.mxu0 0.0
        %4194 = vmatprep.subr.mxu0 0.0
        %4195 = vmatpush1.xpose.msra.mxu0 0.0
        %4196 = vmatprep.subr.mxu0 0.0
        %4197 = vmatpush1.xpose.msra.mxu0 0.0
        %4198 = vmatprep.subr.mxu0 0.0
        %4199 = vmatpush1.xpose.msra.mxu0 0.0
        %4200 = vmatprep.subr.mxu0 0.0
        %4201 = vmatpush1.xpose.msra.mxu0 0.0
        %4202 = vmatprep.subr.mxu0 0.0
        %4203 = vmatpush1.xpose.msra.mxu0 0.0
        %4204 = vmatprep.subr.mxu0 0.0
        %4205 = vmatpush1.xpose.msra.mxu0 0.0
        %4206 = vmatprep.subr.mxu0 0.0
        %4207 = vmatpush1.xpose.msra.mxu0 0.0
        %4208 = vmatprep.subr.mxu0 0.0
        %4209 = vmatpush1.xpose.msra.mxu0 0.0
        %4210 = vmatprep.subr.mxu0 0.0
        %4211 = vmatpush1.xpose.msra.mxu0 0.0
        %4212 = vmatprep.subr.mxu0 0.0
        %4213 = vmatpush1.xpose.msra.mxu0 0.0
        %4214 = vmatprep.subr.mxu0 0.0
        %4215 = vmatpush1.xpose.msra.mxu0 0.0
        %4216 = vmatprep.subr.mxu0 0.0
        %4217 = vmatpush1.xpose.msra.mxu0 0.0
        %4218 = vmatprep.subr.mxu0 0.0
        %4219 = vmatpush1.xpose.msra.mxu0 0.0
        %4220 = vmatprep.subr.mxu0 0.0
        %4221 = vmatpush1.xpose.msra.mxu0 0.0
        %4222 = vmatprep.subr.mxu0 0.0
        %4223 = vmatpush1.xpose.msra.mxu0 0.0
        %4224 = vmatprep.subr.mxu0 0.0
        %4225 = vmatpush1.xpose.msra.mxu0 0.0
        %4226 = vmatprep.subr.mxu0 0.0
        %4227 = vmatpush1.xpose.msra.mxu0 0.0
        %4228 = vmatprep.subr.mxu0 0.0
        %4229 = vmatpush1.xpose.msra.mxu0 0.0
        %4230 = vmatprep.subr.mxu0 0.0
        %4231 = vmatpush1.xpose.msra.mxu0 0.0
        %4232 = vmatprep.subr.mxu0 0.0
        %4233 = vmatpush1.xpose.msra.mxu0 0.0
        %4234 = vmatprep.subr.mxu0 0.0
        %4235 = vmatpush1.xpose.msra.mxu0 0.0
        %4236 = vmatprep.subr.mxu0 0.0
        %4237 = vmatpush1.xpose.msra.mxu0 0.0
        %4238 = vmatprep.mubr.f32.mxu0 %v1021
        %4239 = vmatmul.mubr.f32.gmra.mrb[0].mxu0 %v1019
        %v4240 = vpop.f32.mrb[0].mxu0
        %v4241 = vadd.f32 %v4171, %v4240
        %v4242 = vpop.f32.mrb[0].mxu0
        %4243 = vdwg.mxu0
        %4244 = vmatprep.subr.mxu0 %v357
        %4245 = vmatpush1.xpose.msra.mxu0 %v356
        %4246 = vmatprep.subr.mxu0 %v549
        %4247 = vmatpush1.xpose.msra.mxu0 %v548
        %4248 = vmatprep.subr.mxu0 0.0
        %4249 = vmatpush1.xpose.msra.mxu0 0.0
        %4250 = vmatprep.subr.mxu0 0.0
        %4251 = vmatpush1.xpose.msra.mxu0 0.0
        %4252 = vmatprep.subr.mxu0 0.0
        %4253 = vmatpush1.xpose.msra.mxu0 0.0
        %4254 = vmatprep.subr.mxu0 0.0
        %4255 = vmatpush1.xpose.msra.mxu0 0.0
        %4256 = vmatprep.subr.mxu0 0.0
        %4257 = vmatpush1.xpose.msra.mxu0 0.0
        %4258 = vmatprep.subr.mxu0 0.0
        %4259 = vmatpush1.xpose.msra.mxu0 0.0
        %4260 = vmatprep.subr.mxu0 0.0
        %4261 = vmatpush1.xpose.msra.mxu0 0.0
        %4262 = vmatprep.subr.mxu0 0.0
        %4263 = vmatpush1.xpose.msra.mxu0 0.0
        %4264 = vmatprep.subr.mxu0 0.0
        %4265 = vmatpush1.xpose.msra.mxu0 0.0
        %4266 = vmatprep.subr.mxu0 0.0
        %4267 = vmatpush1.xpose.msra.mxu0 0.0
        %4268 = vmatprep.subr.mxu0 0.0
        %4269 = vmatpush1.xpose.msra.mxu0 0.0
        %4270 = vmatprep.subr.mxu0 0.0
        %4271 = vmatpush1.xpose.msra.mxu0 0.0
        %4272 = vmatprep.subr.mxu0 0.0
        %4273 = vmatpush1.xpose.msra.mxu0 0.0
        %4274 = vmatprep.subr.mxu0 0.0
        %4275 = vmatpush1.xpose.msra.mxu0 0.0
        %4276 = vmatprep.subr.mxu0 0.0
        %4277 = vmatpush1.xpose.msra.mxu0 0.0
        %4278 = vmatprep.subr.mxu0 0.0
        %4279 = vmatpush1.xpose.msra.mxu0 0.0
        %4280 = vmatprep.subr.mxu0 0.0
        %4281 = vmatpush1.xpose.msra.mxu0 0.0
        %4282 = vmatprep.subr.mxu0 0.0
        %4283 = vmatpush1.xpose.msra.mxu0 0.0
        %4284 = vmatprep.subr.mxu0 0.0
        %4285 = vmatpush1.xpose.msra.mxu0 0.0
        %4286 = vmatprep.subr.mxu0 0.0
        %4287 = vmatpush1.xpose.msra.mxu0 0.0
        %4288 = vmatprep.subr.mxu0 0.0
        %4289 = vmatpush1.xpose.msra.mxu0 0.0
        %4290 = vmatprep.subr.mxu0 0.0
        %4291 = vmatpush1.xpose.msra.mxu0 0.0
        %4292 = vmatprep.subr.mxu0 0.0
        %4293 = vmatpush1.xpose.msra.mxu0 0.0
        %4294 = vmatprep.subr.mxu0 0.0
        %4295 = vmatpush1.xpose.msra.mxu0 0.0
        %4296 = vmatprep.subr.mxu0 0.0
        %4297 = vmatpush1.xpose.msra.mxu0 0.0
        %4298 = vmatprep.subr.mxu0 0.0
        %4299 = vmatpush1.xpose.msra.mxu0 0.0
        %4300 = vmatprep.subr.mxu0 0.0
        %4301 = vmatpush1.xpose.msra.mxu0 0.0
        %4302 = vmatprep.subr.mxu0 0.0
        %4303 = vmatpush1.xpose.msra.mxu0 0.0
        %4304 = vmatprep.subr.mxu0 0.0
        %4305 = vmatpush1.xpose.msra.mxu0 0.0
        %4306 = vmatprep.subr.mxu0 0.0
        %4307 = vmatpush1.xpose.msra.mxu0 0.0
        %4308 = vmatprep.mubr.f32.mxu0 %v1037
        %4309 = vmatmul.mubr.f32.gmra.mrb[0].mxu0 %v1029
        %v4310 = vpop.f32.mrb[0].mxu0
        %v4311 = vadd.f32 %v4241, %v4310
        %v4312 = vpop.f32.mrb[0].mxu0
        %4313 = vdwg.mxu0
        %4314 = vmatprep.subr.mxu0 %v359
        %4315 = vmatpush1.xpose.msra.mxu0 %v358
        %4316 = vmatprep.subr.mxu0 %v551
        %4317 = vmatpush1.xpose.msra.mxu0 %v550
        %4318 = vmatprep.subr.mxu0 0.0
        %4319 = vmatpush1.xpose.msra.mxu0 0.0
        %4320 = vmatprep.subr.mxu0 0.0
        %4321 = vmatpush1.xpose.msra.mxu0 0.0
        %4322 = vmatprep.subr.mxu0 0.0
        %4323 = vmatpush1.xpose.msra.mxu0 0.0
        %4324 = vmatprep.subr.mxu0 0.0
        %4325 = vmatpush1.xpose.msra.mxu0 0.0
        %4326 = vmatprep.subr.mxu0 0.0
        %4327 = vmatpush1.xpose.msra.mxu0 0.0
        %4328 = vmatprep.subr.mxu0 0.0
        %4329 = vmatpush1.xpose.msra.mxu0 0.0
        %4330 = vmatprep.subr.mxu0 0.0
        %4331 = vmatpush1.xpose.msra.mxu0 0.0
        %4332 = vmatprep.subr.mxu0 0.0
        %4333 = vmatpush1.xpose.msra.mxu0 0.0
        %4334 = vmatprep.subr.mxu0 0.0
        %4335 = vmatpush1.xpose.msra.mxu0 0.0
        %4336 = vmatprep.subr.mxu0 0.0
        %4337 = vmatpush1.xpose.msra.mxu0 0.0
        %4338 = vmatprep.subr.mxu0 0.0
        %4339 = vmatpush1.xpose.msra.mxu0 0.0
        %4340 = vmatprep.subr.mxu0 0.0
        %4341 = vmatpush1.xpose.msra.mxu0 0.0
        %4342 = vmatprep.subr.mxu0 0.0
        %4343 = vmatpush1.xpose.msra.mxu0 0.0
        %4344 = vmatprep.subr.mxu0 0.0
        %4345 = vmatpush1.xpose.msra.mxu0 0.0
        %4346 = vmatprep.subr.mxu0 0.0
        %4347 = vmatpush1.xpose.msra.mxu0 0.0
        %4348 = vmatprep.subr.mxu0 0.0
        %4349 = vmatpush1.xpose.msra.mxu0 0.0
        %4350 = vmatprep.subr.mxu0 0.0
        %4351 = vmatpush1.xpose.msra.mxu0 0.0
        %4352 = vmatprep.subr.mxu0 0.0
        %4353 = vmatpush1.xpose.msra.mxu0 0.0
        %4354 = vmatprep.subr.mxu0 0.0
        %4355 = vmatpush1.xpose.msra.mxu0 0.0
        %4356 = vmatprep.subr.mxu0 0.0
        %4357 = vmatpush1.xpose.msra.mxu0 0.0
        %4358 = vmatprep.subr.mxu0 0.0
        %4359 = vmatpush1.xpose.msra.mxu0 0.0
        %4360 = vmatprep.subr.mxu0 0.0
        %4361 = vmatpush1.xpose.msra.mxu0 0.0
        %4362 = vmatprep.subr.mxu0 0.0
        %4363 = vmatpush1.xpose.msra.mxu0 0.0
        %4364 = vmatprep.subr.mxu0 0.0
        %4365 = vmatpush1.xpose.msra.mxu0 0.0
        %4366 = vmatprep.subr.mxu0 0.0
        %4367 = vmatpush1.xpose.msra.mxu0 0.0
        %4368 = vmatprep.subr.mxu0 0.0
        %4369 = vmatpush1.xpose.msra.mxu0 0.0
        %4370 = vmatprep.subr.mxu0 0.0
        %4371 = vmatpush1.xpose.msra.mxu0 0.0
        %4372 = vmatprep.subr.mxu0 0.0
        %4373 = vmatpush1.xpose.msra.mxu0 0.0
        %4374 = vmatprep.subr.mxu0 0.0
        %4375 = vmatpush1.xpose.msra.mxu0 0.0
        %4376 = vmatprep.subr.mxu0 0.0
        %4377 = vmatpush1.xpose.msra.mxu0 0.0
        %4378 = vmatprep.mubr.f32.mxu0 %v1038
        %4379 = vmatmul.mubr.f32.gmra.mrb[0].mxu0 %v1036
        %v4380 = vpop.f32.mrb[0].mxu0
        %v4381 = vadd.f32 %v4311, %v4380
        %v4382 = vpop.f32.mrb[0].mxu0
        %4383 = vdwg.mxu0
        %4384 = vmatprep.subr.mxu0 %v361
        %4385 = vmatpush1.xpose.msra.mxu0 %v360
        %4386 = vmatprep.subr.mxu0 %v553
        %4387 = vmatpush1.xpose.msra.mxu0 %v552
        %4388 = vmatprep.subr.mxu0 0.0
        %4389 = vmatpush1.xpose.msra.mxu0 0.0
        %4390 = vmatprep.subr.mxu0 0.0
        %4391 = vmatpush1.xpose.msra.mxu0 0.0
        %4392 = vmatprep.subr.mxu0 0.0
        %4393 = vmatpush1.xpose.msra.mxu0 0.0
        %4394 = vmatprep.subr.mxu0 0.0
        %4395 = vmatpush1.xpose.msra.mxu0 0.0
        %4396 = vmatprep.subr.mxu0 0.0
        %4397 = vmatpush1.xpose.msra.mxu0 0.0
        %4398 = vmatprep.subr.mxu0 0.0
        %4399 = vmatpush1.xpose.msra.mxu0 0.0
        %4400 = vmatprep.subr.mxu0 0.0
        %4401 = vmatpush1.xpose.msra.mxu0 0.0
        %4402 = vmatprep.subr.mxu0 0.0
        %4403 = vmatpush1.xpose.msra.mxu0 0.0
        %4404 = vmatprep.subr.mxu0 0.0
        %4405 = vmatpush1.xpose.msra.mxu0 0.0
        %4406 = vmatprep.subr.mxu0 0.0
        %4407 = vmatpush1.xpose.msra.mxu0 0.0
        %4408 = vmatprep.subr.mxu0 0.0
        %4409 = vmatpush1.xpose.msra.mxu0 0.0
        %4410 = vmatprep.subr.mxu0 0.0
        %4411 = vmatpush1.xpose.msra.mxu0 0.0
        %4412 = vmatprep.subr.mxu0 0.0
        %4413 = vmatpush1.xpose.msra.mxu0 0.0
        %4414 = vmatprep.subr.mxu0 0.0
        %4415 = vmatpush1.xpose.msra.mxu0 0.0
        %4416 = vmatprep.subr.mxu0 0.0
        %4417 = vmatpush1.xpose.msra.mxu0 0.0
        %4418 = vmatprep.subr.mxu0 0.0
        %4419 = vmatpush1.xpose.msra.mxu0 0.0
        %4420 = vmatprep.subr.mxu0 0.0
        %4421 = vmatpush1.xpose.msra.mxu0 0.0
        %4422 = vmatprep.subr.mxu0 0.0
        %4423 = vmatpush1.xpose.msra.mxu0 0.0
        %4424 = vmatprep.subr.mxu0 0.0
        %4425 = vmatpush1.xpose.msra.mxu0 0.0
        %4426 = vmatprep.subr.mxu0 0.0
        %4427 = vmatpush1.xpose.msra.mxu0 0.0
        %4428 = vmatprep.subr.mxu0 0.0
        %4429 = vmatpush1.xpose.msra.mxu0 0.0
        %4430 = vmatprep.subr.mxu0 0.0
        %4431 = vmatpush1.xpose.msra.mxu0 0.0
        %4432 = vmatprep.subr.mxu0 0.0
        %4433 = vmatpush1.xpose.msra.mxu0 0.0
        %4434 = vmatprep.subr.mxu0 0.0
        %4435 = vmatpush1.xpose.msra.mxu0 0.0
        %4436 = vmatprep.subr.mxu0 0.0
        %4437 = vmatpush1.xpose.msra.mxu0 0.0
        %4438 = vmatprep.subr.mxu0 0.0
        %4439 = vmatpush1.xpose.msra.mxu0 0.0
        %4440 = vmatprep.subr.mxu0 0.0
        %4441 = vmatpush1.xpose.msra.mxu0 0.0
        %4442 = vmatprep.subr.mxu0 0.0
        %4443 = vmatpush1.xpose.msra.mxu0 0.0
        %4444 = vmatprep.subr.mxu0 0.0
        %4445 = vmatpush1.xpose.msra.mxu0 0.0
        %4446 = vmatprep.subr.mxu0 0.0
        %4447 = vmatpush1.xpose.msra.mxu0 0.0
        %4448 = vmatprep.mubr.f32.mxu0 %v1054
        %4449 = vmatmul.mubr.f32.gmra.mrb[0].mxu0 %v1046
        %v4450 = vpop.f32.mrb[0].mxu0
        %v4451 = vadd.f32 %v4381, %v4450
        %v4452 = vpop.f32.mrb[0].mxu0
        %4453 = vdwg.mxu0
        %4454 = vmatprep.subr.mxu0 %v363
        %4455 = vmatpush1.xpose.msra.mxu0 %v362
        %4456 = vmatprep.subr.mxu0 %v555
        %4457 = vmatpush1.xpose.msra.mxu0 %v554
        %4458 = vmatprep.subr.mxu0 0.0
        %4459 = vmatpush1.xpose.msra.mxu0 0.0
        %4460 = vmatprep.subr.mxu0 0.0
        %4461 = vmatpush1.xpose.msra.mxu0 0.0
        %4462 = vmatprep.subr.mxu0 0.0
        %4463 = vmatpush1.xpose.msra.mxu0 0.0
        %4464 = vmatprep.subr.mxu0 0.0
        %4465 = vmatpush1.xpose.msra.mxu0 0.0
        %4466 = vmatprep.subr.mxu0 0.0
        %4467 = vmatpush1.xpose.msra.mxu0 0.0
        %4468 = vmatprep.subr.mxu0 0.0
        %4469 = vmatpush1.xpose.msra.mxu0 0.0
        %4470 = vmatprep.subr.mxu0 0.0
        %4471 = vmatpush1.xpose.msra.mxu0 0.0
        %4472 = vmatprep.subr.mxu0 0.0
        %4473 = vmatpush1.xpose.msra.mxu0 0.0
        %4474 = vmatprep.subr.mxu0 0.0
        %4475 = vmatpush1.xpose.msra.mxu0 0.0
        %4476 = vmatprep.subr.mxu0 0.0
        %4477 = vmatpush1.xpose.msra.mxu0 0.0
        %4478 = vmatprep.subr.mxu0 0.0
        %4479 = vmatpush1.xpose.msra.mxu0 0.0
        %4480 = vmatprep.subr.mxu0 0.0
        %4481 = vmatpush1.xpose.msra.mxu0 0.0
        %4482 = vmatprep.subr.mxu0 0.0
        %4483 = vmatpush1.xpose.msra.mxu0 0.0
        %4484 = vmatprep.subr.mxu0 0.0
        %4485 = vmatpush1.xpose.msra.mxu0 0.0
        %4486 = vmatprep.subr.mxu0 0.0
        %4487 = vmatpush1.xpose.msra.mxu0 0.0
        %4488 = vmatprep.subr.mxu0 0.0
        %4489 = vmatpush1.xpose.msra.mxu0 0.0
        %4490 = vmatprep.subr.mxu0 0.0
        %4491 = vmatpush1.xpose.msra.mxu0 0.0
        %4492 = vmatprep.subr.mxu0 0.0
        %4493 = vmatpush1.xpose.msra.mxu0 0.0
        %4494 = vmatprep.subr.mxu0 0.0
        %4495 = vmatpush1.xpose.msra.mxu0 0.0
        %4496 = vmatprep.subr.mxu0 0.0
        %4497 = vmatpush1.xpose.msra.mxu0 0.0
        %4498 = vmatprep.subr.mxu0 0.0
        %4499 = vmatpush1.xpose.msra.mxu0 0.0
        %4500 = vmatprep.subr.mxu0 0.0
        %4501 = vmatpush1.xpose.msra.mxu0 0.0
        %4502 = vmatprep.subr.mxu0 0.0
        %4503 = vmatpush1.xpose.msra.mxu0 0.0
        %4504 = vmatprep.subr.mxu0 0.0
        %4505 = vmatpush1.xpose.msra.mxu0 0.0
        %4506 = vmatprep.subr.mxu0 0.0
        %4507 = vmatpush1.xpose.msra.mxu0 0.0
        %4508 = vmatprep.subr.mxu0 0.0
        %4509 = vmatpush1.xpose.msra.mxu0 0.0
        %4510 = vmatprep.subr.mxu0 0.0
        %4511 = vmatpush1.xpose.msra.mxu0 0.0
        %4512 = vmatprep.subr.mxu0 0.0
        %4513 = vmatpush1.xpose.msra.mxu0 0.0
        %4514 = vmatprep.subr.mxu0 0.0
        %4515 = vmatpush1.xpose.msra.mxu0 0.0
        %4516 = vmatprep.subr.mxu0 0.0
        %4517 = vmatpush1.xpose.msra.mxu0 0.0
        %4518 = vmatprep.mubr.f32.mxu0 %v1055
        %4519 = vmatmul.mubr.f32.gmra.mrb[0].mxu0 %v1053
        %v4520 = vpop.f32.mrb[0].mxu0
        %v4521 = vadd.f32 %v4451, %v4520
        %v4522 = vpop.f32.mrb[0].mxu0
        %4523 = vdwg.mxu0
        %4524 = vmatprep.subr.mxu0 %v365
        %4525 = vmatpush1.xpose.msra.mxu0 %v364
        %4526 = vmatprep.subr.mxu0 %v557
        %4527 = vmatpush1.xpose.msra.mxu0 %v556
        %4528 = vmatprep.subr.mxu0 0.0
        %4529 = vmatpush1.xpose.msra.mxu0 0.0
        %4530 = vmatprep.subr.mxu0 0.0
        %4531 = vmatpush1.xpose.msra.mxu0 0.0
        %4532 = vmatprep.subr.mxu0 0.0
        %4533 = vmatpush1.xpose.msra.mxu0 0.0
        %4534 = vmatprep.subr.mxu0 0.0
        %4535 = vmatpush1.xpose.msra.mxu0 0.0
        %4536 = vmatprep.subr.mxu0 0.0
        %4537 = vmatpush1.xpose.msra.mxu0 0.0
        %4538 = vmatprep.subr.mxu0 0.0
        %4539 = vmatpush1.xpose.msra.mxu0 0.0
        %4540 = vmatprep.subr.mxu0 0.0
        %4541 = vmatpush1.xpose.msra.mxu0 0.0
        %4542 = vmatprep.subr.mxu0 0.0
        %4543 = vmatpush1.xpose.msra.mxu0 0.0
        %4544 = vmatprep.subr.mxu0 0.0
        %4545 = vmatpush1.xpose.msra.mxu0 0.0
        %4546 = vmatprep.subr.mxu0 0.0
        %4547 = vmatpush1.xpose.msra.mxu0 0.0
        %4548 = vmatprep.subr.mxu0 0.0
        %4549 = vmatpush1.xpose.msra.mxu0 0.0
        %4550 = vmatprep.subr.mxu0 0.0
        %4551 = vmatpush1.xpose.msra.mxu0 0.0
        %4552 = vmatprep.subr.mxu0 0.0
        %4553 = vmatpush1.xpose.msra.mxu0 0.0
        %4554 = vmatprep.subr.mxu0 0.0
        %4555 = vmatpush1.xpose.msra.mxu0 0.0
        %4556 = vmatprep.subr.mxu0 0.0
        %4557 = vmatpush1.xpose.msra.mxu0 0.0
        %4558 = vmatprep.subr.mxu0 0.0
        %4559 = vmatpush1.xpose.msra.mxu0 0.0
        %4560 = vmatprep.subr.mxu0 0.0
        %4561 = vmatpush1.xpose.msra.mxu0 0.0
        %4562 = vmatprep.subr.mxu0 0.0
        %4563 = vmatpush1.xpose.msra.mxu0 0.0
        %4564 = vmatprep.subr.mxu0 0.0
        %4565 = vmatpush1.xpose.msra.mxu0 0.0
        %4566 = vmatprep.subr.mxu0 0.0
        %4567 = vmatpush1.xpose.msra.mxu0 0.0
        %4568 = vmatprep.subr.mxu0 0.0
        %4569 = vmatpush1.xpose.msra.mxu0 0.0
        %4570 = vmatprep.subr.mxu0 0.0
        %4571 = vmatpush1.xpose.msra.mxu0 0.0
        %4572 = vmatprep.subr.mxu0 0.0
        %4573 = vmatpush1.xpose.msra.mxu0 0.0
        %4574 = vmatprep.subr.mxu0 0.0
        %4575 = vmatpush1.xpose.msra.mxu0 0.0
        %4576 = vmatprep.subr.mxu0 0.0
        %4577 = vmatpush1.xpose.msra.mxu0 0.0
        %4578 = vmatprep.subr.mxu0 0.0
        %4579 = vmatpush1.xpose.msra.mxu0 0.0
        %4580 = vmatprep.subr.mxu0 0.0
        %4581 = vmatpush1.xpose.msra.mxu0 0.0
        %4582 = vmatprep.subr.mxu0 0.0
        %4583 = vmatpush1.xpose.msra.mxu0 0.0
        %4584 = vmatprep.subr.mxu0 0.0
        %4585 = vmatpush1.xpose.msra.mxu0 0.0
        %4586 = vmatprep.subr.mxu0 0.0
        %4587 = vmatpush1.xpose.msra.mxu0 0.0
        %4588 = vmatprep.mubr.f32.mxu0 %v1071
        %4589 = vmatmul.mubr.f32.gmra.mrb[0].mxu0 %v1063
        %v4590 = vpop.f32.mrb[0].mxu0
        %v4591 = vadd.f32 %v4521, %v4590
        %v4592 = vpop.f32.mrb[0].mxu0
        %4593 = vdwg.mxu0
        %4594 = vmatprep.subr.mxu0 %v367
        %4595 = vmatpush1.xpose.msra.mxu0 %v366
        %4596 = vmatprep.subr.mxu0 %v559
        %4597 = vmatpush1.xpose.msra.mxu0 %v558
        %4598 = vmatprep.subr.mxu0 0.0
        %4599 = vmatpush1.xpose.msra.mxu0 0.0
        %4600 = vmatprep.subr.mxu0 0.0
        %4601 = vmatpush1.xpose.msra.mxu0 0.0
        %4602 = vmatprep.subr.mxu0 0.0
        %4603 = vmatpush1.xpose.msra.mxu0 0.0
        %4604 = vmatprep.subr.mxu0 0.0
        %4605 = vmatpush1.xpose.msra.mxu0 0.0
        %4606 = vmatprep.subr.mxu0 0.0
        %4607 = vmatpush1.xpose.msra.mxu0 0.0
        %4608 = vmatprep.subr.mxu0 0.0
        %4609 = vmatpush1.xpose.msra.mxu0 0.0
        %4610 = vmatprep.subr.mxu0 0.0
        %4611 = vmatpush1.xpose.msra.mxu0 0.0
        %4612 = vmatprep.subr.mxu0 0.0
        %4613 = vmatpush1.xpose.msra.mxu0 0.0
        %4614 = vmatprep.subr.mxu0 0.0
        %4615 = vmatpush1.xpose.msra.mxu0 0.0
        %4616 = vmatprep.subr.mxu0 0.0
        %4617 = vmatpush1.xpose.msra.mxu0 0.0
        %4618 = vmatprep.subr.mxu0 0.0
        %4619 = vmatpush1.xpose.msra.mxu0 0.0
        %4620 = vmatprep.subr.mxu0 0.0
        %4621 = vmatpush1.xpose.msra.mxu0 0.0
        %4622 = vmatprep.subr.mxu0 0.0
        %4623 = vmatpush1.xpose.msra.mxu0 0.0
        %4624 = vmatprep.subr.mxu0 0.0
        %4625 = vmatpush1.xpose.msra.mxu0 0.0
        %4626 = vmatprep.subr.mxu0 0.0
        %4627 = vmatpush1.xpose.msra.mxu0 0.0
        %4628 = vmatprep.subr.mxu0 0.0
        %4629 = vmatpush1.xpose.msra.mxu0 0.0
        %4630 = vmatprep.subr.mxu0 0.0
        %4631 = vmatpush1.xpose.msra.mxu0 0.0
        %4632 = vmatprep.subr.mxu0 0.0
        %4633 = vmatpush1.xpose.msra.mxu0 0.0
        %4634 = vmatprep.subr.mxu0 0.0
        %4635 = vmatpush1.xpose.msra.mxu0 0.0
        %4636 = vmatprep.subr.mxu0 0.0
        %4637 = vmatpush1.xpose.msra.mxu0 0.0
        %4638 = vmatprep.subr.mxu0 0.0
        %4639 = vmatpush1.xpose.msra.mxu0 0.0
        %4640 = vmatprep.subr.mxu0 0.0
        %4641 = vmatpush1.xpose.msra.mxu0 0.0
        %4642 = vmatprep.subr.mxu0 0.0
        %4643 = vmatpush1.xpose.msra.mxu0 0.0
        %4644 = vmatprep.subr.mxu0 0.0
        %4645 = vmatpush1.xpose.msra.mxu0 0.0
        %4646 = vmatprep.subr.mxu0 0.0
        %4647 = vmatpush1.xpose.msra.mxu0 0.0
        %4648 = vmatprep.subr.mxu0 0.0
        %4649 = vmatpush1.xpose.msra.mxu0 0.0
        %4650 = vmatprep.subr.mxu0 0.0
        %4651 = vmatpush1.xpose.msra.mxu0 0.0
        %4652 = vmatprep.subr.mxu0 0.0
        %4653 = vmatpush1.xpose.msra.mxu0 0.0
        %4654 = vmatprep.subr.mxu0 0.0
        %4655 = vmatpush1.xpose.msra.mxu0 0.0
        %4656 = vmatprep.subr.mxu0 0.0
        %4657 = vmatpush1.xpose.msra.mxu0 0.0
        %4658 = vmatprep.mubr.f32.mxu0 %v1072
        %4659 = vmatmul.mubr.f32.gmra.mrb[0].mxu0 %v1070
        %v4660 = vpop.f32.mrb[0].mxu0
        %v4661 = vadd.f32 %v4591, %v4660
        %v4662 = vpop.f32.mrb[0].mxu0
        %4663 = vdwg.mxu0
        %4664 = vmatprep.subr.mxu0 %v369
        %4665 = vmatpush1.xpose.msra.mxu0 %v368
        %4666 = vmatprep.subr.mxu0 %v561
        %4667 = vmatpush1.xpose.msra.mxu0 %v560
        %4668 = vmatprep.subr.mxu0 0.0
        %4669 = vmatpush1.xpose.msra.mxu0 0.0
        %4670 = vmatprep.subr.mxu0 0.0
        %4671 = vmatpush1.xpose.msra.mxu0 0.0
        %4672 = vmatprep.subr.mxu0 0.0
        %4673 = vmatpush1.xpose.msra.mxu0 0.0
        %4674 = vmatprep.subr.mxu0 0.0
        %4675 = vmatpush1.xpose.msra.mxu0 0.0
        %4676 = vmatprep.subr.mxu0 0.0
        %4677 = vmatpush1.xpose.msra.mxu0 0.0
        %4678 = vmatprep.subr.mxu0 0.0
        %4679 = vmatpush1.xpose.msra.mxu0 0.0
        %4680 = vmatprep.subr.mxu0 0.0
        %4681 = vmatpush1.xpose.msra.mxu0 0.0
        %4682 = vmatprep.subr.mxu0 0.0
        %4683 = vmatpush1.xpose.msra.mxu0 0.0
        %4684 = vmatprep.subr.mxu0 0.0
        %4685 = vmatpush1.xpose.msra.mxu0 0.0
        %4686 = vmatprep.subr.mxu0 0.0
        %4687 = vmatpush1.xpose.msra.mxu0 0.0
        %4688 = vmatprep.subr.mxu0 0.0
        %4689 = vmatpush1.xpose.msra.mxu0 0.0
        %4690 = vmatprep.subr.mxu0 0.0
        %4691 = vmatpush1.xpose.msra.mxu0 0.0
        %4692 = vmatprep.subr.mxu0 0.0
        %4693 = vmatpush1.xpose.msra.mxu0 0.0
        %4694 = vmatprep.subr.mxu0 0.0
        %4695 = vmatpush1.xpose.msra.mxu0 0.0
        %4696 = vmatprep.subr.mxu0 0.0
        %4697 = vmatpush1.xpose.msra.mxu0 0.0
        %4698 = vmatprep.subr.mxu0 0.0
        %4699 = vmatpush1.xpose.msra.mxu0 0.0
        %4700 = vmatprep.subr.mxu0 0.0
        %4701 = vmatpush1.xpose.msra.mxu0 0.0
        %4702 = vmatprep.subr.mxu0 0.0
        %4703 = vmatpush1.xpose.msra.mxu0 0.0
        %4704 = vmatprep.subr.mxu0 0.0
        %4705 = vmatpush1.xpose.msra.mxu0 0.0
        %4706 = vmatprep.subr.mxu0 0.0
        %4707 = vmatpush1.xpose.msra.mxu0 0.0
        %4708 = vmatprep.subr.mxu0 0.0
        %4709 = vmatpush1.xpose.msra.mxu0 0.0
        %4710 = vmatprep.subr.mxu0 0.0
        %4711 = vmatpush1.xpose.msra.mxu0 0.0
        %4712 = vmatprep.subr.mxu0 0.0
        %4713 = vmatpush1.xpose.msra.mxu0 0.0
        %4714 = vmatprep.subr.mxu0 0.0
        %4715 = vmatpush1.xpose.msra.mxu0 0.0
        %4716 = vmatprep.subr.mxu0 0.0
        %4717 = vmatpush1.xpose.msra.mxu0 0.0
        %4718 = vmatprep.subr.mxu0 0.0
        %4719 = vmatpush1.xpose.msra.mxu0 0.0
        %4720 = vmatprep.subr.mxu0 0.0
        %4721 = vmatpush1.xpose.msra.mxu0 0.0
        %4722 = vmatprep.subr.mxu0 0.0
        %4723 = vmatpush1.xpose.msra.mxu0 0.0
        %4724 = vmatprep.subr.mxu0 0.0
        %4725 = vmatpush1.xpose.msra.mxu0 0.0
        %4726 = vmatprep.subr.mxu0 0.0
        %4727 = vmatpush1.xpose.msra.mxu0 0.0
        %4728 = vmatprep.mubr.f32.mxu0 %v1088
        %4729 = vmatmul.mubr.f32.gmra.mrb[0].mxu0 %v1080
        %v4730 = vpop.f32.mrb[0].mxu0
        %v4731 = vadd.f32 %v4661, %v4730
        %v4732 = vpop.f32.mrb[0].mxu0
        %4733 = vdwg.mxu0
        %4734 = vmatprep.subr.mxu0 %v371
        %4735 = vmatpush1.xpose.msra.mxu0 %v370
        %4736 = vmatprep.subr.mxu0 %v563
        %4737 = vmatpush1.xpose.msra.mxu0 %v562
        %4738 = vmatprep.subr.mxu0 0.0
        %4739 = vmatpush1.xpose.msra.mxu0 0.0
        %4740 = vmatprep.subr.mxu0 0.0
        %4741 = vmatpush1.xpose.msra.mxu0 0.0
        %4742 = vmatprep.subr.mxu0 0.0
        %4743 = vmatpush1.xpose.msra.mxu0 0.0
        %4744 = vmatprep.subr.mxu0 0.0
        %4745 = vmatpush1.xpose.msra.mxu0 0.0
        %4746 = vmatprep.subr.mxu0 0.0
        %4747 = vmatpush1.xpose.msra.mxu0 0.0
        %4748 = vmatprep.subr.mxu0 0.0
        %4749 = vmatpush1.xpose.msra.mxu0 0.0
        %4750 = vmatprep.subr.mxu0 0.0
        %4751 = vmatpush1.xpose.msra.mxu0 0.0
        %4752 = vmatprep.subr.mxu0 0.0
        %4753 = vmatpush1.xpose.msra.mxu0 0.0
        %4754 = vmatprep.subr.mxu0 0.0
        %4755 = vmatpush1.xpose.msra.mxu0 0.0
        %4756 = vmatprep.subr.mxu0 0.0
        %4757 = vmatpush1.xpose.msra.mxu0 0.0
        %4758 = vmatprep.subr.mxu0 0.0
        %4759 = vmatpush1.xpose.msra.mxu0 0.0
        %4760 = vmatprep.subr.mxu0 0.0
        %4761 = vmatpush1.xpose.msra.mxu0 0.0
        %4762 = vmatprep.subr.mxu0 0.0
        %4763 = vmatpush1.xpose.msra.mxu0 0.0
        %4764 = vmatprep.subr.mxu0 0.0
        %4765 = vmatpush1.xpose.msra.mxu0 0.0
        %4766 = vmatprep.subr.mxu0 0.0
        %4767 = vmatpush1.xpose.msra.mxu0 0.0
        %4768 = vmatprep.subr.mxu0 0.0
        %4769 = vmatpush1.xpose.msra.mxu0 0.0
        %4770 = vmatprep.subr.mxu0 0.0
        %4771 = vmatpush1.xpose.msra.mxu0 0.0
        %4772 = vmatprep.subr.mxu0 0.0
        %4773 = vmatpush1.xpose.msra.mxu0 0.0
        %4774 = vmatprep.subr.mxu0 0.0
        %4775 = vmatpush1.xpose.msra.mxu0 0.0
        %4776 = vmatprep.subr.mxu0 0.0
        %4777 = vmatpush1.xpose.msra.mxu0 0.0
        %4778 = vmatprep.subr.mxu0 0.0
        %4779 = vmatpush1.xpose.msra.mxu0 0.0
        %4780 = vmatprep.subr.mxu0 0.0
        %4781 = vmatpush1.xpose.msra.mxu0 0.0
        %4782 = vmatprep.subr.mxu0 0.0
        %4783 = vmatpush1.xpose.msra.mxu0 0.0
        %4784 = vmatprep.subr.mxu0 0.0
        %4785 = vmatpush1.xpose.msra.mxu0 0.0
        %4786 = vmatprep.subr.mxu0 0.0
        %4787 = vmatpush1.xpose.msra.mxu0 0.0
        %4788 = vmatprep.subr.mxu0 0.0
        %4789 = vmatpush1.xpose.msra.mxu0 0.0
        %4790 = vmatprep.subr.mxu0 0.0
        %4791 = vmatpush1.xpose.msra.mxu0 0.0
        %4792 = vmatprep.subr.mxu0 0.0
        %4793 = vmatpush1.xpose.msra.mxu0 0.0
        %4794 = vmatprep.subr.mxu0 0.0
        %4795 = vmatpush1.xpose.msra.mxu0 0.0
        %4796 = vmatprep.subr.mxu0 0.0
        %4797 = vmatpush1.xpose.msra.mxu0 0.0
        %4798 = vmatprep.mubr.f32.mxu0 %v1089
        %4799 = vmatmul.mubr.f32.gmra.mrb[0].mxu0 %v1087
        %v4800 = vpop.f32.mrb[0].mxu0
        %v4801 = vadd.f32 %v4731, %v4800
        %v4802 = vpop.f32.mrb[0].mxu0
        %4803 = vdwg.mxu0
        %4804 = vmatprep.subr.mxu0 %v373
        %4805 = vmatpush1.xpose.msra.mxu0 %v372
        %4806 = vmatprep.subr.mxu0 %v565
        %4807 = vmatpush1.xpose.msra.mxu0 %v564
        %4808 = vmatprep.subr.mxu0 0.0
        %4809 = vmatpush1.xpose.msra.mxu0 0.0
        %4810 = vmatprep.subr.mxu0 0.0
        %4811 = vmatpush1.xpose.msra.mxu0 0.0
        %4812 = vmatprep.subr.mxu0 0.0
        %4813 = vmatpush1.xpose.msra.mxu0 0.0
        %4814 = vmatprep.subr.mxu0 0.0
        %4815 = vmatpush1.xpose.msra.mxu0 0.0
        %4816 = vmatprep.subr.mxu0 0.0
        %4817 = vmatpush1.xpose.msra.mxu0 0.0
        %4818 = vmatprep.subr.mxu0 0.0
        %4819 = vmatpush1.xpose.msra.mxu0 0.0
        %4820 = vmatprep.subr.mxu0 0.0
        %4821 = vmatpush1.xpose.msra.mxu0 0.0
        %4822 = vmatprep.subr.mxu0 0.0
        %4823 = vmatpush1.xpose.msra.mxu0 0.0
        %4824 = vmatprep.subr.mxu0 0.0
        %4825 = vmatpush1.xpose.msra.mxu0 0.0
        %4826 = vmatprep.subr.mxu0 0.0
        %4827 = vmatpush1.xpose.msra.mxu0 0.0
        %4828 = vmatprep.subr.mxu0 0.0
        %4829 = vmatpush1.xpose.msra.mxu0 0.0
        %4830 = vmatprep.subr.mxu0 0.0
        %4831 = vmatpush1.xpose.msra.mxu0 0.0
        %4832 = vmatprep.subr.mxu0 0.0
        %4833 = vmatpush1.xpose.msra.mxu0 0.0
        %4834 = vmatprep.subr.mxu0 0.0
        %4835 = vmatpush1.xpose.msra.mxu0 0.0
        %4836 = vmatprep.subr.mxu0 0.0
        %4837 = vmatpush1.xpose.msra.mxu0 0.0
        %4838 = vmatprep.subr.mxu0 0.0
        %4839 = vmatpush1.xpose.msra.mxu0 0.0
        %4840 = vmatprep.subr.mxu0 0.0
        %4841 = vmatpush1.xpose.msra.mxu0 0.0
        %4842 = vmatprep.subr.mxu0 0.0
        %4843 = vmatpush1.xpose.msra.mxu0 0.0
        %4844 = vmatprep.subr.mxu0 0.0
        %4845 = vmatpush1.xpose.msra.mxu0 0.0
        %4846 = vmatprep.subr.mxu0 0.0
        %4847 = vmatpush1.xpose.msra.mxu0 0.0
        %4848 = vmatprep.subr.mxu0 0.0
        %4849 = vmatpush1.xpose.msra.mxu0 0.0
        %4850 = vmatprep.subr.mxu0 0.0
        %4851 = vmatpush1.xpose.msra.mxu0 0.0
        %4852 = vmatprep.subr.mxu0 0.0
        %4853 = vmatpush1.xpose.msra.mxu0 0.0
        %4854 = vmatprep.subr.mxu0 0.0
        %4855 = vmatpush1.xpose.msra.mxu0 0.0
        %4856 = vmatprep.subr.mxu0 0.0
        %4857 = vmatpush1.xpose.msra.mxu0 0.0
        %4858 = vmatprep.subr.mxu0 0.0
        %4859 = vmatpush1.xpose.msra.mxu0 0.0
        %4860 = vmatprep.subr.mxu0 0.0
        %4861 = vmatpush1.xpose.msra.mxu0 0.0
        %4862 = vmatprep.subr.mxu0 0.0
        %4863 = vmatpush1.xpose.msra.mxu0 0.0
        %4864 = vmatprep.subr.mxu0 0.0
        %4865 = vmatpush1.xpose.msra.mxu0 0.0
        %4866 = vmatprep.subr.mxu0 0.0
        %4867 = vmatpush1.xpose.msra.mxu0 0.0
        %4868 = vmatprep.mubr.f32.mxu0 %v1105
        %4869 = vmatmul.mubr.f32.gmra.mrb[0].mxu0 %v1097
        %v4870 = vpop.f32.mrb[0].mxu0
        %v4871 = vadd.f32 %v4801, %v4870
        %v4872 = vpop.f32.mrb[0].mxu0
        %4873 = vdwg.mxu0
        %4874 = vmatprep.subr.mxu0 %v375
        %4875 = vmatpush1.xpose.msra.mxu0 %v374
        %4876 = vmatprep.subr.mxu0 %v567
        %4877 = vmatpush1.xpose.msra.mxu0 %v566
        %4878 = vmatprep.subr.mxu0 0.0
        %4879 = vmatpush1.xpose.msra.mxu0 0.0
        %4880 = vmatprep.subr.mxu0 0.0
        %4881 = vmatpush1.xpose.msra.mxu0 0.0
        %4882 = vmatprep.subr.mxu0 0.0
        %4883 = vmatpush1.xpose.msra.mxu0 0.0
        %4884 = vmatprep.subr.mxu0 0.0
        %4885 = vmatpush1.xpose.msra.mxu0 0.0
        %4886 = vmatprep.subr.mxu0 0.0
        %4887 = vmatpush1.xpose.msra.mxu0 0.0
        %4888 = vmatprep.subr.mxu0 0.0
        %4889 = vmatpush1.xpose.msra.mxu0 0.0
        %4890 = vmatprep.subr.mxu0 0.0
        %4891 = vmatpush1.xpose.msra.mxu0 0.0
        %4892 = vmatprep.subr.mxu0 0.0
        %4893 = vmatpush1.xpose.msra.mxu0 0.0
        %4894 = vmatprep.subr.mxu0 0.0
        %4895 = vmatpush1.xpose.msra.mxu0 0.0
        %4896 = vmatprep.subr.mxu0 0.0
        %4897 = vmatpush1.xpose.msra.mxu0 0.0
        %4898 = vmatprep.subr.mxu0 0.0
        %4899 = vmatpush1.xpose.msra.mxu0 0.0
        %4900 = vmatprep.subr.mxu0 0.0
        %4901 = vmatpush1.xpose.msra.mxu0 0.0
        %4902 = vmatprep.subr.mxu0 0.0
        %4903 = vmatpush1.xpose.msra.mxu0 0.0
        %4904 = vmatprep.subr.mxu0 0.0
        %4905 = vmatpush1.xpose.msra.mxu0 0.0
        %4906 = vmatprep.subr.mxu0 0.0
        %4907 = vmatpush1.xpose.msra.mxu0 0.0
        %4908 = vmatprep.subr.mxu0 0.0
        %4909 = vmatpush1.xpose.msra.mxu0 0.0
        %4910 = vmatprep.subr.mxu0 0.0
        %4911 = vmatpush1.xpose.msra.mxu0 0.0
        %4912 = vmatprep.subr.mxu0 0.0
        %4913 = vmatpush1.xpose.msra.mxu0 0.0
        %4914 = vmatprep.subr.mxu0 0.0
        %4915 = vmatpush1.xpose.msra.mxu0 0.0
        %4916 = vmatprep.subr.mxu0 0.0
        %4917 = vmatpush1.xpose.msra.mxu0 0.0
        %4918 = vmatprep.subr.mxu0 0.0
        %4919 = vmatpush1.xpose.msra.mxu0 0.0
        %4920 = vmatprep.subr.mxu0 0.0
        %4921 = vmatpush1.xpose.msra.mxu0 0.0
        %4922 = vmatprep.subr.mxu0 0.0
        %4923 = vmatpush1.xpose.msra.mxu0 0.0
        %4924 = vmatprep.subr.mxu0 0.0
        %4925 = vmatpush1.xpose.msra.mxu0 0.0
        %4926 = vmatprep.subr.mxu0 0.0
        %4927 = vmatpush1.xpose.msra.mxu0 0.0
        %4928 = vmatprep.subr.mxu0 0.0
        %4929 = vmatpush1.xpose.msra.mxu0 0.0
        %4930 = vmatprep.subr.mxu0 0.0
        %4931 = vmatpush1.xpose.msra.mxu0 0.0
        %4932 = vmatprep.subr.mxu0 0.0
        %4933 = vmatpush1.xpose.msra.mxu0 0.0
        %4934 = vmatprep.subr.mxu0 0.0
        %4935 = vmatpush1.xpose.msra.mxu0 0.0
        %4936 = vmatprep.subr.mxu0 0.0
        %4937 = vmatpush1.xpose.msra.mxu0 0.0
        %4938 = vmatprep.mubr.f32.mxu0 %v1106
        %4939 = vmatmul.mubr.f32.gmra.mrb[0].mxu0 %v1104
        %v4940 = vpop.f32.mrb[0].mxu0
        %v4941 = vadd.f32 %v4871, %v4940
        %v4942 = vpop.f32.mrb[0].mxu0
        %4943 = vdwg.mxu0
        %4944 = vmatprep.subr.mxu0 %v377
        %4945 = vmatpush1.xpose.msra.mxu0 %v376
        %4946 = vmatprep.subr.mxu0 %v569
        %4947 = vmatpush1.xpose.msra.mxu0 %v568
        %4948 = vmatprep.subr.mxu0 0.0
        %4949 = vmatpush1.xpose.msra.mxu0 0.0
        %4950 = vmatprep.subr.mxu0 0.0
        %4951 = vmatpush1.xpose.msra.mxu0 0.0
        %4952 = vmatprep.subr.mxu0 0.0
        %4953 = vmatpush1.xpose.msra.mxu0 0.0
        %4954 = vmatprep.subr.mxu0 0.0
        %4955 = vmatpush1.xpose.msra.mxu0 0.0
        %4956 = vmatprep.subr.mxu0 0.0
        %4957 = vmatpush1.xpose.msra.mxu0 0.0
        %4958 = vmatprep.subr.mxu0 0.0
        %4959 = vmatpush1.xpose.msra.mxu0 0.0
        %4960 = vmatprep.subr.mxu0 0.0
        %4961 = vmatpush1.xpose.msra.mxu0 0.0
        %4962 = vmatprep.subr.mxu0 0.0
        %4963 = vmatpush1.xpose.msra.mxu0 0.0
        %4964 = vmatprep.subr.mxu0 0.0
        %4965 = vmatpush1.xpose.msra.mxu0 0.0
        %4966 = vmatprep.subr.mxu0 0.0
        %4967 = vmatpush1.xpose.msra.mxu0 0.0
        %4968 = vmatprep.subr.mxu0 0.0
        %4969 = vmatpush1.xpose.msra.mxu0 0.0
        %4970 = vmatprep.subr.mxu0 0.0
        %4971 = vmatpush1.xpose.msra.mxu0 0.0
        %4972 = vmatprep.subr.mxu0 0.0
        %4973 = vmatpush1.xpose.msra.mxu0 0.0
        %4974 = vmatprep.subr.mxu0 0.0
        %4975 = vmatpush1.xpose.msra.mxu0 0.0
        %4976 = vmatprep.subr.mxu0 0.0
        %4977 = vmatpush1.xpose.msra.mxu0 0.0
        %4978 = vmatprep.subr.mxu0 0.0
        %4979 = vmatpush1.xpose.msra.mxu0 0.0
        %4980 = vmatprep.subr.mxu0 0.0
        %4981 = vmatpush1.xpose.msra.mxu0 0.0
        %4982 = vmatprep.subr.mxu0 0.0
        %4983 = vmatpush1.xpose.msra.mxu0 0.0
        %4984 = vmatprep.subr.mxu0 0.0
        %4985 = vmatpush1.xpose.msra.mxu0 0.0
        %4986 = vmatprep.subr.mxu0 0.0
        %4987 = vmatpush1.xpose.msra.mxu0 0.0
        %4988 = vmatprep.subr.mxu0 0.0
        %4989 = vmatpush1.xpose.msra.mxu0 0.0
        %4990 = vmatprep.subr.mxu0 0.0
        %4991 = vmatpush1.xpose.msra.mxu0 0.0
        %4992 = vmatprep.subr.mxu0 0.0
        %4993 = vmatpush1.xpose.msra.mxu0 0.0
        %4994 = vmatprep.subr.mxu0 0.0
        %4995 = vmatpush1.xpose.msra.mxu0 0.0
        %4996 = vmatprep.subr.mxu0 0.0
        %4997 = vmatpush1.xpose.msra.mxu0 0.0
        %4998 = vmatprep.subr.mxu0 0.0
        %4999 = vmatpush1.xpose.msra.mxu0 0.0
        %5000 = vmatprep.subr.mxu0 0.0
        %5001 = vmatpush1.xpose.msra.mxu0 0.0
        %5002 = vmatprep.subr.mxu0 0.0
        %5003 = vmatpush1.xpose.msra.mxu0 0.0
        %5004 = vmatprep.subr.mxu0 0.0
        %5005 = vmatpush1.xpose.msra.mxu0 0.0
        %5006 = vmatprep.subr.mxu0 0.0
        %5007 = vmatpush1.xpose.msra.mxu0 0.0
        %5008 = vmatprep.mubr.f32.mxu0 %v1122
        %5009 = vmatmul.mubr.f32.gmra.mrb[0].mxu0 %v1114
        %v5010 = vpop.f32.mrb[0].mxu0
        %v5011 = vadd.f32 %v4941, %v5010
        %v5012 = vpop.f32.mrb[0].mxu0
        %5013 = vdwg.mxu0
        %5014 = vmatprep.subr.mxu0 %v379
        %5015 = vmatpush1.xpose.msra.mxu0 %v378
        %5016 = vmatprep.subr.mxu0 %v571
        %5017 = vmatpush1.xpose.msra.mxu0 %v570
        %5018 = vmatprep.subr.mxu0 0.0
        %5019 = vmatpush1.xpose.msra.mxu0 0.0
        %5020 = vmatprep.subr.mxu0 0.0
        %5021 = vmatpush1.xpose.msra.mxu0 0.0
        %5022 = vmatprep.subr.mxu0 0.0
        %5023 = vmatpush1.xpose.msra.mxu0 0.0
        %5024 = vmatprep.subr.mxu0 0.0
        %5025 = vmatpush1.xpose.msra.mxu0 0.0
        %5026 = vmatprep.subr.mxu0 0.0
        %5027 = vmatpush1.xpose.msra.mxu0 0.0
        %5028 = vmatprep.subr.mxu0 0.0
        %5029 = vmatpush1.xpose.msra.mxu0 0.0
        %5030 = vmatprep.subr.mxu0 0.0
        %5031 = vmatpush1.xpose.msra.mxu0 0.0
        %5032 = vmatprep.subr.mxu0 0.0
        %5033 = vmatpush1.xpose.msra.mxu0 0.0
        %5034 = vmatprep.subr.mxu0 0.0
        %5035 = vmatpush1.xpose.msra.mxu0 0.0
        %5036 = vmatprep.subr.mxu0 0.0
        %5037 = vmatpush1.xpose.msra.mxu0 0.0
        %5038 = vmatprep.subr.mxu0 0.0
        %5039 = vmatpush1.xpose.msra.mxu0 0.0
        %5040 = vmatprep.subr.mxu0 0.0
        %5041 = vmatpush1.xpose.msra.mxu0 0.0
        %5042 = vmatprep.subr.mxu0 0.0
        %5043 = vmatpush1.xpose.msra.mxu0 0.0
        %5044 = vmatprep.subr.mxu0 0.0
        %5045 = vmatpush1.xpose.msra.mxu0 0.0
        %5046 = vmatprep.subr.mxu0 0.0
        %5047 = vmatpush1.xpose.msra.mxu0 0.0
        %5048 = vmatprep.subr.mxu0 0.0
        %5049 = vmatpush1.xpose.msra.mxu0 0.0
        %5050 = vmatprep.subr.mxu0 0.0
        %5051 = vmatpush1.xpose.msra.mxu0 0.0
        %5052 = vmatprep.subr.mxu0 0.0
        %5053 = vmatpush1.xpose.msra.mxu0 0.0
        %5054 = vmatprep.subr.mxu0 0.0
        %5055 = vmatpush1.xpose.msra.mxu0 0.0
        %5056 = vmatprep.subr.mxu0 0.0
        %5057 = vmatpush1.xpose.msra.mxu0 0.0
        %5058 = vmatprep.subr.mxu0 0.0
        %5059 = vmatpush1.xpose.msra.mxu0 0.0
        %5060 = vmatprep.subr.mxu0 0.0
        %5061 = vmatpush1.xpose.msra.mxu0 0.0
        %5062 = vmatprep.subr.mxu0 0.0
        %5063 = vmatpush1.xpose.msra.mxu0 0.0
        %5064 = vmatprep.subr.mxu0 0.0
        %5065 = vmatpush1.xpose.msra.mxu0 0.0
        %5066 = vmatprep.subr.mxu0 0.0
        %5067 = vmatpush1.xpose.msra.mxu0 0.0
        %5068 = vmatprep.subr.mxu0 0.0
        %5069 = vmatpush1.xpose.msra.mxu0 0.0
        %5070 = vmatprep.subr.mxu0 0.0
        %5071 = vmatpush1.xpose.msra.mxu0 0.0
        %5072 = vmatprep.subr.mxu0 0.0
        %5073 = vmatpush1.xpose.msra.mxu0 0.0
        %5074 = vmatprep.subr.mxu0 0.0
        %5075 = vmatpush1.xpose.msra.mxu0 0.0
        %5076 = vmatprep.subr.mxu0 0.0
        %5077 = vmatpush1.xpose.msra.mxu0 0.0
        %5078 = vmatprep.mubr.f32.mxu0 %v1123
        %5079 = vmatmul.mubr.f32.gmra.mrb[0].mxu0 %v1121
        %v5080 = vpop.f32.mrb[0].mxu0
        %v5081 = vadd.f32 %v5011, %v5080
        %v5082 = vpop.f32.mrb[0].mxu0
        %5083 = vdwg.mxu0
        %5084 = vmatprep.subr.mxu0 %v381
        %5085 = vmatpush1.xpose.msra.mxu0 %v380
        %5086 = vmatprep.subr.mxu0 %v573
        %5087 = vmatpush1.xpose.msra.mxu0 %v572
        %5088 = vmatprep.subr.mxu0 0.0
        %5089 = vmatpush1.xpose.msra.mxu0 0.0
        %5090 = vmatprep.subr.mxu0 0.0
        %5091 = vmatpush1.xpose.msra.mxu0 0.0
        %5092 = vmatprep.subr.mxu0 0.0
        %5093 = vmatpush1.xpose.msra.mxu0 0.0
        %5094 = vmatprep.subr.mxu0 0.0
        %5095 = vmatpush1.xpose.msra.mxu0 0.0
        %5096 = vmatprep.subr.mxu0 0.0
        %5097 = vmatpush1.xpose.msra.mxu0 0.0
        %5098 = vmatprep.subr.mxu0 0.0
        %5099 = vmatpush1.xpose.msra.mxu0 0.0
        %5100 = vmatprep.subr.mxu0 0.0
        %5101 = vmatpush1.xpose.msra.mxu0 0.0
        %5102 = vmatprep.subr.mxu0 0.0
        %5103 = vmatpush1.xpose.msra.mxu0 0.0
        %5104 = vmatprep.subr.mxu0 0.0
        %5105 = vmatpush1.xpose.msra.mxu0 0.0
        %5106 = vmatprep.subr.mxu0 0.0
        %5107 = vmatpush1.xpose.msra.mxu0 0.0
        %5108 = vmatprep.subr.mxu0 0.0
        %5109 = vmatpush1.xpose.msra.mxu0 0.0
        %5110 = vmatprep.subr.mxu0 0.0
        %5111 = vmatpush1.xpose.msra.mxu0 0.0
        %5112 = vmatprep.subr.mxu0 0.0
        %5113 = vmatpush1.xpose.msra.mxu0 0.0
        %5114 = vmatprep.subr.mxu0 0.0
        %5115 = vmatpush1.xpose.msra.mxu0 0.0
        %5116 = vmatprep.subr.mxu0 0.0
        %5117 = vmatpush1.xpose.msra.mxu0 0.0
        %5118 = vmatprep.subr.mxu0 0.0
        %5119 = vmatpush1.xpose.msra.mxu0 0.0
        %5120 = vmatprep.subr.mxu0 0.0
        %5121 = vmatpush1.xpose.msra.mxu0 0.0
        %5122 = vmatprep.subr.mxu0 0.0
        %5123 = vmatpush1.xpose.msra.mxu0 0.0
        %5124 = vmatprep.subr.mxu0 0.0
        %5125 = vmatpush1.xpose.msra.mxu0 0.0
        %5126 = vmatprep.subr.mxu0 0.0
        %5127 = vmatpush1.xpose.msra.mxu0 0.0
        %5128 = vmatprep.subr.mxu0 0.0
        %5129 = vmatpush1.xpose.msra.mxu0 0.0
        %5130 = vmatprep.subr.mxu0 0.0
        %5131 = vmatpush1.xpose.msra.mxu0 0.0
        %5132 = vmatprep.subr.mxu0 0.0
        %5133 = vmatpush1.xpose.msra.mxu0 0.0
        %5134 = vmatprep.subr.mxu0 0.0
        %5135 = vmatpush1.xpose.msra.mxu0 0.0
        %5136 = vmatprep.subr.mxu0 0.0
        %5137 = vmatpush1.xpose.msra.mxu0 0.0
        %5138 = vmatprep.subr.mxu0 0.0
        %5139 = vmatpush1.xpose.msra.mxu0 0.0
        %5140 = vmatprep.subr.mxu0 0.0
        %5141 = vmatpush1.xpose.msra.mxu0 0.0
        %5142 = vmatprep.subr.mxu0 0.0
        %5143 = vmatpush1.xpose.msra.mxu0 0.0
        %5144 = vmatprep.subr.mxu0 0.0
        %5145 = vmatpush1.xpose.msra.mxu0 0.0
        %5146 = vmatprep.subr.mxu0 0.0
        %5147 = vmatpush1.xpose.msra.mxu0 0.0
        %5148 = vmatprep.mubr.f32.mxu0 %v1139
        %5149 = vmatmul.mubr.f32.gmra.mrb[0].mxu0 %v1131
        %v5150 = vpop.f32.mrb[0].mxu0
        %v5151 = vadd.f32 %v5081, %v5150
        %v5152 = vpop.f32.mrb[0].mxu0
        %5153 = vdwg.mxu0
        %5154 = vmatprep.subr.mxu0 %v383
        %5155 = vmatpush1.xpose.msra.mxu0 %v382
        %5156 = vmatprep.subr.mxu0 %v575
        %5157 = vmatpush1.xpose.msra.mxu0 %v574
        %5158 = vmatprep.subr.mxu0 0.0
        %5159 = vmatpush1.xpose.msra.mxu0 0.0
        %5160 = vmatprep.subr.mxu0 0.0
        %5161 = vmatpush1.xpose.msra.mxu0 0.0
        %5162 = vmatprep.subr.mxu0 0.0
        %5163 = vmatpush1.xpose.msra.mxu0 0.0
        %5164 = vmatprep.subr.mxu0 0.0
        %5165 = vmatpush1.xpose.msra.mxu0 0.0
        %5166 = vmatprep.subr.mxu0 0.0
        %5167 = vmatpush1.xpose.msra.mxu0 0.0
        %5168 = vmatprep.subr.mxu0 0.0
        %5169 = vmatpush1.xpose.msra.mxu0 0.0
        %5170 = vmatprep.subr.mxu0 0.0
        %5171 = vmatpush1.xpose.msra.mxu0 0.0
        %5172 = vmatprep.subr.mxu0 0.0
        %5173 = vmatpush1.xpose.msra.mxu0 0.0
        %5174 = vmatprep.subr.mxu0 0.0
        %5175 = vmatpush1.xpose.msra.mxu0 0.0
        %5176 = vmatprep.subr.mxu0 0.0
        %5177 = vmatpush1.xpose.msra.mxu0 0.0
        %5178 = vmatprep.subr.mxu0 0.0
        %5179 = vmatpush1.xpose.msra.mxu0 0.0
        %5180 = vmatprep.subr.mxu0 0.0
        %5181 = vmatpush1.xpose.msra.mxu0 0.0
        %5182 = vmatprep.subr.mxu0 0.0
        %5183 = vmatpush1.xpose.msra.mxu0 0.0
        %5184 = vmatprep.subr.mxu0 0.0
        %5185 = vmatpush1.xpose.msra.mxu0 0.0
        %5186 = vmatprep.subr.mxu0 0.0
        %5187 = vmatpush1.xpose.msra.mxu0 0.0
        %5188 = vmatprep.subr.mxu0 0.0
        %5189 = vmatpush1.xpose.msra.mxu0 0.0
        %5190 = vmatprep.subr.mxu0 0.0
        %5191 = vmatpush1.xpose.msra.mxu0 0.0
        %5192 = vmatprep.subr.mxu0 0.0
        %5193 = vmatpush1.xpose.msra.mxu0 0.0
        %5194 = vmatprep.subr.mxu0 0.0
        %5195 = vmatpush1.xpose.msra.mxu0 0.0
        %5196 = vmatprep.subr.mxu0 0.0
        %5197 = vmatpush1.xpose.msra.mxu0 0.0
        %5198 = vmatprep.subr.mxu0 0.0
        %5199 = vmatpush1.xpose.msra.mxu0 0.0
        %5200 = vmatprep.subr.mxu0 0.0
        %5201 = vmatpush1.xpose.msra.mxu0 0.0
        %5202 = vmatprep.subr.mxu0 0.0
        %5203 = vmatpush1.xpose.msra.mxu0 0.0
        %5204 = vmatprep.subr.mxu0 0.0
        %5205 = vmatpush1.xpose.msra.mxu0 0.0
        %5206 = vmatprep.subr.mxu0 0.0
        %5207 = vmatpush1.xpose.msra.mxu0 0.0
        %5208 = vmatprep.subr.mxu0 0.0
        %5209 = vmatpush1.xpose.msra.mxu0 0.0
        %5210 = vmatprep.subr.mxu0 0.0
        %5211 = vmatpush1.xpose.msra.mxu0 0.0
        %5212 = vmatprep.subr.mxu0 0.0
        %5213 = vmatpush1.xpose.msra.mxu0 0.0
        %5214 = vmatprep.subr.mxu0 0.0
        %5215 = vmatpush1.xpose.msra.mxu0 0.0
        %5216 = vmatprep.subr.mxu0 0.0
        %5217 = vmatpush1.xpose.msra.mxu0 0.0
        %5218 = vmatprep.mubr.f32.mxu0 %v1140
        %5219 = vmatmul.mubr.f32.gmra.mrb[0].mxu0 %v1138
        %v5220 = vpop.f32.mrb[0].mxu0
        %v5221 = vadd.f32 %v5151, %v5220
        %v5222 = vpop.f32.mrb[0].mxu0
        %5223 = vdwg.mxu0
        %5224 = vmatprep.subr.mxu0 %v385
        %5225 = vmatpush1.xpose.msra.mxu0 %v384
        %5226 = vmatprep.subr.mxu0 %v577
        %5227 = vmatpush1.xpose.msra.mxu0 %v576
        %5228 = vmatprep.subr.mxu0 0.0
        %5229 = vmatpush1.xpose.msra.mxu0 0.0
        %5230 = vmatprep.subr.mxu0 0.0
        %5231 = vmatpush1.xpose.msra.mxu0 0.0
        %5232 = vmatprep.subr.mxu0 0.0
        %5233 = vmatpush1.xpose.msra.mxu0 0.0
        %5234 = vmatprep.subr.mxu0 0.0
        %5235 = vmatpush1.xpose.msra.mxu0 0.0
        %5236 = vmatprep.subr.mxu0 0.0
        %5237 = vmatpush1.xpose.msra.mxu0 0.0
        %5238 = vmatprep.subr.mxu0 0.0
        %5239 = vmatpush1.xpose.msra.mxu0 0.0
        %5240 = vmatprep.subr.mxu0 0.0
        %5241 = vmatpush1.xpose.msra.mxu0 0.0
        %5242 = vmatprep.subr.mxu0 0.0
        %5243 = vmatpush1.xpose.msra.mxu0 0.0
        %5244 = vmatprep.subr.mxu0 0.0
        %5245 = vmatpush1.xpose.msra.mxu0 0.0
        %5246 = vmatprep.subr.mxu0 0.0
        %5247 = vmatpush1.xpose.msra.mxu0 0.0
        %5248 = vmatprep.subr.mxu0 0.0
        %5249 = vmatpush1.xpose.msra.mxu0 0.0
        %5250 = vmatprep.subr.mxu0 0.0
        %5251 = vmatpush1.xpose.msra.mxu0 0.0
        %5252 = vmatprep.subr.mxu0 0.0
        %5253 = vmatpush1.xpose.msra.mxu0 0.0
        %5254 = vmatprep.subr.mxu0 0.0
        %5255 = vmatpush1.xpose.msra.mxu0 0.0
        %5256 = vmatprep.subr.mxu0 0.0
        %5257 = vmatpush1.xpose.msra.mxu0 0.0
        %5258 = vmatprep.subr.mxu0 0.0
        %5259 = vmatpush1.xpose.msra.mxu0 0.0
        %5260 = vmatprep.subr.mxu0 0.0
        %5261 = vmatpush1.xpose.msra.mxu0 0.0
        %5262 = vmatprep.subr.mxu0 0.0
        %5263 = vmatpush1.xpose.msra.mxu0 0.0
        %5264 = vmatprep.subr.mxu0 0.0
        %5265 = vmatpush1.xpose.msra.mxu0 0.0
        %5266 = vmatprep.subr.mxu0 0.0
        %5267 = vmatpush1.xpose.msra.mxu0 0.0
        %5268 = vmatprep.subr.mxu0 0.0
        %5269 = vmatpush1.xpose.msra.mxu0 0.0
        %5270 = vmatprep.subr.mxu0 0.0
        %5271 = vmatpush1.xpose.msra.mxu0 0.0
        %5272 = vmatprep.subr.mxu0 0.0
        %5273 = vmatpush1.xpose.msra.mxu0 0.0
        %5274 = vmatprep.subr.mxu0 0.0
        %5275 = vmatpush1.xpose.msra.mxu0 0.0
        %5276 = vmatprep.subr.mxu0 0.0
        %5277 = vmatpush1.xpose.msra.mxu0 0.0
        %5278 = vmatprep.subr.mxu0 0.0
        %5279 = vmatpush1.xpose.msra.mxu0 0.0
        %5280 = vmatprep.subr.mxu0 0.0
        %5281 = vmatpush1.xpose.msra.mxu0 0.0
        %5282 = vmatprep.subr.mxu0 0.0
        %5283 = vmatpush1.xpose.msra.mxu0 0.0
        %5284 = vmatprep.subr.mxu0 0.0
        %5285 = vmatpush1.xpose.msra.mxu0 0.0
        %5286 = vmatprep.subr.mxu0 0.0
        %5287 = vmatpush1.xpose.msra.mxu0 0.0
        %5288 = vmatprep.mubr.f32.mxu0 %v1156
        %5289 = vmatmul.mubr.f32.gmra.mrb[0].mxu0 %v1148
        %v5290 = vpop.f32.mrb[0].mxu0
        %v5291 = vadd.f32 %v5221, %v5290
        %v5292 = vpop.f32.mrb[0].mxu0
        %5293 = vdwg.mxu0
        %5294 = vmatprep.subr.mxu0 %v387
        %5295 = vmatpush1.xpose.msra.mxu0 %v386
        %5296 = vmatprep.subr.mxu0 %v579
        %5297 = vmatpush1.xpose.msra.mxu0 %v578
        %5298 = vmatprep.subr.mxu0 0.0
        %5299 = vmatpush1.xpose.msra.mxu0 0.0
        %5300 = vmatprep.subr.mxu0 0.0
        %5301 = vmatpush1.xpose.msra.mxu0 0.0
        %5302 = vmatprep.subr.mxu0 0.0
        %5303 = vmatpush1.xpose.msra.mxu0 0.0
        %5304 = vmatprep.subr.mxu0 0.0
        %5305 = vmatpush1.xpose.msra.mxu0 0.0
        %5306 = vmatprep.subr.mxu0 0.0
        %5307 = vmatpush1.xpose.msra.mxu0 0.0
        %5308 = vmatprep.subr.mxu0 0.0
        %5309 = vmatpush1.xpose.msra.mxu0 0.0
        %5310 = vmatprep.subr.mxu0 0.0
        %5311 = vmatpush1.xpose.msra.mxu0 0.0
        %5312 = vmatprep.subr.mxu0 0.0
        %5313 = vmatpush1.xpose.msra.mxu0 0.0
        %5314 = vmatprep.subr.mxu0 0.0
        %5315 = vmatpush1.xpose.msra.mxu0 0.0
        %5316 = vmatprep.subr.mxu0 0.0
        %5317 = vmatpush1.xpose.msra.mxu0 0.0
        %5318 = vmatprep.subr.mxu0 0.0
        %5319 = vmatpush1.xpose.msra.mxu0 0.0
        %5320 = vmatprep.subr.mxu0 0.0
        %5321 = vmatpush1.xpose.msra.mxu0 0.0
        %5322 = vmatprep.subr.mxu0 0.0
        %5323 = vmatpush1.xpose.msra.mxu0 0.0
        %5324 = vmatprep.subr.mxu0 0.0
        %5325 = vmatpush1.xpose.msra.mxu0 0.0
        %5326 = vmatprep.subr.mxu0 0.0
        %5327 = vmatpush1.xpose.msra.mxu0 0.0
        %5328 = vmatprep.subr.mxu0 0.0
        %5329 = vmatpush1.xpose.msra.mxu0 0.0
        %5330 = vmatprep.subr.mxu0 0.0
        %5331 = vmatpush1.xpose.msra.mxu0 0.0
        %5332 = vmatprep.subr.mxu0 0.0
        %5333 = vmatpush1.xpose.msra.mxu0 0.0
        %5334 = vmatprep.subr.mxu0 0.0
        %5335 = vmatpush1.xpose.msra.mxu0 0.0
        %5336 = vmatprep.subr.mxu0 0.0
        %5337 = vmatpush1.xpose.msra.mxu0 0.0
        %5338 = vmatprep.subr.mxu0 0.0
        %5339 = vmatpush1.xpose.msra.mxu0 0.0
        %5340 = vmatprep.subr.mxu0 0.0
        %5341 = vmatpush1.xpose.msra.mxu0 0.0
        %5342 = vmatprep.subr.mxu0 0.0
        %5343 = vmatpush1.xpose.msra.mxu0 0.0
        %5344 = vmatprep.subr.mxu0 0.0
        %5345 = vmatpush1.xpose.msra.mxu0 0.0
        %5346 = vmatprep.subr.mxu0 0.0
        %5347 = vmatpush1.xpose.msra.mxu0 0.0
        %5348 = vmatprep.subr.mxu0 0.0
        %5349 = vmatpush1.xpose.msra.mxu0 0.0
        %5350 = vmatprep.subr.mxu0 0.0
        %5351 = vmatpush1.xpose.msra.mxu0 0.0
        %5352 = vmatprep.subr.mxu0 0.0
        %5353 = vmatpush1.xpose.msra.mxu0 0.0
        %5354 = vmatprep.subr.mxu0 0.0
        %5355 = vmatpush1.xpose.msra.mxu0 0.0
        %5356 = vmatprep.subr.mxu0 0.0
        %5357 = vmatpush1.xpose.msra.mxu0 0.0
        %5358 = vmatprep.mubr.f32.mxu0 %v1157
        %5359 = vmatmul.mubr.f32.gmra.mrb[0].mxu0 %v1155
        %v5360 = vpop.f32.mrb[0].mxu0
        %v5361 = vadd.f32 %v5291, %v5360
        %v5362 = vpop.f32.mrb[0].mxu0
        %5363 = vdwg.mxu0
        %5364 = vmatprep.subr.mxu0 %v389
        %5365 = vmatpush1.xpose.msra.mxu0 %v388
        %5366 = vmatprep.subr.mxu0 %v581
        %5367 = vmatpush1.xpose.msra.mxu0 %v580
        %5368 = vmatprep.subr.mxu0 0.0
        %5369 = vmatpush1.xpose.msra.mxu0 0.0
        %5370 = vmatprep.subr.mxu0 0.0
        %5371 = vmatpush1.xpose.msra.mxu0 0.0
        %5372 = vmatprep.subr.mxu0 0.0
        %5373 = vmatpush1.xpose.msra.mxu0 0.0
        %5374 = vmatprep.subr.mxu0 0.0
        %5375 = vmatpush1.xpose.msra.mxu0 0.0
        %5376 = vmatprep.subr.mxu0 0.0
        %5377 = vmatpush1.xpose.msra.mxu0 0.0
        %5378 = vmatprep.subr.mxu0 0.0
        %5379 = vmatpush1.xpose.msra.mxu0 0.0
        %5380 = vmatprep.subr.mxu0 0.0
        %5381 = vmatpush1.xpose.msra.mxu0 0.0
        %5382 = vmatprep.subr.mxu0 0.0
        %5383 = vmatpush1.xpose.msra.mxu0 0.0
        %5384 = vmatprep.subr.mxu0 0.0
        %5385 = vmatpush1.xpose.msra.mxu0 0.0
        %5386 = vmatprep.subr.mxu0 0.0
        %5387 = vmatpush1.xpose.msra.mxu0 0.0
        %5388 = vmatprep.subr.mxu0 0.0
        %5389 = vmatpush1.xpose.msra.mxu0 0.0
        %5390 = vmatprep.subr.mxu0 0.0
        %5391 = vmatpush1.xpose.msra.mxu0 0.0
        %5392 = vmatprep.subr.mxu0 0.0
        %5393 = vmatpush1.xpose.msra.mxu0 0.0
        %5394 = vmatprep.subr.mxu0 0.0
        %5395 = vmatpush1.xpose.msra.mxu0 0.0
        %5396 = vmatprep.subr.mxu0 0.0
        %5397 = vmatpush1.xpose.msra.mxu0 0.0
        %5398 = vmatprep.subr.mxu0 0.0
        %5399 = vmatpush1.xpose.msra.mxu0 0.0
        %5400 = vmatprep.subr.mxu0 0.0
        %5401 = vmatpush1.xpose.msra.mxu0 0.0
        %5402 = vmatprep.subr.mxu0 0.0
        %5403 = vmatpush1.xpose.msra.mxu0 0.0
        %5404 = vmatprep.subr.mxu0 0.0
        %5405 = vmatpush1.xpose.msra.mxu0 0.0
        %5406 = vmatprep.subr.mxu0 0.0
        %5407 = vmatpush1.xpose.msra.mxu0 0.0
        %5408 = vmatprep.subr.mxu0 0.0
        %5409 = vmatpush1.xpose.msra.mxu0 0.0
        %5410 = vmatprep.subr.mxu0 0.0
        %5411 = vmatpush1.xpose.msra.mxu0 0.0
        %5412 = vmatprep.subr.mxu0 0.0
        %5413 = vmatpush1.xpose.msra.mxu0 0.0
        %5414 = vmatprep.subr.mxu0 0.0
        %5415 = vmatpush1.xpose.msra.mxu0 0.0
        %5416 = vmatprep.subr.mxu0 0.0
        %5417 = vmatpush1.xpose.msra.mxu0 0.0
        %5418 = vmatprep.subr.mxu0 0.0
        %5419 = vmatpush1.xpose.msra.mxu0 0.0
        %5420 = vmatprep.subr.mxu0 0.0
        %5421 = vmatpush1.xpose.msra.mxu0 0.0
        %5422 = vmatprep.subr.mxu0 0.0
        %5423 = vmatpush1.xpose.msra.mxu0 0.0
        %5424 = vmatprep.subr.mxu0 0.0
        %5425 = vmatpush1.xpose.msra.mxu0 0.0
        %5426 = vmatprep.subr.mxu0 0.0
        %5427 = vmatpush1.xpose.msra.mxu0 0.0
        %5428 = vmatprep.mubr.f32.mxu0 %v1173
        %5429 = vmatmul.mubr.f32.gmra.mrb[0].mxu0 %v1165
        %v5430 = vpop.f32.mrb[0].mxu0
        %v5431 = vadd.f32 %v5361, %v5430
        %v5432 = vpop.f32.mrb[0].mxu0
        %5433 = vdwg.mxu0
        %5434 = vmatprep.subr.mxu0 %v391
        %5435 = vmatpush1.xpose.msra.mxu0 %v390
        %5436 = vmatprep.subr.mxu0 %v583
        %5437 = vmatpush1.xpose.msra.mxu0 %v582
        %5438 = vmatprep.subr.mxu0 0.0
        %5439 = vmatpush1.xpose.msra.mxu0 0.0
        %5440 = vmatprep.subr.mxu0 0.0
        %5441 = vmatpush1.xpose.msra.mxu0 0.0
        %5442 = vmatprep.subr.mxu0 0.0
        %5443 = vmatpush1.xpose.msra.mxu0 0.0
        %5444 = vmatprep.subr.mxu0 0.0
        %5445 = vmatpush1.xpose.msra.mxu0 0.0
        %5446 = vmatprep.subr.mxu0 0.0
        %5447 = vmatpush1.xpose.msra.mxu0 0.0
        %5448 = vmatprep.subr.mxu0 0.0
        %5449 = vmatpush1.xpose.msra.mxu0 0.0
        %5450 = vmatprep.subr.mxu0 0.0
        %5451 = vmatpush1.xpose.msra.mxu0 0.0
        %5452 = vmatprep.subr.mxu0 0.0
        %5453 = vmatpush1.xpose.msra.mxu0 0.0
        %5454 = vmatprep.subr.mxu0 0.0
        %5455 = vmatpush1.xpose.msra.mxu0 0.0
        %5456 = vmatprep.subr.mxu0 0.0
        %5457 = vmatpush1.xpose.msra.mxu0 0.0
        %5458 = vmatprep.subr.mxu0 0.0
        %5459 = vmatpush1.xpose.msra.mxu0 0.0
        %5460 = vmatprep.subr.mxu0 0.0
        %5461 = vmatpush1.xpose.msra.mxu0 0.0
        %5462 = vmatprep.subr.mxu0 0.0
        %5463 = vmatpush1.xpose.msra.mxu0 0.0
        %5464 = vmatprep.subr.mxu0 0.0
        %5465 = vmatpush1.xpose.msra.mxu0 0.0
        %5466 = vmatprep.subr.mxu0 0.0
        %5467 = vmatpush1.xpose.msra.mxu0 0.0
        %5468 = vmatprep.subr.mxu0 0.0
        %5469 = vmatpush1.xpose.msra.mxu0 0.0
        %5470 = vmatprep.subr.mxu0 0.0
        %5471 = vmatpush1.xpose.msra.mxu0 0.0
        %5472 = vmatprep.subr.mxu0 0.0
        %5473 = vmatpush1.xpose.msra.mxu0 0.0
        %5474 = vmatprep.subr.mxu0 0.0
        %5475 = vmatpush1.xpose.msra.mxu0 0.0
        %5476 = vmatprep.subr.mxu0 0.0
        %5477 = vmatpush1.xpose.msra.mxu0 0.0
        %5478 = vmatprep.subr.mxu0 0.0
        %5479 = vmatpush1.xpose.msra.mxu0 0.0
        %5480 = vmatprep.subr.mxu0 0.0
        %5481 = vmatpush1.xpose.msra.mxu0 0.0
        %5482 = vmatprep.subr.mxu0 0.0
        %5483 = vmatpush1.xpose.msra.mxu0 0.0
        %5484 = vmatprep.subr.mxu0 0.0
        %5485 = vmatpush1.xpose.msra.mxu0 0.0
        %5486 = vmatprep.subr.mxu0 0.0
        %5487 = vmatpush1.xpose.msra.mxu0 0.0
        %5488 = vmatprep.subr.mxu0 0.0
        %5489 = vmatpush1.xpose.msra.mxu0 0.0
        %5490 = vmatprep.subr.mxu0 0.0
        %5491 = vmatpush1.xpose.msra.mxu0 0.0
        %5492 = vmatprep.subr.mxu0 0.0
        %5493 = vmatpush1.xpose.msra.mxu0 0.0
        %5494 = vmatprep.subr.mxu0 0.0
        %5495 = vmatpush1.xpose.msra.mxu0 0.0
        %5496 = vmatprep.subr.mxu0 0.0
        %5497 = vmatpush1.xpose.msra.mxu0 0.0
        %5498 = vmatprep.mubr.f32.mxu0 %v1174
        %5499 = vmatmul.mubr.f32.gmra.mrb[0].mxu0 %v1172
        %v5500 = vpop.f32.mrb[0].mxu0
        %v5501 = vadd.f32 %v5431, %v5500
        %v5502 = vpop.f32.mrb[0].mxu0
        %5503 = vdwg.mxu0
        %5504 = vmatprep.subr.mxu0 %v393
        %5505 = vmatpush1.xpose.msra.mxu0 %v392
        %5506 = vmatprep.subr.mxu0 %v585
        %5507 = vmatpush1.xpose.msra.mxu0 %v584
        %5508 = vmatprep.subr.mxu0 0.0
        %5509 = vmatpush1.xpose.msra.mxu0 0.0
        %5510 = vmatprep.subr.mxu0 0.0
        %5511 = vmatpush1.xpose.msra.mxu0 0.0
        %5512 = vmatprep.subr.mxu0 0.0
        %5513 = vmatpush1.xpose.msra.mxu0 0.0
        %5514 = vmatprep.subr.mxu0 0.0
        %5515 = vmatpush1.xpose.msra.mxu0 0.0
        %5516 = vmatprep.subr.mxu0 0.0
        %5517 = vmatpush1.xpose.msra.mxu0 0.0
        %5518 = vmatprep.subr.mxu0 0.0
        %5519 = vmatpush1.xpose.msra.mxu0 0.0
        %5520 = vmatprep.subr.mxu0 0.0
        %5521 = vmatpush1.xpose.msra.mxu0 0.0
        %5522 = vmatprep.subr.mxu0 0.0
        %5523 = vmatpush1.xpose.msra.mxu0 0.0
        %5524 = vmatprep.subr.mxu0 0.0
        %5525 = vmatpush1.xpose.msra.mxu0 0.0
        %5526 = vmatprep.subr.mxu0 0.0
        %5527 = vmatpush1.xpose.msra.mxu0 0.0
        %5528 = vmatprep.subr.mxu0 0.0
        %5529 = vmatpush1.xpose.msra.mxu0 0.0
        %5530 = vmatprep.subr.mxu0 0.0
        %5531 = vmatpush1.xpose.msra.mxu0 0.0
        %5532 = vmatprep.subr.mxu0 0.0
        %5533 = vmatpush1.xpose.msra.mxu0 0.0
        %5534 = vmatprep.subr.mxu0 0.0
        %5535 = vmatpush1.xpose.msra.mxu0 0.0
        %5536 = vmatprep.subr.mxu0 0.0
        %5537 = vmatpush1.xpose.msra.mxu0 0.0
        %5538 = vmatprep.subr.mxu0 0.0
        %5539 = vmatpush1.xpose.msra.mxu0 0.0
        %5540 = vmatprep.subr.mxu0 0.0
        %5541 = vmatpush1.xpose.msra.mxu0 0.0
        %5542 = vmatprep.subr.mxu0 0.0
        %5543 = vmatpush1.xpose.msra.mxu0 0.0
        %5544 = vmatprep.subr.mxu0 0.0
        %5545 = vmatpush1.xpose.msra.mxu0 0.0
        %5546 = vmatprep.subr.mxu0 0.0
        %5547 = vmatpush1.xpose.msra.mxu0 0.0
        %5548 = vmatprep.subr.mxu0 0.0
        %5549 = vmatpush1.xpose.msra.mxu0 0.0
        %5550 = vmatprep.subr.mxu0 0.0
        %5551 = vmatpush1.xpose.msra.mxu0 0.0
        %5552 = vmatprep.subr.mxu0 0.0
        %5553 = vmatpush1.xpose.msra.mxu0 0.0
        %5554 = vmatprep.subr.mxu0 0.0
        %5555 = vmatpush1.xpose.msra.mxu0 0.0
        %5556 = vmatprep.subr.mxu0 0.0
        %5557 = vmatpush1.xpose.msra.mxu0 0.0
        %5558 = vmatprep.subr.mxu0 0.0
        %5559 = vmatpush1.xpose.msra.mxu0 0.0
        %5560 = vmatprep.subr.mxu0 0.0
        %5561 = vmatpush1.xpose.msra.mxu0 0.0
        %5562 = vmatprep.subr.mxu0 0.0
        %5563 = vmatpush1.xpose.msra.mxu0 0.0
        %5564 = vmatprep.subr.mxu0 0.0
        %5565 = vmatpush1.xpose.msra.mxu0 0.0
        %5566 = vmatprep.subr.mxu0 0.0
        %5567 = vmatpush1.xpose.msra.mxu0 0.0
        %5568 = vmatprep.mubr.f32.mxu0 %v1190
        %5569 = vmatmul.mubr.f32.gmra.mrb[0].mxu0 %v1182
        %v5570 = vpop.f32.mrb[0].mxu0
        %v5571 = vadd.f32 %v5501, %v5570
        %v5572 = vpop.f32.mrb[0].mxu0
        %5573 = vdwg.mxu0
        %5574 = vmatprep.subr.mxu0 %v395
        %5575 = vmatpush1.xpose.msra.mxu0 %v394
        %5576 = vmatprep.subr.mxu0 %v587
        %5577 = vmatpush1.xpose.msra.mxu0 %v586
        %5578 = vmatprep.subr.mxu0 0.0
        %5579 = vmatpush1.xpose.msra.mxu0 0.0
        %5580 = vmatprep.subr.mxu0 0.0
        %5581 = vmatpush1.xpose.msra.mxu0 0.0
        %5582 = vmatprep.subr.mxu0 0.0
        %5583 = vmatpush1.xpose.msra.mxu0 0.0
        %5584 = vmatprep.subr.mxu0 0.0
        %5585 = vmatpush1.xpose.msra.mxu0 0.0
        %5586 = vmatprep.subr.mxu0 0.0
        %5587 = vmatpush1.xpose.msra.mxu0 0.0
        %5588 = vmatprep.subr.mxu0 0.0
        %5589 = vmatpush1.xpose.msra.mxu0 0.0
        %5590 = vmatprep.subr.mxu0 0.0
        %5591 = vmatpush1.xpose.msra.mxu0 0.0
        %5592 = vmatprep.subr.mxu0 0.0
        %5593 = vmatpush1.xpose.msra.mxu0 0.0
        %5594 = vmatprep.subr.mxu0 0.0
        %5595 = vmatpush1.xpose.msra.mxu0 0.0
        %5596 = vmatprep.subr.mxu0 0.0
        %5597 = vmatpush1.xpose.msra.mxu0 0.0
        %5598 = vmatprep.subr.mxu0 0.0
        %5599 = vmatpush1.xpose.msra.mxu0 0.0
        %5600 = vmatprep.subr.mxu0 0.0
        %5601 = vmatpush1.xpose.msra.mxu0 0.0
        %5602 = vmatprep.subr.mxu0 0.0
        %5603 = vmatpush1.xpose.msra.mxu0 0.0
        %5604 = vmatprep.subr.mxu0 0.0
        %5605 = vmatpush1.xpose.msra.mxu0 0.0
        %5606 = vmatprep.subr.mxu0 0.0
        %5607 = vmatpush1.xpose.msra.mxu0 0.0
        %5608 = vmatprep.subr.mxu0 0.0
        %5609 = vmatpush1.xpose.msra.mxu0 0.0
        %5610 = vmatprep.subr.mxu0 0.0
        %5611 = vmatpush1.xpose.msra.mxu0 0.0
        %5612 = vmatprep.subr.mxu0 0.0
        %5613 = vmatpush1.xpose.msra.mxu0 0.0
        %5614 = vmatprep.subr.mxu0 0.0
        %5615 = vmatpush1.xpose.msra.mxu0 0.0
        %5616 = vmatprep.subr.mxu0 0.0
        %5617 = vmatpush1.xpose.msra.mxu0 0.0
        %5618 = vmatprep.subr.mxu0 0.0
        %5619 = vmatpush1.xpose.msra.mxu0 0.0
        %5620 = vmatprep.subr.mxu0 0.0
        %5621 = vmatpush1.xpose.msra.mxu0 0.0
        %5622 = vmatprep.subr.mxu0 0.0
        %5623 = vmatpush1.xpose.msra.mxu0 0.0
        %5624 = vmatprep.subr.mxu0 0.0
        %5625 = vmatpush1.xpose.msra.mxu0 0.0
        %5626 = vmatprep.subr.mxu0 0.0
        %5627 = vmatpush1.xpose.msra.mxu0 0.0
        %5628 = vmatprep.subr.mxu0 0.0
        %5629 = vmatpush1.xpose.msra.mxu0 0.0
        %5630 = vmatprep.subr.mxu0 0.0
        %5631 = vmatpush1.xpose.msra.mxu0 0.0
        %5632 = vmatprep.subr.mxu0 0.0
        %5633 = vmatpush1.xpose.msra.mxu0 0.0
        %5634 = vmatprep.subr.mxu0 0.0
        %5635 = vmatpush1.xpose.msra.mxu0 0.0
        %5636 = vmatprep.subr.mxu0 0.0
        %5637 = vmatpush1.xpose.msra.mxu0 0.0
        %5638 = vmatprep.mubr.f32.mxu0 %v1191
        %5639 = vmatmul.mubr.f32.gmra.mrb[0].mxu0 %v1189
        %v5640 = vpop.f32.mrb[0].mxu0
        %v5641 = vadd.f32 %v5571, %v5640
        %v5642 = vpop.f32.mrb[0].mxu0
        %5643 = vdwg.mxu0
        %5644 = vmatprep.subr.mxu0 %v397
        %5645 = vmatpush1.xpose.msra.mxu0 %v396
        %5646 = vmatprep.subr.mxu0 %v589
        %5647 = vmatpush1.xpose.msra.mxu0 %v588
        %5648 = vmatprep.subr.mxu0 0.0
        %5649 = vmatpush1.xpose.msra.mxu0 0.0
        %5650 = vmatprep.subr.mxu0 0.0
        %5651 = vmatpush1.xpose.msra.mxu0 0.0
        %5652 = vmatprep.subr.mxu0 0.0
        %5653 = vmatpush1.xpose.msra.mxu0 0.0
        %5654 = vmatprep.subr.mxu0 0.0
        %5655 = vmatpush1.xpose.msra.mxu0 0.0
        %5656 = vmatprep.subr.mxu0 0.0
        %5657 = vmatpush1.xpose.msra.mxu0 0.0
        %5658 = vmatprep.subr.mxu0 0.0
        %5659 = vmatpush1.xpose.msra.mxu0 0.0
        %5660 = vmatprep.subr.mxu0 0.0
        %5661 = vmatpush1.xpose.msra.mxu0 0.0
        %5662 = vmatprep.subr.mxu0 0.0
        %5663 = vmatpush1.xpose.msra.mxu0 0.0
        %5664 = vmatprep.subr.mxu0 0.0
        %5665 = vmatpush1.xpose.msra.mxu0 0.0
        %5666 = vmatprep.subr.mxu0 0.0
        %5667 = vmatpush1.xpose.msra.mxu0 0.0
        %5668 = vmatprep.subr.mxu0 0.0
        %5669 = vmatpush1.xpose.msra.mxu0 0.0
        %5670 = vmatprep.subr.mxu0 0.0
        %5671 = vmatpush1.xpose.msra.mxu0 0.0
        %5672 = vmatprep.subr.mxu0 0.0
        %5673 = vmatpush1.xpose.msra.mxu0 0.0
        %5674 = vmatprep.subr.mxu0 0.0
        %5675 = vmatpush1.xpose.msra.mxu0 0.0
        %5676 = vmatprep.subr.mxu0 0.0
        %5677 = vmatpush1.xpose.msra.mxu0 0.0
        %5678 = vmatprep.subr.mxu0 0.0
        %5679 = vmatpush1.xpose.msra.mxu0 0.0
        %5680 = vmatprep.subr.mxu0 0.0
        %5681 = vmatpush1.xpose.msra.mxu0 0.0
        %5682 = vmatprep.subr.mxu0 0.0
        %5683 = vmatpush1.xpose.msra.mxu0 0.0
        %5684 = vmatprep.subr.mxu0 0.0
        %5685 = vmatpush1.xpose.msra.mxu0 0.0
        %5686 = vmatprep.subr.mxu0 0.0
        %5687 = vmatpush1.xpose.msra.mxu0 0.0
        %5688 = vmatprep.subr.mxu0 0.0
        %5689 = vmatpush1.xpose.msra.mxu0 0.0
        %5690 = vmatprep.subr.mxu0 0.0
        %5691 = vmatpush1.xpose.msra.mxu0 0.0
        %5692 = vmatprep.subr.mxu0 0.0
        %5693 = vmatpush1.xpose.msra.mxu0 0.0
        %5694 = vmatprep.subr.mxu0 0.0
        %5695 = vmatpush1.xpose.msra.mxu0 0.0
        %5696 = vmatprep.subr.mxu0 0.0
        %5697 = vmatpush1.xpose.msra.mxu0 0.0
        %5698 = vmatprep.subr.mxu0 0.0
        %5699 = vmatpush1.xpose.msra.mxu0 0.0
        %5700 = vmatprep.subr.mxu0 0.0
        %5701 = vmatpush1.xpose.msra.mxu0 0.0
        %5702 = vmatprep.subr.mxu0 0.0
        %5703 = vmatpush1.xpose.msra.mxu0 0.0
        %5704 = vmatprep.subr.mxu0 0.0
        %5705 = vmatpush1.xpose.msra.mxu0 0.0
        %5706 = vmatprep.subr.mxu0 0.0
        %5707 = vmatpush1.xpose.msra.mxu0 0.0
        %5708 = vmatprep.mubr.f32.mxu0 %v1207
        %5709 = vmatmul.mubr.f32.gmra.mrb[0].mxu0 %v1199
        %v5710 = vpop.f32.mrb[0].mxu0
        %v5711 = vadd.f32 %v5641, %v5710
        %v5712 = vpop.f32.mrb[0].mxu0
        %5713 = vdwg.mxu0
        %5714 = vmatprep.subr.mxu0 %v399
        %5715 = vmatpush1.xpose.msra.mxu0 %v398
        %5716 = vmatprep.subr.mxu0 %v591
        %5717 = vmatpush1.xpose.msra.mxu0 %v590
        %5718 = vmatprep.subr.mxu0 0.0
        %5719 = vmatpush1.xpose.msra.mxu0 0.0
        %5720 = vmatprep.subr.mxu0 0.0
        %5721 = vmatpush1.xpose.msra.mxu0 0.0
        %5722 = vmatprep.subr.mxu0 0.0
        %5723 = vmatpush1.xpose.msra.mxu0 0.0
        %5724 = vmatprep.subr.mxu0 0.0
        %5725 = vmatpush1.xpose.msra.mxu0 0.0
        %5726 = vmatprep.subr.mxu0 0.0
        %5727 = vmatpush1.xpose.msra.mxu0 0.0
        %5728 = vmatprep.subr.mxu0 0.0
        %5729 = vmatpush1.xpose.msra.mxu0 0.0
        %5730 = vmatprep.subr.mxu0 0.0
        %5731 = vmatpush1.xpose.msra.mxu0 0.0
        %5732 = vmatprep.subr.mxu0 0.0
        %5733 = vmatpush1.xpose.msra.mxu0 0.0
        %5734 = vmatprep.subr.mxu0 0.0
        %5735 = vmatpush1.xpose.msra.mxu0 0.0
        %5736 = vmatprep.subr.mxu0 0.0
        %5737 = vmatpush1.xpose.msra.mxu0 0.0
        %5738 = vmatprep.subr.mxu0 0.0
        %5739 = vmatpush1.xpose.msra.mxu0 0.0
        %5740 = vmatprep.subr.mxu0 0.0
        %5741 = vmatpush1.xpose.msra.mxu0 0.0
        %5742 = vmatprep.subr.mxu0 0.0
        %5743 = vmatpush1.xpose.msra.mxu0 0.0
        %5744 = vmatprep.subr.mxu0 0.0
        %5745 = vmatpush1.xpose.msra.mxu0 0.0
        %5746 = vmatprep.subr.mxu0 0.0
        %5747 = vmatpush1.xpose.msra.mxu0 0.0
        %5748 = vmatprep.subr.mxu0 0.0
        %5749 = vmatpush1.xpose.msra.mxu0 0.0
        %5750 = vmatprep.subr.mxu0 0.0
        %5751 = vmatpush1.xpose.msra.mxu0 0.0
        %5752 = vmatprep.subr.mxu0 0.0
        %5753 = vmatpush1.xpose.msra.mxu0 0.0
        %5754 = vmatprep.subr.mxu0 0.0
        %5755 = vmatpush1.xpose.msra.mxu0 0.0
        %5756 = vmatprep.subr.mxu0 0.0
        %5757 = vmatpush1.xpose.msra.mxu0 0.0
        %5758 = vmatprep.subr.mxu0 0.0
        %5759 = vmatpush1.xpose.msra.mxu0 0.0
        %5760 = vmatprep.subr.mxu0 0.0
        %5761 = vmatpush1.xpose.msra.mxu0 0.0
        %5762 = vmatprep.subr.mxu0 0.0
        %5763 = vmatpush1.xpose.msra.mxu0 0.0
        %5764 = vmatprep.subr.mxu0 0.0
        %5765 = vmatpush1.xpose.msra.mxu0 0.0
        %5766 = vmatprep.subr.mxu0 0.0
        %5767 = vmatpush1.xpose.msra.mxu0 0.0
        %5768 = vmatprep.subr.mxu0 0.0
        %5769 = vmatpush1.xpose.msra.mxu0 0.0
        %5770 = vmatprep.subr.mxu0 0.0
        %5771 = vmatpush1.xpose.msra.mxu0 0.0
        %5772 = vmatprep.subr.mxu0 0.0
        %5773 = vmatpush1.xpose.msra.mxu0 0.0
        %5774 = vmatprep.subr.mxu0 0.0
        %5775 = vmatpush1.xpose.msra.mxu0 0.0
        %5776 = vmatprep.subr.mxu0 0.0
        %5777 = vmatpush1.xpose.msra.mxu0 0.0
        %5778 = vmatprep.mubr.f32.mxu0 %v1208
        %5779 = vmatmul.mubr.f32.gmra.mrb[0].mxu0 %v1206
        %v5780 = vpop.f32.mrb[0].mxu0
        %v5781 = vadd.f32 %v5711, %v5780
        %v5782 = vpop.f32.mrb[0].mxu0
        %5783 = vdwg.mxu0
        %5784 = vmatprep.subr.mxu0 %v401
        %5785 = vmatpush1.xpose.msra.mxu0 %v400
        %5786 = vmatprep.subr.mxu0 %v593
        %5787 = vmatpush1.xpose.msra.mxu0 %v592
        %5788 = vmatprep.subr.mxu0 0.0
        %5789 = vmatpush1.xpose.msra.mxu0 0.0
        %5790 = vmatprep.subr.mxu0 0.0
        %5791 = vmatpush1.xpose.msra.mxu0 0.0
        %5792 = vmatprep.subr.mxu0 0.0
        %5793 = vmatpush1.xpose.msra.mxu0 0.0
        %5794 = vmatprep.subr.mxu0 0.0
        %5795 = vmatpush1.xpose.msra.mxu0 0.0
        %5796 = vmatprep.subr.mxu0 0.0
        %5797 = vmatpush1.xpose.msra.mxu0 0.0
        %5798 = vmatprep.subr.mxu0 0.0
        %5799 = vmatpush1.xpose.msra.mxu0 0.0
        %5800 = vmatprep.subr.mxu0 0.0
        %5801 = vmatpush1.xpose.msra.mxu0 0.0
        %5802 = vmatprep.subr.mxu0 0.0
        %5803 = vmatpush1.xpose.msra.mxu0 0.0
        %5804 = vmatprep.subr.mxu0 0.0
        %5805 = vmatpush1.xpose.msra.mxu0 0.0
        %5806 = vmatprep.subr.mxu0 0.0
        %5807 = vmatpush1.xpose.msra.mxu0 0.0
        %5808 = vmatprep.subr.mxu0 0.0
        %5809 = vmatpush1.xpose.msra.mxu0 0.0
        %5810 = vmatprep.subr.mxu0 0.0
        %5811 = vmatpush1.xpose.msra.mxu0 0.0
        %5812 = vmatprep.subr.mxu0 0.0
        %5813 = vmatpush1.xpose.msra.mxu0 0.0
        %5814 = vmatprep.subr.mxu0 0.0
        %5815 = vmatpush1.xpose.msra.mxu0 0.0
        %5816 = vmatprep.subr.mxu0 0.0
        %5817 = vmatpush1.xpose.msra.mxu0 0.0
        %5818 = vmatprep.subr.mxu0 0.0
        %5819 = vmatpush1.xpose.msra.mxu0 0.0
        %5820 = vmatprep.subr.mxu0 0.0
        %5821 = vmatpush1.xpose.msra.mxu0 0.0
        %5822 = vmatprep.subr.mxu0 0.0
        %5823 = vmatpush1.xpose.msra.mxu0 0.0
        %5824 = vmatprep.subr.mxu0 0.0
        %5825 = vmatpush1.xpose.msra.mxu0 0.0
        %5826 = vmatprep.subr.mxu0 0.0
        %5827 = vmatpush1.xpose.msra.mxu0 0.0
        %5828 = vmatprep.subr.mxu0 0.0
        %5829 = vmatpush1.xpose.msra.mxu0 0.0
        %5830 = vmatprep.subr.mxu0 0.0
        %5831 = vmatpush1.xpose.msra.mxu0 0.0
        %5832 = vmatprep.subr.mxu0 0.0
        %5833 = vmatpush1.xpose.msra.mxu0 0.0
        %5834 = vmatprep.subr.mxu0 0.0
        %5835 = vmatpush1.xpose.msra.mxu0 0.0
        %5836 = vmatprep.subr.mxu0 0.0
        %5837 = vmatpush1.xpose.msra.mxu0 0.0
        %5838 = vmatprep.subr.mxu0 0.0
        %5839 = vmatpush1.xpose.msra.mxu0 0.0
        %5840 = vmatprep.subr.mxu0 0.0
        %5841 = vmatpush1.xpose.msra.mxu0 0.0
        %5842 = vmatprep.subr.mxu0 0.0
        %5843 = vmatpush1.xpose.msra.mxu0 0.0
        %5844 = vmatprep.subr.mxu0 0.0
        %5845 = vmatpush1.xpose.msra.mxu0 0.0
        %5846 = vmatprep.subr.mxu0 0.0
        %5847 = vmatpush1.xpose.msra.mxu0 0.0
        %5848 = vmatprep.mubr.f32.mxu0 %v1224
        %5849 = vmatmul.mubr.f32.gmra.mrb[0].mxu0 %v1216
        %v5850 = vpop.f32.mrb[0].mxu0
        %v5851 = vadd.f32 %v5781, %v5850
        %v5852 = vpop.f32.mrb[0].mxu0
        %5853 = vdwg.mxu0
        %5854 = vmatprep.subr.mxu0 %v403
        %5855 = vmatpush1.xpose.msra.mxu0 %v402
        %5856 = vmatprep.subr.mxu0 %v595
        %5857 = vmatpush1.xpose.msra.mxu0 %v594
        %5858 = vmatprep.subr.mxu0 0.0
        %5859 = vmatpush1.xpose.msra.mxu0 0.0
        %5860 = vmatprep.subr.mxu0 0.0
        %5861 = vmatpush1.xpose.msra.mxu0 0.0
        %5862 = vmatprep.subr.mxu0 0.0
        %5863 = vmatpush1.xpose.msra.mxu0 0.0
        %5864 = vmatprep.subr.mxu0 0.0
        %5865 = vmatpush1.xpose.msra.mxu0 0.0
        %5866 = vmatprep.subr.mxu0 0.0
        %5867 = vmatpush1.xpose.msra.mxu0 0.0
        %5868 = vmatprep.subr.mxu0 0.0
        %5869 = vmatpush1.xpose.msra.mxu0 0.0
        %5870 = vmatprep.subr.mxu0 0.0
        %5871 = vmatpush1.xpose.msra.mxu0 0.0
        %5872 = vmatprep.subr.mxu0 0.0
        %5873 = vmatpush1.xpose.msra.mxu0 0.0
        %5874 = vmatprep.subr.mxu0 0.0
        %5875 = vmatpush1.xpose.msra.mxu0 0.0
        %5876 = vmatprep.subr.mxu0 0.0
        %5877 = vmatpush1.xpose.msra.mxu0 0.0
        %5878 = vmatprep.subr.mxu0 0.0
        %5879 = vmatpush1.xpose.msra.mxu0 0.0
        %5880 = vmatprep.subr.mxu0 0.0
        %5881 = vmatpush1.xpose.msra.mxu0 0.0
        %5882 = vmatprep.subr.mxu0 0.0
        %5883 = vmatpush1.xpose.msra.mxu0 0.0
        %5884 = vmatprep.subr.mxu0 0.0
        %5885 = vmatpush1.xpose.msra.mxu0 0.0
        %5886 = vmatprep.subr.mxu0 0.0
        %5887 = vmatpush1.xpose.msra.mxu0 0.0
        %5888 = vmatprep.subr.mxu0 0.0
        %5889 = vmatpush1.xpose.msra.mxu0 0.0
        %5890 = vmatprep.subr.mxu0 0.0
        %5891 = vmatpush1.xpose.msra.mxu0 0.0
        %5892 = vmatprep.subr.mxu0 0.0
        %5893 = vmatpush1.xpose.msra.mxu0 0.0
        %5894 = vmatprep.subr.mxu0 0.0
        %5895 = vmatpush1.xpose.msra.mxu0 0.0
        %5896 = vmatprep.subr.mxu0 0.0
        %5897 = vmatpush1.xpose.msra.mxu0 0.0
        %5898 = vmatprep.subr.mxu0 0.0
        %5899 = vmatpush1.xpose.msra.mxu0 0.0
        %5900 = vmatprep.subr.mxu0 0.0
        %5901 = vmatpush1.xpose.msra.mxu0 0.0
        %5902 = vmatprep.subr.mxu0 0.0
        %5903 = vmatpush1.xpose.msra.mxu0 0.0
        %5904 = vmatprep.subr.mxu0 0.0
        %5905 = vmatpush1.xpose.msra.mxu0 0.0
        %5906 = vmatprep.subr.mxu0 0.0
        %5907 = vmatpush1.xpose.msra.mxu0 0.0
        %5908 = vmatprep.subr.mxu0 0.0
        %5909 = vmatpush1.xpose.msra.mxu0 0.0
        %5910 = vmatprep.subr.mxu0 0.0
        %5911 = vmatpush1.xpose.msra.mxu0 0.0
        %5912 = vmatprep.subr.mxu0 0.0
        %5913 = vmatpush1.xpose.msra.mxu0 0.0
        %5914 = vmatprep.subr.mxu0 0.0
        %5915 = vmatpush1.xpose.msra.mxu0 0.0
        %5916 = vmatprep.subr.mxu0 0.0
        %5917 = vmatpush1.xpose.msra.mxu0 0.0
        %5918 = vmatprep.mubr.f32.mxu0 %v1225
        %5919 = vmatmul.mubr.f32.gmra.mrb[0].mxu0 %v1223
        %v5920 = vpop.f32.mrb[0].mxu0
        %v5921 = vadd.f32 %v5851, %v5920
        %v5922 = vpop.f32.mrb[0].mxu0
        %5923 = vdwg.mxu0
        %5924 = vmatprep.subr.mxu0 %v405
        %5925 = vmatpush1.xpose.msra.mxu0 %v404
        %5926 = vmatprep.subr.mxu0 %v597
        %5927 = vmatpush1.xpose.msra.mxu0 %v596
        %5928 = vmatprep.subr.mxu0 0.0
        %5929 = vmatpush1.xpose.msra.mxu0 0.0
        %5930 = vmatprep.subr.mxu0 0.0
        %5931 = vmatpush1.xpose.msra.mxu0 0.0
        %5932 = vmatprep.subr.mxu0 0.0
        %5933 = vmatpush1.xpose.msra.mxu0 0.0
        %5934 = vmatprep.subr.mxu0 0.0
        %5935 = vmatpush1.xpose.msra.mxu0 0.0
        %5936 = vmatprep.subr.mxu0 0.0
        %5937 = vmatpush1.xpose.msra.mxu0 0.0
        %5938 = vmatprep.subr.mxu0 0.0
        %5939 = vmatpush1.xpose.msra.mxu0 0.0
        %5940 = vmatprep.subr.mxu0 0.0
        %5941 = vmatpush1.xpose.msra.mxu0 0.0
        %5942 = vmatprep.subr.mxu0 0.0
        %5943 = vmatpush1.xpose.msra.mxu0 0.0
        %5944 = vmatprep.subr.mxu0 0.0
        %5945 = vmatpush1.xpose.msra.mxu0 0.0
        %5946 = vmatprep.subr.mxu0 0.0
        %5947 = vmatpush1.xpose.msra.mxu0 0.0
        %5948 = vmatprep.subr.mxu0 0.0
        %5949 = vmatpush1.xpose.msra.mxu0 0.0
        %5950 = vmatprep.subr.mxu0 0.0
        %5951 = vmatpush1.xpose.msra.mxu0 0.0
        %5952 = vmatprep.subr.mxu0 0.0
        %5953 = vmatpush1.xpose.msra.mxu0 0.0
        %5954 = vmatprep.subr.mxu0 0.0
        %5955 = vmatpush1.xpose.msra.mxu0 0.0
        %5956 = vmatprep.subr.mxu0 0.0
        %5957 = vmatpush1.xpose.msra.mxu0 0.0
        %5958 = vmatprep.subr.mxu0 0.0
        %5959 = vmatpush1.xpose.msra.mxu0 0.0
        %5960 = vmatprep.subr.mxu0 0.0
        %5961 = vmatpush1.xpose.msra.mxu0 0.0
        %5962 = vmatprep.subr.mxu0 0.0
        %5963 = vmatpush1.xpose.msra.mxu0 0.0
        %5964 = vmatprep.subr.mxu0 0.0
        %5965 = vmatpush1.xpose.msra.mxu0 0.0
        %5966 = vmatprep.subr.mxu0 0.0
        %5967 = vmatpush1.xpose.msra.mxu0 0.0
        %5968 = vmatprep.subr.mxu0 0.0
        %5969 = vmatpush1.xpose.msra.mxu0 0.0
        %5970 = vmatprep.subr.mxu0 0.0
        %5971 = vmatpush1.xpose.msra.mxu0 0.0
        %5972 = vmatprep.subr.mxu0 0.0
        %5973 = vmatpush1.xpose.msra.mxu0 0.0
        %5974 = vmatprep.subr.mxu0 0.0
        %5975 = vmatpush1.xpose.msra.mxu0 0.0
        %5976 = vmatprep.subr.mxu0 0.0
        %5977 = vmatpush1.xpose.msra.mxu0 0.0
        %5978 = vmatprep.subr.mxu0 0.0
        %5979 = vmatpush1.xpose.msra.mxu0 0.0
        %5980 = vmatprep.subr.mxu0 0.0
        %5981 = vmatpush1.xpose.msra.mxu0 0.0
        %5982 = vmatprep.subr.mxu0 0.0
        %5983 = vmatpush1.xpose.msra.mxu0 0.0
        %5984 = vmatprep.subr.mxu0 0.0
        %5985 = vmatpush1.xpose.msra.mxu0 0.0
        %5986 = vmatprep.subr.mxu0 0.0
        %5987 = vmatpush1.xpose.msra.mxu0 0.0
        %5988 = vmatprep.mubr.f32.mxu0 %v1241
        %5989 = vmatmul.mubr.f32.gmra.mrb[0].mxu0 %v1233
        %v5990 = vpop.f32.mrb[0].mxu0
        %v5991 = vadd.f32 %v5921, %v5990
        %v5992 = vpop.f32.mrb[0].mxu0
        %5993 = vdwg.mxu0
        %5994 = vmatprep.subr.mxu0 %v407
        %5995 = vmatpush1.xpose.msra.mxu0 %v406
        %5996 = vmatprep.subr.mxu0 %v599
        %5997 = vmatpush1.xpose.msra.mxu0 %v598
        %5998 = vmatprep.subr.mxu0 0.0
        %5999 = vmatpush1.xpose.msra.mxu0 0.0
        %6000 = vmatprep.subr.mxu0 0.0
        %6001 = vmatpush1.xpose.msra.mxu0 0.0
        %6002 = vmatprep.subr.mxu0 0.0
        %6003 = vmatpush1.xpose.msra.mxu0 0.0
        %6004 = vmatprep.subr.mxu0 0.0
        %6005 = vmatpush1.xpose.msra.mxu0 0.0
        %6006 = vmatprep.subr.mxu0 0.0
        %6007 = vmatpush1.xpose.msra.mxu0 0.0
        %6008 = vmatprep.subr.mxu0 0.0
        %6009 = vmatpush1.xpose.msra.mxu0 0.0
        %6010 = vmatprep.subr.mxu0 0.0
        %6011 = vmatpush1.xpose.msra.mxu0 0.0
        %6012 = vmatprep.subr.mxu0 0.0
        %6013 = vmatpush1.xpose.msra.mxu0 0.0
        %6014 = vmatprep.subr.mxu0 0.0
        %6015 = vmatpush1.xpose.msra.mxu0 0.0
        %6016 = vmatprep.subr.mxu0 0.0
        %6017 = vmatpush1.xpose.msra.mxu0 0.0
        %6018 = vmatprep.subr.mxu0 0.0
        %6019 = vmatpush1.xpose.msra.mxu0 0.0
        %6020 = vmatprep.subr.mxu0 0.0
        %6021 = vmatpush1.xpose.msra.mxu0 0.0
        %6022 = vmatprep.subr.mxu0 0.0
        %6023 = vmatpush1.xpose.msra.mxu0 0.0
        %6024 = vmatprep.subr.mxu0 0.0
        %6025 = vmatpush1.xpose.msra.mxu0 0.0
        %6026 = vmatprep.subr.mxu0 0.0
        %6027 = vmatpush1.xpose.msra.mxu0 0.0
        %6028 = vmatprep.subr.mxu0 0.0
        %6029 = vmatpush1.xpose.msra.mxu0 0.0
        %6030 = vmatprep.subr.mxu0 0.0
        %6031 = vmatpush1.xpose.msra.mxu0 0.0
        %6032 = vmatprep.subr.mxu0 0.0
        %6033 = vmatpush1.xpose.msra.mxu0 0.0
        %6034 = vmatprep.subr.mxu0 0.0
        %6035 = vmatpush1.xpose.msra.mxu0 0.0
        %6036 = vmatprep.subr.mxu0 0.0
        %6037 = vmatpush1.xpose.msra.mxu0 0.0
        %6038 = vmatprep.subr.mxu0 0.0
        %6039 = vmatpush1.xpose.msra.mxu0 0.0
        %6040 = vmatprep.subr.mxu0 0.0
        %6041 = vmatpush1.xpose.msra.mxu0 0.0
        %6042 = vmatprep.subr.mxu0 0.0
        %6043 = vmatpush1.xpose.msra.mxu0 0.0
        %6044 = vmatprep.subr.mxu0 0.0
        %6045 = vmatpush1.xpose.msra.mxu0 0.0
        %6046 = vmatprep.subr.mxu0 0.0
        %6047 = vmatpush1.xpose.msra.mxu0 0.0
        %6048 = vmatprep.subr.mxu0 0.0
        %6049 = vmatpush1.xpose.msra.mxu0 0.0
        %6050 = vmatprep.subr.mxu0 0.0
        %6051 = vmatpush1.xpose.msra.mxu0 0.0
        %6052 = vmatprep.subr.mxu0 0.0
        %6053 = vmatpush1.xpose.msra.mxu0 0.0
        %6054 = vmatprep.subr.mxu0 0.0
        %6055 = vmatpush1.xpose.msra.mxu0 0.0
        %6056 = vmatprep.subr.mxu0 0.0
        %6057 = vmatpush1.xpose.msra.mxu0 0.0
        %6058 = vmatprep.mubr.f32.mxu0 %v1242
        %6059 = vmatmul.mubr.f32.gmra.mrb[0].mxu0 %v1240
        %v6060 = vpop.f32.mrb[0].mxu0
        %v6061 = vadd.f32 %v5991, %v6060
        %v6062 = vpop.f32.mrb[0].mxu0
        %6063 = vdwg.mxu0
        %6064 = vmatprep.subr.mxu0 %v409
        %6065 = vmatpush1.xpose.msra.mxu0 %v408
        %6066 = vmatprep.subr.mxu0 %v601
        %6067 = vmatpush1.xpose.msra.mxu0 %v600
        %6068 = vmatprep.subr.mxu0 0.0
        %6069 = vmatpush1.xpose.msra.mxu0 0.0
        %6070 = vmatprep.subr.mxu0 0.0
        %6071 = vmatpush1.xpose.msra.mxu0 0.0
        %6072 = vmatprep.subr.mxu0 0.0
        %6073 = vmatpush1.xpose.msra.mxu0 0.0
        %6074 = vmatprep.subr.mxu0 0.0
        %6075 = vmatpush1.xpose.msra.mxu0 0.0
        %6076 = vmatprep.subr.mxu0 0.0
        %6077 = vmatpush1.xpose.msra.mxu0 0.0
        %6078 = vmatprep.subr.mxu0 0.0
        %6079 = vmatpush1.xpose.msra.mxu0 0.0
        %6080 = vmatprep.subr.mxu0 0.0
        %6081 = vmatpush1.xpose.msra.mxu0 0.0
        %6082 = vmatprep.subr.mxu0 0.0
        %6083 = vmatpush1.xpose.msra.mxu0 0.0
        %6084 = vmatprep.subr.mxu0 0.0
        %6085 = vmatpush1.xpose.msra.mxu0 0.0
        %6086 = vmatprep.subr.mxu0 0.0
        %6087 = vmatpush1.xpose.msra.mxu0 0.0
        %6088 = vmatprep.subr.mxu0 0.0
        %6089 = vmatpush1.xpose.msra.mxu0 0.0
        %6090 = vmatprep.subr.mxu0 0.0
        %6091 = vmatpush1.xpose.msra.mxu0 0.0
        %6092 = vmatprep.subr.mxu0 0.0
        %6093 = vmatpush1.xpose.msra.mxu0 0.0
        %6094 = vmatprep.subr.mxu0 0.0
        %6095 = vmatpush1.xpose.msra.mxu0 0.0
        %6096 = vmatprep.subr.mxu0 0.0
        %6097 = vmatpush1.xpose.msra.mxu0 0.0
        %6098 = vmatprep.subr.mxu0 0.0
        %6099 = vmatpush1.xpose.msra.mxu0 0.0
        %6100 = vmatprep.subr.mxu0 0.0
        %6101 = vmatpush1.xpose.msra.mxu0 0.0
        %6102 = vmatprep.subr.mxu0 0.0
        %6103 = vmatpush1.xpose.msra.mxu0 0.0
        %6104 = vmatprep.subr.mxu0 0.0
        %6105 = vmatpush1.xpose.msra.mxu0 0.0
        %6106 = vmatprep.subr.mxu0 0.0
        %6107 = vmatpush1.xpose.msra.mxu0 0.0
        %6108 = vmatprep.subr.mxu0 0.0
        %6109 = vmatpush1.xpose.msra.mxu0 0.0
        %6110 = vmatprep.subr.mxu0 0.0
        %6111 = vmatpush1.xpose.msra.mxu0 0.0
        %6112 = vmatprep.subr.mxu0 0.0
        %6113 = vmatpush1.xpose.msra.mxu0 0.0
        %6114 = vmatprep.subr.mxu0 0.0
        %6115 = vmatpush1.xpose.msra.mxu0 0.0
        %6116 = vmatprep.subr.mxu0 0.0
        %6117 = vmatpush1.xpose.msra.mxu0 0.0
        %6118 = vmatprep.subr.mxu0 0.0
        %6119 = vmatpush1.xpose.msra.mxu0 0.0
        %6120 = vmatprep.subr.mxu0 0.0
        %6121 = vmatpush1.xpose.msra.mxu0 0.0
        %6122 = vmatprep.subr.mxu0 0.0
        %6123 = vmatpush1.xpose.msra.mxu0 0.0
        %6124 = vmatprep.subr.mxu0 0.0
        %6125 = vmatpush1.xpose.msra.mxu0 0.0
        %6126 = vmatprep.subr.mxu0 0.0
        %6127 = vmatpush1.xpose.msra.mxu0 0.0
        %6128 = vmatprep.mubr.f32.mxu0 %v1258
        %6129 = vmatmul.mubr.f32.gmra.mrb[0].mxu0 %v1250
        %v6130 = vpop.f32.mrb[0].mxu0
        %v6131 = vadd.f32 %v6061, %v6130
        %v6132 = vpop.f32.mrb[0].mxu0
        %6133 = vdwg.mxu0
        %6134 = vmatprep.subr.mxu0 %v411
        %6135 = vmatpush1.xpose.msra.mxu0 %v410
        %6136 = vmatprep.subr.mxu0 %v603
        %6137 = vmatpush1.xpose.msra.mxu0 %v602
        %6138 = vmatprep.subr.mxu0 0.0
        %6139 = vmatpush1.xpose.msra.mxu0 0.0
        %6140 = vmatprep.subr.mxu0 0.0
        %6141 = vmatpush1.xpose.msra.mxu0 0.0
        %6142 = vmatprep.subr.mxu0 0.0
        %6143 = vmatpush1.xpose.msra.mxu0 0.0
        %6144 = vmatprep.subr.mxu0 0.0
        %6145 = vmatpush1.xpose.msra.mxu0 0.0
        %6146 = vmatprep.subr.mxu0 0.0
        %6147 = vmatpush1.xpose.msra.mxu0 0.0
        %6148 = vmatprep.subr.mxu0 0.0
        %6149 = vmatpush1.xpose.msra.mxu0 0.0
        %6150 = vmatprep.subr.mxu0 0.0
        %6151 = vmatpush1.xpose.msra.mxu0 0.0
        %6152 = vmatprep.subr.mxu0 0.0
        %6153 = vmatpush1.xpose.msra.mxu0 0.0
        %6154 = vmatprep.subr.mxu0 0.0
        %6155 = vmatpush1.xpose.msra.mxu0 0.0
        %6156 = vmatprep.subr.mxu0 0.0
        %6157 = vmatpush1.xpose.msra.mxu0 0.0
        %6158 = vmatprep.subr.mxu0 0.0
        %6159 = vmatpush1.xpose.msra.mxu0 0.0
        %6160 = vmatprep.subr.mxu0 0.0
        %6161 = vmatpush1.xpose.msra.mxu0 0.0
        %6162 = vmatprep.subr.mxu0 0.0
        %6163 = vmatpush1.xpose.msra.mxu0 0.0
        %6164 = vmatprep.subr.mxu0 0.0
        %6165 = vmatpush1.xpose.msra.mxu0 0.0
        %6166 = vmatprep.subr.mxu0 0.0
        %6167 = vmatpush1.xpose.msra.mxu0 0.0
        %6168 = vmatprep.subr.mxu0 0.0
        %6169 = vmatpush1.xpose.msra.mxu0 0.0
        %6170 = vmatprep.subr.mxu0 0.0
        %6171 = vmatpush1.xpose.msra.mxu0 0.0
        %6172 = vmatprep.subr.mxu0 0.0
        %6173 = vmatpush1.xpose.msra.mxu0 0.0
        %6174 = vmatprep.subr.mxu0 0.0
        %6175 = vmatpush1.xpose.msra.mxu0 0.0
        %6176 = vmatprep.subr.mxu0 0.0
        %6177 = vmatpush1.xpose.msra.mxu0 0.0
        %6178 = vmatprep.subr.mxu0 0.0
        %6179 = vmatpush1.xpose.msra.mxu0 0.0
        %6180 = vmatprep.subr.mxu0 0.0
        %6181 = vmatpush1.xpose.msra.mxu0 0.0
        %6182 = vmatprep.subr.mxu0 0.0
        %6183 = vmatpush1.xpose.msra.mxu0 0.0
        %6184 = vmatprep.subr.mxu0 0.0
        %6185 = vmatpush1.xpose.msra.mxu0 0.0
        %6186 = vmatprep.subr.mxu0 0.0
        %6187 = vmatpush1.xpose.msra.mxu0 0.0
        %6188 = vmatprep.subr.mxu0 0.0
        %6189 = vmatpush1.xpose.msra.mxu0 0.0
        %6190 = vmatprep.subr.mxu0 0.0
        %6191 = vmatpush1.xpose.msra.mxu0 0.0
        %6192 = vmatprep.subr.mxu0 0.0
        %6193 = vmatpush1.xpose.msra.mxu0 0.0
        %6194 = vmatprep.subr.mxu0 0.0
        %6195 = vmatpush1.xpose.msra.mxu0 0.0
        %6196 = vmatprep.subr.mxu0 0.0
        %6197 = vmatpush1.xpose.msra.mxu0 0.0
        %6198 = vmatprep.mubr.f32.mxu0 %v1259
        %6199 = vmatmul.mubr.f32.gmra.mrb[0].mxu0 %v1257
        %v6200 = vpop.f32.mrb[0].mxu0
        %v6201 = vadd.f32 %v6131, %v6200
        %v6202 = vpop.f32.mrb[0].mxu0
        %6203 = vdwg.mxu0
        %6204 = vmatprep.subr.mxu0 %v413
        %6205 = vmatpush1.xpose.msra.mxu0 %v412
        %6206 = vmatprep.subr.mxu0 %v605
        %6207 = vmatpush1.xpose.msra.mxu0 %v604
        %6208 = vmatprep.subr.mxu0 0.0
        %6209 = vmatpush1.xpose.msra.mxu0 0.0
        %6210 = vmatprep.subr.mxu0 0.0
        %6211 = vmatpush1.xpose.msra.mxu0 0.0
        %6212 = vmatprep.subr.mxu0 0.0
        %6213 = vmatpush1.xpose.msra.mxu0 0.0
        %6214 = vmatprep.subr.mxu0 0.0
        %6215 = vmatpush1.xpose.msra.mxu0 0.0
        %6216 = vmatprep.subr.mxu0 0.0
        %6217 = vmatpush1.xpose.msra.mxu0 0.0
        %6218 = vmatprep.subr.mxu0 0.0
        %6219 = vmatpush1.xpose.msra.mxu0 0.0
        %6220 = vmatprep.subr.mxu0 0.0
        %6221 = vmatpush1.xpose.msra.mxu0 0.0
        %6222 = vmatprep.subr.mxu0 0.0
        %6223 = vmatpush1.xpose.msra.mxu0 0.0
        %6224 = vmatprep.subr.mxu0 0.0
        %6225 = vmatpush1.xpose.msra.mxu0 0.0
        %6226 = vmatprep.subr.mxu0 0.0
        %6227 = vmatpush1.xpose.msra.mxu0 0.0
        %6228 = vmatprep.subr.mxu0 0.0
        %6229 = vmatpush1.xpose.msra.mxu0 0.0
        %6230 = vmatprep.subr.mxu0 0.0
        %6231 = vmatpush1.xpose.msra.mxu0 0.0
        %6232 = vmatprep.subr.mxu0 0.0
        %6233 = vmatpush1.xpose.msra.mxu0 0.0
        %6234 = vmatprep.subr.mxu0 0.0
        %6235 = vmatpush1.xpose.msra.mxu0 0.0
        %6236 = vmatprep.subr.mxu0 0.0
        %6237 = vmatpush1.xpose.msra.mxu0 0.0
        %6238 = vmatprep.subr.mxu0 0.0
        %6239 = vmatpush1.xpose.msra.mxu0 0.0
        %6240 = vmatprep.subr.mxu0 0.0
        %6241 = vmatpush1.xpose.msra.mxu0 0.0
        %6242 = vmatprep.subr.mxu0 0.0
        %6243 = vmatpush1.xpose.msra.mxu0 0.0
        %6244 = vmatprep.subr.mxu0 0.0
        %6245 = vmatpush1.xpose.msra.mxu0 0.0
        %6246 = vmatprep.subr.mxu0 0.0
        %6247 = vmatpush1.xpose.msra.mxu0 0.0
        %6248 = vmatprep.subr.mxu0 0.0
        %6249 = vmatpush1.xpose.msra.mxu0 0.0
        %6250 = vmatprep.subr.mxu0 0.0
        %6251 = vmatpush1.xpose.msra.mxu0 0.0
        %6252 = vmatprep.subr.mxu0 0.0
        %6253 = vmatpush1.xpose.msra.mxu0 0.0
        %6254 = vmatprep.subr.mxu0 0.0
        %6255 = vmatpush1.xpose.msra.mxu0 0.0
        %6256 = vmatprep.subr.mxu0 0.0
        %6257 = vmatpush1.xpose.msra.mxu0 0.0
        %6258 = vmatprep.subr.mxu0 0.0
        %6259 = vmatpush1.xpose.msra.mxu0 0.0
        %6260 = vmatprep.subr.mxu0 0.0
        %6261 = vmatpush1.xpose.msra.mxu0 0.0
        %6262 = vmatprep.subr.mxu0 0.0
        %6263 = vmatpush1.xpose.msra.mxu0 0.0
        %6264 = vmatprep.subr.mxu0 0.0
        %6265 = vmatpush1.xpose.msra.mxu0 0.0
        %6266 = vmatprep.subr.mxu0 0.0
        %6267 = vmatpush1.xpose.msra.mxu0 0.0
        %6268 = vmatprep.mubr.f32.mxu0 %v1275
        %6269 = vmatmul.mubr.f32.gmra.mrb[0].mxu0 %v1267
        %v6270 = vpop.f32.mrb[0].mxu0
        %v6271 = vadd.f32 %v6201, %v6270
        %v6272 = vpop.f32.mrb[0].mxu0
        %6273 = vdwg.mxu0
        %6274 = vmatprep.subr.mxu0 %v415
        %6275 = vmatpush1.xpose.msra.mxu0 %v414
        %6276 = vmatprep.subr.mxu0 %v607
        %6277 = vmatpush1.xpose.msra.mxu0 %v606
        %6278 = vmatprep.subr.mxu0 0.0
        %6279 = vmatpush1.xpose.msra.mxu0 0.0
        %6280 = vmatprep.subr.mxu0 0.0
        %6281 = vmatpush1.xpose.msra.mxu0 0.0
        %6282 = vmatprep.subr.mxu0 0.0
        %6283 = vmatpush1.xpose.msra.mxu0 0.0
        %6284 = vmatprep.subr.mxu0 0.0
        %6285 = vmatpush1.xpose.msra.mxu0 0.0
        %6286 = vmatprep.subr.mxu0 0.0
        %6287 = vmatpush1.xpose.msra.mxu0 0.0
        %6288 = vmatprep.subr.mxu0 0.0
        %6289 = vmatpush1.xpose.msra.mxu0 0.0
        %6290 = vmatprep.subr.mxu0 0.0
        %6291 = vmatpush1.xpose.msra.mxu0 0.0
        %6292 = vmatprep.subr.mxu0 0.0
        %6293 = vmatpush1.xpose.msra.mxu0 0.0
        %6294 = vmatprep.subr.mxu0 0.0
        %6295 = vmatpush1.xpose.msra.mxu0 0.0
        %6296 = vmatprep.subr.mxu0 0.0
        %6297 = vmatpush1.xpose.msra.mxu0 0.0
        %6298 = vmatprep.subr.mxu0 0.0
        %6299 = vmatpush1.xpose.msra.mxu0 0.0
        %6300 = vmatprep.subr.mxu0 0.0
        %6301 = vmatpush1.xpose.msra.mxu0 0.0
        %6302 = vmatprep.subr.mxu0 0.0
        %6303 = vmatpush1.xpose.msra.mxu0 0.0
        %6304 = vmatprep.subr.mxu0 0.0
        %6305 = vmatpush1.xpose.msra.mxu0 0.0
        %6306 = vmatprep.subr.mxu0 0.0
        %6307 = vmatpush1.xpose.msra.mxu0 0.0
        %6308 = vmatprep.subr.mxu0 0.0
        %6309 = vmatpush1.xpose.msra.mxu0 0.0
        %6310 = vmatprep.subr.mxu0 0.0
        %6311 = vmatpush1.xpose.msra.mxu0 0.0
        %6312 = vmatprep.subr.mxu0 0.0
        %6313 = vmatpush1.xpose.msra.mxu0 0.0
        %6314 = vmatprep.subr.mxu0 0.0
        %6315 = vmatpush1.xpose.msra.mxu0 0.0
        %6316 = vmatprep.subr.mxu0 0.0
        %6317 = vmatpush1.xpose.msra.mxu0 0.0
        %6318 = vmatprep.subr.mxu0 0.0
        %6319 = vmatpush1.xpose.msra.mxu0 0.0
        %6320 = vmatprep.subr.mxu0 0.0
        %6321 = vmatpush1.xpose.msra.mxu0 0.0
        %6322 = vmatprep.subr.mxu0 0.0
        %6323 = vmatpush1.xpose.msra.mxu0 0.0
        %6324 = vmatprep.subr.mxu0 0.0
        %6325 = vmatpush1.xpose.msra.mxu0 0.0
        %6326 = vmatprep.subr.mxu0 0.0
        %6327 = vmatpush1.xpose.msra.mxu0 0.0
        %6328 = vmatprep.subr.mxu0 0.0
        %6329 = vmatpush1.xpose.msra.mxu0 0.0
        %6330 = vmatprep.subr.mxu0 0.0
        %6331 = vmatpush1.xpose.msra.mxu0 0.0
        %6332 = vmatprep.subr.mxu0 0.0
        %6333 = vmatpush1.xpose.msra.mxu0 0.0
        %6334 = vmatprep.subr.mxu0 0.0
        %6335 = vmatpush1.xpose.msra.mxu0 0.0
        %6336 = vmatprep.subr.mxu0 0.0
        %6337 = vmatpush1.xpose.msra.mxu0 0.0
        %6338 = vmatprep.mubr.f32.mxu0 %v1276
        %6339 = vmatmul.mubr.f32.gmra.mrb[0].mxu0 %v1274
        %v6340 = vpop.f32.mrb[0].mxu0
        %v6341 = vadd.f32 %v6271, %v6340
        %v6342 = vpop.f32.mrb[0].mxu0
        %6343 = vdwg.mxu0
        %6344 = vmatprep.subr.mxu0 %v417
        %6345 = vmatpush1.xpose.msra.mxu0 %v416
        %6346 = vmatprep.subr.mxu0 %v609
        %6347 = vmatpush1.xpose.msra.mxu0 %v608
        %6348 = vmatprep.subr.mxu0 0.0
        %6349 = vmatpush1.xpose.msra.mxu0 0.0
        %6350 = vmatprep.subr.mxu0 0.0
        %6351 = vmatpush1.xpose.msra.mxu0 0.0
        %6352 = vmatprep.subr.mxu0 0.0
        %6353 = vmatpush1.xpose.msra.mxu0 0.0
        %6354 = vmatprep.subr.mxu0 0.0
        %6355 = vmatpush1.xpose.msra.mxu0 0.0
        %6356 = vmatprep.subr.mxu0 0.0
        %6357 = vmatpush1.xpose.msra.mxu0 0.0
        %6358 = vmatprep.subr.mxu0 0.0
        %6359 = vmatpush1.xpose.msra.mxu0 0.0
        %6360 = vmatprep.subr.mxu0 0.0
        %6361 = vmatpush1.xpose.msra.mxu0 0.0
        %6362 = vmatprep.subr.mxu0 0.0
        %6363 = vmatpush1.xpose.msra.mxu0 0.0
        %6364 = vmatprep.subr.mxu0 0.0
        %6365 = vmatpush1.xpose.msra.mxu0 0.0
        %6366 = vmatprep.subr.mxu0 0.0
        %6367 = vmatpush1.xpose.msra.mxu0 0.0
        %6368 = vmatprep.subr.mxu0 0.0
        %6369 = vmatpush1.xpose.msra.mxu0 0.0
        %6370 = vmatprep.subr.mxu0 0.0
        %6371 = vmatpush1.xpose.msra.mxu0 0.0
        %6372 = vmatprep.subr.mxu0 0.0
        %6373 = vmatpush1.xpose.msra.mxu0 0.0
        %6374 = vmatprep.subr.mxu0 0.0
        %6375 = vmatpush1.xpose.msra.mxu0 0.0
        %6376 = vmatprep.subr.mxu0 0.0
        %6377 = vmatpush1.xpose.msra.mxu0 0.0
        %6378 = vmatprep.subr.mxu0 0.0
        %6379 = vmatpush1.xpose.msra.mxu0 0.0
        %6380 = vmatprep.subr.mxu0 0.0
        %6381 = vmatpush1.xpose.msra.mxu0 0.0
        %6382 = vmatprep.subr.mxu0 0.0
        %6383 = vmatpush1.xpose.msra.mxu0 0.0
        %6384 = vmatprep.subr.mxu0 0.0
        %6385 = vmatpush1.xpose.msra.mxu0 0.0
        %6386 = vmatprep.subr.mxu0 0.0
        %6387 = vmatpush1.xpose.msra.mxu0 0.0
        %6388 = vmatprep.subr.mxu0 0.0
        %6389 = vmatpush1.xpose.msra.mxu0 0.0
        %6390 = vmatprep.subr.mxu0 0.0
        %6391 = vmatpush1.xpose.msra.mxu0 0.0
        %6392 = vmatprep.subr.mxu0 0.0
        %6393 = vmatpush1.xpose.msra.mxu0 0.0
        %6394 = vmatprep.subr.mxu0 0.0
        %6395 = vmatpush1.xpose.msra.mxu0 0.0
        %6396 = vmatprep.subr.mxu0 0.0
        %6397 = vmatpush1.xpose.msra.mxu0 0.0
        %6398 = vmatprep.subr.mxu0 0.0
        %6399 = vmatpush1.xpose.msra.mxu0 0.0
        %6400 = vmatprep.subr.mxu0 0.0
        %6401 = vmatpush1.xpose.msra.mxu0 0.0
        %6402 = vmatprep.subr.mxu0 0.0
        %6403 = vmatpush1.xpose.msra.mxu0 0.0
        %6404 = vmatprep.subr.mxu0 0.0
        %6405 = vmatpush1.xpose.msra.mxu0 0.0
        %6406 = vmatprep.subr.mxu0 0.0
        %6407 = vmatpush1.xpose.msra.mxu0 0.0
        %6408 = vmatprep.mubr.f32.mxu0 %v1292
        %6409 = vmatmul.mubr.f32.gmra.mrb[0].mxu0 %v1284
        %v6410 = vpop.f32.mrb[0].mxu0
        %v6411 = vadd.f32 %v6341, %v6410
        %v6412 = vpop.f32.mrb[0].mxu0
        %6413 = vdwg.mxu0
        %6414 = vmatprep.subr.mxu0 %v419
        %6415 = vmatpush1.xpose.msra.mxu0 %v418
        %6416 = vmatprep.subr.mxu0 %v611
        %6417 = vmatpush1.xpose.msra.mxu0 %v610
        %6418 = vmatprep.subr.mxu0 0.0
        %6419 = vmatpush1.xpose.msra.mxu0 0.0
        %6420 = vmatprep.subr.mxu0 0.0
        %6421 = vmatpush1.xpose.msra.mxu0 0.0
        %6422 = vmatprep.subr.mxu0 0.0
        %6423 = vmatpush1.xpose.msra.mxu0 0.0
        %6424 = vmatprep.subr.mxu0 0.0
        %6425 = vmatpush1.xpose.msra.mxu0 0.0
        %6426 = vmatprep.subr.mxu0 0.0
        %6427 = vmatpush1.xpose.msra.mxu0 0.0
        %6428 = vmatprep.subr.mxu0 0.0
        %6429 = vmatpush1.xpose.msra.mxu0 0.0
        %6430 = vmatprep.subr.mxu0 0.0
        %6431 = vmatpush1.xpose.msra.mxu0 0.0
        %6432 = vmatprep.subr.mxu0 0.0
        %6433 = vmatpush1.xpose.msra.mxu0 0.0
        %6434 = vmatprep.subr.mxu0 0.0
        %6435 = vmatpush1.xpose.msra.mxu0 0.0
        %6436 = vmatprep.subr.mxu0 0.0
        %6437 = vmatpush1.xpose.msra.mxu0 0.0
        %6438 = vmatprep.subr.mxu0 0.0
        %6439 = vmatpush1.xpose.msra.mxu0 0.0
        %6440 = vmatprep.subr.mxu0 0.0
        %6441 = vmatpush1.xpose.msra.mxu0 0.0
        %6442 = vmatprep.subr.mxu0 0.0
        %6443 = vmatpush1.xpose.msra.mxu0 0.0
        %6444 = vmatprep.subr.mxu0 0.0
        %6445 = vmatpush1.xpose.msra.mxu0 0.0
        %6446 = vmatprep.subr.mxu0 0.0
        %6447 = vmatpush1.xpose.msra.mxu0 0.0
        %6448 = vmatprep.subr.mxu0 0.0
        %6449 = vmatpush1.xpose.msra.mxu0 0.0
        %6450 = vmatprep.subr.mxu0 0.0
        %6451 = vmatpush1.xpose.msra.mxu0 0.0
        %6452 = vmatprep.subr.mxu0 0.0
        %6453 = vmatpush1.xpose.msra.mxu0 0.0
        %6454 = vmatprep.subr.mxu0 0.0
        %6455 = vmatpush1.xpose.msra.mxu0 0.0
        %6456 = vmatprep.subr.mxu0 0.0
        %6457 = vmatpush1.xpose.msra.mxu0 0.0
        %6458 = vmatprep.subr.mxu0 0.0
        %6459 = vmatpush1.xpose.msra.mxu0 0.0
        %6460 = vmatprep.subr.mxu0 0.0
        %6461 = vmatpush1.xpose.msra.mxu0 0.0
        %6462 = vmatprep.subr.mxu0 0.0
        %6463 = vmatpush1.xpose.msra.mxu0 0.0
        %6464 = vmatprep.subr.mxu0 0.0
        %6465 = vmatpush1.xpose.msra.mxu0 0.0
        %6466 = vmatprep.subr.mxu0 0.0
        %6467 = vmatpush1.xpose.msra.mxu0 0.0
        %6468 = vmatprep.subr.mxu0 0.0
        %6469 = vmatpush1.xpose.msra.mxu0 0.0
        %6470 = vmatprep.subr.mxu0 0.0
        %6471 = vmatpush1.xpose.msra.mxu0 0.0
        %6472 = vmatprep.subr.mxu0 0.0
        %6473 = vmatpush1.xpose.msra.mxu0 0.0
        %6474 = vmatprep.subr.mxu0 0.0
        %6475 = vmatpush1.xpose.msra.mxu0 0.0
        %6476 = vmatprep.subr.mxu0 0.0
        %6477 = vmatpush1.xpose.msra.mxu0 0.0
        %6478 = vmatprep.mubr.f32.mxu0 %v1293
        %6479 = vmatmul.mubr.f32.gmra.mrb[0].mxu0 %v1291
        %v6480 = vpop.f32.mrb[0].mxu0
        %v6481 = vadd.f32 %v6411, %v6480
        %v6482 = vpop.f32.mrb[0].mxu0
        %6483 = vdwg.mxu0
        %6484 = vmatprep.subr.mxu0 %v421
        %6485 = vmatpush1.xpose.msra.mxu0 %v420
        %6486 = vmatprep.subr.mxu0 %v613
        %6487 = vmatpush1.xpose.msra.mxu0 %v612
        %6488 = vmatprep.subr.mxu0 0.0
        %6489 = vmatpush1.xpose.msra.mxu0 0.0
        %6490 = vmatprep.subr.mxu0 0.0
        %6491 = vmatpush1.xpose.msra.mxu0 0.0
        %6492 = vmatprep.subr.mxu0 0.0
        %6493 = vmatpush1.xpose.msra.mxu0 0.0
        %6494 = vmatprep.subr.mxu0 0.0
        %6495 = vmatpush1.xpose.msra.mxu0 0.0
        %6496 = vmatprep.subr.mxu0 0.0
        %6497 = vmatpush1.xpose.msra.mxu0 0.0
        %6498 = vmatprep.subr.mxu0 0.0
        %6499 = vmatpush1.xpose.msra.mxu0 0.0
        %6500 = vmatprep.subr.mxu0 0.0
        %6501 = vmatpush1.xpose.msra.mxu0 0.0
        %6502 = vmatprep.subr.mxu0 0.0
        %6503 = vmatpush1.xpose.msra.mxu0 0.0
        %6504 = vmatprep.subr.mxu0 0.0
        %6505 = vmatpush1.xpose.msra.mxu0 0.0
        %6506 = vmatprep.subr.mxu0 0.0
        %6507 = vmatpush1.xpose.msra.mxu0 0.0
        %6508 = vmatprep.subr.mxu0 0.0
        %6509 = vmatpush1.xpose.msra.mxu0 0.0
        %6510 = vmatprep.subr.mxu0 0.0
        %6511 = vmatpush1.xpose.msra.mxu0 0.0
        %6512 = vmatprep.subr.mxu0 0.0
        %6513 = vmatpush1.xpose.msra.mxu0 0.0
        %6514 = vmatprep.subr.mxu0 0.0
        %6515 = vmatpush1.xpose.msra.mxu0 0.0
        %6516 = vmatprep.subr.mxu0 0.0
        %6517 = vmatpush1.xpose.msra.mxu0 0.0
        %6518 = vmatprep.subr.mxu0 0.0
        %6519 = vmatpush1.xpose.msra.mxu0 0.0
        %6520 = vmatprep.subr.mxu0 0.0
        %6521 = vmatpush1.xpose.msra.mxu0 0.0
        %6522 = vmatprep.subr.mxu0 0.0
        %6523 = vmatpush1.xpose.msra.mxu0 0.0
        %6524 = vmatprep.subr.mxu0 0.0
        %6525 = vmatpush1.xpose.msra.mxu0 0.0
        %6526 = vmatprep.subr.mxu0 0.0
        %6527 = vmatpush1.xpose.msra.mxu0 0.0
        %6528 = vmatprep.subr.mxu0 0.0
        %6529 = vmatpush1.xpose.msra.mxu0 0.0
        %6530 = vmatprep.subr.mxu0 0.0
        %6531 = vmatpush1.xpose.msra.mxu0 0.0
        %6532 = vmatprep.subr.mxu0 0.0
        %6533 = vmatpush1.xpose.msra.mxu0 0.0
        %6534 = vmatprep.subr.mxu0 0.0
        %6535 = vmatpush1.xpose.msra.mxu0 0.0
        %6536 = vmatprep.subr.mxu0 0.0
        %6537 = vmatpush1.xpose.msra.mxu0 0.0
        %6538 = vmatprep.subr.mxu0 0.0
        %6539 = vmatpush1.xpose.msra.mxu0 0.0
        %6540 = vmatprep.subr.mxu0 0.0
        %6541 = vmatpush1.xpose.msra.mxu0 0.0
        %6542 = vmatprep.subr.mxu0 0.0
        %6543 = vmatpush1.xpose.msra.mxu0 0.0
        %6544 = vmatprep.subr.mxu0 0.0
        %6545 = vmatpush1.xpose.msra.mxu0 0.0
        %6546 = vmatprep.subr.mxu0 0.0
        %6547 = vmatpush1.xpose.msra.mxu0 0.0
        %6548 = vmatprep.mubr.f32.mxu0 %v1309
        %6549 = vmatmul.mubr.f32.gmra.mrb[0].mxu0 %v1301
        %v6550 = vpop.f32.mrb[0].mxu0
        %v6551 = vadd.f32 %v6481, %v6550
        %v6552 = vpop.f32.mrb[0].mxu0
        %6553 = vdwg.mxu0
        %6554 = vmatprep.subr.mxu0 %v423
        %6555 = vmatpush1.xpose.msra.mxu0 %v422
        %6556 = vmatprep.subr.mxu0 %v615
        %6557 = vmatpush1.xpose.msra.mxu0 %v614
        %6558 = vmatprep.subr.mxu0 0.0
        %6559 = vmatpush1.xpose.msra.mxu0 0.0
        %6560 = vmatprep.subr.mxu0 0.0
        %6561 = vmatpush1.xpose.msra.mxu0 0.0
        %6562 = vmatprep.subr.mxu0 0.0
        %6563 = vmatpush1.xpose.msra.mxu0 0.0
        %6564 = vmatprep.subr.mxu0 0.0
        %6565 = vmatpush1.xpose.msra.mxu0 0.0
        %6566 = vmatprep.subr.mxu0 0.0
        %6567 = vmatpush1.xpose.msra.mxu0 0.0
        %6568 = vmatprep.subr.mxu0 0.0
        %6569 = vmatpush1.xpose.msra.mxu0 0.0
        %6570 = vmatprep.subr.mxu0 0.0
        %6571 = vmatpush1.xpose.msra.mxu0 0.0
        %6572 = vmatprep.subr.mxu0 0.0
        %6573 = vmatpush1.xpose.msra.mxu0 0.0
        %6574 = vmatprep.subr.mxu0 0.0
        %6575 = vmatpush1.xpose.msra.mxu0 0.0
        %6576 = vmatprep.subr.mxu0 0.0
        %6577 = vmatpush1.xpose.msra.mxu0 0.0
        %6578 = vmatprep.subr.mxu0 0.0
        %6579 = vmatpush1.xpose.msra.mxu0 0.0
        %6580 = vmatprep.subr.mxu0 0.0
        %6581 = vmatpush1.xpose.msra.mxu0 0.0
        %6582 = vmatprep.subr.mxu0 0.0
        %6583 = vmatpush1.xpose.msra.mxu0 0.0
        %6584 = vmatprep.subr.mxu0 0.0
        %6585 = vmatpush1.xpose.msra.mxu0 0.0
        %6586 = vmatprep.subr.mxu0 0.0
        %6587 = vmatpush1.xpose.msra.mxu0 0.0
        %6588 = vmatprep.subr.mxu0 0.0
        %6589 = vmatpush1.xpose.msra.mxu0 0.0
        %6590 = vmatprep.subr.mxu0 0.0
        %6591 = vmatpush1.xpose.msra.mxu0 0.0
        %6592 = vmatprep.subr.mxu0 0.0
        %6593 = vmatpush1.xpose.msra.mxu0 0.0
        %6594 = vmatprep.subr.mxu0 0.0
        %6595 = vmatpush1.xpose.msra.mxu0 0.0
        %6596 = vmatprep.subr.mxu0 0.0
        %6597 = vmatpush1.xpose.msra.mxu0 0.0
        %6598 = vmatprep.subr.mxu0 0.0
        %6599 = vmatpush1.xpose.msra.mxu0 0.0
        %6600 = vmatprep.subr.mxu0 0.0
        %6601 = vmatpush1.xpose.msra.mxu0 0.0
        %6602 = vmatprep.subr.mxu0 0.0
        %6603 = vmatpush1.xpose.msra.mxu0 0.0
        %6604 = vmatprep.subr.mxu0 0.0
        %6605 = vmatpush1.xpose.msra.mxu0 0.0
        %6606 = vmatprep.subr.mxu0 0.0
        %6607 = vmatpush1.xpose.msra.mxu0 0.0
        %6608 = vmatprep.subr.mxu0 0.0
        %6609 = vmatpush1.xpose.msra.mxu0 0.0
        %6610 = vmatprep.subr.mxu0 0.0
        %6611 = vmatpush1.xpose.msra.mxu0 0.0
        %6612 = vmatprep.subr.mxu0 0.0
        %6613 = vmatpush1.xpose.msra.mxu0 0.0
        %6614 = vmatprep.subr.mxu0 0.0
        %6615 = vmatpush1.xpose.msra.mxu0 0.0
        %6616 = vmatprep.subr.mxu0 0.0
        %6617 = vmatpush1.xpose.msra.mxu0 0.0
        %6618 = vmatprep.mubr.f32.mxu0 %v1310
        %6619 = vmatmul.mubr.f32.gmra.mrb[0].mxu0 %v1308
        %v6620 = vpop.f32.mrb[0].mxu0
        %v6621 = vadd.f32 %v6551, %v6620
        %v6622 = vpop.f32.mrb[0].mxu0
        %6623 = vdwg.mxu0
        %6624 = vmatprep.subr.mxu0 %v425
        %6625 = vmatpush1.xpose.msra.mxu0 %v424
        %6626 = vmatprep.subr.mxu0 %v617
        %6627 = vmatpush1.xpose.msra.mxu0 %v616
        %6628 = vmatprep.subr.mxu0 0.0
        %6629 = vmatpush1.xpose.msra.mxu0 0.0
        %6630 = vmatprep.subr.mxu0 0.0
        %6631 = vmatpush1.xpose.msra.mxu0 0.0
        %6632 = vmatprep.subr.mxu0 0.0
        %6633 = vmatpush1.xpose.msra.mxu0 0.0
        %6634 = vmatprep.subr.mxu0 0.0
        %6635 = vmatpush1.xpose.msra.mxu0 0.0
        %6636 = vmatprep.subr.mxu0 0.0
        %6637 = vmatpush1.xpose.msra.mxu0 0.0
        %6638 = vmatprep.subr.mxu0 0.0
        %6639 = vmatpush1.xpose.msra.mxu0 0.0
        %6640 = vmatprep.subr.mxu0 0.0
        %6641 = vmatpush1.xpose.msra.mxu0 0.0
        %6642 = vmatprep.subr.mxu0 0.0
        %6643 = vmatpush1.xpose.msra.mxu0 0.0
        %6644 = vmatprep.subr.mxu0 0.0
        %6645 = vmatpush1.xpose.msra.mxu0 0.0
        %6646 = vmatprep.subr.mxu0 0.0
        %6647 = vmatpush1.xpose.msra.mxu0 0.0
        %6648 = vmatprep.subr.mxu0 0.0
        %6649 = vmatpush1.xpose.msra.mxu0 0.0
        %6650 = vmatprep.subr.mxu0 0.0
        %6651 = vmatpush1.xpose.msra.mxu0 0.0
        %6652 = vmatprep.subr.mxu0 0.0
        %6653 = vmatpush1.xpose.msra.mxu0 0.0
        %6654 = vmatprep.subr.mxu0 0.0
        %6655 = vmatpush1.xpose.msra.mxu0 0.0
        %6656 = vmatprep.subr.mxu0 0.0
        %6657 = vmatpush1.xpose.msra.mxu0 0.0
        %6658 = vmatprep.subr.mxu0 0.0
        %6659 = vmatpush1.xpose.msra.mxu0 0.0
        %6660 = vmatprep.subr.mxu0 0.0
        %6661 = vmatpush1.xpose.msra.mxu0 0.0
        %6662 = vmatprep.subr.mxu0 0.0
        %6663 = vmatpush1.xpose.msra.mxu0 0.0
        %6664 = vmatprep.subr.mxu0 0.0
        %6665 = vmatpush1.xpose.msra.mxu0 0.0
        %6666 = vmatprep.subr.mxu0 0.0
        %6667 = vmatpush1.xpose.msra.mxu0 0.0
        %6668 = vmatprep.subr.mxu0 0.0
        %6669 = vmatpush1.xpose.msra.mxu0 0.0
        %6670 = vmatprep.subr.mxu0 0.0
        %6671 = vmatpush1.xpose.msra.mxu0 0.0
        %6672 = vmatprep.subr.mxu0 0.0
        %6673 = vmatpush1.xpose.msra.mxu0 0.0
        %6674 = vmatprep.subr.mxu0 0.0
        %6675 = vmatpush1.xpose.msra.mxu0 0.0
        %6676 = vmatprep.subr.mxu0 0.0
        %6677 = vmatpush1.xpose.msra.mxu0 0.0
        %6678 = vmatprep.subr.mxu0 0.0
        %6679 = vmatpush1.xpose.msra.mxu0 0.0
        %6680 = vmatprep.subr.mxu0 0.0
        %6681 = vmatpush1.xpose.msra.mxu0 0.0
        %6682 = vmatprep.subr.mxu0 0.0
        %6683 = vmatpush1.xpose.msra.mxu0 0.0
        %6684 = vmatprep.subr.mxu0 0.0
        %6685 = vmatpush1.xpose.msra.mxu0 0.0
        %6686 = vmatprep.subr.mxu0 0.0
        %6687 = vmatpush1.xpose.msra.mxu0 0.0
        %6688 = vmatprep.mubr.f32.mxu0 %v1326
        %6689 = vmatmul.mubr.f32.gmra.mrb[0].mxu0 %v1318
        %v6690 = vpop.f32.mrb[0].mxu0
        %v6691 = vadd.f32 %v6621, %v6690
        %v6692 = vpop.f32.mrb[0].mxu0
        %6693 = vdwg.mxu0
        %6694 = vmatprep.subr.mxu0 %v427
        %6695 = vmatpush1.xpose.msra.mxu0 %v426
        %6696 = vmatprep.subr.mxu0 %v619
        %6697 = vmatpush1.xpose.msra.mxu0 %v618
        %6698 = vmatprep.subr.mxu0 0.0
        %6699 = vmatpush1.xpose.msra.mxu0 0.0
        %6700 = vmatprep.subr.mxu0 0.0
        %6701 = vmatpush1.xpose.msra.mxu0 0.0
        %6702 = vmatprep.subr.mxu0 0.0
        %6703 = vmatpush1.xpose.msra.mxu0 0.0
        %6704 = vmatprep.subr.mxu0 0.0
        %6705 = vmatpush1.xpose.msra.mxu0 0.0
        %6706 = vmatprep.subr.mxu0 0.0
        %6707 = vmatpush1.xpose.msra.mxu0 0.0
        %6708 = vmatprep.subr.mxu0 0.0
        %6709 = vmatpush1.xpose.msra.mxu0 0.0
        %6710 = vmatprep.subr.mxu0 0.0
        %6711 = vmatpush1.xpose.msra.mxu0 0.0
        %6712 = vmatprep.subr.mxu0 0.0
        %6713 = vmatpush1.xpose.msra.mxu0 0.0
        %6714 = vmatprep.subr.mxu0 0.0
        %6715 = vmatpush1.xpose.msra.mxu0 0.0
        %6716 = vmatprep.subr.mxu0 0.0
        %6717 = vmatpush1.xpose.msra.mxu0 0.0
        %6718 = vmatprep.subr.mxu0 0.0
        %6719 = vmatpush1.xpose.msra.mxu0 0.0
        %6720 = vmatprep.subr.mxu0 0.0
        %6721 = vmatpush1.xpose.msra.mxu0 0.0
        %6722 = vmatprep.subr.mxu0 0.0
        %6723 = vmatpush1.xpose.msra.mxu0 0.0
        %6724 = vmatprep.subr.mxu0 0.0
        %6725 = vmatpush1.xpose.msra.mxu0 0.0
        %6726 = vmatprep.subr.mxu0 0.0
        %6727 = vmatpush1.xpose.msra.mxu0 0.0
        %6728 = vmatprep.subr.mxu0 0.0
        %6729 = vmatpush1.xpose.msra.mxu0 0.0
        %6730 = vmatprep.subr.mxu0 0.0
        %6731 = vmatpush1.xpose.msra.mxu0 0.0
        %6732 = vmatprep.subr.mxu0 0.0
        %6733 = vmatpush1.xpose.msra.mxu0 0.0
        %6734 = vmatprep.subr.mxu0 0.0
        %6735 = vmatpush1.xpose.msra.mxu0 0.0
        %6736 = vmatprep.subr.mxu0 0.0
        %6737 = vmatpush1.xpose.msra.mxu0 0.0
        %6738 = vmatprep.subr.mxu0 0.0
        %6739 = vmatpush1.xpose.msra.mxu0 0.0
        %6740 = vmatprep.subr.mxu0 0.0
        %6741 = vmatpush1.xpose.msra.mxu0 0.0
        %6742 = vmatprep.subr.mxu0 0.0
        %6743 = vmatpush1.xpose.msra.mxu0 0.0
        %6744 = vmatprep.subr.mxu0 0.0
        %6745 = vmatpush1.xpose.msra.mxu0 0.0
        %6746 = vmatprep.subr.mxu0 0.0
        %6747 = vmatpush1.xpose.msra.mxu0 0.0
        %6748 = vmatprep.subr.mxu0 0.0
        %6749 = vmatpush1.xpose.msra.mxu0 0.0
        %6750 = vmatprep.subr.mxu0 0.0
        %6751 = vmatpush1.xpose.msra.mxu0 0.0
        %6752 = vmatprep.subr.mxu0 0.0
        %6753 = vmatpush1.xpose.msra.mxu0 0.0
        %6754 = vmatprep.subr.mxu0 0.0
        %6755 = vmatpush1.xpose.msra.mxu0 0.0
        %6756 = vmatprep.subr.mxu0 0.0
        %6757 = vmatpush1.xpose.msra.mxu0 0.0
        %6758 = vmatprep.mubr.f32.mxu0 %v1327
        %6759 = vmatmul.mubr.f32.gmra.mrb[0].mxu0 %v1325
        %v6760 = vpop.f32.mrb[0].mxu0
        %v6761 = vadd.f32 %v6691, %v6760
        %v6762 = vpop.f32.mrb[0].mxu0
        %6763 = vdwg.mxu0
        %6764 = vmatprep.subr.mxu0 %v429
        %6765 = vmatpush1.xpose.msra.mxu0 %v428
        %6766 = vmatprep.subr.mxu0 %v621
        %6767 = vmatpush1.xpose.msra.mxu0 %v620
        %6768 = vmatprep.subr.mxu0 0.0
        %6769 = vmatpush1.xpose.msra.mxu0 0.0
        %6770 = vmatprep.subr.mxu0 0.0
        %6771 = vmatpush1.xpose.msra.mxu0 0.0
        %6772 = vmatprep.subr.mxu0 0.0
        %6773 = vmatpush1.xpose.msra.mxu0 0.0
        %6774 = vmatprep.subr.mxu0 0.0
        %6775 = vmatpush1.xpose.msra.mxu0 0.0
        %6776 = vmatprep.subr.mxu0 0.0
        %6777 = vmatpush1.xpose.msra.mxu0 0.0
        %6778 = vmatprep.subr.mxu0 0.0
        %6779 = vmatpush1.xpose.msra.mxu0 0.0
        %6780 = vmatprep.subr.mxu0 0.0
        %6781 = vmatpush1.xpose.msra.mxu0 0.0
        %6782 = vmatprep.subr.mxu0 0.0
        %6783 = vmatpush1.xpose.msra.mxu0 0.0
        %6784 = vmatprep.subr.mxu0 0.0
        %6785 = vmatpush1.xpose.msra.mxu0 0.0
        %6786 = vmatprep.subr.mxu0 0.0
        %6787 = vmatpush1.xpose.msra.mxu0 0.0
        %6788 = vmatprep.subr.mxu0 0.0
        %6789 = vmatpush1.xpose.msra.mxu0 0.0
        %6790 = vmatprep.subr.mxu0 0.0
        %6791 = vmatpush1.xpose.msra.mxu0 0.0
        %6792 = vmatprep.subr.mxu0 0.0
        %6793 = vmatpush1.xpose.msra.mxu0 0.0
        %6794 = vmatprep.subr.mxu0 0.0
        %6795 = vmatpush1.xpose.msra.mxu0 0.0
        %6796 = vmatprep.subr.mxu0 0.0
        %6797 = vmatpush1.xpose.msra.mxu0 0.0
        %6798 = vmatprep.subr.mxu0 0.0
        %6799 = vmatpush1.xpose.msra.mxu0 0.0
        %6800 = vmatprep.subr.mxu0 0.0
        %6801 = vmatpush1.xpose.msra.mxu0 0.0
        %6802 = vmatprep.subr.mxu0 0.0
        %6803 = vmatpush1.xpose.msra.mxu0 0.0
        %6804 = vmatprep.subr.mxu0 0.0
        %6805 = vmatpush1.xpose.msra.mxu0 0.0
        %6806 = vmatprep.subr.mxu0 0.0
        %6807 = vmatpush1.xpose.msra.mxu0 0.0
        %6808 = vmatprep.subr.mxu0 0.0
        %6809 = vmatpush1.xpose.msra.mxu0 0.0
        %6810 = vmatprep.subr.mxu0 0.0
        %6811 = vmatpush1.xpose.msra.mxu0 0.0
        %6812 = vmatprep.subr.mxu0 0.0
        %6813 = vmatpush1.xpose.msra.mxu0 0.0
        %6814 = vmatprep.subr.mxu0 0.0
        %6815 = vmatpush1.xpose.msra.mxu0 0.0
        %6816 = vmatprep.subr.mxu0 0.0
        %6817 = vmatpush1.xpose.msra.mxu0 0.0
        %6818 = vmatprep.subr.mxu0 0.0
        %6819 = vmatpush1.xpose.msra.mxu0 0.0
        %6820 = vmatprep.subr.mxu0 0.0
        %6821 = vmatpush1.xpose.msra.mxu0 0.0
        %6822 = vmatprep.subr.mxu0 0.0
        %6823 = vmatpush1.xpose.msra.mxu0 0.0
        %6824 = vmatprep.subr.mxu0 0.0
        %6825 = vmatpush1.xpose.msra.mxu0 0.0
        %6826 = vmatprep.subr.mxu0 0.0
        %6827 = vmatpush1.xpose.msra.mxu0 0.0
        %6828 = vmatprep.mubr.f32.mxu0 %v1343
        %6829 = vmatmul.mubr.f32.gmra.mrb[0].mxu0 %v1335
        %v6830 = vpop.f32.mrb[0].mxu0
        %v6831 = vadd.f32 %v6761, %v6830
        %v6832 = vpop.f32.mrb[0].mxu0
        %6833 = vdwg.mxu0
        %6834 = vmatprep.subr.mxu0 %v431
        %6835 = vmatpush1.xpose.msra.mxu0 %v430
        %6836 = vmatprep.subr.mxu0 %v623
        %6837 = vmatpush1.xpose.msra.mxu0 %v622
        %6838 = vmatprep.subr.mxu0 0.0
        %6839 = vmatpush1.xpose.msra.mxu0 0.0
        %6840 = vmatprep.subr.mxu0 0.0
        %6841 = vmatpush1.xpose.msra.mxu0 0.0
        %6842 = vmatprep.subr.mxu0 0.0
        %6843 = vmatpush1.xpose.msra.mxu0 0.0
        %6844 = vmatprep.subr.mxu0 0.0
        %6845 = vmatpush1.xpose.msra.mxu0 0.0
        %6846 = vmatprep.subr.mxu0 0.0
        %6847 = vmatpush1.xpose.msra.mxu0 0.0
        %6848 = vmatprep.subr.mxu0 0.0
        %6849 = vmatpush1.xpose.msra.mxu0 0.0
        %6850 = vmatprep.subr.mxu0 0.0
        %6851 = vmatpush1.xpose.msra.mxu0 0.0
        %6852 = vmatprep.subr.mxu0 0.0
        %6853 = vmatpush1.xpose.msra.mxu0 0.0
        %6854 = vmatprep.subr.mxu0 0.0
        %6855 = vmatpush1.xpose.msra.mxu0 0.0
        %6856 = vmatprep.subr.mxu0 0.0
        %6857 = vmatpush1.xpose.msra.mxu0 0.0
        %6858 = vmatprep.subr.mxu0 0.0
        %6859 = vmatpush1.xpose.msra.mxu0 0.0
        %6860 = vmatprep.subr.mxu0 0.0
        %6861 = vmatpush1.xpose.msra.mxu0 0.0
        %6862 = vmatprep.subr.mxu0 0.0
        %6863 = vmatpush1.xpose.msra.mxu0 0.0
        %6864 = vmatprep.subr.mxu0 0.0
        %6865 = vmatpush1.xpose.msra.mxu0 0.0
        %6866 = vmatprep.subr.mxu0 0.0
        %6867 = vmatpush1.xpose.msra.mxu0 0.0
        %6868 = vmatprep.subr.mxu0 0.0
        %6869 = vmatpush1.xpose.msra.mxu0 0.0
        %6870 = vmatprep.subr.mxu0 0.0
        %6871 = vmatpush1.xpose.msra.mxu0 0.0
        %6872 = vmatprep.subr.mxu0 0.0
        %6873 = vmatpush1.xpose.msra.mxu0 0.0
        %6874 = vmatprep.subr.mxu0 0.0
        %6875 = vmatpush1.xpose.msra.mxu0 0.0
        %6876 = vmatprep.subr.mxu0 0.0
        %6877 = vmatpush1.xpose.msra.mxu0 0.0
        %6878 = vmatprep.subr.mxu0 0.0
        %6879 = vmatpush1.xpose.msra.mxu0 0.0
        %6880 = vmatprep.subr.mxu0 0.0
        %6881 = vmatpush1.xpose.msra.mxu0 0.0
        %6882 = vmatprep.subr.mxu0 0.0
        %6883 = vmatpush1.xpose.msra.mxu0 0.0
        %6884 = vmatprep.subr.mxu0 0.0
        %6885 = vmatpush1.xpose.msra.mxu0 0.0
        %6886 = vmatprep.subr.mxu0 0.0
        %6887 = vmatpush1.xpose.msra.mxu0 0.0
        %6888 = vmatprep.subr.mxu0 0.0
        %6889 = vmatpush1.xpose.msra.mxu0 0.0
        %6890 = vmatprep.subr.mxu0 0.0
        %6891 = vmatpush1.xpose.msra.mxu0 0.0
        %6892 = vmatprep.subr.mxu0 0.0
        %6893 = vmatpush1.xpose.msra.mxu0 0.0
        %6894 = vmatprep.subr.mxu0 0.0
        %6895 = vmatpush1.xpose.msra.mxu0 0.0
        %6896 = vmatprep.subr.mxu0 0.0
        %6897 = vmatpush1.xpose.msra.mxu0 0.0
        %6898 = vmatprep.mubr.f32.mxu0 %v1344
        %6899 = vmatmul.mubr.f32.gmra.mrb[0].mxu0 %v1342
        %v6900 = vpop.f32.mrb[0].mxu0
        %v6901 = vadd.f32 %v6831, %v6900
        %v6902 = vpop.f32.mrb[0].mxu0
        %6903 = vdwg.mxu0
        %6904 = vmatprep.subr.mxu0 %v433
        %6905 = vmatpush1.xpose.msra.mxu0 %v432
        %6906 = vmatprep.subr.mxu0 %v625
        %6907 = vmatpush1.xpose.msra.mxu0 %v624
        %6908 = vmatprep.subr.mxu0 0.0
        %6909 = vmatpush1.xpose.msra.mxu0 0.0
        %6910 = vmatprep.subr.mxu0 0.0
        %6911 = vmatpush1.xpose.msra.mxu0 0.0
        %6912 = vmatprep.subr.mxu0 0.0
        %6913 = vmatpush1.xpose.msra.mxu0 0.0
        %6914 = vmatprep.subr.mxu0 0.0
        %6915 = vmatpush1.xpose.msra.mxu0 0.0
        %6916 = vmatprep.subr.mxu0 0.0
        %6917 = vmatpush1.xpose.msra.mxu0 0.0
        %6918 = vmatprep.subr.mxu0 0.0
        %6919 = vmatpush1.xpose.msra.mxu0 0.0
        %6920 = vmatprep.subr.mxu0 0.0
        %6921 = vmatpush1.xpose.msra.mxu0 0.0
        %6922 = vmatprep.subr.mxu0 0.0
        %6923 = vmatpush1.xpose.msra.mxu0 0.0
        %6924 = vmatprep.subr.mxu0 0.0
        %6925 = vmatpush1.xpose.msra.mxu0 0.0
        %6926 = vmatprep.subr.mxu0 0.0
        %6927 = vmatpush1.xpose.msra.mxu0 0.0
        %6928 = vmatprep.subr.mxu0 0.0
        %6929 = vmatpush1.xpose.msra.mxu0 0.0
        %6930 = vmatprep.subr.mxu0 0.0
        %6931 = vmatpush1.xpose.msra.mxu0 0.0
        %6932 = vmatprep.subr.mxu0 0.0
        %6933 = vmatpush1.xpose.msra.mxu0 0.0
        %6934 = vmatprep.subr.mxu0 0.0
        %6935 = vmatpush1.xpose.msra.mxu0 0.0
        %6936 = vmatprep.subr.mxu0 0.0
        %6937 = vmatpush1.xpose.msra.mxu0 0.0
        %6938 = vmatprep.subr.mxu0 0.0
        %6939 = vmatpush1.xpose.msra.mxu0 0.0
        %6940 = vmatprep.subr.mxu0 0.0
        %6941 = vmatpush1.xpose.msra.mxu0 0.0
        %6942 = vmatprep.subr.mxu0 0.0
        %6943 = vmatpush1.xpose.msra.mxu0 0.0
        %6944 = vmatprep.subr.mxu0 0.0
        %6945 = vmatpush1.xpose.msra.mxu0 0.0
        %6946 = vmatprep.subr.mxu0 0.0
        %6947 = vmatpush1.xpose.msra.mxu0 0.0
        %6948 = vmatprep.subr.mxu0 0.0
        %6949 = vmatpush1.xpose.msra.mxu0 0.0
        %6950 = vmatprep.subr.mxu0 0.0
        %6951 = vmatpush1.xpose.msra.mxu0 0.0
        %6952 = vmatprep.subr.mxu0 0.0
        %6953 = vmatpush1.xpose.msra.mxu0 0.0
        %6954 = vmatprep.subr.mxu0 0.0
        %6955 = vmatpush1.xpose.msra.mxu0 0.0
        %6956 = vmatprep.subr.mxu0 0.0
        %6957 = vmatpush1.xpose.msra.mxu0 0.0
        %6958 = vmatprep.subr.mxu0 0.0
        %6959 = vmatpush1.xpose.msra.mxu0 0.0
        %6960 = vmatprep.subr.mxu0 0.0
        %6961 = vmatpush1.xpose.msra.mxu0 0.0
        %6962 = vmatprep.subr.mxu0 0.0
        %6963 = vmatpush1.xpose.msra.mxu0 0.0
        %6964 = vmatprep.subr.mxu0 0.0
        %6965 = vmatpush1.xpose.msra.mxu0 0.0
        %6966 = vmatprep.subr.mxu0 0.0
        %6967 = vmatpush1.xpose.msra.mxu0 0.0
        %6968 = vmatprep.mubr.f32.mxu0 %v1360
        %6969 = vmatmul.mubr.f32.gmra.mrb[0].mxu0 %v1352
        %v6970 = vpop.f32.mrb[0].mxu0
        %v6971 = vadd.f32 %v6901, %v6970
        %v6972 = vpop.f32.mrb[0].mxu0
        %6973 = vdwg.mxu0
        %6974 = vmatprep.subr.mxu0 %v435
        %6975 = vmatpush1.xpose.msra.mxu0 %v434
        %6976 = vmatprep.subr.mxu0 %v627
        %6977 = vmatpush1.xpose.msra.mxu0 %v626
        %6978 = vmatprep.subr.mxu0 0.0
        %6979 = vmatpush1.xpose.msra.mxu0 0.0
        %6980 = vmatprep.subr.mxu0 0.0
        %6981 = vmatpush1.xpose.msra.mxu0 0.0
        %6982 = vmatprep.subr.mxu0 0.0
        %6983 = vmatpush1.xpose.msra.mxu0 0.0
        %6984 = vmatprep.subr.mxu0 0.0
        %6985 = vmatpush1.xpose.msra.mxu0 0.0
        %6986 = vmatprep.subr.mxu0 0.0
        %6987 = vmatpush1.xpose.msra.mxu0 0.0
        %6988 = vmatprep.subr.mxu0 0.0
        %6989 = vmatpush1.xpose.msra.mxu0 0.0
        %6990 = vmatprep.subr.mxu0 0.0
        %6991 = vmatpush1.xpose.msra.mxu0 0.0
        %6992 = vmatprep.subr.mxu0 0.0
        %6993 = vmatpush1.xpose.msra.mxu0 0.0
        %6994 = vmatprep.subr.mxu0 0.0
        %6995 = vmatpush1.xpose.msra.mxu0 0.0
        %6996 = vmatprep.subr.mxu0 0.0
        %6997 = vmatpush1.xpose.msra.mxu0 0.0
        %6998 = vmatprep.subr.mxu0 0.0
        %6999 = vmatpush1.xpose.msra.mxu0 0.0
        %7000 = vmatprep.subr.mxu0 0.0
        %7001 = vmatpush1.xpose.msra.mxu0 0.0
        %7002 = vmatprep.subr.mxu0 0.0
        %7003 = vmatpush1.xpose.msra.mxu0 0.0
        %7004 = vmatprep.subr.mxu0 0.0
        %7005 = vmatpush1.xpose.msra.mxu0 0.0
        %7006 = vmatprep.subr.mxu0 0.0
        %7007 = vmatpush1.xpose.msra.mxu0 0.0
        %7008 = vmatprep.subr.mxu0 0.0
        %7009 = vmatpush1.xpose.msra.mxu0 0.0
        %7010 = vmatprep.subr.mxu0 0.0
        %7011 = vmatpush1.xpose.msra.mxu0 0.0
        %7012 = vmatprep.subr.mxu0 0.0
        %7013 = vmatpush1.xpose.msra.mxu0 0.0
        %7014 = vmatprep.subr.mxu0 0.0
        %7015 = vmatpush1.xpose.msra.mxu0 0.0
        %7016 = vmatprep.subr.mxu0 0.0
        %7017 = vmatpush1.xpose.msra.mxu0 0.0
        %7018 = vmatprep.subr.mxu0 0.0
        %7019 = vmatpush1.xpose.msra.mxu0 0.0
        %7020 = vmatprep.subr.mxu0 0.0
        %7021 = vmatpush1.xpose.msra.mxu0 0.0
        %7022 = vmatprep.subr.mxu0 0.0
        %7023 = vmatpush1.xpose.msra.mxu0 0.0
        %7024 = vmatprep.subr.mxu0 0.0
        %7025 = vmatpush1.xpose.msra.mxu0 0.0
        %7026 = vmatprep.subr.mxu0 0.0
        %7027 = vmatpush1.xpose.msra.mxu0 0.0
        %7028 = vmatprep.subr.mxu0 0.0
        %7029 = vmatpush1.xpose.msra.mxu0 0.0
        %7030 = vmatprep.subr.mxu0 0.0
        %7031 = vmatpush1.xpose.msra.mxu0 0.0
        %7032 = vmatprep.subr.mxu0 0.0
        %7033 = vmatpush1.xpose.msra.mxu0 0.0
        %7034 = vmatprep.subr.mxu0 0.0
        %7035 = vmatpush1.xpose.msra.mxu0 0.0
        %7036 = vmatprep.subr.mxu0 0.0
        %7037 = vmatpush1.xpose.msra.mxu0 0.0
        %7038 = vmatprep.mubr.f32.mxu0 %v1361
        %7039 = vmatmul.mubr.f32.gmra.mrb[0].mxu0 %v1359
        %v7040 = vpop.f32.mrb[0].mxu0
        %v7041 = vadd.f32 %v6971, %v7040
        %v7042 = vpop.f32.mrb[0].mxu0
        %7043 = vdwg.mxu0
        %7044 = vmatprep.subr.mxu0 %v437
        %7045 = vmatpush1.xpose.msra.mxu0 %v436
        %7046 = vmatprep.subr.mxu0 %v629
        %7047 = vmatpush1.xpose.msra.mxu0 %v628
        %7048 = vmatprep.subr.mxu0 0.0
        %7049 = vmatpush1.xpose.msra.mxu0 0.0
        %7050 = vmatprep.subr.mxu0 0.0
        %7051 = vmatpush1.xpose.msra.mxu0 0.0
        %7052 = vmatprep.subr.mxu0 0.0
        %7053 = vmatpush1.xpose.msra.mxu0 0.0
        %7054 = vmatprep.subr.mxu0 0.0
        %7055 = vmatpush1.xpose.msra.mxu0 0.0
        %7056 = vmatprep.subr.mxu0 0.0
        %7057 = vmatpush1.xpose.msra.mxu0 0.0
        %7058 = vmatprep.subr.mxu0 0.0
        %7059 = vmatpush1.xpose.msra.mxu0 0.0
        %7060 = vmatprep.subr.mxu0 0.0
        %7061 = vmatpush1.xpose.msra.mxu0 0.0
        %7062 = vmatprep.subr.mxu0 0.0
        %7063 = vmatpush1.xpose.msra.mxu0 0.0
        %7064 = vmatprep.subr.mxu0 0.0
        %7065 = vmatpush1.xpose.msra.mxu0 0.0
        %7066 = vmatprep.subr.mxu0 0.0
        %7067 = vmatpush1.xpose.msra.mxu0 0.0
        %7068 = vmatprep.subr.mxu0 0.0
        %7069 = vmatpush1.xpose.msra.mxu0 0.0
        %7070 = vmatprep.subr.mxu0 0.0
        %7071 = vmatpush1.xpose.msra.mxu0 0.0
        %7072 = vmatprep.subr.mxu0 0.0
        %7073 = vmatpush1.xpose.msra.mxu0 0.0
        %7074 = vmatprep.subr.mxu0 0.0
        %7075 = vmatpush1.xpose.msra.mxu0 0.0
        %7076 = vmatprep.subr.mxu0 0.0
        %7077 = vmatpush1.xpose.msra.mxu0 0.0
        %7078 = vmatprep.subr.mxu0 0.0
        %7079 = vmatpush1.xpose.msra.mxu0 0.0
        %7080 = vmatprep.subr.mxu0 0.0
        %7081 = vmatpush1.xpose.msra.mxu0 0.0
        %7082 = vmatprep.subr.mxu0 0.0
        %7083 = vmatpush1.xpose.msra.mxu0 0.0
        %7084 = vmatprep.subr.mxu0 0.0
        %7085 = vmatpush1.xpose.msra.mxu0 0.0
        %7086 = vmatprep.subr.mxu0 0.0
        %7087 = vmatpush1.xpose.msra.mxu0 0.0
        %7088 = vmatprep.subr.mxu0 0.0
        %7089 = vmatpush1.xpose.msra.mxu0 0.0
        %7090 = vmatprep.subr.mxu0 0.0
        %7091 = vmatpush1.xpose.msra.mxu0 0.0
        %7092 = vmatprep.subr.mxu0 0.0
        %7093 = vmatpush1.xpose.msra.mxu0 0.0
        %7094 = vmatprep.subr.mxu0 0.0
        %7095 = vmatpush1.xpose.msra.mxu0 0.0
        %7096 = vmatprep.subr.mxu0 0.0
        %7097 = vmatpush1.xpose.msra.mxu0 0.0
        %7098 = vmatprep.subr.mxu0 0.0
        %7099 = vmatpush1.xpose.msra.mxu0 0.0
        %7100 = vmatprep.subr.mxu0 0.0
        %7101 = vmatpush1.xpose.msra.mxu0 0.0
        %7102 = vmatprep.subr.mxu0 0.0
        %7103 = vmatpush1.xpose.msra.mxu0 0.0
        %7104 = vmatprep.subr.mxu0 0.0
        %7105 = vmatpush1.xpose.msra.mxu0 0.0
        %7106 = vmatprep.subr.mxu0 0.0
        %7107 = vmatpush1.xpose.msra.mxu0 0.0
        %7108 = vmatprep.mubr.f32.mxu0 %v1377
        %7109 = vmatmul.mubr.f32.gmra.mrb[0].mxu0 %v1369
        %v7110 = vpop.f32.mrb[0].mxu0
        %v7111 = vadd.f32 %v7041, %v7110
        %v7112 = vpop.f32.mrb[0].mxu0
        %7113 = vdwg.mxu0
        %7114 = vmatprep.subr.mxu0 %v439
        %7115 = vmatpush1.xpose.msra.mxu0 %v438
        %7116 = vmatprep.subr.mxu0 %v631
        %7117 = vmatpush1.xpose.msra.mxu0 %v630
        %7118 = vmatprep.subr.mxu0 0.0
        %7119 = vmatpush1.xpose.msra.mxu0 0.0
        %7120 = vmatprep.subr.mxu0 0.0
        %7121 = vmatpush1.xpose.msra.mxu0 0.0
        %7122 = vmatprep.subr.mxu0 0.0
        %7123 = vmatpush1.xpose.msra.mxu0 0.0
        %7124 = vmatprep.subr.mxu0 0.0
        %7125 = vmatpush1.xpose.msra.mxu0 0.0
        %7126 = vmatprep.subr.mxu0 0.0
        %7127 = vmatpush1.xpose.msra.mxu0 0.0
        %7128 = vmatprep.subr.mxu0 0.0
        %7129 = vmatpush1.xpose.msra.mxu0 0.0
        %7130 = vmatprep.subr.mxu0 0.0
        %7131 = vmatpush1.xpose.msra.mxu0 0.0
        %7132 = vmatprep.subr.mxu0 0.0
        %7133 = vmatpush1.xpose.msra.mxu0 0.0
        %7134 = vmatprep.subr.mxu0 0.0
        %7135 = vmatpush1.xpose.msra.mxu0 0.0
        %7136 = vmatprep.subr.mxu0 0.0
        %7137 = vmatpush1.xpose.msra.mxu0 0.0
        %7138 = vmatprep.subr.mxu0 0.0
        %7139 = vmatpush1.xpose.msra.mxu0 0.0
        %7140 = vmatprep.subr.mxu0 0.0
        %7141 = vmatpush1.xpose.msra.mxu0 0.0
        %7142 = vmatprep.subr.mxu0 0.0
        %7143 = vmatpush1.xpose.msra.mxu0 0.0
        %7144 = vmatprep.subr.mxu0 0.0
        %7145 = vmatpush1.xpose.msra.mxu0 0.0
        %7146 = vmatprep.subr.mxu0 0.0
        %7147 = vmatpush1.xpose.msra.mxu0 0.0
        %7148 = vmatprep.subr.mxu0 0.0
        %7149 = vmatpush1.xpose.msra.mxu0 0.0
        %7150 = vmatprep.subr.mxu0 0.0
        %7151 = vmatpush1.xpose.msra.mxu0 0.0
        %7152 = vmatprep.subr.mxu0 0.0
        %7153 = vmatpush1.xpose.msra.mxu0 0.0
        %7154 = vmatprep.subr.mxu0 0.0
        %7155 = vmatpush1.xpose.msra.mxu0 0.0
        %7156 = vmatprep.subr.mxu0 0.0
        %7157 = vmatpush1.xpose.msra.mxu0 0.0
        %7158 = vmatprep.subr.mxu0 0.0
        %7159 = vmatpush1.xpose.msra.mxu0 0.0
        %7160 = vmatprep.subr.mxu0 0.0
        %7161 = vmatpush1.xpose.msra.mxu0 0.0
        %7162 = vmatprep.subr.mxu0 0.0
        %7163 = vmatpush1.xpose.msra.mxu0 0.0
        %7164 = vmatprep.subr.mxu0 0.0
        %7165 = vmatpush1.xpose.msra.mxu0 0.0
        %7166 = vmatprep.subr.mxu0 0.0
        %7167 = vmatpush1.xpose.msra.mxu0 0.0
        %7168 = vmatprep.subr.mxu0 0.0
        %7169 = vmatpush1.xpose.msra.mxu0 0.0
        %7170 = vmatprep.subr.mxu0 0.0
        %7171 = vmatpush1.xpose.msra.mxu0 0.0
        %7172 = vmatprep.subr.mxu0 0.0
        %7173 = vmatpush1.xpose.msra.mxu0 0.0
        %7174 = vmatprep.subr.mxu0 0.0
        %7175 = vmatpush1.xpose.msra.mxu0 0.0
        %7176 = vmatprep.subr.mxu0 0.0
        %7177 = vmatpush1.xpose.msra.mxu0 0.0
        %7178 = vmatprep.mubr.f32.mxu0 %v1378
        %7179 = vmatmul.mubr.f32.gmra.mrb[0].mxu0 %v1376
        %v7180 = vpop.f32.mrb[0].mxu0
        %v7181 = vadd.f32 %v7111, %v7180
        %v7182 = vpop.f32.mrb[0].mxu0
        %7183 = vdwg.mxu0
        %7184 = vmatprep.subr.mxu0 %v441
        %7185 = vmatpush1.xpose.msra.mxu0 %v440
        %7186 = vmatprep.subr.mxu0 %v633
        %7187 = vmatpush1.xpose.msra.mxu0 %v632
        %7188 = vmatprep.subr.mxu0 0.0
        %7189 = vmatpush1.xpose.msra.mxu0 0.0
        %7190 = vmatprep.subr.mxu0 0.0
        %7191 = vmatpush1.xpose.msra.mxu0 0.0
        %7192 = vmatprep.subr.mxu0 0.0
        %7193 = vmatpush1.xpose.msra.mxu0 0.0
        %7194 = vmatprep.subr.mxu0 0.0
        %7195 = vmatpush1.xpose.msra.mxu0 0.0
        %7196 = vmatprep.subr.mxu0 0.0
        %7197 = vmatpush1.xpose.msra.mxu0 0.0
        %7198 = vmatprep.subr.mxu0 0.0
        %7199 = vmatpush1.xpose.msra.mxu0 0.0
        %7200 = vmatprep.subr.mxu0 0.0
        %7201 = vmatpush1.xpose.msra.mxu0 0.0
        %7202 = vmatprep.subr.mxu0 0.0
        %7203 = vmatpush1.xpose.msra.mxu0 0.0
        %7204 = vmatprep.subr.mxu0 0.0
        %7205 = vmatpush1.xpose.msra.mxu0 0.0
        %7206 = vmatprep.subr.mxu0 0.0
        %7207 = vmatpush1.xpose.msra.mxu0 0.0
        %7208 = vmatprep.subr.mxu0 0.0
        %7209 = vmatpush1.xpose.msra.mxu0 0.0
        %7210 = vmatprep.subr.mxu0 0.0
        %7211 = vmatpush1.xpose.msra.mxu0 0.0
        %7212 = vmatprep.subr.mxu0 0.0
        %7213 = vmatpush1.xpose.msra.mxu0 0.0
        %7214 = vmatprep.subr.mxu0 0.0
        %7215 = vmatpush1.xpose.msra.mxu0 0.0
        %7216 = vmatprep.subr.mxu0 0.0
        %7217 = vmatpush1.xpose.msra.mxu0 0.0
        %7218 = vmatprep.subr.mxu0 0.0
        %7219 = vmatpush1.xpose.msra.mxu0 0.0
        %7220 = vmatprep.subr.mxu0 0.0
        %7221 = vmatpush1.xpose.msra.mxu0 0.0
        %7222 = vmatprep.subr.mxu0 0.0
        %7223 = vmatpush1.xpose.msra.mxu0 0.0
        %7224 = vmatprep.subr.mxu0 0.0
        %7225 = vmatpush1.xpose.msra.mxu0 0.0
        %7226 = vmatprep.subr.mxu0 0.0
        %7227 = vmatpush1.xpose.msra.mxu0 0.0
        %7228 = vmatprep.subr.mxu0 0.0
        %7229 = vmatpush1.xpose.msra.mxu0 0.0
        %7230 = vmatprep.subr.mxu0 0.0
        %7231 = vmatpush1.xpose.msra.mxu0 0.0
        %7232 = vmatprep.subr.mxu0 0.0
        %7233 = vmatpush1.xpose.msra.mxu0 0.0
        %7234 = vmatprep.subr.mxu0 0.0
        %7235 = vmatpush1.xpose.msra.mxu0 0.0
        %7236 = vmatprep.subr.mxu0 0.0
        %7237 = vmatpush1.xpose.msra.mxu0 0.0
        %7238 = vmatprep.subr.mxu0 0.0
        %7239 = vmatpush1.xpose.msra.mxu0 0.0
        %7240 = vmatprep.subr.mxu0 0.0
        %7241 = vmatpush1.xpose.msra.mxu0 0.0
        %7242 = vmatprep.subr.mxu0 0.0
        %7243 = vmatpush1.xpose.msra.mxu0 0.0
        %7244 = vmatprep.subr.mxu0 0.0
        %7245 = vmatpush1.xpose.msra.mxu0 0.0
        %7246 = vmatprep.subr.mxu0 0.0
        %7247 = vmatpush1.xpose.msra.mxu0 0.0
        %7248 = vmatprep.mubr.f32.mxu0 %v1394
        %7249 = vmatmul.mubr.f32.gmra.mrb[0].mxu0 %v1386
        %v7250 = vpop.f32.mrb[0].mxu0
        %v7251 = vadd.f32 %v7181, %v7250
        %v7252 = vpop.f32.mrb[0].mxu0
        %7253 = vdwg.mxu0
        %7254 = vmatprep.subr.mxu0 %v443
        %7255 = vmatpush1.xpose.msra.mxu0 %v442
        %7256 = vmatprep.subr.mxu0 %v635
        %7257 = vmatpush1.xpose.msra.mxu0 %v634
        %7258 = vmatprep.subr.mxu0 0.0
        %7259 = vmatpush1.xpose.msra.mxu0 0.0
        %7260 = vmatprep.subr.mxu0 0.0
        %7261 = vmatpush1.xpose.msra.mxu0 0.0
        %7262 = vmatprep.subr.mxu0 0.0
        %7263 = vmatpush1.xpose.msra.mxu0 0.0
        %7264 = vmatprep.subr.mxu0 0.0
        %7265 = vmatpush1.xpose.msra.mxu0 0.0
        %7266 = vmatprep.subr.mxu0 0.0
        %7267 = vmatpush1.xpose.msra.mxu0 0.0
        %7268 = vmatprep.subr.mxu0 0.0
        %7269 = vmatpush1.xpose.msra.mxu0 0.0
        %7270 = vmatprep.subr.mxu0 0.0
        %7271 = vmatpush1.xpose.msra.mxu0 0.0
        %7272 = vmatprep.subr.mxu0 0.0
        %7273 = vmatpush1.xpose.msra.mxu0 0.0
        %7274 = vmatprep.subr.mxu0 0.0
        %7275 = vmatpush1.xpose.msra.mxu0 0.0
        %7276 = vmatprep.subr.mxu0 0.0
        %7277 = vmatpush1.xpose.msra.mxu0 0.0
        %7278 = vmatprep.subr.mxu0 0.0
        %7279 = vmatpush1.xpose.msra.mxu0 0.0
        %7280 = vmatprep.subr.mxu0 0.0
        %7281 = vmatpush1.xpose.msra.mxu0 0.0
        %7282 = vmatprep.subr.mxu0 0.0
        %7283 = vmatpush1.xpose.msra.mxu0 0.0
        %7284 = vmatprep.subr.mxu0 0.0
        %7285 = vmatpush1.xpose.msra.mxu0 0.0
        %7286 = vmatprep.subr.mxu0 0.0
        %7287 = vmatpush1.xpose.msra.mxu0 0.0
        %7288 = vmatprep.subr.mxu0 0.0
        %7289 = vmatpush1.xpose.msra.mxu0 0.0
        %7290 = vmatprep.subr.mxu0 0.0
        %7291 = vmatpush1.xpose.msra.mxu0 0.0
        %7292 = vmatprep.subr.mxu0 0.0
        %7293 = vmatpush1.xpose.msra.mxu0 0.0
        %7294 = vmatprep.subr.mxu0 0.0
        %7295 = vmatpush1.xpose.msra.mxu0 0.0
        %7296 = vmatprep.subr.mxu0 0.0
        %7297 = vmatpush1.xpose.msra.mxu0 0.0
        %7298 = vmatprep.subr.mxu0 0.0
        %7299 = vmatpush1.xpose.msra.mxu0 0.0
        %7300 = vmatprep.subr.mxu0 0.0
        %7301 = vmatpush1.xpose.msra.mxu0 0.0
        %7302 = vmatprep.subr.mxu0 0.0
        %7303 = vmatpush1.xpose.msra.mxu0 0.0
        %7304 = vmatprep.subr.mxu0 0.0
        %7305 = vmatpush1.xpose.msra.mxu0 0.0
        %7306 = vmatprep.subr.mxu0 0.0
        %7307 = vmatpush1.xpose.msra.mxu0 0.0
        %7308 = vmatprep.subr.mxu0 0.0
        %7309 = vmatpush1.xpose.msra.mxu0 0.0
        %7310 = vmatprep.subr.mxu0 0.0
        %7311 = vmatpush1.xpose.msra.mxu0 0.0
        %7312 = vmatprep.subr.mxu0 0.0
        %7313 = vmatpush1.xpose.msra.mxu0 0.0
        %7314 = vmatprep.subr.mxu0 0.0
        %7315 = vmatpush1.xpose.msra.mxu0 0.0
        %7316 = vmatprep.subr.mxu0 0.0
        %7317 = vmatpush1.xpose.msra.mxu0 0.0
        %7318 = vmatprep.mubr.f32.mxu0 %v1395
        %7319 = vmatmul.mubr.f32.gmra.mrb[0].mxu0 %v1393
        %v7320 = vpop.f32.mrb[0].mxu0
        %v7321 = vadd.f32 %v7251, %v7320
        %v7322 = vpop.f32.mrb[0].mxu0
        %7323 = vdwg.mxu0
        %7324 = vmatprep.subr.mxu0 %v445
        %7325 = vmatpush1.xpose.msra.mxu0 %v444
        %7326 = vmatprep.subr.mxu0 %v637
        %7327 = vmatpush1.xpose.msra.mxu0 %v636
        %7328 = vmatprep.subr.mxu0 0.0
        %7329 = vmatpush1.xpose.msra.mxu0 0.0
        %7330 = vmatprep.subr.mxu0 0.0
        %7331 = vmatpush1.xpose.msra.mxu0 0.0
        %7332 = vmatprep.subr.mxu0 0.0
        %7333 = vmatpush1.xpose.msra.mxu0 0.0
        %7334 = vmatprep.subr.mxu0 0.0
        %7335 = vmatpush1.xpose.msra.mxu0 0.0
        %7336 = vmatprep.subr.mxu0 0.0
        %7337 = vmatpush1.xpose.msra.mxu0 0.0
        %7338 = vmatprep.subr.mxu0 0.0
        %7339 = vmatpush1.xpose.msra.mxu0 0.0
        %7340 = vmatprep.subr.mxu0 0.0
        %7341 = vmatpush1.xpose.msra.mxu0 0.0
        %7342 = vmatprep.subr.mxu0 0.0
        %7343 = vmatpush1.xpose.msra.mxu0 0.0
        %7344 = vmatprep.subr.mxu0 0.0
        %7345 = vmatpush1.xpose.msra.mxu0 0.0
        %7346 = vmatprep.subr.mxu0 0.0
        %7347 = vmatpush1.xpose.msra.mxu0 0.0
        %7348 = vmatprep.subr.mxu0 0.0
        %7349 = vmatpush1.xpose.msra.mxu0 0.0
        %7350 = vmatprep.subr.mxu0 0.0
        %7351 = vmatpush1.xpose.msra.mxu0 0.0
        %7352 = vmatprep.subr.mxu0 0.0
        %7353 = vmatpush1.xpose.msra.mxu0 0.0
        %7354 = vmatprep.subr.mxu0 0.0
        %7355 = vmatpush1.xpose.msra.mxu0 0.0
        %7356 = vmatprep.subr.mxu0 0.0
        %7357 = vmatpush1.xpose.msra.mxu0 0.0
        %7358 = vmatprep.subr.mxu0 0.0
        %7359 = vmatpush1.xpose.msra.mxu0 0.0
        %7360 = vmatprep.subr.mxu0 0.0
        %7361 = vmatpush1.xpose.msra.mxu0 0.0
        %7362 = vmatprep.subr.mxu0 0.0
        %7363 = vmatpush1.xpose.msra.mxu0 0.0
        %7364 = vmatprep.subr.mxu0 0.0
        %7365 = vmatpush1.xpose.msra.mxu0 0.0
        %7366 = vmatprep.subr.mxu0 0.0
        %7367 = vmatpush1.xpose.msra.mxu0 0.0
        %7368 = vmatprep.subr.mxu0 0.0
        %7369 = vmatpush1.xpose.msra.mxu0 0.0
        %7370 = vmatprep.subr.mxu0 0.0
        %7371 = vmatpush1.xpose.msra.mxu0 0.0
        %7372 = vmatprep.subr.mxu0 0.0
        %7373 = vmatpush1.xpose.msra.mxu0 0.0
        %7374 = vmatprep.subr.mxu0 0.0
        %7375 = vmatpush1.xpose.msra.mxu0 0.0
        %7376 = vmatprep.subr.mxu0 0.0
        %7377 = vmatpush1.xpose.msra.mxu0 0.0
        %7378 = vmatprep.subr.mxu0 0.0
        %7379 = vmatpush1.xpose.msra.mxu0 0.0
        %7380 = vmatprep.subr.mxu0 0.0
        %7381 = vmatpush1.xpose.msra.mxu0 0.0
        %7382 = vmatprep.subr.mxu0 0.0
        %7383 = vmatpush1.xpose.msra.mxu0 0.0
        %7384 = vmatprep.subr.mxu0 0.0
        %7385 = vmatpush1.xpose.msra.mxu0 0.0
        %7386 = vmatprep.subr.mxu0 0.0
        %7387 = vmatpush1.xpose.msra.mxu0 0.0
        %7388 = vmatprep.mubr.f32.mxu0 %v1411
        %7389 = vmatmul.mubr.f32.gmra.mrb[0].mxu0 %v1403
        %v7390 = vpop.f32.mrb[0].mxu0
        %v7391 = vadd.f32 %v7321, %v7390
        %v7392 = vpop.f32.mrb[0].mxu0
        %7393 = vdwg.mxu0
        %7394 = vmatprep.subr.mxu0 %v447
        %7395 = vmatpush1.xpose.msra.mxu0 %v446
        %7396 = vmatprep.subr.mxu0 %v639
        %7397 = vmatpush1.xpose.msra.mxu0 %v638
        %7398 = vmatprep.subr.mxu0 0.0
        %7399 = vmatpush1.xpose.msra.mxu0 0.0
        %7400 = vmatprep.subr.mxu0 0.0
        %7401 = vmatpush1.xpose.msra.mxu0 0.0
        %7402 = vmatprep.subr.mxu0 0.0
        %7403 = vmatpush1.xpose.msra.mxu0 0.0
        %7404 = vmatprep.subr.mxu0 0.0
        %7405 = vmatpush1.xpose.msra.mxu0 0.0
        %7406 = vmatprep.subr.mxu0 0.0
        %7407 = vmatpush1.xpose.msra.mxu0 0.0
        %7408 = vmatprep.subr.mxu0 0.0
        %7409 = vmatpush1.xpose.msra.mxu0 0.0
        %7410 = vmatprep.subr.mxu0 0.0
        %7411 = vmatpush1.xpose.msra.mxu0 0.0
        %7412 = vmatprep.subr.mxu0 0.0
        %7413 = vmatpush1.xpose.msra.mxu0 0.0
        %7414 = vmatprep.subr.mxu0 0.0
        %7415 = vmatpush1.xpose.msra.mxu0 0.0
        %7416 = vmatprep.subr.mxu0 0.0
        %7417 = vmatpush1.xpose.msra.mxu0 0.0
        %7418 = vmatprep.subr.mxu0 0.0
        %7419 = vmatpush1.xpose.msra.mxu0 0.0
        %7420 = vmatprep.subr.mxu0 0.0
        %7421 = vmatpush1.xpose.msra.mxu0 0.0
        %7422 = vmatprep.subr.mxu0 0.0
        %7423 = vmatpush1.xpose.msra.mxu0 0.0
        %7424 = vmatprep.subr.mxu0 0.0
        %7425 = vmatpush1.xpose.msra.mxu0 0.0
        %7426 = vmatprep.subr.mxu0 0.0
        %7427 = vmatpush1.xpose.msra.mxu0 0.0
        %7428 = vmatprep.subr.mxu0 0.0
        %7429 = vmatpush1.xpose.msra.mxu0 0.0
        %7430 = vmatprep.subr.mxu0 0.0
        %7431 = vmatpush1.xpose.msra.mxu0 0.0
        %7432 = vmatprep.subr.mxu0 0.0
        %7433 = vmatpush1.xpose.msra.mxu0 0.0
        %7434 = vmatprep.subr.mxu0 0.0
        %7435 = vmatpush1.xpose.msra.mxu0 0.0
        %7436 = vmatprep.subr.mxu0 0.0
        %7437 = vmatpush1.xpose.msra.mxu0 0.0
        %7438 = vmatprep.subr.mxu0 0.0
        %7439 = vmatpush1.xpose.msra.mxu0 0.0
        %7440 = vmatprep.subr.mxu0 0.0
        %7441 = vmatpush1.xpose.msra.mxu0 0.0
        %7442 = vmatprep.subr.mxu0 0.0
        %7443 = vmatpush1.xpose.msra.mxu0 0.0
        %7444 = vmatprep.subr.mxu0 0.0
        %7445 = vmatpush1.xpose.msra.mxu0 0.0
        %7446 = vmatprep.subr.mxu0 0.0
        %7447 = vmatpush1.xpose.msra.mxu0 0.0
        %7448 = vmatprep.subr.mxu0 0.0
        %7449 = vmatpush1.xpose.msra.mxu0 0.0
        %7450 = vmatprep.subr.mxu0 0.0
        %7451 = vmatpush1.xpose.msra.mxu0 0.0
        %7452 = vmatprep.subr.mxu0 0.0
        %7453 = vmatpush1.xpose.msra.mxu0 0.0
        %7454 = vmatprep.subr.mxu0 0.0
        %7455 = vmatpush1.xpose.msra.mxu0 0.0
        %7456 = vmatprep.subr.mxu0 0.0
        %7457 = vmatpush1.xpose.msra.mxu0 0.0
        %7458 = vmatprep.mubr.f32.mxu0 %v1412
        %7459 = vmatmul.mubr.f32.gmra.mrb[0].mxu0 %v1410
        %v7460 = vpop.f32.mrb[0].mxu0
        %v7461 = vadd.f32 %v7391, %v7460
        %v7462 = vpop.f32.mrb[0].mxu0
        %7463 = vdwg.mxu0
        %7464 = vmatprep.subr.mxu0 %v449
        %7465 = vmatpush1.xpose.msra.mxu0 %v448
        %7466 = vmatprep.subr.mxu0 %v641
        %7467 = vmatpush1.xpose.msra.mxu0 %v640
        %7468 = vmatprep.subr.mxu0 0.0
        %7469 = vmatpush1.xpose.msra.mxu0 0.0
        %7470 = vmatprep.subr.mxu0 0.0
        %7471 = vmatpush1.xpose.msra.mxu0 0.0
        %7472 = vmatprep.subr.mxu0 0.0
        %7473 = vmatpush1.xpose.msra.mxu0 0.0
        %7474 = vmatprep.subr.mxu0 0.0
        %7475 = vmatpush1.xpose.msra.mxu0 0.0
        %7476 = vmatprep.subr.mxu0 0.0
        %7477 = vmatpush1.xpose.msra.mxu0 0.0
        %7478 = vmatprep.subr.mxu0 0.0
        %7479 = vmatpush1.xpose.msra.mxu0 0.0
        %7480 = vmatprep.subr.mxu0 0.0
        %7481 = vmatpush1.xpose.msra.mxu0 0.0
        %7482 = vmatprep.subr.mxu0 0.0
        %7483 = vmatpush1.xpose.msra.mxu0 0.0
        %7484 = vmatprep.subr.mxu0 0.0
        %7485 = vmatpush1.xpose.msra.mxu0 0.0
        %7486 = vmatprep.subr.mxu0 0.0
        %7487 = vmatpush1.xpose.msra.mxu0 0.0
        %7488 = vmatprep.subr.mxu0 0.0
        %7489 = vmatpush1.xpose.msra.mxu0 0.0
        %7490 = vmatprep.subr.mxu0 0.0
        %7491 = vmatpush1.xpose.msra.mxu0 0.0
        %7492 = vmatprep.subr.mxu0 0.0
        %7493 = vmatpush1.xpose.msra.mxu0 0.0
        %7494 = vmatprep.subr.mxu0 0.0
        %7495 = vmatpush1.xpose.msra.mxu0 0.0
        %7496 = vmatprep.subr.mxu0 0.0
        %7497 = vmatpush1.xpose.msra.mxu0 0.0
        %7498 = vmatprep.subr.mxu0 0.0
        %7499 = vmatpush1.xpose.msra.mxu0 0.0
        %7500 = vmatprep.subr.mxu0 0.0
        %7501 = vmatpush1.xpose.msra.mxu0 0.0
        %7502 = vmatprep.subr.mxu0 0.0
        %7503 = vmatpush1.xpose.msra.mxu0 0.0
        %7504 = vmatprep.subr.mxu0 0.0
        %7505 = vmatpush1.xpose.msra.mxu0 0.0
        %7506 = vmatprep.subr.mxu0 0.0
        %7507 = vmatpush1.xpose.msra.mxu0 0.0
        %7508 = vmatprep.subr.mxu0 0.0
        %7509 = vmatpush1.xpose.msra.mxu0 0.0
        %7510 = vmatprep.subr.mxu0 0.0
        %7511 = vmatpush1.xpose.msra.mxu0 0.0
        %7512 = vmatprep.subr.mxu0 0.0
        %7513 = vmatpush1.xpose.msra.mxu0 0.0
        %7514 = vmatprep.subr.mxu0 0.0
        %7515 = vmatpush1.xpose.msra.mxu0 0.0
        %7516 = vmatprep.subr.mxu0 0.0
        %7517 = vmatpush1.xpose.msra.mxu0 0.0
        %7518 = vmatprep.subr.mxu0 0.0
        %7519 = vmatpush1.xpose.msra.mxu0 0.0
        %7520 = vmatprep.subr.mxu0 0.0
        %7521 = vmatpush1.xpose.msra.mxu0 0.0
        %7522 = vmatprep.subr.mxu0 0.0
        %7523 = vmatpush1.xpose.msra.mxu0 0.0
        %7524 = vmatprep.subr.mxu0 0.0
        %7525 = vmatpush1.xpose.msra.mxu0 0.0
        %7526 = vmatprep.subr.mxu0 0.0
        %7527 = vmatpush1.xpose.msra.mxu0 0.0
        %7528 = vmatprep.mubr.f32.mxu0 %v1428
        %7529 = vmatmul.mubr.f32.gmra.mrb[0].mxu0 %v1420
        %v7530 = vpop.f32.mrb[0].mxu0
        %v7531 = vadd.f32 %v7461, %v7530
        %v7532 = vpop.f32.mrb[0].mxu0
        %7533 = vdwg.mxu0
        %7534 = vmatprep.subr.mxu0 %v451
        %7535 = vmatpush1.xpose.msra.mxu0 %v450
        %7536 = vmatprep.subr.mxu0 %v643
        %7537 = vmatpush1.xpose.msra.mxu0 %v642
        %7538 = vmatprep.subr.mxu0 0.0
        %7539 = vmatpush1.xpose.msra.mxu0 0.0
        %7540 = vmatprep.subr.mxu0 0.0
        %7541 = vmatpush1.xpose.msra.mxu0 0.0
        %7542 = vmatprep.subr.mxu0 0.0
        %7543 = vmatpush1.xpose.msra.mxu0 0.0
        %7544 = vmatprep.subr.mxu0 0.0
        %7545 = vmatpush1.xpose.msra.mxu0 0.0
        %7546 = vmatprep.subr.mxu0 0.0
        %7547 = vmatpush1.xpose.msra.mxu0 0.0
        %7548 = vmatprep.subr.mxu0 0.0
        %7549 = vmatpush1.xpose.msra.mxu0 0.0
        %7550 = vmatprep.subr.mxu0 0.0
        %7551 = vmatpush1.xpose.msra.mxu0 0.0
        %7552 = vmatprep.subr.mxu0 0.0
        %7553 = vmatpush1.xpose.msra.mxu0 0.0
        %7554 = vmatprep.subr.mxu0 0.0
        %7555 = vmatpush1.xpose.msra.mxu0 0.0
        %7556 = vmatprep.subr.mxu0 0.0
        %7557 = vmatpush1.xpose.msra.mxu0 0.0
        %7558 = vmatprep.subr.mxu0 0.0
        %7559 = vmatpush1.xpose.msra.mxu0 0.0
        %7560 = vmatprep.subr.mxu0 0.0
        %7561 = vmatpush1.xpose.msra.mxu0 0.0
        %7562 = vmatprep.subr.mxu0 0.0
        %7563 = vmatpush1.xpose.msra.mxu0 0.0
        %7564 = vmatprep.subr.mxu0 0.0
        %7565 = vmatpush1.xpose.msra.mxu0 0.0
        %7566 = vmatprep.subr.mxu0 0.0
        %7567 = vmatpush1.xpose.msra.mxu0 0.0
        %7568 = vmatprep.subr.mxu0 0.0
        %7569 = vmatpush1.xpose.msra.mxu0 0.0
        %7570 = vmatprep.subr.mxu0 0.0
        %7571 = vmatpush1.xpose.msra.mxu0 0.0
        %7572 = vmatprep.subr.mxu0 0.0
        %7573 = vmatpush1.xpose.msra.mxu0 0.0
        %7574 = vmatprep.subr.mxu0 0.0
        %7575 = vmatpush1.xpose.msra.mxu0 0.0
        %7576 = vmatprep.subr.mxu0 0.0
        %7577 = vmatpush1.xpose.msra.mxu0 0.0
        %7578 = vmatprep.subr.mxu0 0.0
        %7579 = vmatpush1.xpose.msra.mxu0 0.0
        %7580 = vmatprep.subr.mxu0 0.0
        %7581 = vmatpush1.xpose.msra.mxu0 0.0
        %7582 = vmatprep.subr.mxu0 0.0
        %7583 = vmatpush1.xpose.msra.mxu0 0.0
        %7584 = vmatprep.subr.mxu0 0.0
        %7585 = vmatpush1.xpose.msra.mxu0 0.0
        %7586 = vmatprep.subr.mxu0 0.0
        %7587 = vmatpush1.xpose.msra.mxu0 0.0
        %7588 = vmatprep.subr.mxu0 0.0
        %7589 = vmatpush1.xpose.msra.mxu0 0.0
        %7590 = vmatprep.subr.mxu0 0.0
        %7591 = vmatpush1.xpose.msra.mxu0 0.0
        %7592 = vmatprep.subr.mxu0 0.0
        %7593 = vmatpush1.xpose.msra.mxu0 0.0
        %7594 = vmatprep.subr.mxu0 0.0
        %7595 = vmatpush1.xpose.msra.mxu0 0.0
        %7596 = vmatprep.subr.mxu0 0.0
        %7597 = vmatpush1.xpose.msra.mxu0 0.0
        %7598 = vmatprep.mubr.f32.mxu0 %v1429
        %7599 = vmatmul.mubr.f32.gmra.mrb[0].mxu0 %v1427
        %v7600 = vpop.f32.mrb[0].mxu0
        %v7601 = vadd.f32 %v7531, %v7600
        %v7602 = vpop.f32.mrb[0].mxu0
        %7603 = vdwg.mxu0
        %7604 = vmatprep.subr.mxu0 %v453
        %7605 = vmatpush1.xpose.msra.mxu0 %v452
        %7606 = vmatprep.subr.mxu0 %v645
        %7607 = vmatpush1.xpose.msra.mxu0 %v644
        %7608 = vmatprep.subr.mxu0 0.0
        %7609 = vmatpush1.xpose.msra.mxu0 0.0
        %7610 = vmatprep.subr.mxu0 0.0
        %7611 = vmatpush1.xpose.msra.mxu0 0.0
        %7612 = vmatprep.subr.mxu0 0.0
        %7613 = vmatpush1.xpose.msra.mxu0 0.0
        %7614 = vmatprep.subr.mxu0 0.0
        %7615 = vmatpush1.xpose.msra.mxu0 0.0
        %7616 = vmatprep.subr.mxu0 0.0
        %7617 = vmatpush1.xpose.msra.mxu0 0.0
        %7618 = vmatprep.subr.mxu0 0.0
        %7619 = vmatpush1.xpose.msra.mxu0 0.0
        %7620 = vmatprep.subr.mxu0 0.0
        %7621 = vmatpush1.xpose.msra.mxu0 0.0
        %7622 = vmatprep.subr.mxu0 0.0
        %7623 = vmatpush1.xpose.msra.mxu0 0.0
        %7624 = vmatprep.subr.mxu0 0.0
        %7625 = vmatpush1.xpose.msra.mxu0 0.0
        %7626 = vmatprep.subr.mxu0 0.0
        %7627 = vmatpush1.xpose.msra.mxu0 0.0
        %7628 = vmatprep.subr.mxu0 0.0
        %7629 = vmatpush1.xpose.msra.mxu0 0.0
        %7630 = vmatprep.subr.mxu0 0.0
        %7631 = vmatpush1.xpose.msra.mxu0 0.0
        %7632 = vmatprep.subr.mxu0 0.0
        %7633 = vmatpush1.xpose.msra.mxu0 0.0
        %7634 = vmatprep.subr.mxu0 0.0
        %7635 = vmatpush1.xpose.msra.mxu0 0.0
        %7636 = vmatprep.subr.mxu0 0.0
        %7637 = vmatpush1.xpose.msra.mxu0 0.0
        %7638 = vmatprep.subr.mxu0 0.0
        %7639 = vmatpush1.xpose.msra.mxu0 0.0
        %7640 = vmatprep.subr.mxu0 0.0
        %7641 = vmatpush1.xpose.msra.mxu0 0.0
        %7642 = vmatprep.subr.mxu0 0.0
        %7643 = vmatpush1.xpose.msra.mxu0 0.0
        %7644 = vmatprep.subr.mxu0 0.0
        %7645 = vmatpush1.xpose.msra.mxu0 0.0
        %7646 = vmatprep.subr.mxu0 0.0
        %7647 = vmatpush1.xpose.msra.mxu0 0.0
        %7648 = vmatprep.subr.mxu0 0.0
        %7649 = vmatpush1.xpose.msra.mxu0 0.0
        %7650 = vmatprep.subr.mxu0 0.0
        %7651 = vmatpush1.xpose.msra.mxu0 0.0
        %7652 = vmatprep.subr.mxu0 0.0
        %7653 = vmatpush1.xpose.msra.mxu0 0.0
        %7654 = vmatprep.subr.mxu0 0.0
        %7655 = vmatpush1.xpose.msra.mxu0 0.0
        %7656 = vmatprep.subr.mxu0 0.0
        %7657 = vmatpush1.xpose.msra.mxu0 0.0
        %7658 = vmatprep.subr.mxu0 0.0
        %7659 = vmatpush1.xpose.msra.mxu0 0.0
        %7660 = vmatprep.subr.mxu0 0.0
        %7661 = vmatpush1.xpose.msra.mxu0 0.0
        %7662 = vmatprep.subr.mxu0 0.0
        %7663 = vmatpush1.xpose.msra.mxu0 0.0
        %7664 = vmatprep.subr.mxu0 0.0
        %7665 = vmatpush1.xpose.msra.mxu0 0.0
        %7666 = vmatprep.subr.mxu0 0.0
        %7667 = vmatpush1.xpose.msra.mxu0 0.0
        %7668 = vmatprep.mubr.f32.mxu0 %v1445
        %7669 = vmatmul.mubr.f32.gmra.mrb[0].mxu0 %v1437
        %v7670 = vpop.f32.mrb[0].mxu0
        %v7671 = vadd.f32 %v7601, %v7670
        %v7672 = vpop.f32.mrb[0].mxu0
        %7673 = vdwg.mxu0
        %7674 = vmatprep.subr.mxu0 %v455
        %7675 = vmatpush1.xpose.msra.mxu0 %v454
        %7676 = vmatprep.subr.mxu0 %v647
        %7677 = vmatpush1.xpose.msra.mxu0 %v646
        %7678 = vmatprep.subr.mxu0 0.0
        %7679 = vmatpush1.xpose.msra.mxu0 0.0
        %7680 = vmatprep.subr.mxu0 0.0
        %7681 = vmatpush1.xpose.msra.mxu0 0.0
        %7682 = vmatprep.subr.mxu0 0.0
        %7683 = vmatpush1.xpose.msra.mxu0 0.0
        %7684 = vmatprep.subr.mxu0 0.0
        %7685 = vmatpush1.xpose.msra.mxu0 0.0
        %7686 = vmatprep.subr.mxu0 0.0
        %7687 = vmatpush1.xpose.msra.mxu0 0.0
        %7688 = vmatprep.subr.mxu0 0.0
        %7689 = vmatpush1.xpose.msra.mxu0 0.0
        %7690 = vmatprep.subr.mxu0 0.0
        %7691 = vmatpush1.xpose.msra.mxu0 0.0
        %7692 = vmatprep.subr.mxu0 0.0
        %7693 = vmatpush1.xpose.msra.mxu0 0.0
        %7694 = vmatprep.subr.mxu0 0.0
        %7695 = vmatpush1.xpose.msra.mxu0 0.0
        %7696 = vmatprep.subr.mxu0 0.0
        %7697 = vmatpush1.xpose.msra.mxu0 0.0
        %7698 = vmatprep.subr.mxu0 0.0
        %7699 = vmatpush1.xpose.msra.mxu0 0.0
        %7700 = vmatprep.subr.mxu0 0.0
        %7701 = vmatpush1.xpose.msra.mxu0 0.0
        %7702 = vmatprep.subr.mxu0 0.0
        %7703 = vmatpush1.xpose.msra.mxu0 0.0
        %7704 = vmatprep.subr.mxu0 0.0
        %7705 = vmatpush1.xpose.msra.mxu0 0.0
        %7706 = vmatprep.subr.mxu0 0.0
        %7707 = vmatpush1.xpose.msra.mxu0 0.0
        %7708 = vmatprep.subr.mxu0 0.0
        %7709 = vmatpush1.xpose.msra.mxu0 0.0
        %7710 = vmatprep.subr.mxu0 0.0
        %7711 = vmatpush1.xpose.msra.mxu0 0.0
        %7712 = vmatprep.subr.mxu0 0.0
        %7713 = vmatpush1.xpose.msra.mxu0 0.0
        %7714 = vmatprep.subr.mxu0 0.0
        %7715 = vmatpush1.xpose.msra.mxu0 0.0
        %7716 = vmatprep.subr.mxu0 0.0
        %7717 = vmatpush1.xpose.msra.mxu0 0.0
        %7718 = vmatprep.subr.mxu0 0.0
        %7719 = vmatpush1.xpose.msra.mxu0 0.0
        %7720 = vmatprep.subr.mxu0 0.0
        %7721 = vmatpush1.xpose.msra.mxu0 0.0
        %7722 = vmatprep.subr.mxu0 0.0
        %7723 = vmatpush1.xpose.msra.mxu0 0.0
        %7724 = vmatprep.subr.mxu0 0.0
        %7725 = vmatpush1.xpose.msra.mxu0 0.0
        %7726 = vmatprep.subr.mxu0 0.0
        %7727 = vmatpush1.xpose.msra.mxu0 0.0
        %7728 = vmatprep.subr.mxu0 0.0
        %7729 = vmatpush1.xpose.msra.mxu0 0.0
        %7730 = vmatprep.subr.mxu0 0.0
        %7731 = vmatpush1.xpose.msra.mxu0 0.0
        %7732 = vmatprep.subr.mxu0 0.0
        %7733 = vmatpush1.xpose.msra.mxu0 0.0
        %7734 = vmatprep.subr.mxu0 0.0
        %7735 = vmatpush1.xpose.msra.mxu0 0.0
        %7736 = vmatprep.subr.mxu0 0.0
        %7737 = vmatpush1.xpose.msra.mxu0 0.0
        %7738 = vmatprep.mubr.f32.mxu0 %v1446
        %7739 = vmatmul.mubr.f32.gmra.mrb[0].mxu0 %v1444
        %v7740 = vpop.f32.mrb[0].mxu0
        %v7741 = vadd.f32 %v7671, %v7740
        %v7742 = vpop.f32.mrb[0].mxu0
        %7743 = vdwg.mxu0
        %7744 = vmatprep.subr.mxu0 %v457
        %7745 = vmatpush1.xpose.msra.mxu0 %v456
        %7746 = vmatprep.subr.mxu0 %v649
        %7747 = vmatpush1.xpose.msra.mxu0 %v648
        %7748 = vmatprep.subr.mxu0 0.0
        %7749 = vmatpush1.xpose.msra.mxu0 0.0
        %7750 = vmatprep.subr.mxu0 0.0
        %7751 = vmatpush1.xpose.msra.mxu0 0.0
        %7752 = vmatprep.subr.mxu0 0.0
        %7753 = vmatpush1.xpose.msra.mxu0 0.0
        %7754 = vmatprep.subr.mxu0 0.0
        %7755 = vmatpush1.xpose.msra.mxu0 0.0
        %7756 = vmatprep.subr.mxu0 0.0
        %7757 = vmatpush1.xpose.msra.mxu0 0.0
        %7758 = vmatprep.subr.mxu0 0.0
        %7759 = vmatpush1.xpose.msra.mxu0 0.0
        %7760 = vmatprep.subr.mxu0 0.0
        %7761 = vmatpush1.xpose.msra.mxu0 0.0
        %7762 = vmatprep.subr.mxu0 0.0
        %7763 = vmatpush1.xpose.msra.mxu0 0.0
        %7764 = vmatprep.subr.mxu0 0.0
        %7765 = vmatpush1.xpose.msra.mxu0 0.0
        %7766 = vmatprep.subr.mxu0 0.0
        %7767 = vmatpush1.xpose.msra.mxu0 0.0
        %7768 = vmatprep.subr.mxu0 0.0
        %7769 = vmatpush1.xpose.msra.mxu0 0.0
        %7770 = vmatprep.subr.mxu0 0.0
        %7771 = vmatpush1.xpose.msra.mxu0 0.0
        %7772 = vmatprep.subr.mxu0 0.0
        %7773 = vmatpush1.xpose.msra.mxu0 0.0
        %7774 = vmatprep.subr.mxu0 0.0
        %7775 = vmatpush1.xpose.msra.mxu0 0.0
        %7776 = vmatprep.subr.mxu0 0.0
        %7777 = vmatpush1.xpose.msra.mxu0 0.0
        %7778 = vmatprep.subr.mxu0 0.0
        %7779 = vmatpush1.xpose.msra.mxu0 0.0
        %7780 = vmatprep.subr.mxu0 0.0
        %7781 = vmatpush1.xpose.msra.mxu0 0.0
        %7782 = vmatprep.subr.mxu0 0.0
        %7783 = vmatpush1.xpose.msra.mxu0 0.0
        %7784 = vmatprep.subr.mxu0 0.0
        %7785 = vmatpush1.xpose.msra.mxu0 0.0
        %7786 = vmatprep.subr.mxu0 0.0
        %7787 = vmatpush1.xpose.msra.mxu0 0.0
        %7788 = vmatprep.subr.mxu0 0.0
        %7789 = vmatpush1.xpose.msra.mxu0 0.0
        %7790 = vmatprep.subr.mxu0 0.0
        %7791 = vmatpush1.xpose.msra.mxu0 0.0
        %7792 = vmatprep.subr.mxu0 0.0
        %7793 = vmatpush1.xpose.msra.mxu0 0.0
        %7794 = vmatprep.subr.mxu0 0.0
        %7795 = vmatpush1.xpose.msra.mxu0 0.0
        %7796 = vmatprep.subr.mxu0 0.0
        %7797 = vmatpush1.xpose.msra.mxu0 0.0
        %7798 = vmatprep.subr.mxu0 0.0
        %7799 = vmatpush1.xpose.msra.mxu0 0.0
        %7800 = vmatprep.subr.mxu0 0.0
        %7801 = vmatpush1.xpose.msra.mxu0 0.0
        %7802 = vmatprep.subr.mxu0 0.0
        %7803 = vmatpush1.xpose.msra.mxu0 0.0
        %7804 = vmatprep.subr.mxu0 0.0
        %7805 = vmatpush1.xpose.msra.mxu0 0.0
        %7806 = vmatprep.subr.mxu0 0.0
        %7807 = vmatpush1.xpose.msra.mxu0 0.0
        %7808 = vmatprep.mubr.f32.mxu0 %v1462
        %7809 = vmatmul.mubr.f32.gmra.mrb[0].mxu0 %v1454
        %v7810 = vpop.f32.mrb[0].mxu0
        %v7811 = vadd.f32 %v7741, %v7810
        %v7812 = vpop.f32.mrb[0].mxu0
        %7813 = vdwg.mxu0
        %7814 = vmatprep.subr.mxu0 %v459
        %7815 = vmatpush1.xpose.msra.mxu0 %v458
        %7816 = vmatprep.subr.mxu0 %v651
        %7817 = vmatpush1.xpose.msra.mxu0 %v650
        %7818 = vmatprep.subr.mxu0 0.0
        %7819 = vmatpush1.xpose.msra.mxu0 0.0
        %7820 = vmatprep.subr.mxu0 0.0
        %7821 = vmatpush1.xpose.msra.mxu0 0.0
        %7822 = vmatprep.subr.mxu0 0.0
        %7823 = vmatpush1.xpose.msra.mxu0 0.0
        %7824 = vmatprep.subr.mxu0 0.0
        %7825 = vmatpush1.xpose.msra.mxu0 0.0
        %7826 = vmatprep.subr.mxu0 0.0
        %7827 = vmatpush1.xpose.msra.mxu0 0.0
        %7828 = vmatprep.subr.mxu0 0.0
        %7829 = vmatpush1.xpose.msra.mxu0 0.0
        %7830 = vmatprep.subr.mxu0 0.0
        %7831 = vmatpush1.xpose.msra.mxu0 0.0
        %7832 = vmatprep.subr.mxu0 0.0
        %7833 = vmatpush1.xpose.msra.mxu0 0.0
        %7834 = vmatprep.subr.mxu0 0.0
        %7835 = vmatpush1.xpose.msra.mxu0 0.0
        %7836 = vmatprep.subr.mxu0 0.0
        %7837 = vmatpush1.xpose.msra.mxu0 0.0
        %7838 = vmatprep.subr.mxu0 0.0
        %7839 = vmatpush1.xpose.msra.mxu0 0.0
        %7840 = vmatprep.subr.mxu0 0.0
        %7841 = vmatpush1.xpose.msra.mxu0 0.0
        %7842 = vmatprep.subr.mxu0 0.0
        %7843 = vmatpush1.xpose.msra.mxu0 0.0
        %7844 = vmatprep.subr.mxu0 0.0
        %7845 = vmatpush1.xpose.msra.mxu0 0.0
        %7846 = vmatprep.subr.mxu0 0.0
        %7847 = vmatpush1.xpose.msra.mxu0 0.0
        %7848 = vmatprep.subr.mxu0 0.0
        %7849 = vmatpush1.xpose.msra.mxu0 0.0
        %7850 = vmatprep.subr.mxu0 0.0
        %7851 = vmatpush1.xpose.msra.mxu0 0.0
        %7852 = vmatprep.subr.mxu0 0.0
        %7853 = vmatpush1.xpose.msra.mxu0 0.0
        %7854 = vmatprep.subr.mxu0 0.0
        %7855 = vmatpush1.xpose.msra.mxu0 0.0
        %7856 = vmatprep.subr.mxu0 0.0
        %7857 = vmatpush1.xpose.msra.mxu0 0.0
        %7858 = vmatprep.subr.mxu0 0.0
        %7859 = vmatpush1.xpose.msra.mxu0 0.0
        %7860 = vmatprep.subr.mxu0 0.0
        %7861 = vmatpush1.xpose.msra.mxu0 0.0
        %7862 = vmatprep.subr.mxu0 0.0
        %7863 = vmatpush1.xpose.msra.mxu0 0.0
        %7864 = vmatprep.subr.mxu0 0.0
        %7865 = vmatpush1.xpose.msra.mxu0 0.0
        %7866 = vmatprep.subr.mxu0 0.0
        %7867 = vmatpush1.xpose.msra.mxu0 0.0
        %7868 = vmatprep.subr.mxu0 0.0
        %7869 = vmatpush1.xpose.msra.mxu0 0.0
        %7870 = vmatprep.subr.mxu0 0.0
        %7871 = vmatpush1.xpose.msra.mxu0 0.0
        %7872 = vmatprep.subr.mxu0 0.0
        %7873 = vmatpush1.xpose.msra.mxu0 0.0
        %7874 = vmatprep.subr.mxu0 0.0
        %7875 = vmatpush1.xpose.msra.mxu0 0.0
        %7876 = vmatprep.subr.mxu0 0.0
        %7877 = vmatpush1.xpose.msra.mxu0 0.0
        %7878 = vmatprep.mubr.f32.mxu0 %v1463
        %7879 = vmatmul.mubr.f32.gmra.mrb[0].mxu0 %v1461
        %v7880 = vpop.f32.mrb[0].mxu0
        %v7881 = vadd.f32 %v7811, %v7880
        %v7882 = vpop.f32.mrb[0].mxu0
        %7883 = vdwg.mxu0
        %7884 = vmatprep.subr.mxu0 %v461
        %7885 = vmatpush1.xpose.msra.mxu0 %v460
        %7886 = vmatprep.subr.mxu0 %v653
        %7887 = vmatpush1.xpose.msra.mxu0 %v652
        %7888 = vmatprep.subr.mxu0 0.0
        %7889 = vmatpush1.xpose.msra.mxu0 0.0
        %7890 = vmatprep.subr.mxu0 0.0
        %7891 = vmatpush1.xpose.msra.mxu0 0.0
        %7892 = vmatprep.subr.mxu0 0.0
        %7893 = vmatpush1.xpose.msra.mxu0 0.0
        %7894 = vmatprep.subr.mxu0 0.0
        %7895 = vmatpush1.xpose.msra.mxu0 0.0
        %7896 = vmatprep.subr.mxu0 0.0
        %7897 = vmatpush1.xpose.msra.mxu0 0.0
        %7898 = vmatprep.subr.mxu0 0.0
        %7899 = vmatpush1.xpose.msra.mxu0 0.0
        %7900 = vmatprep.subr.mxu0 0.0
        %7901 = vmatpush1.xpose.msra.mxu0 0.0
        %7902 = vmatprep.subr.mxu0 0.0
        %7903 = vmatpush1.xpose.msra.mxu0 0.0
        %7904 = vmatprep.subr.mxu0 0.0
        %7905 = vmatpush1.xpose.msra.mxu0 0.0
        %7906 = vmatprep.subr.mxu0 0.0
        %7907 = vmatpush1.xpose.msra.mxu0 0.0
        %7908 = vmatprep.subr.mxu0 0.0
        %7909 = vmatpush1.xpose.msra.mxu0 0.0
        %7910 = vmatprep.subr.mxu0 0.0
        %7911 = vmatpush1.xpose.msra.mxu0 0.0
        %7912 = vmatprep.subr.mxu0 0.0
        %7913 = vmatpush1.xpose.msra.mxu0 0.0
        %7914 = vmatprep.subr.mxu0 0.0
        %7915 = vmatpush1.xpose.msra.mxu0 0.0
        %7916 = vmatprep.subr.mxu0 0.0
        %7917 = vmatpush1.xpose.msra.mxu0 0.0
        %7918 = vmatprep.subr.mxu0 0.0
        %7919 = vmatpush1.xpose.msra.mxu0 0.0
        %7920 = vmatprep.subr.mxu0 0.0
        %7921 = vmatpush1.xpose.msra.mxu0 0.0
        %7922 = vmatprep.subr.mxu0 0.0
        %7923 = vmatpush1.xpose.msra.mxu0 0.0
        %7924 = vmatprep.subr.mxu0 0.0
        %7925 = vmatpush1.xpose.msra.mxu0 0.0
        %7926 = vmatprep.subr.mxu0 0.0
        %7927 = vmatpush1.xpose.msra.mxu0 0.0
        %7928 = vmatprep.subr.mxu0 0.0
        %7929 = vmatpush1.xpose.msra.mxu0 0.0
        %7930 = vmatprep.subr.mxu0 0.0
        %7931 = vmatpush1.xpose.msra.mxu0 0.0
        %7932 = vmatprep.subr.mxu0 0.0
        %7933 = vmatpush1.xpose.msra.mxu0 0.0
        %7934 = vmatprep.subr.mxu0 0.0
        %7935 = vmatpush1.xpose.msra.mxu0 0.0
        %7936 = vmatprep.subr.mxu0 0.0
        %7937 = vmatpush1.xpose.msra.mxu0 0.0
        %7938 = vmatprep.subr.mxu0 0.0
        %7939 = vmatpush1.xpose.msra.mxu0 0.0
        %7940 = vmatprep.subr.mxu0 0.0
        %7941 = vmatpush1.xpose.msra.mxu0 0.0
        %7942 = vmatprep.subr.mxu0 0.0
        %7943 = vmatpush1.xpose.msra.mxu0 0.0
        %7944 = vmatprep.subr.mxu0 0.0
        %7945 = vmatpush1.xpose.msra.mxu0 0.0
        %7946 = vmatprep.subr.mxu0 0.0
        %7947 = vmatpush1.xpose.msra.mxu0 0.0
        %7948 = vmatprep.mubr.f32.mxu0 %v1479
        %7949 = vmatmul.mubr.f32.gmra.mrb[0].mxu0 %v1471
        %v7950 = vpop.f32.mrb[0].mxu0
        %v7951 = vadd.f32 %v7881, %v7950
        %v7952 = vpop.f32.mrb[0].mxu0
        %7953 = vdwg.mxu0
        %7954 = vmatprep.subr.mxu0 %v463
        %7955 = vmatpush1.xpose.msra.mxu0 %v462
        %7956 = vmatprep.subr.mxu0 %v655
        %7957 = vmatpush1.xpose.msra.mxu0 %v654
        %7958 = vmatprep.subr.mxu0 0.0
        %7959 = vmatpush1.xpose.msra.mxu0 0.0
        %7960 = vmatprep.subr.mxu0 0.0
        %7961 = vmatpush1.xpose.msra.mxu0 0.0
        %7962 = vmatprep.subr.mxu0 0.0
        %7963 = vmatpush1.xpose.msra.mxu0 0.0
        %7964 = vmatprep.subr.mxu0 0.0
        %7965 = vmatpush1.xpose.msra.mxu0 0.0
        %7966 = vmatprep.subr.mxu0 0.0
        %7967 = vmatpush1.xpose.msra.mxu0 0.0
        %7968 = vmatprep.subr.mxu0 0.0
        %7969 = vmatpush1.xpose.msra.mxu0 0.0
        %7970 = vmatprep.subr.mxu0 0.0
        %7971 = vmatpush1.xpose.msra.mxu0 0.0
        %7972 = vmatprep.subr.mxu0 0.0
        %7973 = vmatpush1.xpose.msra.mxu0 0.0
        %7974 = vmatprep.subr.mxu0 0.0
        %7975 = vmatpush1.xpose.msra.mxu0 0.0
        %7976 = vmatprep.subr.mxu0 0.0
        %7977 = vmatpush1.xpose.msra.mxu0 0.0
        %7978 = vmatprep.subr.mxu0 0.0
        %7979 = vmatpush1.xpose.msra.mxu0 0.0
        %7980 = vmatprep.subr.mxu0 0.0
        %7981 = vmatpush1.xpose.msra.mxu0 0.0
        %7982 = vmatprep.subr.mxu0 0.0
        %7983 = vmatpush1.xpose.msra.mxu0 0.0
        %7984 = vmatprep.subr.mxu0 0.0
        %7985 = vmatpush1.xpose.msra.mxu0 0.0
        %7986 = vmatprep.subr.mxu0 0.0
        %7987 = vmatpush1.xpose.msra.mxu0 0.0
        %7988 = vmatprep.subr.mxu0 0.0
        %7989 = vmatpush1.xpose.msra.mxu0 0.0
        %7990 = vmatprep.subr.mxu0 0.0
        %7991 = vmatpush1.xpose.msra.mxu0 0.0
        %7992 = vmatprep.subr.mxu0 0.0
        %7993 = vmatpush1.xpose.msra.mxu0 0.0
        %7994 = vmatprep.subr.mxu0 0.0
        %7995 = vmatpush1.xpose.msra.mxu0 0.0
        %7996 = vmatprep.subr.mxu0 0.0
        %7997 = vmatpush1.xpose.msra.mxu0 0.0
        %7998 = vmatprep.subr.mxu0 0.0
        %7999 = vmatpush1.xpose.msra.mxu0 0.0
        %8000 = vmatprep.subr.mxu0 0.0
        %8001 = vmatpush1.xpose.msra.mxu0 0.0
        %8002 = vmatprep.subr.mxu0 0.0
        %8003 = vmatpush1.xpose.msra.mxu0 0.0
        %8004 = vmatprep.subr.mxu0 0.0
        %8005 = vmatpush1.xpose.msra.mxu0 0.0
        %8006 = vmatprep.subr.mxu0 0.0
        %8007 = vmatpush1.xpose.msra.mxu0 0.0
        %8008 = vmatprep.subr.mxu0 0.0
        %8009 = vmatpush1.xpose.msra.mxu0 0.0
        %8010 = vmatprep.subr.mxu0 0.0
        %8011 = vmatpush1.xpose.msra.mxu0 0.0
        %8012 = vmatprep.subr.mxu0 0.0
        %8013 = vmatpush1.xpose.msra.mxu0 0.0
        %8014 = vmatprep.subr.mxu0 0.0
        %8015 = vmatpush1.xpose.msra.mxu0 0.0
        %8016 = vmatprep.subr.mxu0 0.0
        %8017 = vmatpush1.xpose.msra.mxu0 0.0
        %8018 = vmatprep.mubr.f32.mxu0 %v1480
        %8019 = vmatmul.mubr.f32.gmra.mrb[0].mxu0 %v1478
        %v8020 = vpop.f32.mrb[0].mxu0
        %v8021 = vadd.f32 %v7951, %v8020
        %v8022 = vpop.f32.mrb[0].mxu0
        %8023 = vdwg.mxu0
        %8024 = vmatprep.subr.mxu0 %v465
        %8025 = vmatpush1.xpose.msra.mxu0 %v464
        %8026 = vmatprep.subr.mxu0 %v657
        %8027 = vmatpush1.xpose.msra.mxu0 %v656
        %8028 = vmatprep.subr.mxu0 0.0
        %8029 = vmatpush1.xpose.msra.mxu0 0.0
        %8030 = vmatprep.subr.mxu0 0.0
        %8031 = vmatpush1.xpose.msra.mxu0 0.0
        %8032 = vmatprep.subr.mxu0 0.0
        %8033 = vmatpush1.xpose.msra.mxu0 0.0
        %8034 = vmatprep.subr.mxu0 0.0
        %8035 = vmatpush1.xpose.msra.mxu0 0.0
        %8036 = vmatprep.subr.mxu0 0.0
        %8037 = vmatpush1.xpose.msra.mxu0 0.0
        %8038 = vmatprep.subr.mxu0 0.0
        %8039 = vmatpush1.xpose.msra.mxu0 0.0
        %8040 = vmatprep.subr.mxu0 0.0
        %8041 = vmatpush1.xpose.msra.mxu0 0.0
        %8042 = vmatprep.subr.mxu0 0.0
        %8043 = vmatpush1.xpose.msra.mxu0 0.0
        %8044 = vmatprep.subr.mxu0 0.0
        %8045 = vmatpush1.xpose.msra.mxu0 0.0
        %8046 = vmatprep.subr.mxu0 0.0
        %8047 = vmatpush1.xpose.msra.mxu0 0.0
        %8048 = vmatprep.subr.mxu0 0.0
        %8049 = vmatpush1.xpose.msra.mxu0 0.0
        %8050 = vmatprep.subr.mxu0 0.0
        %8051 = vmatpush1.xpose.msra.mxu0 0.0
        %8052 = vmatprep.subr.mxu0 0.0
        %8053 = vmatpush1.xpose.msra.mxu0 0.0
        %8054 = vmatprep.subr.mxu0 0.0
        %8055 = vmatpush1.xpose.msra.mxu0 0.0
        %8056 = vmatprep.subr.mxu0 0.0
        %8057 = vmatpush1.xpose.msra.mxu0 0.0
        %8058 = vmatprep.subr.mxu0 0.0
        %8059 = vmatpush1.xpose.msra.mxu0 0.0
        %8060 = vmatprep.subr.mxu0 0.0
        %8061 = vmatpush1.xpose.msra.mxu0 0.0
        %8062 = vmatprep.subr.mxu0 0.0
        %8063 = vmatpush1.xpose.msra.mxu0 0.0
        %8064 = vmatprep.subr.mxu0 0.0
        %8065 = vmatpush1.xpose.msra.mxu0 0.0
        %8066 = vmatprep.subr.mxu0 0.0
        %8067 = vmatpush1.xpose.msra.mxu0 0.0
        %8068 = vmatprep.subr.mxu0 0.0
        %8069 = vmatpush1.xpose.msra.mxu0 0.0
        %8070 = vmatprep.subr.mxu0 0.0
        %8071 = vmatpush1.xpose.msra.mxu0 0.0
        %8072 = vmatprep.subr.mxu0 0.0
        %8073 = vmatpush1.xpose.msra.mxu0 0.0
        %8074 = vmatprep.subr.mxu0 0.0
        %8075 = vmatpush1.xpose.msra.mxu0 0.0
        %8076 = vmatprep.subr.mxu0 0.0
        %8077 = vmatpush1.xpose.msra.mxu0 0.0
        %8078 = vmatprep.subr.mxu0 0.0
        %8079 = vmatpush1.xpose.msra.mxu0 0.0
        %8080 = vmatprep.subr.mxu0 0.0
        %8081 = vmatpush1.xpose.msra.mxu0 0.0
        %8082 = vmatprep.subr.mxu0 0.0
        %8083 = vmatpush1.xpose.msra.mxu0 0.0
        %8084 = vmatprep.subr.mxu0 0.0
        %8085 = vmatpush1.xpose.msra.mxu0 0.0
        %8086 = vmatprep.subr.mxu0 0.0
        %8087 = vmatpush1.xpose.msra.mxu0 0.0
        %8088 = vmatprep.mubr.f32.mxu0 %v1496
        %8089 = vmatmul.mubr.f32.gmra.mrb[0].mxu0 %v1488
        %v8090 = vpop.f32.mrb[0].mxu0
        %v8091 = vadd.f32 %v8021, %v8090
        %v8092 = vpop.f32.mrb[0].mxu0
        %8093 = vdwg.mxu0
        %8094 = vmatprep.subr.mxu0 %v467
        %8095 = vmatpush1.xpose.msra.mxu0 %v466
        %8096 = vmatprep.subr.mxu0 %v659
        %8097 = vmatpush1.xpose.msra.mxu0 %v658
        %8098 = vmatprep.subr.mxu0 0.0
        %8099 = vmatpush1.xpose.msra.mxu0 0.0
        %8100 = vmatprep.subr.mxu0 0.0
        %8101 = vmatpush1.xpose.msra.mxu0 0.0
        %8102 = vmatprep.subr.mxu0 0.0
        %8103 = vmatpush1.xpose.msra.mxu0 0.0
        %8104 = vmatprep.subr.mxu0 0.0
        %8105 = vmatpush1.xpose.msra.mxu0 0.0
        %8106 = vmatprep.subr.mxu0 0.0
        %8107 = vmatpush1.xpose.msra.mxu0 0.0
        %8108 = vmatprep.subr.mxu0 0.0
        %8109 = vmatpush1.xpose.msra.mxu0 0.0
        %8110 = vmatprep.subr.mxu0 0.0
        %8111 = vmatpush1.xpose.msra.mxu0 0.0
        %8112 = vmatprep.subr.mxu0 0.0
        %8113 = vmatpush1.xpose.msra.mxu0 0.0
        %8114 = vmatprep.subr.mxu0 0.0
        %8115 = vmatpush1.xpose.msra.mxu0 0.0
        %8116 = vmatprep.subr.mxu0 0.0
        %8117 = vmatpush1.xpose.msra.mxu0 0.0
        %8118 = vmatprep.subr.mxu0 0.0
        %8119 = vmatpush1.xpose.msra.mxu0 0.0
        %8120 = vmatprep.subr.mxu0 0.0
        %8121 = vmatpush1.xpose.msra.mxu0 0.0
        %8122 = vmatprep.subr.mxu0 0.0
        %8123 = vmatpush1.xpose.msra.mxu0 0.0
        %8124 = vmatprep.subr.mxu0 0.0
        %8125 = vmatpush1.xpose.msra.mxu0 0.0
        %8126 = vmatprep.subr.mxu0 0.0
        %8127 = vmatpush1.xpose.msra.mxu0 0.0
        %8128 = vmatprep.subr.mxu0 0.0
        %8129 = vmatpush1.xpose.msra.mxu0 0.0
        %8130 = vmatprep.subr.mxu0 0.0
        %8131 = vmatpush1.xpose.msra.mxu0 0.0
        %8132 = vmatprep.subr.mxu0 0.0
        %8133 = vmatpush1.xpose.msra.mxu0 0.0
        %8134 = vmatprep.subr.mxu0 0.0
        %8135 = vmatpush1.xpose.msra.mxu0 0.0
        %8136 = vmatprep.subr.mxu0 0.0
        %8137 = vmatpush1.xpose.msra.mxu0 0.0
        %8138 = vmatprep.subr.mxu0 0.0
        %8139 = vmatpush1.xpose.msra.mxu0 0.0
        %8140 = vmatprep.subr.mxu0 0.0
        %8141 = vmatpush1.xpose.msra.mxu0 0.0
        %8142 = vmatprep.subr.mxu0 0.0
        %8143 = vmatpush1.xpose.msra.mxu0 0.0
        %8144 = vmatprep.subr.mxu0 0.0
        %8145 = vmatpush1.xpose.msra.mxu0 0.0
        %8146 = vmatprep.subr.mxu0 0.0
        %8147 = vmatpush1.xpose.msra.mxu0 0.0
        %8148 = vmatprep.subr.mxu0 0.0
        %8149 = vmatpush1.xpose.msra.mxu0 0.0
        %8150 = vmatprep.subr.mxu0 0.0
        %8151 = vmatpush1.xpose.msra.mxu0 0.0
        %8152 = vmatprep.subr.mxu0 0.0
        %8153 = vmatpush1.xpose.msra.mxu0 0.0
        %8154 = vmatprep.subr.mxu0 0.0
        %8155 = vmatpush1.xpose.msra.mxu0 0.0
        %8156 = vmatprep.subr.mxu0 0.0
        %8157 = vmatpush1.xpose.msra.mxu0 0.0
        %8158 = vmatprep.mubr.f32.mxu0 %v1497
        %8159 = vmatmul.mubr.f32.gmra.mrb[0].mxu0 %v1495
        %v8160 = vpop.f32.mrb[0].mxu0
        %v8161 = vadd.f32 %v8091, %v8160
        %v8162 = vpop.f32.mrb[0].mxu0
        %8163 = vdwg.mxu0
        %8164 = vmatprep.subr.mxu0 %v469
        %8165 = vmatpush1.xpose.msra.mxu0 %v468
        %8166 = vmatprep.subr.mxu0 %v661
        %8167 = vmatpush1.xpose.msra.mxu0 %v660
        %8168 = vmatprep.subr.mxu0 0.0
        %8169 = vmatpush1.xpose.msra.mxu0 0.0
        %8170 = vmatprep.subr.mxu0 0.0
        %8171 = vmatpush1.xpose.msra.mxu0 0.0
        %8172 = vmatprep.subr.mxu0 0.0
        %8173 = vmatpush1.xpose.msra.mxu0 0.0
        %8174 = vmatprep.subr.mxu0 0.0
        %8175 = vmatpush1.xpose.msra.mxu0 0.0
        %8176 = vmatprep.subr.mxu0 0.0
        %8177 = vmatpush1.xpose.msra.mxu0 0.0
        %8178 = vmatprep.subr.mxu0 0.0
        %8179 = vmatpush1.xpose.msra.mxu0 0.0
        %8180 = vmatprep.subr.mxu0 0.0
        %8181 = vmatpush1.xpose.msra.mxu0 0.0
        %8182 = vmatprep.subr.mxu0 0.0
        %8183 = vmatpush1.xpose.msra.mxu0 0.0
        %8184 = vmatprep.subr.mxu0 0.0
        %8185 = vmatpush1.xpose.msra.mxu0 0.0
        %8186 = vmatprep.subr.mxu0 0.0
        %8187 = vmatpush1.xpose.msra.mxu0 0.0
        %8188 = vmatprep.subr.mxu0 0.0
        %8189 = vmatpush1.xpose.msra.mxu0 0.0
        %8190 = vmatprep.subr.mxu0 0.0
        %8191 = vmatpush1.xpose.msra.mxu0 0.0
        %8192 = vmatprep.subr.mxu0 0.0
        %8193 = vmatpush1.xpose.msra.mxu0 0.0
        %8194 = vmatprep.subr.mxu0 0.0
        %8195 = vmatpush1.xpose.msra.mxu0 0.0
        %8196 = vmatprep.subr.mxu0 0.0
        %8197 = vmatpush1.xpose.msra.mxu0 0.0
        %8198 = vmatprep.subr.mxu0 0.0
        %8199 = vmatpush1.xpose.msra.mxu0 0.0
        %8200 = vmatprep.subr.mxu0 0.0
        %8201 = vmatpush1.xpose.msra.mxu0 0.0
        %8202 = vmatprep.subr.mxu0 0.0
        %8203 = vmatpush1.xpose.msra.mxu0 0.0
        %8204 = vmatprep.subr.mxu0 0.0
        %8205 = vmatpush1.xpose.msra.mxu0 0.0
        %8206 = vmatprep.subr.mxu0 0.0
        %8207 = vmatpush1.xpose.msra.mxu0 0.0
        %8208 = vmatprep.subr.mxu0 0.0
        %8209 = vmatpush1.xpose.msra.mxu0 0.0
        %8210 = vmatprep.subr.mxu0 0.0
        %8211 = vmatpush1.xpose.msra.mxu0 0.0
        %8212 = vmatprep.subr.mxu0 0.0
        %8213 = vmatpush1.xpose.msra.mxu0 0.0
        %8214 = vmatprep.subr.mxu0 0.0
        %8215 = vmatpush1.xpose.msra.mxu0 0.0
        %8216 = vmatprep.subr.mxu0 0.0
        %8217 = vmatpush1.xpose.msra.mxu0 0.0
        %8218 = vmatprep.subr.mxu0 0.0
        %8219 = vmatpush1.xpose.msra.mxu0 0.0
        %8220 = vmatprep.subr.mxu0 0.0
        %8221 = vmatpush1.xpose.msra.mxu0 0.0
        %8222 = vmatprep.subr.mxu0 0.0
        %8223 = vmatpush1.xpose.msra.mxu0 0.0
        %8224 = vmatprep.subr.mxu0 0.0
        %8225 = vmatpush1.xpose.msra.mxu0 0.0
        %8226 = vmatprep.subr.mxu0 0.0
        %8227 = vmatpush1.xpose.msra.mxu0 0.0
        %8228 = vmatprep.mubr.f32.mxu0 %v1513
        %8229 = vmatmul.mubr.f32.gmra.mrb[0].mxu0 %v1505
        %v8230 = vpop.f32.mrb[0].mxu0
        %v8231 = vadd.f32 %v8161, %v8230
        %v8232 = vpop.f32.mrb[0].mxu0
        %8233 = vdwg.mxu0
        %8234 = vmatprep.subr.mxu0 %v471
        %8235 = vmatpush1.xpose.msra.mxu0 %v470
        %8236 = vmatprep.subr.mxu0 %v663
        %8237 = vmatpush1.xpose.msra.mxu0 %v662
        %8238 = vmatprep.subr.mxu0 0.0
        %8239 = vmatpush1.xpose.msra.mxu0 0.0
        %8240 = vmatprep.subr.mxu0 0.0
        %8241 = vmatpush1.xpose.msra.mxu0 0.0
        %8242 = vmatprep.subr.mxu0 0.0
        %8243 = vmatpush1.xpose.msra.mxu0 0.0
        %8244 = vmatprep.subr.mxu0 0.0
        %8245 = vmatpush1.xpose.msra.mxu0 0.0
        %8246 = vmatprep.subr.mxu0 0.0
        %8247 = vmatpush1.xpose.msra.mxu0 0.0
        %8248 = vmatprep.subr.mxu0 0.0
        %8249 = vmatpush1.xpose.msra.mxu0 0.0
        %8250 = vmatprep.subr.mxu0 0.0
        %8251 = vmatpush1.xpose.msra.mxu0 0.0
        %8252 = vmatprep.subr.mxu0 0.0
        %8253 = vmatpush1.xpose.msra.mxu0 0.0
        %8254 = vmatprep.subr.mxu0 0.0
        %8255 = vmatpush1.xpose.msra.mxu0 0.0
        %8256 = vmatprep.subr.mxu0 0.0
        %8257 = vmatpush1.xpose.msra.mxu0 0.0
        %8258 = vmatprep.subr.mxu0 0.0
        %8259 = vmatpush1.xpose.msra.mxu0 0.0
        %8260 = vmatprep.subr.mxu0 0.0
        %8261 = vmatpush1.xpose.msra.mxu0 0.0
        %8262 = vmatprep.subr.mxu0 0.0
        %8263 = vmatpush1.xpose.msra.mxu0 0.0
        %8264 = vmatprep.subr.mxu0 0.0
        %8265 = vmatpush1.xpose.msra.mxu0 0.0
        %8266 = vmatprep.subr.mxu0 0.0
        %8267 = vmatpush1.xpose.msra.mxu0 0.0
        %8268 = vmatprep.subr.mxu0 0.0
        %8269 = vmatpush1.xpose.msra.mxu0 0.0
        %8270 = vmatprep.subr.mxu0 0.0
        %8271 = vmatpush1.xpose.msra.mxu0 0.0
        %8272 = vmatprep.subr.mxu0 0.0
        %8273 = vmatpush1.xpose.msra.mxu0 0.0
        %8274 = vmatprep.subr.mxu0 0.0
        %8275 = vmatpush1.xpose.msra.mxu0 0.0
        %8276 = vmatprep.subr.mxu0 0.0
        %8277 = vmatpush1.xpose.msra.mxu0 0.0
        %8278 = vmatprep.subr.mxu0 0.0
        %8279 = vmatpush1.xpose.msra.mxu0 0.0
        %8280 = vmatprep.subr.mxu0 0.0
        %8281 = vmatpush1.xpose.msra.mxu0 0.0
        %8282 = vmatprep.subr.mxu0 0.0
        %8283 = vmatpush1.xpose.msra.mxu0 0.0
        %8284 = vmatprep.subr.mxu0 0.0
        %8285 = vmatpush1.xpose.msra.mxu0 0.0
        %8286 = vmatprep.subr.mxu0 0.0
        %8287 = vmatpush1.xpose.msra.mxu0 0.0
        %8288 = vmatprep.subr.mxu0 0.0
        %8289 = vmatpush1.xpose.msra.mxu0 0.0
        %8290 = vmatprep.subr.mxu0 0.0
        %8291 = vmatpush1.xpose.msra.mxu0 0.0
        %8292 = vmatprep.subr.mxu0 0.0
        %8293 = vmatpush1.xpose.msra.mxu0 0.0
        %8294 = vmatprep.subr.mxu0 0.0
        %8295 = vmatpush1.xpose.msra.mxu0 0.0
        %8296 = vmatprep.subr.mxu0 0.0
        %8297 = vmatpush1.xpose.msra.mxu0 0.0
        %8298 = vmatprep.mubr.f32.mxu0 %v1514
        %8299 = vmatmul.mubr.f32.gmra.mrb[0].mxu0 %v1512
        %v8300 = vpop.f32.mrb[0].mxu0
        %v8301 = vadd.f32 %v8231, %v8300
        %v8302 = vpop.f32.mrb[0].mxu0
        %8303 = vdwg.mxu0
        %8304 = vmatprep.subr.mxu0 %v473
        %8305 = vmatpush1.xpose.msra.mxu0 %v472
        %8306 = vmatprep.subr.mxu0 %v665
        %8307 = vmatpush1.xpose.msra.mxu0 %v664
        %8308 = vmatprep.subr.mxu0 0.0
        %8309 = vmatpush1.xpose.msra.mxu0 0.0
        %8310 = vmatprep.subr.mxu0 0.0
        %8311 = vmatpush1.xpose.msra.mxu0 0.0
        %8312 = vmatprep.subr.mxu0 0.0
        %8313 = vmatpush1.xpose.msra.mxu0 0.0
        %8314 = vmatprep.subr.mxu0 0.0
        %8315 = vmatpush1.xpose.msra.mxu0 0.0
        %8316 = vmatprep.subr.mxu0 0.0
        %8317 = vmatpush1.xpose.msra.mxu0 0.0
        %8318 = vmatprep.subr.mxu0 0.0
        %8319 = vmatpush1.xpose.msra.mxu0 0.0
        %8320 = vmatprep.subr.mxu0 0.0
        %8321 = vmatpush1.xpose.msra.mxu0 0.0
        %8322 = vmatprep.subr.mxu0 0.0
        %8323 = vmatpush1.xpose.msra.mxu0 0.0
        %8324 = vmatprep.subr.mxu0 0.0
        %8325 = vmatpush1.xpose.msra.mxu0 0.0
        %8326 = vmatprep.subr.mxu0 0.0
        %8327 = vmatpush1.xpose.msra.mxu0 0.0
        %8328 = vmatprep.subr.mxu0 0.0
        %8329 = vmatpush1.xpose.msra.mxu0 0.0
        %8330 = vmatprep.subr.mxu0 0.0
        %8331 = vmatpush1.xpose.msra.mxu0 0.0
        %8332 = vmatprep.subr.mxu0 0.0
        %8333 = vmatpush1.xpose.msra.mxu0 0.0
        %8334 = vmatprep.subr.mxu0 0.0
        %8335 = vmatpush1.xpose.msra.mxu0 0.0
        %8336 = vmatprep.subr.mxu0 0.0
        %8337 = vmatpush1.xpose.msra.mxu0 0.0
        %8338 = vmatprep.subr.mxu0 0.0
        %8339 = vmatpush1.xpose.msra.mxu0 0.0
        %8340 = vmatprep.subr.mxu0 0.0
        %8341 = vmatpush1.xpose.msra.mxu0 0.0
        %8342 = vmatprep.subr.mxu0 0.0
        %8343 = vmatpush1.xpose.msra.mxu0 0.0
        %8344 = vmatprep.subr.mxu0 0.0
        %8345 = vmatpush1.xpose.msra.mxu0 0.0
        %8346 = vmatprep.subr.mxu0 0.0
        %8347 = vmatpush1.xpose.msra.mxu0 0.0
        %8348 = vmatprep.subr.mxu0 0.0
        %8349 = vmatpush1.xpose.msra.mxu0 0.0
        %8350 = vmatprep.subr.mxu0 0.0
        %8351 = vmatpush1.xpose.msra.mxu0 0.0
        %8352 = vmatprep.subr.mxu0 0.0
        %8353 = vmatpush1.xpose.msra.mxu0 0.0
        %8354 = vmatprep.subr.mxu0 0.0
        %8355 = vmatpush1.xpose.msra.mxu0 0.0
        %8356 = vmatprep.subr.mxu0 0.0
        %8357 = vmatpush1.xpose.msra.mxu0 0.0
        %8358 = vmatprep.subr.mxu0 0.0
        %8359 = vmatpush1.xpose.msra.mxu0 0.0
        %8360 = vmatprep.subr.mxu0 0.0
        %8361 = vmatpush1.xpose.msra.mxu0 0.0
        %8362 = vmatprep.subr.mxu0 0.0
        %8363 = vmatpush1.xpose.msra.mxu0 0.0
        %8364 = vmatprep.subr.mxu0 0.0
        %8365 = vmatpush1.xpose.msra.mxu0 0.0
        %8366 = vmatprep.subr.mxu0 0.0
        %8367 = vmatpush1.xpose.msra.mxu0 0.0
        %8368 = vmatprep.mubr.f32.mxu0 %v1530
        %8369 = vmatmul.mubr.f32.gmra.mrb[0].mxu0 %v1522
        %v8370 = vpop.f32.mrb[0].mxu0
        %v8371 = vadd.f32 %v8301, %v8370
        %v8372 = vpop.f32.mrb[0].mxu0
        %8373 = vdwg.mxu0
        %8374 = vmatprep.subr.mxu0 %v475
        %8375 = vmatpush1.xpose.msra.mxu0 %v474
        %8376 = vmatprep.subr.mxu0 %v667
        %8377 = vmatpush1.xpose.msra.mxu0 %v666
        %8378 = vmatprep.subr.mxu0 0.0
        %8379 = vmatpush1.xpose.msra.mxu0 0.0
        %8380 = vmatprep.subr.mxu0 0.0
        %8381 = vmatpush1.xpose.msra.mxu0 0.0
        %8382 = vmatprep.subr.mxu0 0.0
        %8383 = vmatpush1.xpose.msra.mxu0 0.0
        %8384 = vmatprep.subr.mxu0 0.0
        %8385 = vmatpush1.xpose.msra.mxu0 0.0
        %8386 = vmatprep.subr.mxu0 0.0
        %8387 = vmatpush1.xpose.msra.mxu0 0.0
        %8388 = vmatprep.subr.mxu0 0.0
        %8389 = vmatpush1.xpose.msra.mxu0 0.0
        %8390 = vmatprep.subr.mxu0 0.0
        %8391 = vmatpush1.xpose.msra.mxu0 0.0
        %8392 = vmatprep.subr.mxu0 0.0
        %8393 = vmatpush1.xpose.msra.mxu0 0.0
        %8394 = vmatprep.subr.mxu0 0.0
        %8395 = vmatpush1.xpose.msra.mxu0 0.0
        %8396 = vmatprep.subr.mxu0 0.0
        %8397 = vmatpush1.xpose.msra.mxu0 0.0
        %8398 = vmatprep.subr.mxu0 0.0
        %8399 = vmatpush1.xpose.msra.mxu0 0.0
        %8400 = vmatprep.subr.mxu0 0.0
        %8401 = vmatpush1.xpose.msra.mxu0 0.0
        %8402 = vmatprep.subr.mxu0 0.0
        %8403 = vmatpush1.xpose.msra.mxu0 0.0
        %8404 = vmatprep.subr.mxu0 0.0
        %8405 = vmatpush1.xpose.msra.mxu0 0.0
        %8406 = vmatprep.subr.mxu0 0.0
        %8407 = vmatpush1.xpose.msra.mxu0 0.0
        %8408 = vmatprep.subr.mxu0 0.0
        %8409 = vmatpush1.xpose.msra.mxu0 0.0
        %8410 = vmatprep.subr.mxu0 0.0
        %8411 = vmatpush1.xpose.msra.mxu0 0.0
        %8412 = vmatprep.subr.mxu0 0.0
        %8413 = vmatpush1.xpose.msra.mxu0 0.0
        %8414 = vmatprep.subr.mxu0 0.0
        %8415 = vmatpush1.xpose.msra.mxu0 0.0
        %8416 = vmatprep.subr.mxu0 0.0
        %8417 = vmatpush1.xpose.msra.mxu0 0.0
        %8418 = vmatprep.subr.mxu0 0.0
        %8419 = vmatpush1.xpose.msra.mxu0 0.0
        %8420 = vmatprep.subr.mxu0 0.0
        %8421 = vmatpush1.xpose.msra.mxu0 0.0
        %8422 = vmatprep.subr.mxu0 0.0
        %8423 = vmatpush1.xpose.msra.mxu0 0.0
        %8424 = vmatprep.subr.mxu0 0.0
        %8425 = vmatpush1.xpose.msra.mxu0 0.0
        %8426 = vmatprep.subr.mxu0 0.0
        %8427 = vmatpush1.xpose.msra.mxu0 0.0
        %8428 = vmatprep.subr.mxu0 0.0
        %8429 = vmatpush1.xpose.msra.mxu0 0.0
        %8430 = vmatprep.subr.mxu0 0.0
        %8431 = vmatpush1.xpose.msra.mxu0 0.0
        %8432 = vmatprep.subr.mxu0 0.0
        %8433 = vmatpush1.xpose.msra.mxu0 0.0
        %8434 = vmatprep.subr.mxu0 0.0
        %8435 = vmatpush1.xpose.msra.mxu0 0.0
        %8436 = vmatprep.subr.mxu0 0.0
        %8437 = vmatpush1.xpose.msra.mxu0 0.0
        %8438 = vmatprep.mubr.f32.mxu0 %v1531
        %8439 = vmatmul.mubr.f32.gmra.mrb[0].mxu0 %v1529
        %v8440 = vpop.f32.mrb[0].mxu0
        %v8441 = vadd.f32 %v8371, %v8440
        %v8442 = vpop.f32.mrb[0].mxu0
        %8443 = vdwg.mxu0
        %v8444 = vadd.f32 %v235, %v8441
        %vm8445 = vcmask 74752
        %8446 = vst.msk [vmem:[#allocation2] sm:$0x3] %vm8445, %v8444
        %p8447 = scmp.eq.s32.totalorder %s21, 7
        // Predicated region
        $region49: #{sj_forward.1} parent=31 // pred_check
          %p8448 = pneg %p8447
        $region50: #{sj_forward.1} parent=31 // pred_check_branch
          %8450 = sbr.rel (%p8448) target = $region52
        $region51: #{sj_forward.1} parent=31 // pred_region
          %v8451 = vld [vmem:[#allocation2] sm:$0x3]
          %v8452 = vld [vmem:[#allocation8] sm:$0x1]
          %v8454 = vlaneseq
          %v8455 = vshrl.u32 %v8454, 7
          %v8456 = vsub.s32 0, %v8455
          %v8457 = vrot.slane %v8452, %v8456
          %v8459 = vadd.f32 %v8451, %v8457
          %8460 = vst.msk [vmem:[#allocation9] sm:$0x3] %vm8445, %v8459
        $region52: #{sj_forward.1} parent=31 // pred_fallthru
          _
        // Predicated region
        $region53: #{sj_forward.1} parent=31 // pred_check
          %p8461 = pneg %p107
        $region54: #{sj_forward.1} parent=31 // pred_check_branch
          %8463 = sbr.rel (%p8461) target = $region56
        $region55: #{sj_forward.1} parent=31 // pred_region
          %s8465 = ssub.s32 32, 32
          %8466 = vsyncadd [#allocation5], %s8465
          %s8468 = sshll.u32 [#allocation9], 4
          %s8469 = int_to_ptr.vmem [resolvable:$true] %s8468
          %8471 = dma.vmem_to_hbm [thread:$0]  %s8469, 32, %s3, [#allocation5]
        $region56: #{sj_forward.1} parent=31 // pred_fallthru
          _
        // Predicated region
        $region57: #{sj_forward.1} parent=31 // pred_check
          %p8472 = pneg %p107
        $region58: #{sj_forward.1} parent=31 // pred_check_branch
          %8474 = sbr.rel (%p8472) target = $region60
        $region59: #{sj_forward.1} parent=31 // pred_region
          %8475 = dma.done [#allocation5], 32
        $region60: #{sj_forward.1} parent=31 // pred_fallthru
          _
      $region32: #{sj_forward.1} parent=5 // pred_fallthru
        _
      %p8476 = scmp.le.s32.totalorder 2, %s16
      // Predicated region
      $region61: #{sj_forward.1} parent=5 // pred_check
        %p8477 = pneg %p8476
      $region62: #{sj_forward.1} parent=5 // pred_check_branch
        %8479 = sbr.rel (%p8477) target = $region64
      $region63: #{sj_forward.1} parent=5 // pred_region
        %s8480 = ssub.s32 %s16, 2
      $region64: #{sj_forward.1} parent=5 // pred_fallthru
        _
    $region6: #{sj_forward.1} parent=1 // loop_footer
      %s20 = sadd.s32 1, %s16
    $region7: #{sj_forward.1} parent=1 // loop_footer_branch
      %15 = sbr.rel target = $region3
    $region8: #{sj_forward.1} parent=1 // loop_exit
      _
    %8481 = vsyncpa [#allocation4], 1
    %s8482 = scalar_lea.sflag [#allocation4], 1
    %8483 = vsyncpa %s8482, 1
    %8484 = vsyncpa [#allocation7], 1
    %s8485 = scalar_lea.sflag [#allocation7], 1
    %8486 = vsyncpa %s8485, 1
    %8487 = vsyncpa [#allocation5], 1
    %s8488 = scalar_lea.sflag [#allocation5], 1
    %8489 = vsyncpa %s8488, 1

</llo_original>
